<compile_context>
chip_gen: v6e
topology: v6e:2x2x1
jax: 0.10.0
libtpu: 0.0.40
codegen_flags: <defaults>
</compile_context>

<pallas_src>
import functools

import jax
import jax.numpy as jnp
from jax import lax
from jax.experimental import pallas as pl
from jax.experimental.pallas import tpu as pltpu


def _round_up(x, m):
    return ((x + m - 1) // m) * m


def _pick_length_tile(length, batch, tl_max=512):
    """Length tile: multiple of 16 (clean bf16 sublane packing), single tile for short
    sequences, and >= 2 tiles when batch == 1 so both v7x TensorCores get work."""
    tl = min(tl_max, _round_up(length, 16))
    if batch == 1 and length > 16:
        tl = min(tl, _round_up((length + 1) // 2, 16))
    return max(16, tl)


def prepare_conv_params(conv_params, num_features, compute_dtype=jnp.bfloat16):
    """One-time parameter prep (hoisted out of the forward path).

    conv_params : list of (w (kh, Cin, Cout), b (Cout,), kernel_size, dilation)
    returns     : list of (w_pairs (ceil(kh/2), 2*Cpad, Cpad) compute_dtype,
                           b_row (1, Cpad) float32, kh, dilation)
    """
    C = num_features
    Cpad = _round_up(C, 128)
    prepared = []
    for (w, b, kh, d) in conv_params:
        kh_even = kh + (kh % 2)                       # zero phantom tap for odd kernels
        wpad = jnp.zeros((kh_even, Cpad, Cpad), jnp.float32)
        wpad = wpad.at[:kh, :C, :C].set(w.astype(jnp.float32))
        # Pair taps (2j, 2j+1) along the contraction dim -> K = 2*Cpad per MXU matmul.
        w_pairs = wpad.reshape(kh_even // 2, 2 * Cpad, Cpad).astype(compute_dtype)
        b_row = jnp.zeros((1, Cpad), jnp.float32).at[0, :C].set(b.astype(jnp.float32))
        prepared.append((w_pairs, b_row, int(kh), int(d)))
    return prepared


def _conv_block1d_kernel(*refs, npairs, dilation, tl, strip, negative_slope,
                         align_hint, has_residual):
    """Fused ConvBlock1d (nonlinear_first): leaky_relu -> dilated conv1d -> + bias
    (+ optional residual add for the final conv of the residual block).

    refs:
      x_ref   : (1, Lp, Cpad)          zero-padded activation (full length, VMEM-resident)
      w_ref   : (npairs, 2*Cpad, Cpad) K-stacked tap-pair weights
      b_ref   : (1, Cpad)              bias (float32)
      res_ref : (1, tl, Cpad)          residual tile (only when has_residual)
      o_ref   : (1, tl, Cpad)          output tile
      act_ref : (strip, Cpad)          VMEM scratch holding the pre-activated strip
    """
    if has_residual:
        x_ref, w_ref, b_ref, res_ref, o_ref, act_ref = refs
    else:
        x_ref, w_ref, b_ref, o_ref, act_ref = refs

    i = pl.program_id(1)
    start = pl.multiple_of(i * tl, align_hint)

    # Pre-activation (nonlinear_first) applied ONCE over the covering strip and stored in
    # compute-dtype scratch; the tap slices below re-read it instead of redoing the
    # compare+select per tap.  leaky_relu(0) == 0, so activating the zero-padded buffer is
    # identical to pad(leaky_relu(x)).
    xs = x_ref[0, pl.ds(start, strip), :].astype(jnp.float32)
    act_ref[...] = jnp.where(xs >= 0, xs,
                             jnp.float32(negative_slope) * xs).astype(act_ref.dtype)

    b_row = b_ref[...]                               # (1, Cpad) float32
    acc = None
    for j in range(npairs):                          # static unrolled tap-pair loop
        o0 = 2 * j * dilation
        # Two shifted tap slices concatenated along lanes -> K = 2*Cpad contraction.
        lhs = jnp.concatenate(
            [act_ref[o0:o0 + tl, :],
             act_ref[o0 + dilation:o0 + dilation + tl, :]], axis=-1)
        contrib = jnp.dot(lhs, w_ref[j, :, :], preferred_element_type=jnp.float32)
        acc = (contrib + b_row) if acc is None else (acc + contrib)

    if has_residual:
        acc = acc + res_ref[0, :, :].astype(jnp.float32)
    o_ref[0, :, :] = acc.astype(o_ref.dtype)


def conv_block1d_pallas(h, w_pairs, b_row, kernel_size, dilation, negative_slope, *,
                        tl, residual=None, compute_dtype=jnp.bfloat16, out_dtype=None):
    """One ConvBlock1d (nonlinear_first=True, stride=1, groups=1).

    h        : (B, L, Cpad) channels-last, channel lanes already padded to 128*n
    w_pairs  : (npairs, 2*Cpad, Cpad) K-stacked tap-pair weights (compute dtype)
    b_row    : (1, Cpad) float32 bias
    residual : optional (B, Lr, Cpad) tensor added to the conv output (fused residual add)
    returns  : (B, L, Cpad) in out_dtype (defaults to h.dtype)
    """
    B, L, Cpad = h.shape
    kh = kernel_size
    d = dilation
    kh_even = kh + (kh % 2)
    npairs = kh_even // 2
    assert w_pairs.shape == (npairs, 2 * Cpad, Cpad), w_pairs.shape
    assert ((kh - 1) * d) % 2 == 0, "requires symmetric 'same' padding (odd kernels)"
    p = d * (kh - 1) // 2
    if out_dtype is None:
        out_dtype = h.dtype

    Lr = _round_up(L, tl)
    nL = Lr // tl
    # Covering strip per length tile (includes the phantom-tap halo for odd kernels).
    strip = _round_up(tl + (kh_even - 1) * d, 16)
    Lp = Lr - tl + strip
    # One zero pad: conv halo (p) on the left; halo + tile/strip round-up on the right.
    xp = jnp.pad(h, ((0, 0), (p, Lp - p - L), (0, 0)))

    in_specs = [
        # Full padded length stays resident in VMEM while the length tiles iterate
        # (index map constant along ii -> re-fetched only per batch row).
        pl.BlockSpec((1, Lp, Cpad), lambda bb, ii: (bb, 0, 0)),
        pl.BlockSpec((npairs, 2 * Cpad, Cpad), lambda bb, ii: (0, 0, 0)),
        pl.BlockSpec((1, Cpad), lambda bb, ii: (0, 0)),
    ]
    args = [xp, w_pairs, b_row]
    if residual is not None:
        in_specs.append(pl.BlockSpec((1, tl, Cpad), lambda bb, ii: (bb, ii, 0)))
        args.append(residual)

    # Explicit scoped-VMEM budget sized from the actual blocks (double-buffered inputs),
    # clamped to stay valid on v7x's 64 MiB physical VMEM.
    abytes = xp.dtype.itemsize
    cbytes = jnp.dtype(compute_dtype).itemsize
    needed = 2 * Lp * Cpad * abytes                       # full-length x (double-buffered)
    needed += 2 * w_pairs.size * w_pairs.dtype.itemsize   # weights
    needed += 2 * tl * Cpad * jnp.dtype(out_dtype).itemsize
    if residual is not None:
        needed += 2 * tl * Cpad * residual.dtype.itemsize
    needed += strip * Cpad * cbytes                       # activated-strip scratch
    needed += 8 * tl * Cpad * 4                           # f32 acc / K-stacked lhs temps
    vmem_limit = int(min(max(needed + (4 << 20), 32 << 20), 56 << 20))

    align_hint = 128 if tl % 128 == 0 else 16

    kernel = functools.partial(
        _conv_block1d_kernel,
        npairs=npairs, dilation=d, tl=tl, strip=strip,
        negative_slope=float(negative_slope),
        align_hint=align_hint,
        has_residual=residual is not None)

    return pl.pallas_call(
        kernel,
        out_shape=jax.ShapeDtypeStruct((B, L, Cpad), out_dtype),
        grid=(B, nL),
        in_specs=in_specs,
        out_specs=pl.BlockSpec((1, tl, Cpad), lambda bb, ii: (bb, ii, 0)),
        scratch_shapes=[pltpu.VMEM((strip, Cpad), compute_dtype)],
        compiler_params=pltpu.CompilerParams(
            dimension_semantics=("parallel", "parallel"),
            vmem_limit_bytes=vmem_limit),
    )(*args)


def residual_block1d_forward(prepared_params, x, negative_slope=0.1,
                             act_dtype=jnp.bfloat16, compute_dtype=jnp.bfloat16,
                             tl_max=512):
    """ResidualBlock1d.forward.

    prepared_params : output of prepare_conv_params (flattened ConvBlock1d sequence).
    x               : (B, C, L) torch NCL layout.
    returns         : (B, C, L), dtype of x.
    """
    B, C, L = x.shape
    Cpad = prepared_params[0][0].shape[-1]
    assert C <= Cpad
    tl = _pick_length_tile(L, B, tl_max)
    Lr = _round_up(L, tl)

    h = jnp.transpose(x, (0, 2, 1))                       # (B, L, C) channels-last
    h = jnp.pad(h, ((0, 0), (0, 0), (0, Cpad - C)))       # pad channel lanes once
    h = h.astype(act_dtype)                               # bf16 inter-layer storage
    residual = jnp.pad(h, ((0, 0), (0, Lr - L), (0, 0)))  # (B, Lr, Cpad) fused final add

    n = len(prepared_params)
    for li, (w_pairs, b_row, kh, d) in enumerate(prepared_params):
        last = li == n - 1
        h = conv_block1d_pallas(
            h, w_pairs, b_row, kh, d, negative_slope, tl=tl,
            residual=residual if last else None,
            compute_dtype=compute_dtype,
            out_dtype=x.dtype if last else act_dtype)     # f32 accumulate -> f32 final out

    out = h[:, :, :C]                                     # drop padded channel lanes
    return jnp.transpose(out, (0, 2, 1)).astype(x.dtype)  # back to (B, C, L)


def reference_forward(conv_params, x, negative_slope=0.1):
    """Pure-JAX reference (lax.conv_general_dilated) for correctness checking."""
    h = x
    for (w, b, kh, d) in conv_params:
        a = jnp.where(h >= 0, h, negative_slope * h)      # leaky relu (nonlinear_first)
        p = d * (kh - 1) // 2
        y = lax.conv_general_dilated(
            a, jnp.transpose(w, (2, 1, 0)),               # (Cout, Cin, kh) = OIH
            window_strides=(1,), padding=[(p, p)], rhs_dilation=(d,),
            dimension_numbers=("NCH", "OIH", "NCH"))
        h = y + b[None, :, None]
    return h + x                                          # residual add


if __name__ == "__main__":
    key = jax.random.PRNGKey(0)

    # Small config consistent with ResidualBlock1d (stacked=True, num_layers=3), scaled
    # down: 32 features, odd HiFi-GAN-style kernel sizes and dilations.
    num_features = 32
    kernel_sizes = [3, 5, 7]
    dilations = [1, 3, 5]
    negative_slope = 0.1
    num_layers = 3
    B, L = 2, 50          # L not a multiple of the tile -> exercises masked edge rows

    # Flatten the backbone into the 2 * num_layers ConvBlock1d convolutions it performs:
    # StackedConvBlock1d = ConvBlock1d(dilation=d) then ConvBlock1d(dilation=1), same
    # kernel_size.  weight_norm at init is identity, so these are plain Conv1d weights.
    conv_params = []
    for li in range(num_layers):
        kh = kernel_sizes[li]
        for d in (dilations[li], 1):
            key, wk, bk = jax.random.split(key, 3)
            w = 0.1 * jax.random.normal(wk, (kh, num_features, num_features), jnp.float32)
            b = 0.1 * jax.random.normal(bk, (num_features,), jnp.float32)
            conv_params.append((w, b, kh, d))

    key, xk = jax.random.split(key)
    x = jax.random.normal(xk, (B, num_features, L), jnp.float32)
    ref = reference_forward(conv_params, x, negative_slope)

    # Default path: bf16 MXU operands + bf16 inter-layer activations, f32 accumulation.
    prep_bf16 = prepare_conv_params(conv_params, num_features, compute_dtype=jnp.bfloat16)
    fwd = jax.jit(functools.partial(residual_block1d_forward, prep_bf16,
                                    negative_slope=negative_slope))
    out = jax.block_until_ready(fwd(x))
    assert out.shape == ref.shape == (B, num_features, L), (out.shape, ref.shape)
    assert bool(jnp.all(jnp.isfinite(out)))
    assert float(jnp.max(jnp.abs(out - ref))) < 0.25, float(jnp.max(jnp.abs(out - ref)))
    assert float(jnp.mean(jnp.abs(out - ref))) < 0.02, float(jnp.mean(jnp.abs(out - ref)))

    # f32 debug/exact path: tight-tolerance check against the lax.conv reference.
    prep_f32 = prepare_conv_params(conv_params, num_features, compute_dtype=jnp.float32)
    fwd_f32 = jax.jit(functools.partial(residual_block1d_forward, prep_f32,
                                        negative_slope=negative_slope,
                                        act_dtype=jnp.float32,
                                        compute_dtype=jnp.float32))
    out_f32 = jax.block_until_ready(fwd_f32(x))
    assert out_f32.shape == ref.shape
    assert bool(jnp.allclose(out_f32, ref, atol=1e-3, rtol=1e-3)), \
        float(jnp.max(jnp.abs(out_f32 - ref)))

    print("KERNEL_OK")
</pallas_src>

<mosaic_0001>
module attributes {stable_mosaic.version = 11 : i64} {
  func.func @_conv_block1d_kernel(%arg0: i32, %arg1: i32, %arg2: memref<1x80x128xbf16, #tpu.memory_space<vmem>>, %arg3: memref<3x256x128xbf16, #tpu.memory_space<vmem>>, %arg4: memref<1x128xf32, #tpu.memory_space<vmem>>, %arg5: memref<1x64x128xbf16, #tpu.memory_space<vmem>>, %arg6: memref<80x128xbf16, #tpu.memory_space<vmem>>) attributes {dimension_semantics = [#tpu.dimension_semantics<parallel>, #tpu.dimension_semantics<parallel>], iteration_bounds = array<i64: 2, 1>, scalar_prefetch = 0 : i64, scratch_operands = 1 : i64, tpu.core_type = #tpu.core_type<tc>, window_params = [{transform_indices = @transform_0, window_bounds = array<i64: 1, 80, 128>}, {pipeline_mode = #tpu.pipeline_mode<synchronous>, transform_indices = @transform_1, window_bounds = array<i64: 3, 256, 128>}, {pipeline_mode = #tpu.pipeline_mode<synchronous>, transform_indices = @transform_2, window_bounds = array<i64: 1, 128>}, {transform_indices = @transform_3, window_bounds = array<i64: 1, 64, 128>}]} {
    %c64_i32 = arith.constant 64 : i32
    %0 = arith.muli %arg1, %c64_i32 : i32
    %1 = tpu.assume_multiple %0, 16 : i32
    %c0 = arith.constant 0 : index
    %2 = arith.index_cast %1 : i32 to index
    %c0_0 = arith.constant 0 : index
    %3 = vector.load %arg2[%c0, %2, %c0_0] : memref<1x80x128xbf16, #tpu.memory_space<vmem>>, vector<1x80x128xbf16>
    %4 = vector.shape_cast %3 : vector<1x80x128xbf16> to vector<80x128xbf16>
    %5 = arith.extf %4 : vector<80x128xbf16> to vector<80x128xf32>
    %cst = arith.constant 0.000000e+00 : f32
    %6 = vector.broadcast %cst : f32 to vector<80x128xf32>
    %7 = arith.cmpf oge, %5, %6 : vector<80x128xf32>
    %cst_1 = arith.constant 1.000000e-01 : f32
    %8 = vector.broadcast %cst_1 : f32 to vector<80x128xf32>
    %9 = arith.mulf %8, %5 : vector<80x128xf32>
    %10 = arith.select %7, %5, %9 : vector<80x128xi1>, vector<80x128xf32>
    %11 = arith.truncf %10 : vector<80x128xf32> to vector<80x128xbf16>
    %c0_2 = arith.constant 0 : index
    %c0_3 = arith.constant 0 : index
    %12 = vector.load %arg6[%c0_2, %c0_3] : memref<80x128xbf16, #tpu.memory_space<vmem>>, vector<80x128xbf16>
    tpu.vector_store %arg6[%c0_2, %c0_3], %11 {strides = array<i32>} : memref<80x128xbf16, #tpu.memory_space<vmem>>, vector<80x128xbf16>,
    %c0_4 = arith.constant 0 : index
    %c0_5 = arith.constant 0 : index
    %13 = vector.load %arg4[%c0_4, %c0_5] : memref<1x128xf32, #tpu.memory_space<vmem>>, vector<1x128xf32>
    %c0_6 = arith.constant 0 : index
    %c0_7 = arith.constant 0 : index
    %14 = vector.load %arg6[%c0_6, %c0_7] : memref<80x128xbf16, #tpu.memory_space<vmem>>, vector<64x128xbf16>
    %c3 = arith.constant 3 : index
    %c0_8 = arith.constant 0 : index
    %15 = vector.load %arg6[%c3, %c0_8] : memref<80x128xbf16, #tpu.memory_space<vmem>>, vector<64x128xbf16>
    %16 = tpu.concatenate %14, %15 in 1 : vector<64x128xbf16>, vector<64x128xbf16> -> vector<64x256xbf16>
    %c0_9 = arith.constant 0 : index
    %c0_10 = arith.constant 0 : index
    %c0_11 = arith.constant 0 : index
    %17 = vector.load %arg3[%c0_9, %c0_10, %c0_11] : memref<3x256x128xbf16, #tpu.memory_space<vmem>>, vector<1x256x128xbf16>
    %18 = vector.shape_cast %17 : vector<1x256x128xbf16> to vector<256x128xbf16>
    %cst_12 = arith.constant dense<0.000000e+00> : vector<64x128xf32>
    %19 = tpu.matmul %16, %18, %cst_12 {dimension_numbers = #tpu.dot_dimension_numbers<[1], [0], [0], [1], [0, 0, 1, 1], [], []>} : vector<64x256xbf16>, vector<256x128xbf16>, vector<64x128xf32> -> vector<64x128xf32>
    %20 = vector.broadcast %13 : vector<1x128xf32> to vector<64x128xf32>
    %21 = arith.addf %19, %20 : vector<64x128xf32>
    %c6 = arith.constant 6 : index
    %c0_13 = arith.constant 0 : index
    %22 = vector.load %arg6[%c6, %c0_13] : memref<80x128xbf16, #tpu.memory_space<vmem>>, vector<64x128xbf16>
    %c9 = arith.constant 9 : index
    %c0_14 = arith.constant 0 : index
    %23 = vector.load %arg6[%c9, %c0_14] : memref<80x128xbf16, #tpu.memory_space<vmem>>, vector<64x128xbf16>
    %24 = tpu.concatenate %22, %23 in 1 : vector<64x128xbf16>, vector<64x128xbf16> -> vector<64x256xbf16>
    %c1 = arith.constant 1 : index
    %c0_15 = arith.constant 0 : index
    %c0_16 = arith.constant 0 : index
    %25 = vector.load %arg3[%c1, %c0_15, %c0_16] : memref<3x256x128xbf16, #tpu.memory_space<vmem>>, vector<1x256x128xbf16>
    %26 = vector.shape_cast %25 : vector<1x256x128xbf16> to vector<256x128xbf16>
    %cst_17 = arith.constant dense<0.000000e+00> : vector<64x128xf32>
    %27 = tpu.matmul %24, %26, %cst_17 {dimension_numbers = #tpu.dot_dimension_numbers<[1], [0], [0], [1], [0, 0, 1, 1], [], []>} : vector<64x256xbf16>, vector<256x128xbf16>, vector<64x128xf32> -> vector<64x128xf32>
    %28 = arith.addf %21, %27 : vector<64x128xf32>
    %c12 = arith.constant 12 : index
    %c0_18 = arith.constant 0 : index
    %29 = vector.load %arg6[%c12, %c0_18] : memref<80x128xbf16, #tpu.memory_space<vmem>>, vector<64x128xbf16>
    %c15 = arith.constant 15 : index
    %c0_19 = arith.constant 0 : index
    %30 = vector.load %arg6[%c15, %c0_19] : memref<80x128xbf16, #tpu.memory_space<vmem>>, vector<64x128xbf16>
    %31 = tpu.concatenate %29, %30 in 1 : vector<64x128xbf16>, vector<64x128xbf16> -> vector<64x256xbf16>
    %c2 = arith.constant 2 : index
    %c0_20 = arith.constant 0 : index
    %c0_21 = arith.constant 0 : index
    %32 = vector.load %arg3[%c2, %c0_20, %c0_21] : memref<3x256x128xbf16, #tpu.memory_space<vmem>>, vector<1x256x128xbf16>
    %33 = vector.shape_cast %32 : vector<1x256x128xbf16> to vector<256x128xbf16>
    %cst_22 = arith.constant dense<0.000000e+00> : vector<64x128xf32>
    %34 = tpu.matmul %31, %33, %cst_22 {dimension_numbers = #tpu.dot_dimension_numbers<[1], [0], [0], [1], [0, 0, 1, 1], [], []>} : vector<64x256xbf16>, vector<256x128xbf16>, vector<64x128xf32> -> vector<64x128xf32>
    %35 = arith.addf %28, %34 : vector<64x128xf32>
    %36 = arith.truncf %35 : vector<64x128xf32> to vector<64x128xbf16>
    %c0_23 = arith.constant 0 : index
    %c0_24 = arith.constant 0 : index
    %c0_25 = arith.constant 0 : index
    %37 = vector.load %arg5[%c0_23, %c0_24, %c0_25] : memref<1x64x128xbf16, #tpu.memory_space<vmem>>, vector<1x64x128xbf16>
    %38 = vector.shape_cast %37 : vector<1x64x128xbf16> to vector<64x128xbf16>
    %39 = vector.shape_cast %36 : vector<64x128xbf16> to vector<1x64x128xbf16>
    tpu.vector_store %arg5[%c0_23, %c0_24, %c0_25], %39 {strides = array<i32>} : memref<1x64x128xbf16, #tpu.memory_space<vmem>>, vector<1x64x128xbf16>,
    return
  }
  func.func @transform_0(%arg0: i32, %arg1: i32) -> (i32, i32, i32) {
    %c0_i32 = arith.constant 0 : i32
    %c0_i32_0 = arith.constant 0 : i32
    %c0_i32_1 = arith.constant 0 : i32
    return %arg0, %c0_i32, %c0_i32_0 : i32, i32, i32
  }
  func.func @transform_1(%arg0: i32, %arg1: i32) -> (i32, i32, i32) {
    %c0_i32 = arith.constant 0 : i32
    %c0_i32_0 = arith.constant 0 : i32
    %c0_i32_1 = arith.constant 0 : i32
    %c0_i32_2 = arith.constant 0 : i32
    return %c0_i32, %c0_i32_0, %c0_i32_1 : i32, i32, i32
  }
  func.func @transform_2(%arg0: i32, %arg1: i32) -> (i32, i32) {
    %c0_i32 = arith.constant 0 : i32
    %c0_i32_0 = arith.constant 0 : i32
    %c0_i32_1 = arith.constant 0 : i32
    return %c0_i32, %c0_i32_0 : i32, i32
  }
  func.func @transform_3(%arg0: i32, %arg1: i32) -> (i32, i32, i32) {
    %c0_i32 = arith.constant 0 : i32
    %c0_i32_0 = arith.constant 0 : i32
    return %arg0, %arg1, %c0_i32 : i32, i32, i32
  }
}

module attributes {stable_mosaic.version = 11 : i64} {
  func.func @_conv_block1d_kernel(%arg0: i32, %arg1: i32, %arg2: memref<1x80x128xbf16, #tpu.memory_space<vmem>>, %arg3: memref<3x256x128xbf16, #tpu.memory_space<vmem>>, %arg4: memref<1x128xf32, #tpu.memory_space<vmem>>, %arg5: memref<1x64x128xbf16, #tpu.memory_space<vmem>>, %arg6: memref<80x128xbf16, #tpu.memory_space<vmem>>) attributes {dimension_semantics = [#tpu.dimension_semantics<parallel>, #tpu.dimension_semantics<parallel>], iteration_bounds = array<i64: 2, 1>, scalar_prefetch = 0 : i64, scratch_operands = 1 : i64, tpu.core_type = #tpu.core_type<tc>, window_params = [{transform_indices = @transform_0, window_bounds = array<i64: 1, 80, 128>}, {pipeline_mode = #tpu.pipeline_mode<synchronous>, transform_indices = @transform_1, window_bounds = array<i64: 3, 256, 128>}, {pipeline_mode = #tpu.pipeline_mode<synchronous>, transform_indices = @transform_2, window_bounds = array<i64: 1, 128>}, {transform_indices = @transform_3, window_bounds = array<i64: 1, 64, 128>}]} {
    %c64_i32 = arith.constant 64 : i32
    %0 = arith.muli %arg1, %c64_i32 : i32
    %1 = tpu.assume_multiple %0, 16 : i32
    %c0 = arith.constant 0 : index
    %2 = arith.index_cast %1 : i32 to index
    %c0_0 = arith.constant 0 : index
    %3 = vector.load %arg2[%c0, %2, %c0_0] : memref<1x80x128xbf16, #tpu.memory_space<vmem>>, vector<1x80x128xbf16>
    %4 = vector.shape_cast %3 : vector<1x80x128xbf16> to vector<80x128xbf16>
    %5 = arith.extf %4 : vector<80x128xbf16> to vector<80x128xf32>
    %cst = arith.constant 0.000000e+00 : f32
    %6 = vector.broadcast %cst : f32 to vector<80x128xf32>
    %7 = arith.cmpf oge, %5, %6 : vector<80x128xf32>
    %cst_1 = arith.constant 1.000000e-01 : f32
    %8 = vector.broadcast %cst_1 : f32 to vector<80x128xf32>
    %9 = arith.mulf %8, %5 : vector<80x128xf32>
    %10 = arith.select %7, %5, %9 : vector<80x128xi1>, vector<80x128xf32>
    %11 = arith.truncf %10 : vector<80x128xf32> to vector<80x128xbf16>
    %c0_2 = arith.constant 0 : index
    %c0_3 = arith.constant 0 : index
    %12 = vector.load %arg6[%c0_2, %c0_3] : memref<80x128xbf16, #tpu.memory_space<vmem>>, vector<80x128xbf16>
    tpu.vector_store %arg6[%c0_2, %c0_3], %11 {strides = array<i32>} : memref<80x128xbf16, #tpu.memory_space<vmem>>, vector<80x128xbf16>,
    %c0_4 = arith.constant 0 : index
    %c0_5 = arith.constant 0 : index
    %13 = vector.load %arg4[%c0_4, %c0_5] : memref<1x128xf32, #tpu.memory_space<vmem>>, vector<1x128xf32>
    %c0_6 = arith.constant 0 : index
    %c0_7 = arith.constant 0 : index
    %14 = vector.load %arg6[%c0_6, %c0_7] : memref<80x128xbf16, #tpu.memory_space<vmem>>, vector<64x128xbf16>
    %c1 = arith.constant 1 : index
    %c0_8 = arith.constant 0 : index
    %15 = vector.load %arg6[%c1, %c0_8] : memref<80x128xbf16, #tpu.memory_space<vmem>>, vector<64x128xbf16>
    %16 = tpu.concatenate %14, %15 in 1 : vector<64x128xbf16>, vector<64x128xbf16> -> vector<64x256xbf16>
    %c0_9 = arith.constant 0 : index
    %c0_10 = arith.constant 0 : index
    %c0_11 = arith.constant 0 : index
    %17 = vector.load %arg3[%c0_9, %c0_10, %c0_11] : memref<3x256x128xbf16, #tpu.memory_space<vmem>>, vector<1x256x128xbf16>
    %18 = vector.shape_cast %17 : vector<1x256x128xbf16> to vector<256x128xbf16>
    %cst_12 = arith.constant dense<0.000000e+00> : vector<64x128xf32>
    %19 = tpu.matmul %16, %18, %cst_12 {dimension_numbers = #tpu.dot_dimension_numbers<[1], [0], [0], [1], [0, 0, 1, 1], [], []>} : vector<64x256xbf16>, vector<256x128xbf16>, vector<64x128xf32> -> vector<64x128xf32>
    %20 = vector.broadcast %13 : vector<1x128xf32> to vector<64x128xf32>
    %21 = arith.addf %19, %20 : vector<64x128xf32>
    %c2 = arith.constant 2 : index
    %c0_13 = arith.constant 0 : index
    %22 = vector.load %arg6[%c2, %c0_13] : memref<80x128xbf16, #tpu.memory_space<vmem>>, vector<64x128xbf16>
    %c3 = arith.constant 3 : index
    %c0_14 = arith.constant 0 : index
    %23 = vector.load %arg6[%c3, %c0_14] : memref<80x128xbf16, #tpu.memory_space<vmem>>, vector<64x128xbf16>
    %24 = tpu.concatenate %22, %23 in 1 : vector<64x128xbf16>, vector<64x128xbf16> -> vector<64x256xbf16>
    %c1_15 = arith.constant 1 : index
    %c0_16 = arith.constant 0 : index
    %c0_17 = arith.constant 0 : index
    %25 = vector.load %arg3[%c1_15, %c0_16, %c0_17] : memref<3x256x128xbf16, #tpu.memory_space<vmem>>, vector<1x256x128xbf16>
    %26 = vector.shape_cast %25 : vector<1x256x128xbf16> to vector<256x128xbf16>
    %cst_18 = arith.constant dense<0.000000e+00> : vector<64x128xf32>
    %27 = tpu.matmul %24, %26, %cst_18 {dimension_numbers = #tpu.dot_dimension_numbers<[1], [0], [0], [1], [0, 0, 1, 1], [], []>} : vector<64x256xbf16>, vector<256x128xbf16>, vector<64x128xf32> -> vector<64x128xf32>
    %28 = arith.addf %21, %27 : vector<64x128xf32>
    %c4 = arith.constant 4 : index
    %c0_19 = arith.constant 0 : index
    %29 = vector.load %arg6[%c4, %c0_19] : memref<80x128xbf16, #tpu.memory_space<vmem>>, vector<64x128xbf16>
    %c5 = arith.constant 5 : index
    %c0_20 = arith.constant 0 : index
    %30 = vector.load %arg6[%c5, %c0_20] : memref<80x128xbf16, #tpu.memory_space<vmem>>, vector<64x128xbf16>
    %31 = tpu.concatenate %29, %30 in 1 : vector<64x128xbf16>, vector<64x128xbf16> -> vector<64x256xbf16>
    %c2_21 = arith.constant 2 : index
    %c0_22 = arith.constant 0 : index
    %c0_23 = arith.constant 0 : index
    %32 = vector.load %arg3[%c2_21, %c0_22, %c0_23] : memref<3x256x128xbf16, #tpu.memory_space<vmem>>, vector<1x256x128xbf16>
    %33 = vector.shape_cast %32 : vector<1x256x128xbf16> to vector<256x128xbf16>
    %cst_24 = arith.constant dense<0.000000e+00> : vector<64x128xf32>
    %34 = tpu.matmul %31, %33, %cst_24 {dimension_numbers = #tpu.dot_dimension_numbers<[1], [0], [0], [1], [0, 0, 1, 1], [], []>} : vector<64x256xbf16>, vector<256x128xbf16>, vector<64x128xf32> -> vector<64x128xf32>
    %35 = arith.addf %28, %34 : vector<64x128xf32>
    %36 = arith.truncf %35 : vector<64x128xf32> to vector<64x128xbf16>
    %c0_25 = arith.constant 0 : index
    %c0_26 = arith.constant 0 : index
    %c0_27 = arith.constant 0 : index
    %37 = vector.load %arg5[%c0_25, %c0_26, %c0_27] : memref<1x64x128xbf16, #tpu.memory_space<vmem>>, vector<1x64x128xbf16>
    %38 = vector.shape_cast %37 : vector<1x64x128xbf16> to vector<64x128xbf16>
    %39 = vector.shape_cast %36 : vector<64x128xbf16> to vector<1x64x128xbf16>
    tpu.vector_store %arg5[%c0_25, %c0_26, %c0_27], %39 {strides = array<i32>} : memref<1x64x128xbf16, #tpu.memory_space<vmem>>, vector<1x64x128xbf16>,
    return
  }
  func.func @transform_0(%arg0: i32, %arg1: i32) -> (i32, i32, i32) {
    %c0_i32 = arith.constant 0 : i32
    %c0_i32_0 = arith.constant 0 : i32
    %c0_i32_1 = arith.constant 0 : i32
    return %arg0, %c0_i32, %c0_i32_0 : i32, i32, i32
  }
  func.func @transform_1(%arg0: i32, %arg1: i32) -> (i32, i32, i32) {
    %c0_i32 = arith.constant 0 : i32
    %c0_i32_0 = arith.constant 0 : i32
    %c0_i32_1 = arith.constant 0 : i32
    %c0_i32_2 = arith.constant 0 : i32
    return %c0_i32, %c0_i32_0, %c0_i32_1 : i32, i32, i32
  }
  func.func @transform_2(%arg0: i32, %arg1: i32) -> (i32, i32) {
    %c0_i32 = arith.constant 0 : i32
    %c0_i32_0 = arith.constant 0 : i32
    %c0_i32_1 = arith.constant 0 : i32
    return %c0_i32, %c0_i32_0 : i32, i32
  }
  func.func @transform_3(%arg0: i32, %arg1: i32) -> (i32, i32, i32) {
    %c0_i32 = arith.constant 0 : i32
    %c0_i32_0 = arith.constant 0 : i32
    return %arg0, %arg1, %c0_i32 : i32, i32, i32
  }
}

module attributes {stable_mosaic.version = 11 : i64} {
  func.func @_conv_block1d_kernel(%arg0: i32, %arg1: i32, %arg2: memref<1x80x128xbf16, #tpu.memory_space<vmem>>, %arg3: memref<2x256x128xbf16, #tpu.memory_space<vmem>>, %arg4: memref<1x128xf32, #tpu.memory_space<vmem>>, %arg5: memref<1x64x128xbf16, #tpu.memory_space<vmem>>, %arg6: memref<80x128xbf16, #tpu.memory_space<vmem>>) attributes {dimension_semantics = [#tpu.dimension_semantics<parallel>, #tpu.dimension_semantics<parallel>], iteration_bounds = array<i64: 2, 1>, scalar_prefetch = 0 : i64, scratch_operands = 1 : i64, tpu.core_type = #tpu.core_type<tc>, window_params = [{transform_indices = @transform_0, window_bounds = array<i64: 1, 80, 128>}, {pipeline_mode = #tpu.pipeline_mode<synchronous>, transform_indices = @transform_1, window_bounds = array<i64: 2, 256, 128>}, {pipeline_mode = #tpu.pipeline_mode<synchronous>, transform_indices = @transform_2, window_bounds = array<i64: 1, 128>}, {transform_indices = @transform_3, window_bounds = array<i64: 1, 64, 128>}]} {
    %c64_i32 = arith.constant 64 : i32
    %0 = arith.muli %arg1, %c64_i32 : i32
    %1 = tpu.assume_multiple %0, 16 : i32
    %c0 = arith.constant 0 : index
    %2 = arith.index_cast %1 : i32 to index
    %c0_0 = arith.constant 0 : index
    %3 = vector.load %arg2[%c0, %2, %c0_0] : memref<1x80x128xbf16, #tpu.memory_space<vmem>>, vector<1x80x128xbf16>
    %4 = vector.shape_cast %3 : vector<1x80x128xbf16> to vector<80x128xbf16>
    %5 = arith.extf %4 : vector<80x128xbf16> to vector<80x128xf32>
    %cst = arith.constant 0.000000e+00 : f32
    %6 = vector.broadcast %cst : f32 to vector<80x128xf32>
    %7 = arith.cmpf oge, %5, %6 : vector<80x128xf32>
    %cst_1 = arith.constant 1.000000e-01 : f32
    %8 = vector.broadcast %cst_1 : f32 to vector<80x128xf32>
    %9 = arith.mulf %8, %5 : vector<80x128xf32>
    %10 = arith.select %7, %5, %9 : vector<80x128xi1>, vector<80x128xf32>
    %11 = arith.truncf %10 : vector<80x128xf32> to vector<80x128xbf16>
    %c0_2 = arith.constant 0 : index
    %c0_3 = arith.constant 0 : index
    %12 = vector.load %arg6[%c0_2, %c0_3] : memref<80x128xbf16, #tpu.memory_space<vmem>>, vector<80x128xbf16>
    tpu.vector_store %arg6[%c0_2, %c0_3], %11 {strides = array<i32>} : memref<80x128xbf16, #tpu.memory_space<vmem>>, vector<80x128xbf16>,
    %c0_4 = arith.constant 0 : index
    %c0_5 = arith.constant 0 : index
    %13 = vector.load %arg4[%c0_4, %c0_5] : memref<1x128xf32, #tpu.memory_space<vmem>>, vector<1x128xf32>
    %c0_6 = arith.constant 0 : index
    %c0_7 = arith.constant 0 : index
    %14 = vector.load %arg6[%c0_6, %c0_7] : memref<80x128xbf16, #tpu.memory_space<vmem>>, vector<64x128xbf16>
    %c1 = arith.constant 1 : index
    %c0_8 = arith.constant 0 : index
    %15 = vector.load %arg6[%c1, %c0_8] : memref<80x128xbf16, #tpu.memory_space<vmem>>, vector<64x128xbf16>
    %16 = tpu.concatenate %14, %15 in 1 : vector<64x128xbf16>, vector<64x128xbf16> -> vector<64x256xbf16>
    %c0_9 = arith.constant 0 : index
    %c0_10 = arith.constant 0 : index
    %c0_11 = arith.constant 0 : index
    %17 = vector.load %arg3[%c0_9, %c0_10, %c0_11] : memref<2x256x128xbf16, #tpu.memory_space<vmem>>, vector<1x256x128xbf16>
    %18 = vector.shape_cast %17 : vector<1x256x128xbf16> to vector<256x128xbf16>
    %cst_12 = arith.constant dense<0.000000e+00> : vector<64x128xf32>
    %19 = tpu.matmul %16, %18, %cst_12 {dimension_numbers = #tpu.dot_dimension_numbers<[1], [0], [0], [1], [0, 0, 1, 1], [], []>} : vector<64x256xbf16>, vector<256x128xbf16>, vector<64x128xf32> -> vector<64x128xf32>
    %20 = vector.broadcast %13 : vector<1x128xf32> to vector<64x128xf32>
    %21 = arith.addf %19, %20 : vector<64x128xf32>
    %c2 = arith.constant 2 : index
    %c0_13 = arith.constant 0 : index
    %22 = vector.load %arg6[%c2, %c0_13] : memref<80x128xbf16, #tpu.memory_space<vmem>>, vector<64x128xbf16>
    %c3 = arith.constant 3 : index
    %c0_14 = arith.constant 0 : index
    %23 = vector.load %arg6[%c3, %c0_14] : memref<80x128xbf16, #tpu.memory_space<vmem>>, vector<64x128xbf16>
    %24 = tpu.concatenate %22, %23 in 1 : vector<64x128xbf16>, vector<64x128xbf16> -> vector<64x256xbf16>
    %c1_15 = arith.constant 1 : index
    %c0_16 = arith.constant 0 : index
    %c0_17 = arith.constant 0 : index
    %25 = vector.load %arg3[%c1_15, %c0_16, %c0_17] : memref<2x256x128xbf16, #tpu.memory_space<vmem>>, vector<1x256x128xbf16>
    %26 = vector.shape_cast %25 : vector<1x256x128xbf16> to vector<256x128xbf16>
    %cst_18 = arith.constant dense<0.000000e+00> : vector<64x128xf32>
    %27 = tpu.matmul %24, %26, %cst_18 {dimension_numbers = #tpu.dot_dimension_numbers<[1], [0], [0], [1], [0, 0, 1, 1], [], []>} : vector<64x256xbf16>, vector<256x128xbf16>, vector<64x128xf32> -> vector<64x128xf32>
    %28 = arith.addf %21, %27 : vector<64x128xf32>
    %29 = arith.truncf %28 : vector<64x128xf32> to vector<64x128xbf16>
    %c0_19 = arith.constant 0 : index
    %c0_20 = arith.constant 0 : index
    %c0_21 = arith.constant 0 : index
    %30 = vector.load %arg5[%c0_19, %c0_20, %c0_21] : memref<1x64x128xbf16, #tpu.memory_space<vmem>>, vector<1x64x128xbf16>
    %31 = vector.shape_cast %30 : vector<1x64x128xbf16> to vector<64x128xbf16>
    %32 = vector.shape_cast %29 : vector<64x128xbf16> to vector<1x64x128xbf16>
    tpu.vector_store %arg5[%c0_19, %c0_20, %c0_21], %32 {strides = array<i32>} : memref<1x64x128xbf16, #tpu.memory_space<vmem>>, vector<1x64x128xbf16>,
    return
  }
  func.func @transform_0(%arg0: i32, %arg1: i32) -> (i32, i32, i32) {
    %c0_i32 = arith.constant 0 : i32
    %c0_i32_0 = arith.constant 0 : i32
    %c0_i32_1 = arith.constant 0 : i32
    return %arg0, %c0_i32, %c0_i32_0 : i32, i32, i32
  }
  func.func @transform_1(%arg0: i32, %arg1: i32) -> (i32, i32, i32) {
    %c0_i32 = arith.constant 0 : i32
    %c0_i32_0 = arith.constant 0 : i32
    %c0_i32_1 = arith.constant 0 : i32
    %c0_i32_2 = arith.constant 0 : i32
    return %c0_i32, %c0_i32_0, %c0_i32_1 : i32, i32, i32
  }
  func.func @transform_2(%arg0: i32, %arg1: i32) -> (i32, i32) {
    %c0_i32 = arith.constant 0 : i32
    %c0_i32_0 = arith.constant 0 : i32
    %c0_i32_1 = arith.constant 0 : i32
    return %c0_i32, %c0_i32_0 : i32, i32
  }
  func.func @transform_3(%arg0: i32, %arg1: i32) -> (i32, i32, i32) {
    %c0_i32 = arith.constant 0 : i32
    %c0_i32_0 = arith.constant 0 : i32
    return %arg0, %arg1, %c0_i32 : i32, i32, i32
  }
}

module attributes {stable_mosaic.version = 11 : i64} {
  func.func @_conv_block1d_kernel(%arg0: i32, %arg1: i32, %arg2: memref<1x112x128xbf16, #tpu.memory_space<vmem>>, %arg3: memref<4x256x128xbf16, #tpu.memory_space<vmem>>, %arg4: memref<1x128xf32, #tpu.memory_space<vmem>>, %arg5: memref<1x64x128xbf16, #tpu.memory_space<vmem>>, %arg6: memref<112x128xbf16, #tpu.memory_space<vmem>>) attributes {dimension_semantics = [#tpu.dimension_semantics<parallel>, #tpu.dimension_semantics<parallel>], iteration_bounds = array<i64: 2, 1>, scalar_prefetch = 0 : i64, scratch_operands = 1 : i64, tpu.core_type = #tpu.core_type<tc>, window_params = [{transform_indices = @transform_0, window_bounds = array<i64: 1, 112, 128>}, {pipeline_mode = #tpu.pipeline_mode<synchronous>, transform_indices = @transform_1, window_bounds = array<i64: 4, 256, 128>}, {pipeline_mode = #tpu.pipeline_mode<synchronous>, transform_indices = @transform_2, window_bounds = array<i64: 1, 128>}, {transform_indices = @transform_3, window_bounds = array<i64: 1, 64, 128>}]} {
    %c64_i32 = arith.constant 64 : i32
    %0 = arith.muli %arg1, %c64_i32 : i32
    %1 = tpu.assume_multiple %0, 16 : i32
    %c0 = arith.constant 0 : index
    %2 = arith.index_cast %1 : i32 to index
    %c0_0 = arith.constant 0 : index
    %3 = vector.load %arg2[%c0, %2, %c0_0] : memref<1x112x128xbf16, #tpu.memory_space<vmem>>, vector<1x112x128xbf16>
    %4 = vector.shape_cast %3 : vector<1x112x128xbf16> to vector<112x128xbf16>
    %5 = arith.extf %4 : vector<112x128xbf16> to vector<112x128xf32>
    %cst = arith.constant 0.000000e+00 : f32
    %6 = vector.broadcast %cst : f32 to vector<112x128xf32>
    %7 = arith.cmpf oge, %5, %6 : vector<112x128xf32>
    %cst_1 = arith.constant 1.000000e-01 : f32
    %8 = vector.broadcast %cst_1 : f32 to vector<112x128xf32>
    %9 = arith.mulf %8, %5 : vector<112x128xf32>
    %10 = arith.select %7, %5, %9 : vector<112x128xi1>, vector<112x128xf32>
    %11 = arith.truncf %10 : vector<112x128xf32> to vector<112x128xbf16>
    %c0_2 = arith.constant 0 : index
    %c0_3 = arith.constant 0 : index
    %12 = vector.load %arg6[%c0_2, %c0_3] : memref<112x128xbf16, #tpu.memory_space<vmem>>, vector<112x128xbf16>
    tpu.vector_store %arg6[%c0_2, %c0_3], %11 {strides = array<i32>} : memref<112x128xbf16, #tpu.memory_space<vmem>>, vector<112x128xbf16>,
    %c0_4 = arith.constant 0 : index
    %c0_5 = arith.constant 0 : index
    %13 = vector.load %arg4[%c0_4, %c0_5] : memref<1x128xf32, #tpu.memory_space<vmem>>, vector<1x128xf32>
    %c0_6 = arith.constant 0 : index
    %c0_7 = arith.constant 0 : index
    %14 = vector.load %arg6[%c0_6, %c0_7] : memref<112x128xbf16, #tpu.memory_space<vmem>>, vector<64x128xbf16>
    %c5 = arith.constant 5 : index
    %c0_8 = arith.constant 0 : index
    %15 = vector.load %arg6[%c5, %c0_8] : memref<112x128xbf16, #tpu.memory_space<vmem>>, vector<64x128xbf16>
    %16 = tpu.concatenate %14, %15 in 1 : vector<64x128xbf16>, vector<64x128xbf16> -> vector<64x256xbf16>
    %c0_9 = arith.constant 0 : index
    %c0_10 = arith.constant 0 : index
    %c0_11 = arith.constant 0 : index
    %17 = vector.load %arg3[%c0_9, %c0_10, %c0_11] : memref<4x256x128xbf16, #tpu.memory_space<vmem>>, vector<1x256x128xbf16>
    %18 = vector.shape_cast %17 : vector<1x256x128xbf16> to vector<256x128xbf16>
    %cst_12 = arith.constant dense<0.000000e+00> : vector<64x128xf32>
    %19 = tpu.matmul %16, %18, %cst_12 {dimension_numbers = #tpu.dot_dimension_numbers<[1], [0], [0], [1], [0, 0, 1, 1], [], []>} : vector<64x256xbf16>, vector<256x128xbf16>, vector<64x128xf32> -> vector<64x128xf32>
    %20 = vector.broadcast %13 : vector<1x128xf32> to vector<64x128xf32>
    %21 = arith.addf %19, %20 : vector<64x128xf32>
    %c10 = arith.constant 10 : index
    %c0_13 = arith.constant 0 : index
    %22 = vector.load %arg6[%c10, %c0_13] : memref<112x128xbf16, #tpu.memory_space<vmem>>, vector<64x128xbf16>
    %c15 = arith.constant 15 : index
    %c0_14 = arith.constant 0 : index
    %23 = vector.load %arg6[%c15, %c0_14] : memref<112x128xbf16, #tpu.memory_space<vmem>>, vector<64x128xbf16>
    %24 = tpu.concatenate %22, %23 in 1 : vector<64x128xbf16>, vector<64x128xbf16> -> vector<64x256xbf16>
    %c1 = arith.constant 1 : index
    %c0_15 = arith.constant 0 : index
    %c0_16 = arith.constant 0 : index
    %25 = vector.load %arg3[%c1, %c0_15, %c0_16] : memref<4x256x128xbf16, #tpu.memory_space<vmem>>, vector<1x256x128xbf16>
    %26 = vector.shape_cast %25 : vector<1x256x128xbf16> to vector<256x128xbf16>
    %cst_17 = arith.constant dense<0.000000e+00> : vector<64x128xf32>
    %27 = tpu.matmul %24, %26, %cst_17 {dimension_numbers = #tpu.dot_dimension_numbers<[1], [0], [0], [1], [0, 0, 1, 1], [], []>} : vector<64x256xbf16>, vector<256x128xbf16>, vector<64x128xf32> -> vector<64x128xf32>
    %28 = arith.addf %21, %27 : vector<64x128xf32>
    %c20 = arith.constant 20 : index
    %c0_18 = arith.constant 0 : index
    %29 = vector.load %arg6[%c20, %c0_18] : memref<112x128xbf16, #tpu.memory_space<vmem>>, vector<64x128xbf16>
    %c25 = arith.constant 25 : index
    %c0_19 = arith.constant 0 : index
    %30 = vector.load %arg6[%c25, %c0_19] : memref<112x128xbf16, #tpu.memory_space<vmem>>, vector<64x128xbf16>
    %31 = tpu.concatenate %29, %30 in 1 : vector<64x128xbf16>, vector<64x128xbf16> -> vector<64x256xbf16>
    %c2 = arith.constant 2 : index
    %c0_20 = arith.constant 0 : index
    %c0_21 = arith.constant 0 : index
    %32 = vector.load %arg3[%c2, %c0_20, %c0_21] : memref<4x256x128xbf16, #tpu.memory_space<vmem>>, vector<1x256x128xbf16>
    %33 = vector.shape_cast %32 : vector<1x256x128xbf16> to vector<256x128xbf16>
    %cst_22 = arith.constant dense<0.000000e+00> : vector<64x128xf32>
    %34 = tpu.matmul %31, %33, %cst_22 {dimension_numbers = #tpu.dot_dimension_numbers<[1], [0], [0], [1], [0, 0, 1, 1], [], []>} : vector<64x256xbf16>, vector<256x128xbf16>, vector<64x128xf32> -> vector<64x128xf32>
    %35 = arith.addf %28, %34 : vector<64x128xf32>
    %c30 = arith.constant 30 : index
    %c0_23 = arith.constant 0 : index
    %36 = vector.load %arg6[%c30, %c0_23] : memref<112x128xbf16, #tpu.memory_space<vmem>>, vector<64x128xbf16>
    %c35 = arith.constant 35 : index
    %c0_24 = arith.constant 0 : index
    %37 = vector.load %arg6[%c35, %c0_24] : memref<112x128xbf16, #tpu.memory_space<vmem>>, vector<64x128xbf16>
    %38 = tpu.concatenate %36, %37 in 1 : vector<64x128xbf16>, vector<64x128xbf16> -> vector<64x256xbf16>
    %c3 = arith.constant 3 : index
    %c0_25 = arith.constant 0 : index
    %c0_26 = arith.constant 0 : index
    %39 = vector.load %arg3[%c3, %c0_25, %c0_26] : memref<4x256x128xbf16, #tpu.memory_space<vmem>>, vector<1x256x128xbf16>
    %40 = vector.shape_cast %39 : vector<1x256x128xbf16> to vector<256x128xbf16>
    %cst_27 = arith.constant dense<0.000000e+00> : vector<64x128xf32>
    %41 = tpu.matmul %38, %40, %cst_27 {dimension_numbers = #tpu.dot_dimension_numbers<[1], [0], [0], [1], [0, 0, 1, 1], [], []>} : vector<64x256xbf16>, vector<256x128xbf16>, vector<64x128xf32> -> vector<64x128xf32>
    %42 = arith.addf %35, %41 : vector<64x128xf32>
    %43 = arith.truncf %42 : vector<64x128xf32> to vector<64x128xbf16>
    %c0_28 = arith.constant 0 : index
    %c0_29 = arith.constant 0 : index
    %c0_30 = arith.constant 0 : index
    %44 = vector.load %arg5[%c0_28, %c0_29, %c0_30] : memref<1x64x128xbf16, #tpu.memory_space<vmem>>, vector<1x64x128xbf16>
    %45 = vector.shape_cast %44 : vector<1x64x128xbf16> to vector<64x128xbf16>
    %46 = vector.shape_cast %43 : vector<64x128xbf16> to vector<1x64x128xbf16>
    tpu.vector_store %arg5[%c0_28, %c0_29, %c0_30], %46 {strides = array<i32>} : memref<1x64x128xbf16, #tpu.memory_space<vmem>>, vector<1x64x128xbf16>,
    return
  }
  func.func @transform_0(%arg0: i32, %arg1: i32) -> (i32, i32, i32) {
    %c0_i32 = arith.constant 0 : i32
    %c0_i32_0 = arith.constant 0 : i32
    %c0_i32_1 = arith.constant 0 : i32
    return %arg0, %c0_i32, %c0_i32_0 : i32, i32, i32
  }
  func.func @transform_1(%arg0: i32, %arg1: i32) -> (i32, i32, i32) {
    %c0_i32 = arith.constant 0 : i32
    %c0_i32_0 = arith.constant 0 : i32
    %c0_i32_1 = arith.constant 0 : i32
    %c0_i32_2 = arith.constant 0 : i32
    return %c0_i32, %c0_i32_0, %c0_i32_1 : i32, i32, i32
  }
  func.func @transform_2(%arg0: i32, %arg1: i32) -> (i32, i32) {
    %c0_i32 = arith.constant 0 : i32
    %c0_i32_0 = arith.constant 0 : i32
    %c0_i32_1 = arith.constant 0 : i32
    return %c0_i32, %c0_i32_0 : i32, i32
  }
  func.func @transform_3(%arg0: i32, %arg1: i32) -> (i32, i32, i32) {
    %c0_i32 = arith.constant 0 : i32
    %c0_i32_0 = arith.constant 0 : i32
    return %arg0, %arg1, %c0_i32 : i32, i32, i32
  }
}

module attributes {stable_mosaic.version = 11 : i64} {
  func.func @_conv_block1d_kernel(%arg0: i32, %arg1: i32, %arg2: memref<1x80x128xbf16, #tpu.memory_space<vmem>>, %arg3: memref<4x256x128xbf16, #tpu.memory_space<vmem>>, %arg4: memref<1x128xf32, #tpu.memory_space<vmem>>, %arg5: memref<1x64x128xbf16, #tpu.memory_space<vmem>>, %arg6: memref<1x64x128xf32, #tpu.memory_space<vmem>>, %arg7: memref<80x128xbf16, #tpu.memory_space<vmem>>) attributes {dimension_semantics = [#tpu.dimension_semantics<parallel>, #tpu.dimension_semantics<parallel>], iteration_bounds = array<i64: 2, 1>, scalar_prefetch = 0 : i64, scratch_operands = 1 : i64, tpu.core_type = #tpu.core_type<tc>, window_params = [{transform_indices = @transform_0, window_bounds = array<i64: 1, 80, 128>}, {pipeline_mode = #tpu.pipeline_mode<synchronous>, transform_indices = @transform_1, window_bounds = array<i64: 4, 256, 128>}, {pipeline_mode = #tpu.pipeline_mode<synchronous>, transform_indices = @transform_2, window_bounds = array<i64: 1, 128>}, {transform_indices = @transform_3, window_bounds = array<i64: 1, 64, 128>}, {transform_indices = @transform_4, window_bounds = array<i64: 1, 64, 128>}]} {
    %c64_i32 = arith.constant 64 : i32
    %0 = arith.muli %arg1, %c64_i32 : i32
    %1 = tpu.assume_multiple %0, 16 : i32
    %c0 = arith.constant 0 : index
    %2 = arith.index_cast %1 : i32 to index
    %c0_0 = arith.constant 0 : index
    %3 = vector.load %arg2[%c0, %2, %c0_0] : memref<1x80x128xbf16, #tpu.memory_space<vmem>>, vector<1x80x128xbf16>
    %4 = vector.shape_cast %3 : vector<1x80x128xbf16> to vector<80x128xbf16>
    %5 = arith.extf %4 : vector<80x128xbf16> to vector<80x128xf32>
    %cst = arith.constant 0.000000e+00 : f32
    %6 = vector.broadcast %cst : f32 to vector<80x128xf32>
    %7 = arith.cmpf oge, %5, %6 : vector<80x128xf32>
    %cst_1 = arith.constant 1.000000e-01 : f32
    %8 = vector.broadcast %cst_1 : f32 to vector<80x128xf32>
    %9 = arith.mulf %8, %5 : vector<80x128xf32>
    %10 = arith.select %7, %5, %9 : vector<80x128xi1>, vector<80x128xf32>
    %11 = arith.truncf %10 : vector<80x128xf32> to vector<80x128xbf16>
    %c0_2 = arith.constant 0 : index
    %c0_3 = arith.constant 0 : index
    %12 = vector.load %arg7[%c0_2, %c0_3] : memref<80x128xbf16, #tpu.memory_space<vmem>>, vector<80x128xbf16>
    tpu.vector_store %arg7[%c0_2, %c0_3], %11 {strides = array<i32>} : memref<80x128xbf16, #tpu.memory_space<vmem>>, vector<80x128xbf16>,
    %c0_4 = arith.constant 0 : index
    %c0_5 = arith.constant 0 : index
    %13 = vector.load %arg4[%c0_4, %c0_5] : memref<1x128xf32, #tpu.memory_space<vmem>>, vector<1x128xf32>
    %c0_6 = arith.constant 0 : index
    %c0_7 = arith.constant 0 : index
    %14 = vector.load %arg7[%c0_6, %c0_7] : memref<80x128xbf16, #tpu.memory_space<vmem>>, vector<64x128xbf16>
    %c1 = arith.constant 1 : index
    %c0_8 = arith.constant 0 : index
    %15 = vector.load %arg7[%c1, %c0_8] : memref<80x128xbf16, #tpu.memory_space<vmem>>, vector<64x128xbf16>
    %16 = tpu.concatenate %14, %15 in 1 : vector<64x128xbf16>, vector<64x128xbf16> -> vector<64x256xbf16>
    %c0_9 = arith.constant 0 : index
    %c0_10 = arith.constant 0 : index
    %c0_11 = arith.constant 0 : index
    %17 = vector.load %arg3[%c0_9, %c0_10, %c0_11] : memref<4x256x128xbf16, #tpu.memory_space<vmem>>, vector<1x256x128xbf16>
    %18 = vector.shape_cast %17 : vector<1x256x128xbf16> to vector<256x128xbf16>
    %cst_12 = arith.constant dense<0.000000e+00> : vector<64x128xf32>
    %19 = tpu.matmul %16, %18, %cst_12 {dimension_numbers = #tpu.dot_dimension_numbers<[1], [0], [0], [1], [0, 0, 1, 1], [], []>} : vector<64x256xbf16>, vector<256x128xbf16>, vector<64x128xf32> -> vector<64x128xf32>
    %20 = vector.broadcast %13 : vector<1x128xf32> to vector<64x128xf32>
    %21 = arith.addf %19, %20 : vector<64x128xf32>
    %c2 = arith.constant 2 : index
    %c0_13 = arith.constant 0 : index
    %22 = vector.load %arg7[%c2, %c0_13] : memref<80x128xbf16, #tpu.memory_space<vmem>>, vector<64x128xbf16>
    %c3 = arith.constant 3 : index
    %c0_14 = arith.constant 0 : index
    %23 = vector.load %arg7[%c3, %c0_14] : memref<80x128xbf16, #tpu.memory_space<vmem>>, vector<64x128xbf16>
    %24 = tpu.concatenate %22, %23 in 1 : vector<64x128xbf16>, vector<64x128xbf16> -> vector<64x256xbf16>
    %c1_15 = arith.constant 1 : index
    %c0_16 = arith.constant 0 : index
    %c0_17 = arith.constant 0 : index
    %25 = vector.load %arg3[%c1_15, %c0_16, %c0_17] : memref<4x256x128xbf16, #tpu.memory_space<vmem>>, vector<1x256x128xbf16>
    %26 = vector.shape_cast %25 : vector<1x256x128xbf16> to vector<256x128xbf16>
    %cst_18 = arith.constant dense<0.000000e+00> : vector<64x128xf32>
    %27 = tpu.matmul %24, %26, %cst_18 {dimension_numbers = #tpu.dot_dimension_numbers<[1], [0], [0], [1], [0, 0, 1, 1], [], []>} : vector<64x256xbf16>, vector<256x128xbf16>, vector<64x128xf32> -> vector<64x128xf32>
    %28 = arith.addf %21, %27 : vector<64x128xf32>
    %c4 = arith.constant 4 : index
    %c0_19 = arith.constant 0 : index
    %29 = vector.load %arg7[%c4, %c0_19] : memref<80x128xbf16, #tpu.memory_space<vmem>>, vector<64x128xbf16>
    %c5 = arith.constant 5 : index
    %c0_20 = arith.constant 0 : index
    %30 = vector.load %arg7[%c5, %c0_20] : memref<80x128xbf16, #tpu.memory_space<vmem>>, vector<64x128xbf16>
    %31 = tpu.concatenate %29, %30 in 1 : vector<64x128xbf16>, vector<64x128xbf16> -> vector<64x256xbf16>
    %c2_21 = arith.constant 2 : index
    %c0_22 = arith.constant 0 : index
    %c0_23 = arith.constant 0 : index
    %32 = vector.load %arg3[%c2_21, %c0_22, %c0_23] : memref<4x256x128xbf16, #tpu.memory_space<vmem>>, vector<1x256x128xbf16>
    %33 = vector.shape_cast %32 : vector<1x256x128xbf16> to vector<256x128xbf16>
    %cst_24 = arith.constant dense<0.000000e+00> : vector<64x128xf32>
    %34 = tpu.matmul %31, %33, %cst_24 {dimension_numbers = #tpu.dot_dimension_numbers<[1], [0], [0], [1], [0, 0, 1, 1], [], []>} : vector<64x256xbf16>, vector<256x128xbf16>, vector<64x128xf32> -> vector<64x128xf32>
    %35 = arith.addf %28, %34 : vector<64x128xf32>
    %c6 = arith.constant 6 : index
    %c0_25 = arith.constant 0 : index
    %36 = vector.load %arg7[%c6, %c0_25] : memref<80x128xbf16, #tpu.memory_space<vmem>>, vector<64x128xbf16>
    %c7 = arith.constant 7 : index
    %c0_26 = arith.constant 0 : index
    %37 = vector.load %arg7[%c7, %c0_26] : memref<80x128xbf16, #tpu.memory_space<vmem>>, vector<64x128xbf16>
    %38 = tpu.concatenate %36, %37 in 1 : vector<64x128xbf16>, vector<64x128xbf16> -> vector<64x256xbf16>
    %c3_27 = arith.constant 3 : index
    %c0_28 = arith.constant 0 : index
    %c0_29 = arith.constant 0 : index
    %39 = vector.load %arg3[%c3_27, %c0_28, %c0_29] : memref<4x256x128xbf16, #tpu.memory_space<vmem>>, vector<1x256x128xbf16>
    %40 = vector.shape_cast %39 : vector<1x256x128xbf16> to vector<256x128xbf16>
    %cst_30 = arith.constant dense<0.000000e+00> : vector<64x128xf32>
    %41 = tpu.matmul %38, %40, %cst_30 {dimension_numbers = #tpu.dot_dimension_numbers<[1], [0], [0], [1], [0, 0, 1, 1], [], []>} : vector<64x256xbf16>, vector<256x128xbf16>, vector<64x128xf32> -> vector<64x128xf32>
    %42 = arith.addf %35, %41 : vector<64x128xf32>
    %c0_31 = arith.constant 0 : index
    %c0_32 = arith.constant 0 : index
    %c0_33 = arith.constant 0 : index
    %43 = vector.load %arg5[%c0_31, %c0_32, %c0_33] : memref<1x64x128xbf16, #tpu.memory_space<vmem>>, vector<1x64x128xbf16>
    %44 = vector.shape_cast %43 : vector<1x64x128xbf16> to vector<64x128xbf16>
    %45 = arith.extf %44 : vector<64x128xbf16> to vector<64x128xf32>
    %46 = arith.addf %42, %45 : vector<64x128xf32>
    %c0_34 = arith.constant 0 : index
    %c0_35 = arith.constant 0 : index
    %c0_36 = arith.constant 0 : index
    %47 = vector.load %arg6[%c0_34, %c0_35, %c0_36] : memref<1x64x128xf32, #tpu.memory_space<vmem>>, vector<1x64x128xf32>
    %48 = vector.shape_cast %47 : vector<1x64x128xf32> to vector<64x128xf32>
    %49 = vector.shape_cast %46 : vector<64x128xf32> to vector<1x64x128xf32>
    tpu.vector_store %arg6[%c0_34, %c0_35, %c0_36], %49 {strides = array<i32>} : memref<1x64x128xf32, #tpu.memory_space<vmem>>, vector<1x64x128xf32>,
    return
  }
  func.func @transform_0(%arg0: i32, %arg1: i32) -> (i32, i32, i32) {
    %c0_i32 = arith.constant 0 : i32
    %c0_i32_0 = arith.constant 0 : i32
    %c0_i32_1 = arith.constant 0 : i32
    return %arg0, %c0_i32, %c0_i32_0 : i32, i32, i32
  }
  func.func @transform_1(%arg0: i32, %arg1: i32) -> (i32, i32, i32) {
    %c0_i32 = arith.constant 0 : i32
    %c0_i32_0 = arith.constant 0 : i32
    %c0_i32_1 = arith.constant 0 : i32
    %c0_i32_2 = arith.constant 0 : i32
    return %c0_i32, %c0_i32_0, %c0_i32_1 : i32, i32, i32
  }
  func.func @transform_2(%arg0: i32, %arg1: i32) -> (i32, i32) {
    %c0_i32 = arith.constant 0 : i32
    %c0_i32_0 = arith.constant 0 : i32
    %c0_i32_1 = arith.constant 0 : i32
    return %c0_i32, %c0_i32_0 : i32, i32
  }
  func.func @transform_3(%arg0: i32, %arg1: i32) -> (i32, i32, i32) {
    %c0_i32 = arith.constant 0 : i32
    %c0_i32_0 = arith.constant 0 : i32
    return %arg0, %arg1, %c0_i32 : i32, i32, i32
  }
  func.func @transform_4(%arg0: i32, %arg1: i32) -> (i32, i32, i32) {
    %c0_i32 = arith.constant 0 : i32
    %c0_i32_0 = arith.constant 0 : i32
    return %arg0, %arg1, %c0_i32 : i32, i32, i32
  }
}

</mosaic_0001>

<llo_original>
// kernel: residual_block1d_forward.8
$region0: #{residual_block1d_forward.8}
  #allocation0 [shape = 'u32[]', space=smem, size = 0x4, offset = 0x4, fixed_abs, tag = 'smem constant byte address 0x4 - core index']
  #allocation1 [shape = 'u32[144,128]{1,0:T(1,128)}', space=vmem, size = 0x12000, scoped, tag = 'internal scratch']
  #allocation2 [shape = 'bf16[80,128]{1,0:T(8,128)(2,1)}', space=vmem, size = 0x5000, scoped, tag = 'scratch operand']
  %s0 = inlined_call_operand.vmem [shape: bf16[2,80,128], index: 0, kind: input, shape index: {}]
  %s1 = inlined_call_operand.vmem [shape: bf16[3,256,128], index: 1, kind: input, shape index: {}]
  %s2 = inlined_call_operand.vmem [shape: f32[1,128], index: 2, kind: input, shape index: {}]
  %s3 = inlined_call_operand.vmem [shape: bf16[2,50,128], index: 3, kind: output, shape index: {}]
  %s4 = sld [smem:[#allocation0]]
  $region89: #{residual_block1d_forward.8} parent=0
    _
  %s6 = ssub.s32 1, %s4
  %s7 = scalar_select 0, %s6, %s4
  $region1: #{residual_block1d_forward.8} parent=0
    #allocation3 [shape = 'u8[32768]{0}', space=vmem, size = 0x8000, scoped, tag = 'output window, operand 0']
    loop: start=0, step=1, limit=4
    $region2: #{residual_block1d_forward.8} parent=1 // loop_pre_header
      _
    $region3: #{residual_block1d_forward.8} parent=1 // loop_header
      %s9 = sphi 0, %s13
      %p10 = scmp.ge.s32.totalorder %s9, 4
      %s16 = sphi 0, %s28
      %s17 = sphi 0, %s24
      %s18 = sphi 0, %s16
      %s19 = sphi 0, %s17
      %s20 = sphi 0, %s18
      %s21 = sphi 0, %s19
      %s31 = sphi 0, %s33
      %s34 = sphi 0, %s31
      %s35 = sphi 0, %s34
      %s51 = sphi 0, %s35
      %s55 = sphi 0, %s55
      %s57 = sphi 0, %s55
      %s58 = sphi 0, %s57
      %s72 = sphi 0, %s58
      %s76 = sphi 0, %s76
      %s78 = sphi 0, %s76
      %s79 = sphi 0, %s78
      %s93 = sphi 0, %s79
      %s101 = sphi 0, %s103
      %s104 = sphi 0, %s101
      %s105 = sphi 0, %s104
      %s121 = sphi 0, %s105
    $region4: #{residual_block1d_forward.8} parent=1 // loop_header_branch
      %12 = sbr.rel (%p10) target = $region8
    $region5: #{residual_block1d_forward.8} parent=1 // loop_body
      %s14 = ssub.s32 %s9, 1
      %s15 = ssub.s32 %s9, 2
      %s22 = sadd.s32 1, %s17
      %p23 = scmp.ge.s32.totalorder %s22, 1
      %s24 = scalar_select %p23, 0, %s22
      %s25 = sadd.s32 1, %s16
      %s26 = scalar_select %p23, %s25, %s16
      %p27 = scmp.ge.s32.totalorder %s26, 2
      %s28 = scalar_select %p27, 0, %s26
      %s29 = ssub.s32 %s16, %s28
      %p30 = scmp.eq.s32.totalorder %s29, 0
      %s32 = sadd.s32 %s31, 1
      %s33 = scalar_select %p30, %s31, %s32
      %p36 = pneg %p30
      %p37 = scmp.eq.s32.totalorder %s9, 1
      %p38 = por %p36, %p37
      %p39 = scmp.ne.s32.totalorder %s31, %s34
      %p40 = scmp.eq.s32.totalorder %s9, 0
      %p41 = por %p39, %p40
      %p42 = scmp.ne.s32.totalorder %s31, %s34
      %p43 = scmp.eq.s32.totalorder %s14, 1
      %p44 = por %p42, %p43
      %p45 = scmp.ne.s32.totalorder %s34, %s35
      %p46 = scmp.eq.s32.totalorder %s14, 0
      %p47 = por %p45, %p46
      %p48 = scmp.ne.s32.totalorder %s34, %s35
      %p49 = scmp.eq.s32.totalorder %s15, 1
      %p50 = por %p48, %p49
      %p52 = scmp.ne.s32.totalorder %s35, %s51
      %p53 = scmp.eq.s32.totalorder %s15, 0
      %p54 = por %p52, %p53
      %s56 = sadd.s32 %s55, 1
      %p59 = scmp.eq.s32.totalorder %s9, 1
      %p60 = scmp.ne.s32.totalorder %s55, %s57
      %p61 = scmp.eq.s32.totalorder %s9, 0
      %p62 = por %p60, %p61
      %p63 = scmp.ne.s32.totalorder %s55, %s57
      %p64 = scmp.eq.s32.totalorder %s14, 1
      %p65 = por %p63, %p64
      %p66 = scmp.ne.s32.totalorder %s57, %s58
      %p67 = scmp.eq.s32.totalorder %s14, 0
      %p68 = por %p66, %p67
      %p69 = scmp.ne.s32.totalorder %s57, %s58
      %p70 = scmp.eq.s32.totalorder %s15, 1
      %p71 = por %p69, %p70
      %p73 = scmp.ne.s32.totalorder %s58, %s72
      %p74 = scmp.eq.s32.totalorder %s15, 0
      %p75 = por %p73, %p74
      %s77 = sadd.s32 %s76, 1
      %p80 = scmp.eq.s32.totalorder %s9, 1
      %p81 = scmp.ne.s32.totalorder %s76, %s78
      %p82 = scmp.eq.s32.totalorder %s9, 0
      %p83 = por %p81, %p82
      %p84 = scmp.ne.s32.totalorder %s76, %s78
      %p85 = scmp.eq.s32.totalorder %s14, 1
      %p86 = por %p84, %p85
      %p87 = scmp.ne.s32.totalorder %s78, %s79
      %p88 = scmp.eq.s32.totalorder %s14, 0
      %p89 = por %p87, %p88
      %p90 = scmp.ne.s32.totalorder %s78, %s79
      %p91 = scmp.eq.s32.totalorder %s15, 1
      %p92 = por %p90, %p91
      %p94 = scmp.ne.s32.totalorder %s79, %s93
      %p95 = scmp.eq.s32.totalorder %s15, 0
      %p96 = por %p94, %p95
      %s97 = ssub.s32 %s16, %s28
      %s98 = ssub.s32 %s17, %s24
      %s99 = sor.u32 %s97, %s98
      %p100 = scmp.eq.s32.totalorder %s99, 0
      %s102 = sadd.s32 %s101, 1
      %s103 = scalar_select %p100, %s101, %s102
      %p106 = pneg %p100
      %p107 = scmp.eq.s32.totalorder %s9, 1
      %p108 = por %p106, %p107
      %p109 = scmp.ne.s32.totalorder %s101, %s104
      %p110 = scmp.eq.s32.totalorder %s9, 0
      %p111 = por %p109, %p110
      %p112 = scmp.ne.s32.totalorder %s101, %s104
      %p113 = scmp.eq.s32.totalorder %s14, 1
      %p114 = por %p112, %p113
      %p115 = scmp.ne.s32.totalorder %s104, %s105
      %p116 = scmp.eq.s32.totalorder %s14, 0
      %p117 = por %p115, %p116
      %p118 = scmp.ne.s32.totalorder %s104, %s105
      %p119 = scmp.eq.s32.totalorder %s15, 1
      %p120 = por %p118, %p119
      %p122 = scmp.ne.s32.totalorder %s105, %s121
      %p123 = scmp.eq.s32.totalorder %s15, 0
      %p124 = por %p122, %p123
      %p125 = scmp.le.s32.totalorder 1, %s9
      %p126 = scmp.lt.s32.totalorder %s9, 3
      %p127 = pnand %p125, %p126
      %p128 = pneg %p127
      // Predicated region
      $region9: #{residual_block1d_forward.8} parent=5 // pred_check
        _
      $region10: #{residual_block1d_forward.8} parent=5 // pred_check_branch
        %130 = sbr.rel (%p127) target = $region12
      $region11: #{residual_block1d_forward.8} parent=5 // pred_region
        %s131 = ssub.s32 %s9, 1
        // Predicated region
        $region13: #{residual_block1d_forward.8} parent=11 // pred_check
          %p132 = pneg %p68
        $region14: #{residual_block1d_forward.8} parent=11 // pred_check_branch
          %134 = sbr.rel (%p132) target = $region16
        $region15: #{residual_block1d_forward.8} parent=11 // pred_region
          _
        $region16: #{residual_block1d_forward.8} parent=11 // pred_fallthru
          _
        // Predicated region
        $region17: #{residual_block1d_forward.8} parent=11 // pred_check
          %p135 = pneg %p89
        $region18: #{residual_block1d_forward.8} parent=11 // pred_check_branch
          %137 = sbr.rel (%p135) target = $region20
        $region19: #{residual_block1d_forward.8} parent=11 // pred_region
          _
        $region20: #{residual_block1d_forward.8} parent=11 // pred_fallthru
          _
      $region12: #{residual_block1d_forward.8} parent=5 // pred_fallthru
        _
      %p138 = scmp.lt.s32.totalorder %s9, 2
      // Predicated region
      $region21: #{residual_block1d_forward.8} parent=5 // pred_check
        %p139 = pneg %p138
      $region22: #{residual_block1d_forward.8} parent=5 // pred_check_branch
        %141 = sbr.rel (%p139) target = $region24
      $region23: #{residual_block1d_forward.8} parent=5 // pred_region
        // Predicated region
        $region25: #{residual_block1d_forward.8} parent=23 // pred_check
          %p142 = pneg %p41
        $region26: #{residual_block1d_forward.8} parent=23 // pred_check_branch
          %144 = sbr.rel (%p142) target = $region28
        $region27: #{residual_block1d_forward.8} parent=23 // pred_region
          %p145 = scmp.lt.s32.totalorder %s16, 1
          %s146 = scalar_select %p145, %s16, 1
          %s147 = smul.addr %s146, 10
          %s148 = smul.addr %s147, 4
          %s149 = scalar_lea.vmem %s0, %s148
        $region28: #{residual_block1d_forward.8} parent=23 // pred_fallthru
          _
      $region24: #{residual_block1d_forward.8} parent=5 // pred_fallthru
        _
      %p150 = scmp.le.s32.totalorder 1, %s9
      %p151 = scmp.lt.s32.totalorder %s9, 3
      %p152 = pnand %p150, %p151
      %p153 = pneg %p152
      // Predicated region
      $region29: #{residual_block1d_forward.8} parent=5 // pred_check
        _
      $region30: #{residual_block1d_forward.8} parent=5 // pred_check_branch
        %155 = sbr.rel (%p152) target = $region32
      $region31: #{residual_block1d_forward.8} parent=5 // pred_region
        %s156 = ssub.s32 %s9, 1
        %p157 = scmp.lt.s32.totalorder %s18, 1
        %s158 = scalar_select %p157, %s18, 1
        %s159 = smul.addr %s158, 10
        %s160 = smul.addr %s159, 4
        %s161 = scalar_lea.vmem %s0, %s160
        %p162 = pneg %p47
        %p163 = pneg %p44
        %p164 = pneg %p68
        %p165 = pneg %p65
        %p166 = pneg %p89
        %p167 = pneg %p86
        %p168 = pneg %p117
        %p169 = pneg %p114
        %s170 = sand.u32 %s104, 1
        %s171 = sand.u32 %s104, 1
        %s172 = smul.addr %s171, 32
        %s173 = scalar_lea.vmem [#allocation3], %s172
        %p174 = scmp.lt.s32.totalorder %s18, 1
        %s175 = scalar_select %p174, %s18, 1
        %s176 = smul.addr %s175, 10
        %s177 = smul.addr %s176, 4
        %s178 = scalar_lea.vmem %s0, %s177
        %s179 = smul.u32 8, %s19
        %s180 = ssub.s32 7, %s179
        %s181 = smul.u32 64, %s180
        %s183 = smul.u32 %s19, 64
        %s184 = sshra.s32 %s183, 3
        %s185 = sand.u32 %s183, 7
        %s186 = smul.addr %s184, 4
        %s187 = scalar_lea.vmem %s178, %s186
        %v188 = vld [vmem:[%s187] sm:$0xf]
        %v189 = vld [vmem:[%s187 + $0x4] sm:$0xf]
        %v190 = vld [vmem:[%s187 + $0x8] sm:$0xf]
        %v191 = vld [vmem:[%s187 + $0xc] sm:$0xf]
        %v192 = vld [vmem:[%s187 + $0x10] sm:$0xf]
        %v193 = vld [vmem:[%s187 + $0x14] sm:$0xf]
        %v194 = vld [vmem:[%s187 + $0x18] sm:$0xf]
        %v195 = vld [vmem:[%s187 + $0x1c] sm:$0xf]
        %v196 = vld [vmem:[%s187 + $0x20] sm:$0xf]
        %v197 = vld [vmem:[%s187 + $0x24] sm:$0xf]
        %v198 = vunpack.c.l.bf16 %v188
        %v199 = vunpack.c.l.bf16 %v189
        %v200 = vunpack.c.l.bf16 %v190
        %v201 = vunpack.c.l.bf16 %v191
        %v202 = vunpack.c.l.bf16 %v192
        %v203 = vunpack.c.l.bf16 %v193
        %v204 = vunpack.c.l.bf16 %v194
        %v205 = vunpack.c.l.bf16 %v195
        %v206 = vunpack.c.l.bf16 %v196
        %v207 = vunpack.c.l.bf16 %v197
        %vm208 = vcmp.ge.f32.partialorder %v198, 0.0
        %vm209 = vcmp.ge.f32.partialorder %v199, 0.0
        %vm210 = vcmp.ge.f32.partialorder %v200, 0.0
        %vm211 = vcmp.ge.f32.partialorder %v201, 0.0
        %vm212 = vcmp.ge.f32.partialorder %v202, 0.0
        %vm213 = vcmp.ge.f32.partialorder %v203, 0.0
        %vm214 = vcmp.ge.f32.partialorder %v204, 0.0
        %vm215 = vcmp.ge.f32.partialorder %v205, 0.0
        %vm216 = vcmp.ge.f32.partialorder %v206, 0.0
        %vm217 = vcmp.ge.f32.partialorder %v207, 0.0
        %v218 = vmul.f32 %v198, 0.1
        %v219 = vmul.f32 %v199, 0.1
        %v220 = vmul.f32 %v200, 0.1
        %v221 = vmul.f32 %v201, 0.1
        %v222 = vmul.f32 %v202, 0.1
        %v223 = vmul.f32 %v203, 0.1
        %v224 = vmul.f32 %v204, 0.1
        %v225 = vmul.f32 %v205, 0.1
        %v226 = vmul.f32 %v206, 0.1
        %v227 = vmul.f32 %v207, 0.1
        %v228 = vsel %vm208, %v198, %v218
        %v229 = vsel %vm209, %v199, %v219
        %v230 = vsel %vm210, %v200, %v220
        %v231 = vsel %vm211, %v201, %v221
        %v232 = vsel %vm212, %v202, %v222
        %v233 = vsel %vm213, %v203, %v223
        %v234 = vsel %vm214, %v204, %v224
        %v235 = vsel %vm215, %v205, %v225
        %v236 = vsel %vm216, %v206, %v226
        %v237 = vsel %vm217, %v207, %v227
        %v238 = vpack.c.bf16 %v229, %v228
        %v239 = vpack.c.bf16 %v231, %v230
        %v240 = vpack.c.bf16 %v233, %v232
        %v241 = vpack.c.bf16 %v235, %v234
        %v242 = vpack.c.bf16 %v237, %v236
        %v248 = vunpack.c.l.b16 %v238
        %v249 = vunpack.c.h.b16 %v238
        %v250 = vunpack.c.l.b16 %v239
        %v251 = vunpack.c.h.b16 %v239
        %v252 = vunpack.c.l.b16 %v240
        %v253 = vunpack.c.h.b16 %v240
        %v254 = vunpack.c.l.b16 %v241
        %v255 = vunpack.c.h.b16 %v241
        %v256 = vunpack.c.l.b16 %v242
        %v257 = vunpack.c.h.b16 %v242
        %v258 = vpack.c.b16 %v248, %v248
        %v259 = vpack.c.b16 %v249, %v249
        %v260 = vpack.c.b16 %v250, %v250
        %v261 = vpack.c.b16 %v251, %v251
        %v262 = vpack.c.b16 %v252, %v252
        %v263 = vpack.c.b16 %v253, %v253
        %v264 = vpack.c.b16 %v254, %v254
        %v265 = vpack.c.b16 %v255, %v255
        %v266 = vpack.c.b16 %v256, %v256
        %v267 = vpack.c.b16 %v257, %v257
        %278 = vst [vmem:[#allocation2] sm:$0xf] %v258
        %279 = vst [vmem:[#allocation2 + $0x4] sm:$0xf] %v259
        %280 = vst [vmem:[#allocation2 + $0x8] sm:$0xf] %v260
        %281 = vst [vmem:[#allocation2 + $0xc] sm:$0xf] %v261
        %282 = vst [vmem:[#allocation2 + $0x10] sm:$0xf] %v262
        %283 = vst [vmem:[#allocation2 + $0x14] sm:$0xf] %v263
        %284 = vst [vmem:[#allocation2 + $0x18] sm:$0xf] %v264
        %285 = vst [vmem:[#allocation2 + $0x1c] sm:$0xf] %v265
        %286 = vst [vmem:[#allocation2 + $0x20] sm:$0xf] %v266
        %287 = vst [vmem:[#allocation2 + $0x24] sm:$0xf] %v267
        %v288 = vld [vmem:[%s2] sm:$0x1]
        %v289 = vld [vmem:[#allocation2] sm:$0xf]
        %v290 = vld [vmem:[#allocation2 + $0x4] sm:$0xf]
        %v291 = vld [vmem:[#allocation2 + $0x8] sm:$0xf]
        %v292 = vld [vmem:[#allocation2 + $0xc] sm:$0xf]
        %v293 = vld [vmem:[#allocation2 + $0x10] sm:$0xf]
        %v294 = vld [vmem:[#allocation2 + $0x14] sm:$0xf]
        %v295 = vld [vmem:[#allocation2 + $0x18] sm:$0xf]
        %v296 = vld [vmem:[#allocation2 + $0x1c] sm:$0xf]
        %v297 = vld [vmem:[#allocation2] sm:$0xe]
        %v298 = vld [vmem:[#allocation2 + $0x20] sm:$0x3]
        %v307 = vunpack.c.l.b16 %v289
        %v308 = vunpack.c.l.b16 %v290
        %v309 = vunpack.c.l.b16 %v291
        %v310 = vunpack.c.l.b16 %v292
        %v311 = vunpack.c.l.b16 %v293
        %v312 = vunpack.c.l.b16 %v294
        %v313 = vunpack.c.l.b16 %v295
        %v314 = vunpack.c.l.b16 %v296
        %v315 = vpack.c.b16 %v308, %v307
        %v316 = vpack.c.b16 %v310, %v309
        %v317 = vpack.c.b16 %v312, %v311
        %v318 = vpack.c.b16 %v314, %v313
        %v325 = vunpack.c.l.b16 %v297
        %v326 = vunpack.c.l.b16 %v298
        %v327 = vpack.c.b16 %v308, %v325
        %v328 = vpack.c.b16 %v326, %v326
        %vm329 = vsmask.f32 6400
        %v331 = vshrl.u32 %v327, 16
        %v333 = vrot.slane %v331, 1
        %v334 = vshll.u32 %v327, 16
        %v336 = vrot.slane %v334, 2
        %v337 = vor.u32 %v333, %v336
        %v339 = vshrl.u32 %v316, 16
        %v341 = vrot.slane %v339, 1
        %v342 = vshll.u32 %v316, 16
        %v344 = vrot.slane %v342, 2
        %v345 = vor.u32 %v341, %v344
        %v346 = vsel %vm329, %v337, %v345
        %v348 = vshrl.u32 %v317, 16
        %v350 = vrot.slane %v348, 1
        %v351 = vshll.u32 %v317, 16
        %v353 = vrot.slane %v351, 2
        %v354 = vor.u32 %v350, %v353
        %v355 = vsel %vm329, %v345, %v354
        %v357 = vshrl.u32 %v318, 16
        %v359 = vrot.slane %v357, 1
        %v360 = vshll.u32 %v318, 16
        %v362 = vrot.slane %v360, 2
        %v363 = vor.u32 %v359, %v362
        %v364 = vsel %vm329, %v354, %v363
        %v366 = vshrl.u32 %v328, 16
        %v368 = vrot.slane %v366, 1
        %v369 = vshll.u32 %v328, 16
        %v371 = vrot.slane %v369, 2
        %v372 = vor.u32 %v368, %v371
        %v373 = vsel %vm329, %v363, %v372
        %v378 = vld [vmem:[%s1] sm:$0xf]
        %v379 = vld [vmem:[%s1 + $0x4] sm:$0xf]
        %v380 = vld [vmem:[%s1 + $0x8] sm:$0xf]
        %v381 = vld [vmem:[%s1 + $0xc] sm:$0xf]
        %v382 = vld [vmem:[%s1 + $0x10] sm:$0xf]
        %v383 = vld [vmem:[%s1 + $0x14] sm:$0xf]
        %v384 = vld [vmem:[%s1 + $0x18] sm:$0xf]
        %v385 = vld [vmem:[%s1 + $0x1c] sm:$0xf]
        %v386 = vld [vmem:[%s1 + $0x20] sm:$0xf]
        %v387 = vld [vmem:[%s1 + $0x24] sm:$0xf]
        %v388 = vld [vmem:[%s1 + $0x28] sm:$0xf]
        %v389 = vld [vmem:[%s1 + $0x2c] sm:$0xf]
        %v390 = vld [vmem:[%s1 + $0x30] sm:$0xf]
        %v391 = vld [vmem:[%s1 + $0x34] sm:$0xf]
        %v392 = vld [vmem:[%s1 + $0x38] sm:$0xf]
        %v393 = vld [vmem:[%s1 + $0x3c] sm:$0xf]
        %v394 = vld [vmem:[%s1 + $0x40] sm:$0xf]
        %v395 = vld [vmem:[%s1 + $0x44] sm:$0xf]
        %v396 = vld [vmem:[%s1 + $0x48] sm:$0xf]
        %v397 = vld [vmem:[%s1 + $0x4c] sm:$0xf]
        %v398 = vld [vmem:[%s1 + $0x50] sm:$0xf]
        %v399 = vld [vmem:[%s1 + $0x54] sm:$0xf]
        %v400 = vld [vmem:[%s1 + $0x58] sm:$0xf]
        %v401 = vld [vmem:[%s1 + $0x5c] sm:$0xf]
        %v402 = vld [vmem:[%s1 + $0x60] sm:$0xf]
        %v403 = vld [vmem:[%s1 + $0x64] sm:$0xf]
        %v404 = vld [vmem:[%s1 + $0x68] sm:$0xf]
        %v405 = vld [vmem:[%s1 + $0x6c] sm:$0xf]
        %v406 = vld [vmem:[%s1 + $0x70] sm:$0xf]
        %v407 = vld [vmem:[%s1 + $0x74] sm:$0xf]
        %v408 = vld [vmem:[%s1 + $0x78] sm:$0xf]
        %v409 = vld [vmem:[%s1 + $0x7c] sm:$0xf]
        %v411 = vlaneseq
        %v412 = vshrl.u32 %v411, 7
        %v413 = vsub.s32 0, %v412
        %v414 = vrot.slane %v288, %v413
        %v448 = vunpack.c.l.b16 %v378
        %v449 = vunpack.c.l.b16 %v379
        %v450 = vunpack.c.l.b16 %v380
        %v451 = vunpack.c.l.b16 %v381
        %v452 = vunpack.c.l.b16 %v382
        %v453 = vunpack.c.l.b16 %v383
        %v454 = vunpack.c.l.b16 %v384
        %v455 = vunpack.c.l.b16 %v385
        %v456 = vunpack.c.l.b16 %v386
        %v457 = vunpack.c.l.b16 %v387
        %v458 = vunpack.c.l.b16 %v388
        %v459 = vunpack.c.l.b16 %v389
        %v460 = vunpack.c.l.b16 %v390
        %v461 = vunpack.c.l.b16 %v391
        %v462 = vunpack.c.l.b16 %v392
        %v463 = vunpack.c.l.b16 %v393
        %v464 = vunpack.c.l.b16 %v394
        %v465 = vunpack.c.l.b16 %v395
        %v466 = vunpack.c.l.b16 %v396
        %v467 = vunpack.c.l.b16 %v397
        %v468 = vunpack.c.l.b16 %v398
        %v469 = vunpack.c.l.b16 %v399
        %v470 = vunpack.c.l.b16 %v400
        %v471 = vunpack.c.l.b16 %v401
        %v472 = vunpack.c.l.b16 %v402
        %v473 = vunpack.c.l.b16 %v403
        %v474 = vunpack.c.l.b16 %v404
        %v475 = vunpack.c.l.b16 %v405
        %v476 = vunpack.c.l.b16 %v406
        %v477 = vunpack.c.l.b16 %v407
        %v478 = vunpack.c.l.b16 %v408
        %v479 = vunpack.c.l.b16 %v409
        %v480 = vpack.c.b16 %v449, %v448
        %v481 = vpack.c.b16 %v451, %v450
        %v482 = vpack.c.b16 %v453, %v452
        %v483 = vpack.c.b16 %v455, %v454
        %v484 = vpack.c.b16 %v457, %v456
        %v485 = vpack.c.b16 %v459, %v458
        %v486 = vpack.c.b16 %v461, %v460
        %v487 = vpack.c.b16 %v463, %v462
        %v488 = vpack.c.b16 %v465, %v464
        %v489 = vpack.c.b16 %v467, %v466
        %v490 = vpack.c.b16 %v469, %v468
        %v491 = vpack.c.b16 %v471, %v470
        %v492 = vpack.c.b16 %v473, %v472
        %v493 = vpack.c.b16 %v475, %v474
        %v494 = vpack.c.b16 %v477, %v476
        %v495 = vpack.c.b16 %v479, %v478
        %512 = vmatprep.subr.bf16.mxu0 0
        %513 = vmatpush1.bf16.msra.mxu0 %v487
        %514 = vmatprep.subr.bf16.mxu0 0
        %515 = vmatpush1.bf16.msra.mxu0 %v486
        %516 = vmatprep.subr.bf16.mxu0 0
        %517 = vmatpush1.bf16.msra.mxu0 %v485
        %518 = vmatprep.subr.bf16.mxu0 0
        %519 = vmatpush1.bf16.msra.mxu0 %v484
        %520 = vmatprep.subr.bf16.mxu0 0
        %521 = vmatpush1.bf16.msra.mxu0 %v483
        %522 = vmatprep.subr.bf16.mxu0 0
        %523 = vmatpush1.bf16.msra.mxu0 %v482
        %524 = vmatprep.subr.bf16.mxu0 0
        %525 = vmatpush1.bf16.msra.mxu0 %v481
        %526 = vmatprep.subr.bf16.mxu0 0
        %527 = vmatpush1.bf16.msra.mxu0 %v480
        %528 = vmatprep.subr.bf16.mxu0 0
        %529 = vmatpush2.bf16.msra.mxu0 %v495
        %530 = vmatprep.subr.bf16.mxu0 0
        %531 = vmatpush2.bf16.msra.mxu0 %v494
        %532 = vmatprep.subr.bf16.mxu0 0
        %533 = vmatpush2.bf16.msra.mxu0 %v493
        %534 = vmatprep.subr.bf16.mxu0 0
        %535 = vmatpush2.bf16.msra.mxu0 %v492
        %536 = vmatprep.subr.bf16.mxu0 0
        %537 = vmatpush2.bf16.msra.mxu0 %v491
        %538 = vmatprep.subr.bf16.mxu0 0
        %539 = vmatpush2.bf16.msra.mxu0 %v490
        %540 = vmatprep.subr.bf16.mxu0 0
        %541 = vmatpush2.bf16.msra.mxu0 %v489
        %542 = vmatprep.subr.bf16.mxu0 0
        %543 = vmatpush2.bf16.msra.mxu0 %v488
        %544 = vmatprep.mubr.bf16.mxu0 %v346
        %545 = vmatmul.mubr.bf16.gmra.mxu0 %v315
        %v546 = vpop.f32.mrf.mxu0
        %v547 = vadd.f32 %v414, %v546
        %v548 = vpop.f32.mrf.mxu0
        %v549 = vpop.f32.mrf.mxu0
        %v550 = vadd.f32 %v414, %v549
        %v551 = vpop.f32.mrf.mxu0
        %552 = vmatprep.mubr.bf16.mxu0 %v355
        %553 = vmatmul.mubr.bf16.gmra.mxu0 %v316
        %v554 = vpop.f32.mrf.mxu0
        %v555 = vadd.f32 %v414, %v554
        %v556 = vpop.f32.mrf.mxu0
        %v557 = vpop.f32.mrf.mxu0
        %v558 = vadd.f32 %v414, %v557
        %v559 = vpop.f32.mrf.mxu0
        %560 = vmatprep.mubr.bf16.mxu0 %v364
        %561 = vmatmul.mubr.bf16.gmra.mxu0 %v317
        %v562 = vpop.f32.mrf.mxu0
        %v563 = vadd.f32 %v414, %v562
        %v564 = vpop.f32.mrf.mxu0
        %v565 = vpop.f32.mrf.mxu0
        %v566 = vadd.f32 %v414, %v565
        %v567 = vpop.f32.mrf.mxu0
        %568 = vmatprep.mubr.bf16.mxu0 %v373
        %569 = vmatmul.mubr.bf16.gmra.mxu0 %v318
        %v570 = vpop.f32.mrf.mxu0
        %v571 = vadd.f32 %v414, %v570
        %v572 = vpop.f32.mrf.mxu0
        %v573 = vpop.f32.mrf.mxu0
        %v574 = vadd.f32 %v414, %v573
        %v575 = vpop.f32.mrf.mxu0
        %576 = vdwg.mxu0
        %v577 = vld [vmem:[#allocation2] sm:$0x8]
        %v578 = vld [vmem:[#allocation2 + $0x20] sm:$0x7]
        %v579 = vld [vmem:[#allocation2 + $0x4] sm:$0xf]
        %v580 = vld [vmem:[#allocation2 + $0x8] sm:$0xf]
        %v581 = vld [vmem:[#allocation2 + $0xc] sm:$0xf]
        %v582 = vld [vmem:[#allocation2 + $0x10] sm:$0xf]
        %v583 = vld [vmem:[#allocation2 + $0x14] sm:$0xf]
        %v584 = vld [vmem:[#allocation2 + $0x18] sm:$0xf]
        %v585 = vld [vmem:[#allocation2 + $0x1c] sm:$0xf]
        %v586 = vld [vmem:[#allocation2 + $0x20] sm:$0xf]
        %v587 = vld [vmem:[#allocation2 + $0x24] sm:$0x1]
        %v590 = vunpack.c.l.b16 %v577
        %v591 = vunpack.c.l.b16 %v578
        %v592 = vpack.c.b16 %v308, %v590
        %v593 = vpack.c.b16 %v591, %v591
        %v603 = vunpack.c.l.b16 %v579
        %v604 = vunpack.c.l.b16 %v580
        %v605 = vunpack.c.l.b16 %v581
        %v606 = vunpack.c.l.b16 %v582
        %v607 = vunpack.c.l.b16 %v583
        %v608 = vunpack.c.l.b16 %v584
        %v609 = vunpack.c.l.b16 %v585
        %v610 = vunpack.c.l.b16 %v586
        %v611 = vunpack.c.l.b16 %v587
        %v612 = vpack.c.b16 %v604, %v603
        %v613 = vpack.c.b16 %v606, %v605
        %v614 = vpack.c.b16 %v608, %v607
        %v615 = vpack.c.b16 %v610, %v609
        %v616 = vpack.c.b16 %v611, %v611
        %vm617 = vsmask.f32 2304
        %v619 = vshrl.u32 %v612, 16
        %v621 = vrot.slane %v619, 5
        %v622 = vshll.u32 %v612, 16
        %v624 = vrot.slane %v622, 6
        %v625 = vor.u32 %v621, %v624
        %v627 = vshrl.u32 %v613, 16
        %v629 = vrot.slane %v627, 5
        %v630 = vshll.u32 %v613, 16
        %v632 = vrot.slane %v630, 6
        %v633 = vor.u32 %v629, %v632
        %v634 = vsel %vm617, %v625, %v633
        %v636 = vshrl.u32 %v614, 16
        %v638 = vrot.slane %v636, 5
        %v639 = vshll.u32 %v614, 16
        %v641 = vrot.slane %v639, 6
        %v642 = vor.u32 %v638, %v641
        %v643 = vsel %vm617, %v633, %v642
        %v645 = vshrl.u32 %v615, 16
        %v647 = vrot.slane %v645, 5
        %v648 = vshll.u32 %v615, 16
        %v650 = vrot.slane %v648, 6
        %v651 = vor.u32 %v647, %v650
        %v652 = vsel %vm617, %v642, %v651
        %v654 = vshll.u32 %v616, 16
        %v656 = vrot.slane %v654, 6
        %v657 = vsel %vm617, %v651, %v656
        %s658 = scalar_lea.vmem %s1, 128
        %v659 = vld [vmem:[%s658] sm:$0xf]
        %v660 = vld [vmem:[%s658 + $0x4] sm:$0xf]
        %v661 = vld [vmem:[%s658 + $0x8] sm:$0xf]
        %v662 = vld [vmem:[%s658 + $0xc] sm:$0xf]
        %v663 = vld [vmem:[%s658 + $0x10] sm:$0xf]
        %v664 = vld [vmem:[%s658 + $0x14] sm:$0xf]
        %v665 = vld [vmem:[%s658 + $0x18] sm:$0xf]
        %v666 = vld [vmem:[%s658 + $0x1c] sm:$0xf]
        %v667 = vld [vmem:[%s658 + $0x20] sm:$0xf]
        %v668 = vld [vmem:[%s658 + $0x24] sm:$0xf]
        %v669 = vld [vmem:[%s658 + $0x28] sm:$0xf]
        %v670 = vld [vmem:[%s658 + $0x2c] sm:$0xf]
        %v671 = vld [vmem:[%s658 + $0x30] sm:$0xf]
        %v672 = vld [vmem:[%s658 + $0x34] sm:$0xf]
        %v673 = vld [vmem:[%s658 + $0x38] sm:$0xf]
        %v674 = vld [vmem:[%s658 + $0x3c] sm:$0xf]
        %v675 = vld [vmem:[%s658 + $0x40] sm:$0xf]
        %v676 = vld [vmem:[%s658 + $0x44] sm:$0xf]
        %v677 = vld [vmem:[%s658 + $0x48] sm:$0xf]
        %v678 = vld [vmem:[%s658 + $0x4c] sm:$0xf]
        %v679 = vld [vmem:[%s658 + $0x50] sm:$0xf]
        %v680 = vld [vmem:[%s658 + $0x54] sm:$0xf]
        %v681 = vld [vmem:[%s658 + $0x58] sm:$0xf]
        %v682 = vld [vmem:[%s658 + $0x5c] sm:$0xf]
        %v683 = vld [vmem:[%s658 + $0x60] sm:$0xf]
        %v684 = vld [vmem:[%s658 + $0x64] sm:$0xf]
        %v685 = vld [vmem:[%s658 + $0x68] sm:$0xf]
        %v686 = vld [vmem:[%s658 + $0x6c] sm:$0xf]
        %v687 = vld [vmem:[%s658 + $0x70] sm:$0xf]
        %v688 = vld [vmem:[%s658 + $0x74] sm:$0xf]
        %v689 = vld [vmem:[%s658 + $0x78] sm:$0xf]
        %v690 = vld [vmem:[%s658 + $0x7c] sm:$0xf]
        %vm691 = vcmask 1044480
        %v692 = vrot.slane %v592, 3
        %v693 = vrot.slane %v316, 3
        %v694 = vsel %vm691, %v692, %v693
        %v695 = vrot.slane %v625, 3
        %v696 = vrot.slane %v634, 3
        %v697 = vsel %vm691, %v695, %v696
        %v698 = vrot.slane %v317, 3
        %v699 = vsel %vm691, %v693, %v698
        %v700 = vrot.slane %v643, 3
        %v701 = vsel %vm691, %v696, %v700
        %v702 = vrot.slane %v318, 3
        %v703 = vsel %vm691, %v698, %v702
        %v704 = vrot.slane %v652, 3
        %v705 = vsel %vm691, %v700, %v704
        %v706 = vrot.slane %v593, 3
        %v707 = vsel %vm691, %v702, %v706
        %v708 = vrot.slane %v657, 3
        %v709 = vsel %vm691, %v704, %v708
        %v750 = vunpack.c.l.b16 %v659
        %v751 = vunpack.c.l.b16 %v660
        %v752 = vunpack.c.l.b16 %v661
        %v753 = vunpack.c.l.b16 %v662
        %v754 = vunpack.c.l.b16 %v663
        %v755 = vunpack.c.l.b16 %v664
        %v756 = vunpack.c.l.b16 %v665
        %v757 = vunpack.c.l.b16 %v666
        %v758 = vunpack.c.l.b16 %v667
        %v759 = vunpack.c.l.b16 %v668
        %v760 = vunpack.c.l.b16 %v669
        %v761 = vunpack.c.l.b16 %v670
        %v762 = vunpack.c.l.b16 %v671
        %v763 = vunpack.c.l.b16 %v672
        %v764 = vunpack.c.l.b16 %v673
        %v765 = vunpack.c.l.b16 %v674
        %v766 = vunpack.c.l.b16 %v675
        %v767 = vunpack.c.l.b16 %v676
        %v768 = vunpack.c.l.b16 %v677
        %v769 = vunpack.c.l.b16 %v678
        %v770 = vunpack.c.l.b16 %v679
        %v771 = vunpack.c.l.b16 %v680
        %v772 = vunpack.c.l.b16 %v681
        %v773 = vunpack.c.l.b16 %v682
        %v774 = vunpack.c.l.b16 %v683
        %v775 = vunpack.c.l.b16 %v684
        %v776 = vunpack.c.l.b16 %v685
        %v777 = vunpack.c.l.b16 %v686
        %v778 = vunpack.c.l.b16 %v687
        %v779 = vunpack.c.l.b16 %v688
        %v780 = vunpack.c.l.b16 %v689
        %v781 = vunpack.c.l.b16 %v690
        %v782 = vpack.c.b16 %v751, %v750
        %v783 = vpack.c.b16 %v753, %v752
        %v784 = vpack.c.b16 %v755, %v754
        %v785 = vpack.c.b16 %v757, %v756
        %v786 = vpack.c.b16 %v759, %v758
        %v787 = vpack.c.b16 %v761, %v760
        %v788 = vpack.c.b16 %v763, %v762
        %v789 = vpack.c.b16 %v765, %v764
        %v790 = vpack.c.b16 %v767, %v766
        %v791 = vpack.c.b16 %v769, %v768
        %v792 = vpack.c.b16 %v771, %v770
        %v793 = vpack.c.b16 %v773, %v772
        %v794 = vpack.c.b16 %v775, %v774
        %v795 = vpack.c.b16 %v777, %v776
        %v796 = vpack.c.b16 %v779, %v778
        %v797 = vpack.c.b16 %v781, %v780
        %814 = vmatprep.subr.bf16.mxu0 0
        %815 = vmatpush1.bf16.msra.mxu0 %v789
        %816 = vmatprep.subr.bf16.mxu0 0
        %817 = vmatpush1.bf16.msra.mxu0 %v788
        %818 = vmatprep.subr.bf16.mxu0 0
        %819 = vmatpush1.bf16.msra.mxu0 %v787
        %820 = vmatprep.subr.bf16.mxu0 0
        %821 = vmatpush1.bf16.msra.mxu0 %v786
        %822 = vmatprep.subr.bf16.mxu0 0
        %823 = vmatpush1.bf16.msra.mxu0 %v785
        %824 = vmatprep.subr.bf16.mxu0 0
        %825 = vmatpush1.bf16.msra.mxu0 %v784
        %826 = vmatprep.subr.bf16.mxu0 0
        %827 = vmatpush1.bf16.msra.mxu0 %v783
        %828 = vmatprep.subr.bf16.mxu0 0
        %829 = vmatpush1.bf16.msra.mxu0 %v782
        %830 = vmatprep.subr.bf16.mxu0 0
        %831 = vmatpush2.bf16.msra.mxu0 %v797
        %832 = vmatprep.subr.bf16.mxu0 0
        %833 = vmatpush2.bf16.msra.mxu0 %v796
        %834 = vmatprep.subr.bf16.mxu0 0
        %835 = vmatpush2.bf16.msra.mxu0 %v795
        %836 = vmatprep.subr.bf16.mxu0 0
        %837 = vmatpush2.bf16.msra.mxu0 %v794
        %838 = vmatprep.subr.bf16.mxu0 0
        %839 = vmatpush2.bf16.msra.mxu0 %v793
        %840 = vmatprep.subr.bf16.mxu0 0
        %841 = vmatpush2.bf16.msra.mxu0 %v792
        %842 = vmatprep.subr.bf16.mxu0 0
        %843 = vmatpush2.bf16.msra.mxu0 %v791
        %844 = vmatprep.subr.bf16.mxu0 0
        %845 = vmatpush2.bf16.msra.mxu0 %v790
        %846 = vmatprep.mubr.bf16.mxu0 %v697
        %847 = vmatmul.mubr.bf16.gmra.mxu0 %v694
        %v848 = vpop.f32.mrf.mxu0
        %v849 = vadd.f32 0.0, %v848
        %v850 = vpop.f32.mrf.mxu0
        %v851 = vpop.f32.mrf.mxu0
        %v852 = vadd.f32 0.0, %v851
        %v853 = vpop.f32.mrf.mxu0
        %854 = vmatprep.mubr.bf16.mxu0 %v701
        %855 = vmatmul.mubr.bf16.gmra.mxu0 %v699
        %v856 = vpop.f32.mrf.mxu0
        %v857 = vadd.f32 0.0, %v856
        %v858 = vpop.f32.mrf.mxu0
        %v859 = vpop.f32.mrf.mxu0
        %v860 = vadd.f32 0.0, %v859
        %v861 = vpop.f32.mrf.mxu0
        %862 = vmatprep.mubr.bf16.mxu0 %v705
        %863 = vmatmul.mubr.bf16.gmra.mxu0 %v703
        %v864 = vpop.f32.mrf.mxu0
        %v865 = vadd.f32 0.0, %v864
        %v866 = vpop.f32.mrf.mxu0
        %v867 = vpop.f32.mrf.mxu0
        %v868 = vadd.f32 0.0, %v867
        %v869 = vpop.f32.mrf.mxu0
        %870 = vmatprep.mubr.bf16.mxu0 %v709
        %871 = vmatmul.mubr.bf16.gmra.mxu0 %v707
        %v872 = vpop.f32.mrf.mxu0
        %v873 = vadd.f32 0.0, %v872
        %v874 = vpop.f32.mrf.mxu0
        %v875 = vpop.f32.mrf.mxu0
        %v876 = vadd.f32 0.0, %v875
        %v877 = vpop.f32.mrf.mxu0
        %878 = vdwg.mxu0
        %v879 = vadd.f32 %v547, %v849
        %v880 = vadd.f32 %v550, %v852
        %v881 = vadd.f32 %v555, %v857
        %v882 = vadd.f32 %v558, %v860
        %v883 = vadd.f32 %v563, %v865
        %v884 = vadd.f32 %v566, %v868
        %v885 = vadd.f32 %v571, %v873
        %v886 = vadd.f32 %v574, %v876
        %v887 = vld [vmem:[#allocation2 + $0x4] sm:$0xc]
        %v888 = vld [vmem:[#allocation2 + $0x24] sm:$0x3]
        %v889 = vld [vmem:[#allocation2 + $0x4] sm:$0x8]
        %v890 = vld [vmem:[#allocation2 + $0x24] sm:$0xf]
        %v893 = vunpack.c.l.b16 %v887
        %v894 = vunpack.c.l.b16 %v888
        %v895 = vpack.c.b16 %v604, %v893
        %v896 = vpack.c.b16 %v894, %v894
        %v899 = vunpack.c.l.b16 %v889
        %v900 = vunpack.c.l.b16 %v890
        %v901 = vpack.c.b16 %v604, %v899
        %v902 = vpack.c.b16 %v900, %v900
        %v904 = vshrl.u32 %v901, 16
        %v906 = vrot.slane %v904, 1
        %v907 = vshll.u32 %v901, 16
        %v909 = vrot.slane %v907, 2
        %v910 = vor.u32 %v906, %v909
        %v911 = vrot.slane %v627, 1
        %v912 = vrot.slane %v630, 2
        %v913 = vor.u32 %v911, %v912
        %v914 = vsel %vm329, %v910, %v913
        %v915 = vrot.slane %v636, 1
        %v916 = vrot.slane %v639, 2
        %v917 = vor.u32 %v915, %v916
        %v918 = vsel %vm329, %v913, %v917
        %v919 = vrot.slane %v645, 1
        %v920 = vrot.slane %v648, 2
        %v921 = vor.u32 %v919, %v920
        %v922 = vsel %vm329, %v917, %v921
        %v924 = vshrl.u32 %v902, 16
        %v926 = vrot.slane %v924, 1
        %v927 = vshll.u32 %v902, 16
        %v929 = vrot.slane %v927, 2
        %v930 = vor.u32 %v926, %v929
        %v931 = vsel %vm329, %v921, %v930
        %s932 = scalar_lea.vmem %s1, 256
        %v933 = vld [vmem:[%s932] sm:$0xf]
        %v934 = vld [vmem:[%s932 + $0x4] sm:$0xf]
        %v935 = vld [vmem:[%s932 + $0x8] sm:$0xf]
        %v936 = vld [vmem:[%s932 + $0xc] sm:$0xf]
        %v937 = vld [vmem:[%s932 + $0x10] sm:$0xf]
        %v938 = vld [vmem:[%s932 + $0x14] sm:$0xf]
        %v939 = vld [vmem:[%s932 + $0x18] sm:$0xf]
        %v940 = vld [vmem:[%s932 + $0x1c] sm:$0xf]
        %v941 = vld [vmem:[%s932 + $0x20] sm:$0xf]
        %v942 = vld [vmem:[%s932 + $0x24] sm:$0xf]
        %v943 = vld [vmem:[%s932 + $0x28] sm:$0xf]
        %v944 = vld [vmem:[%s932 + $0x2c] sm:$0xf]
        %v945 = vld [vmem:[%s932 + $0x30] sm:$0xf]
        %v946 = vld [vmem:[%s932 + $0x34] sm:$0xf]
        %v947 = vld [vmem:[%s932 + $0x38] sm:$0xf]
        %v948 = vld [vmem:[%s932 + $0x3c] sm:$0xf]
        %v949 = vld [vmem:[%s932 + $0x40] sm:$0xf]
        %v950 = vld [vmem:[%s932 + $0x44] sm:$0xf]
        %v951 = vld [vmem:[%s932 + $0x48] sm:$0xf]
        %v952 = vld [vmem:[%s932 + $0x4c] sm:$0xf]
        %v953 = vld [vmem:[%s932 + $0x50] sm:$0xf]
        %v954 = vld [vmem:[%s932 + $0x54] sm:$0xf]
        %v955 = vld [vmem:[%s932 + $0x58] sm:$0xf]
        %v956 = vld [vmem:[%s932 + $0x5c] sm:$0xf]
        %v957 = vld [vmem:[%s932 + $0x60] sm:$0xf]
        %v958 = vld [vmem:[%s932 + $0x64] sm:$0xf]
        %v959 = vld [vmem:[%s932 + $0x68] sm:$0xf]
        %v960 = vld [vmem:[%s932 + $0x6c] sm:$0xf]
        %v961 = vld [vmem:[%s932 + $0x70] sm:$0xf]
        %v962 = vld [vmem:[%s932 + $0x74] sm:$0xf]
        %v963 = vld [vmem:[%s932 + $0x78] sm:$0xf]
        %v964 = vld [vmem:[%s932 + $0x7c] sm:$0xf]
        %vm965 = vcmask 1045504
        %v966 = vrot.slane %v895, 2
        %v967 = vrot.slane %v613, 2
        %v968 = vsel %vm965, %v966, %v967
        %v969 = vrot.slane %v914, 2
        %v970 = vrot.slane %v918, 2
        %v971 = vsel %vm965, %v969, %v970
        %v972 = vrot.slane %v614, 2
        %v973 = vsel %vm965, %v967, %v972
        %v974 = vrot.slane %v922, 2
        %v975 = vsel %vm965, %v970, %v974
        %v976 = vrot.slane %v615, 2
        %v977 = vsel %vm965, %v972, %v976
        %v978 = vrot.slane %v931, 2
        %v979 = vsel %vm965, %v974, %v978
        %v980 = vrot.slane %v896, 2
        %v981 = vsel %vm965, %v976, %v980
        %v982 = vrot.slane %v930, 2
        %v983 = vsel %vm965, %v978, %v982
        %v1024 = vunpack.c.l.b16 %v933
        %v1025 = vunpack.c.l.b16 %v934
        %v1026 = vunpack.c.l.b16 %v935
        %v1027 = vunpack.c.l.b16 %v936
        %v1028 = vunpack.c.l.b16 %v937
        %v1029 = vunpack.c.l.b16 %v938
        %v1030 = vunpack.c.l.b16 %v939
        %v1031 = vunpack.c.l.b16 %v940
        %v1032 = vunpack.c.l.b16 %v941
        %v1033 = vunpack.c.l.b16 %v942
        %v1034 = vunpack.c.l.b16 %v943
        %v1035 = vunpack.c.l.b16 %v944
        %v1036 = vunpack.c.l.b16 %v945
        %v1037 = vunpack.c.l.b16 %v946
        %v1038 = vunpack.c.l.b16 %v947
        %v1039 = vunpack.c.l.b16 %v948
        %v1040 = vunpack.c.l.b16 %v949
        %v1041 = vunpack.c.l.b16 %v950
        %v1042 = vunpack.c.l.b16 %v951
        %v1043 = vunpack.c.l.b16 %v952
        %v1044 = vunpack.c.l.b16 %v953
        %v1045 = vunpack.c.l.b16 %v954
        %v1046 = vunpack.c.l.b16 %v955
        %v1047 = vunpack.c.l.b16 %v956
        %v1048 = vunpack.c.l.b16 %v957
        %v1049 = vunpack.c.l.b16 %v958
        %v1050 = vunpack.c.l.b16 %v959
        %v1051 = vunpack.c.l.b16 %v960
        %v1052 = vunpack.c.l.b16 %v961
        %v1053 = vunpack.c.l.b16 %v962
        %v1054 = vunpack.c.l.b16 %v963
        %v1055 = vunpack.c.l.b16 %v964
        %v1056 = vpack.c.b16 %v1025, %v1024
        %v1057 = vpack.c.b16 %v1027, %v1026
        %v1058 = vpack.c.b16 %v1029, %v1028
        %v1059 = vpack.c.b16 %v1031, %v1030
        %v1060 = vpack.c.b16 %v1033, %v1032
        %v1061 = vpack.c.b16 %v1035, %v1034
        %v1062 = vpack.c.b16 %v1037, %v1036
        %v1063 = vpack.c.b16 %v1039, %v1038
        %v1064 = vpack.c.b16 %v1041, %v1040
        %v1065 = vpack.c.b16 %v1043, %v1042
        %v1066 = vpack.c.b16 %v1045, %v1044
        %v1067 = vpack.c.b16 %v1047, %v1046
        %v1068 = vpack.c.b16 %v1049, %v1048
        %v1069 = vpack.c.b16 %v1051, %v1050
        %v1070 = vpack.c.b16 %v1053, %v1052
        %v1071 = vpack.c.b16 %v1055, %v1054
        %1088 = vmatprep.subr.bf16.mxu0 0
        %1089 = vmatpush1.bf16.msra.mxu0 %v1063
        %1090 = vmatprep.subr.bf16.mxu0 0
        %1091 = vmatpush1.bf16.msra.mxu0 %v1062
        %1092 = vmatprep.subr.bf16.mxu0 0
        %1093 = vmatpush1.bf16.msra.mxu0 %v1061
        %1094 = vmatprep.subr.bf16.mxu0 0
        %1095 = vmatpush1.bf16.msra.mxu0 %v1060
        %1096 = vmatprep.subr.bf16.mxu0 0
        %1097 = vmatpush1.bf16.msra.mxu0 %v1059
        %1098 = vmatprep.subr.bf16.mxu0 0
        %1099 = vmatpush1.bf16.msra.mxu0 %v1058
        %1100 = vmatprep.subr.bf16.mxu0 0
        %1101 = vmatpush1.bf16.msra.mxu0 %v1057
        %1102 = vmatprep.subr.bf16.mxu0 0
        %1103 = vmatpush1.bf16.msra.mxu0 %v1056
        %1104 = vmatprep.subr.bf16.mxu0 0
        %1105 = vmatpush2.bf16.msra.mxu0 %v1071
        %1106 = vmatprep.subr.bf16.mxu0 0
        %1107 = vmatpush2.bf16.msra.mxu0 %v1070
        %1108 = vmatprep.subr.bf16.mxu0 0
        %1109 = vmatpush2.bf16.msra.mxu0 %v1069
        %1110 = vmatprep.subr.bf16.mxu0 0
        %1111 = vmatpush2.bf16.msra.mxu0 %v1068
        %1112 = vmatprep.subr.bf16.mxu0 0
        %1113 = vmatpush2.bf16.msra.mxu0 %v1067
        %1114 = vmatprep.subr.bf16.mxu0 0
        %1115 = vmatpush2.bf16.msra.mxu0 %v1066
        %1116 = vmatprep.subr.bf16.mxu0 0
        %1117 = vmatpush2.bf16.msra.mxu0 %v1065
        %1118 = vmatprep.subr.bf16.mxu0 0
        %1119 = vmatpush2.bf16.msra.mxu0 %v1064
        %1120 = vmatprep.mubr.bf16.mxu0 %v971
        %1121 = vmatmul.mubr.bf16.gmra.mxu0 %v968
        %v1122 = vpop.f32.mrf.mxu0
        %v1123 = vadd.f32 0.0, %v1122
        %v1124 = vpop.f32.mrf.mxu0
        %v1125 = vpop.f32.mrf.mxu0
        %v1126 = vadd.f32 0.0, %v1125
        %v1127 = vpop.f32.mrf.mxu0
        %1128 = vmatprep.mubr.bf16.mxu0 %v975
        %1129 = vmatmul.mubr.bf16.gmra.mxu0 %v973
        %v1130 = vpop.f32.mrf.mxu0
        %v1131 = vadd.f32 0.0, %v1130
        %v1132 = vpop.f32.mrf.mxu0
        %v1133 = vpop.f32.mrf.mxu0
        %v1134 = vadd.f32 0.0, %v1133
        %v1135 = vpop.f32.mrf.mxu0
        %1136 = vmatprep.mubr.bf16.mxu0 %v979
        %1137 = vmatmul.mubr.bf16.gmra.mxu0 %v977
        %v1138 = vpop.f32.mrf.mxu0
        %v1139 = vadd.f32 0.0, %v1138
        %v1140 = vpop.f32.mrf.mxu0
        %v1141 = vpop.f32.mrf.mxu0
        %v1142 = vadd.f32 0.0, %v1141
        %v1143 = vpop.f32.mrf.mxu0
        %1144 = vmatprep.mubr.bf16.mxu0 %v983
        %1145 = vmatmul.mubr.bf16.gmra.mxu0 %v981
        %v1146 = vpop.f32.mrf.mxu0
        %v1147 = vadd.f32 0.0, %v1146
        %v1148 = vpop.f32.mrf.mxu0
        %v1149 = vpop.f32.mrf.mxu0
        %v1150 = vadd.f32 0.0, %v1149
        %v1151 = vpop.f32.mrf.mxu0
        %1152 = vdwg.mxu0
        %v1153 = vadd.f32 %v879, %v1123
        %v1154 = vadd.f32 %v880, %v1126
        %v1155 = vadd.f32 %v881, %v1131
        %v1156 = vadd.f32 %v882, %v1134
        %v1157 = vadd.f32 %v883, %v1139
        %v1158 = vadd.f32 %v884, %v1142
        %v1159 = vadd.f32 %v885, %v1147
        %v1160 = vadd.f32 %v886, %v1150
        %v1161 = vpack.c.bf16 %v1154, %v1153
        %v1162 = vpack.c.bf16 %v1156, %v1155
        %v1163 = vpack.c.bf16 %v1158, %v1157
        %v1164 = vpack.c.bf16 %v1160, %v1159
        %v1169 = vunpack.c.l.b16 %v1161
        %v1170 = vunpack.c.h.b16 %v1161
        %v1171 = vunpack.c.l.b16 %v1162
        %v1172 = vunpack.c.h.b16 %v1162
        %v1173 = vunpack.c.l.b16 %v1163
        %v1174 = vunpack.c.h.b16 %v1163
        %v1175 = vunpack.c.l.b16 %v1164
        %v1176 = vunpack.c.h.b16 %v1164
        %v1177 = vpack.c.b16 %v1169, %v1169
        %v1178 = vpack.c.b16 %v1170, %v1170
        %v1179 = vpack.c.b16 %v1171, %v1171
        %v1180 = vpack.c.b16 %v1172, %v1172
        %v1181 = vpack.c.b16 %v1173, %v1173
        %v1182 = vpack.c.b16 %v1174, %v1174
        %v1183 = vpack.c.b16 %v1175, %v1175
        %v1184 = vpack.c.b16 %v1176, %v1176
        %1193 = vst [vmem:[%s173] sm:$0xf] %v1177
        %1194 = vst [vmem:[%s173 + $0x4] sm:$0xf] %v1178
        %1195 = vst [vmem:[%s173 + $0x8] sm:$0xf] %v1179
        %1196 = vst [vmem:[%s173 + $0xc] sm:$0xf] %v1180
        %1197 = vst [vmem:[%s173 + $0x10] sm:$0xf] %v1181
        %1198 = vst [vmem:[%s173 + $0x14] sm:$0xf] %v1182
        %1199 = vst [vmem:[%s173 + $0x18] sm:$0xf] %v1183
        %1200 = vst [vmem:[%s173 + $0x1c] sm:$0xf] %v1184
        %s1201 = sand.u32 %s104, 1
        %s1202 = sand.u32 %s104, 1
        %s1203 = smul.addr %s1202, 32
        %s1204 = scalar_lea.vmem [#allocation3], %s1203
        // Predicated region
        $region33: #{residual_block1d_forward.8} parent=31 // pred_check
          %p1205 = pneg %p114
        $region34: #{residual_block1d_forward.8} parent=31 // pred_check_branch
          %1207 = sbr.rel (%p1205) target = $region36
        $region35: #{residual_block1d_forward.8} parent=31 // pred_region
          %s1208 = smul.u32 8, %s19
          %s1209 = ssub.s32 7, %s1208
          %s1210 = smul.u32 64, %s1209
          %p1211 = scmp.ne.s32.totalorder 0, %s1210
          %s1212 = smul.addr %s18, 7
          %s1213 = sadd.s32 %s1208, %s1212
          %s1214 = smul.addr %s1213, 4
          %s1215 = scalar_lea.vmem %s3, %s1214
          // Predicated region
          $region37: #{residual_block1d_forward.8} parent=35 // pred_check
            %p1216 = pneg %p1211
          $region38: #{residual_block1d_forward.8} parent=35 // pred_check_branch
            %1218 = sbr.rel (%p1216) target = $region40
          $region39: #{residual_block1d_forward.8} parent=35 // pred_region
            // Predicated region
            $region41: #{residual_block1d_forward.8} parent=39 // pred_check
              _
            $region42: #{residual_block1d_forward.8} parent=39 // pred_check_branch
              %1220 = sbr.rel target = $region44
            $region43: #{residual_block1d_forward.8} parent=39 // pred_region
              // Predicated region
              $region63: #{residual_block1d_forward.8} parent=43 // pred_check
                _
              $region64: #{residual_block1d_forward.8} parent=43 // pred_check_branch
                %1283 = sbr.rel (0) target = $region66
              $region65: #{residual_block1d_forward.8} parent=43 // pred_region
                %s1285 = ssub.s32 16, 1
                %s1286 = sdiv.u32.pop %s1209, 7
                %s1287 = srem.u32.pop %s1209, 7
                // While loop
                $region67: #{residual_block1d_forward.8} parent=65 // loop_pre_header
                  _
                $region68: #{residual_block1d_forward.8} parent=65 // loop_header
                  %s1289 = sphi 0, %s1291
                  %p1290 = scmp.ge.s32.totalorder %s1289, %s1286
                  %s1294 = sphi 0, %s1313
                  %s1295 = sphi %s1204, %s1316
                  %s1296 = sphi %s1215, %s1317
                $region69: #{residual_block1d_forward.8} parent=65 // loop_header_branch
                  %1293 = sbr.rel (%p1290) target = $region73
                $region70: #{residual_block1d_forward.8} parent=65 // loop_body
                  %v1297 = vld [vmem:[%s1295] sm:%s1285]
                  %1298 = vst [vmem:[%s1296] sm:%s1285] %v1297
                  %v1299 = vld [vmem:[%s1295 + $0x4] sm:%s1285]
                  %1300 = vst [vmem:[%s1296 + $0x4] sm:%s1285] %v1299
                  %v1301 = vld [vmem:[%s1295 + $0x8] sm:%s1285]
                  %1302 = vst [vmem:[%s1296 + $0x8] sm:%s1285] %v1301
                  %v1303 = vld [vmem:[%s1295 + $0xc] sm:%s1285]
                  %1304 = vst [vmem:[%s1296 + $0xc] sm:%s1285] %v1303
                  %v1305 = vld [vmem:[%s1295 + $0x10] sm:%s1285]
                  %1306 = vst [vmem:[%s1296 + $0x10] sm:%s1285] %v1305
                  %v1307 = vld [vmem:[%s1295 + $0x14] sm:%s1285]
                  %1308 = vst [vmem:[%s1296 + $0x14] sm:%s1285] %v1307
                  %v1309 = vld [vmem:[%s1295 + $0x18] sm:%s1285]
                  %1310 = vst [vmem:[%s1296 + $0x18] sm:%s1285] %v1309
                  %s1311 = sadd.s32 1, %s1294
                  %p1312 = scmp.ge.s32.totalorder %s1311, %s1286
                  %s1313 = scalar_select %p1312, 0, %s1311
                  %s1314 = smul.u32 %s1313, 28
                  %s1315 = smul.u32 %s1313, 28
                  %s1316 = scalar_lea.vmem %s1204, %s1314 [#allocation3]
                  %s1317 = scalar_lea.vmem %s1215, %s1315
                $region71: #{residual_block1d_forward.8} parent=65 // loop_footer
                  %s1291 = sadd.s32 %s1289, 1
                $region72: #{residual_block1d_forward.8} parent=65 // loop_footer_branch
                  %1288 = sbr.rel target = $region68
                $region73: #{residual_block1d_forward.8} parent=65 // loop_exit
                  _
                %s1318 = sdiv.u32.pop %s1209, 7
                %s1319 = srem.u32.pop %s1209, 7
                %s1320 = smul.u32 %s1318, 7
                %s1321 = smul.u32 4, %s1320
                %s1322 = scalar_lea.vmem %s1204, %s1321 [#allocation3]
                %s1323 = smul.u32 4, %s1320
                %s1324 = scalar_lea.vmem %s1215, %s1323
                // While loop
                $region74: #{residual_block1d_forward.8} parent=65 // loop_pre_header
                  _
                $region75: #{residual_block1d_forward.8} parent=65 // loop_header
                  %s1326 = sphi 0, %s1328
                  %p1327 = scmp.ge.s32.totalorder %s1326, %s1319
                  %s1331 = sphi 0, %s1338
                  %s1332 = sphi %s1322, %s1341
                  %s1333 = sphi %s1324, %s1342
                $region76: #{residual_block1d_forward.8} parent=65 // loop_header_branch
                  %1330 = sbr.rel (%p1327) target = $region80
                $region77: #{residual_block1d_forward.8} parent=65 // loop_body
                  %v1334 = vld [vmem:[%s1332] sm:%s1285]
                  %1335 = vst [vmem:[%s1333] sm:%s1285] %v1334
                  %s1336 = sadd.s32 1, %s1331
                  %p1337 = scmp.ge.s32.totalorder %s1336, %s1319
                  %s1338 = scalar_select %p1337, 0, %s1336
                  %s1339 = smul.u32 %s1338, 4
                  %s1340 = smul.u32 %s1338, 4
                  %s1341 = scalar_lea.vmem %s1322, %s1339 [#allocation3]
                  %s1342 = scalar_lea.vmem %s1324, %s1340
                $region78: #{residual_block1d_forward.8} parent=65 // loop_footer
                  %s1328 = sadd.s32 %s1326, 1
                $region79: #{residual_block1d_forward.8} parent=65 // loop_footer_branch
                  %1325 = sbr.rel target = $region75
                $region80: #{residual_block1d_forward.8} parent=65 // loop_exit
                  _
              $region66: #{residual_block1d_forward.8} parent=43 // pred_fallthru
                _
            $region44: #{residual_block1d_forward.8} parent=39 // pred_fallthru
              _
            // Predicated region
            $region45: #{residual_block1d_forward.8} parent=39 // pred_check
              _
            $region46: #{residual_block1d_forward.8} parent=39 // pred_check_branch
              %1222 = sbr.rel (0) target = $region48
            $region47: #{residual_block1d_forward.8} parent=39 // pred_region
              %s1224 = ssub.s32 16, 1
              %s1225 = sdiv.u32.pop %s1209, 7
              %s1226 = srem.u32.pop %s1209, 7
              // While loop
              $region49: #{residual_block1d_forward.8} parent=47 // loop_pre_header
                _
              $region50: #{residual_block1d_forward.8} parent=47 // loop_header
                %s1228 = sphi 0, %s1230
                %p1229 = scmp.ge.s32.totalorder %s1228, %s1225
                %s1233 = sphi 0, %s1252
                %s1234 = sphi %s1204, %s1255
                %s1235 = sphi %s1215, %s1256
              $region51: #{residual_block1d_forward.8} parent=47 // loop_header_branch
                %1232 = sbr.rel (%p1229) target = $region55
              $region52: #{residual_block1d_forward.8} parent=47 // loop_body
                %v1236 = vld [vmem:[%s1234] sm:%s1224]
                %1237 = vst [vmem:[%s1235] sm:%s1224] %v1236
                %v1238 = vld [vmem:[%s1234 + $0x4] sm:%s1224]
                %1239 = vst [vmem:[%s1235 + $0x4] sm:%s1224] %v1238
                %v1240 = vld [vmem:[%s1234 + $0x8] sm:%s1224]
                %1241 = vst [vmem:[%s1235 + $0x8] sm:%s1224] %v1240
                %v1242 = vld [vmem:[%s1234 + $0xc] sm:%s1224]
                %1243 = vst [vmem:[%s1235 + $0xc] sm:%s1224] %v1242
                %v1244 = vld [vmem:[%s1234 + $0x10] sm:%s1224]
                %1245 = vst [vmem:[%s1235 + $0x10] sm:%s1224] %v1244
                %v1246 = vld [vmem:[%s1234 + $0x14] sm:%s1224]
                %1247 = vst [vmem:[%s1235 + $0x14] sm:%s1224] %v1246
                %v1248 = vld [vmem:[%s1234 + $0x18] sm:%s1224]
                %1249 = vst [vmem:[%s1235 + $0x18] sm:%s1224] %v1248
                %s1250 = sadd.s32 1, %s1233
                %p1251 = scmp.ge.s32.totalorder %s1250, %s1225
                %s1252 = scalar_select %p1251, 0, %s1250
                %s1253 = smul.u32 %s1252, 28
                %s1254 = smul.u32 %s1252, 28
                %s1255 = scalar_lea.vmem %s1204, %s1253 [#allocation3]
                %s1256 = scalar_lea.vmem %s1215, %s1254
              $region53: #{residual_block1d_forward.8} parent=47 // loop_footer
                %s1230 = sadd.s32 %s1228, 1
              $region54: #{residual_block1d_forward.8} parent=47 // loop_footer_branch
                %1227 = sbr.rel target = $region50
              $region55: #{residual_block1d_forward.8} parent=47 // loop_exit
                _
              %s1257 = sdiv.u32.pop %s1209, 7
              %s1258 = srem.u32.pop %s1209, 7
              %s1259 = smul.u32 %s1257, 7
              %s1260 = smul.u32 4, %s1259
              %s1261 = scalar_lea.vmem %s1204, %s1260 [#allocation3]
              %s1262 = smul.u32 4, %s1259
              %s1263 = scalar_lea.vmem %s1215, %s1262
              // While loop
              $region56: #{residual_block1d_forward.8} parent=47 // loop_pre_header
                _
              $region57: #{residual_block1d_forward.8} parent=47 // loop_header
                %s1265 = sphi 0, %s1267
                %p1266 = scmp.ge.s32.totalorder %s1265, %s1258
                %s1270 = sphi 0, %s1277
                %s1271 = sphi %s1261, %s1280
                %s1272 = sphi %s1263, %s1281
              $region58: #{residual_block1d_forward.8} parent=47 // loop_header_branch
                %1269 = sbr.rel (%p1266) target = $region62
              $region59: #{residual_block1d_forward.8} parent=47 // loop_body
                %v1273 = vld [vmem:[%s1271] sm:%s1224]
                %1274 = vst [vmem:[%s1272] sm:%s1224] %v1273
                %s1275 = sadd.s32 1, %s1270
                %p1276 = scmp.ge.s32.totalorder %s1275, %s1258
                %s1277 = scalar_select %p1276, 0, %s1275
                %s1278 = smul.u32 %s1277, 4
                %s1279 = smul.u32 %s1277, 4
                %s1280 = scalar_lea.vmem %s1261, %s1278 [#allocation3]
                %s1281 = scalar_lea.vmem %s1263, %s1279
              $region60: #{residual_block1d_forward.8} parent=47 // loop_footer
                %s1267 = sadd.s32 %s1265, 1
              $region61: #{residual_block1d_forward.8} parent=47 // loop_footer_branch
                %1264 = sbr.rel target = $region57
              $region62: #{residual_block1d_forward.8} parent=47 // loop_exit
                _
            $region48: #{residual_block1d_forward.8} parent=39 // pred_fallthru
              _
          $region40: #{residual_block1d_forward.8} parent=35 // pred_fallthru
            _
          %1343 = vnop
        $region36: #{residual_block1d_forward.8} parent=31 // pred_fallthru
          _
      $region32: #{residual_block1d_forward.8} parent=5 // pred_fallthru
        _
      %p1344 = scmp.le.s32.totalorder 2, %s9
      // Predicated region
      $region81: #{residual_block1d_forward.8} parent=5 // pred_check
        %p1345 = pneg %p1344
      $region82: #{residual_block1d_forward.8} parent=5 // pred_check_branch
        %1347 = sbr.rel (%p1345) target = $region84
      $region83: #{residual_block1d_forward.8} parent=5 // pred_region
        %s1348 = ssub.s32 %s9, 2
        // Predicated region
        $region85: #{residual_block1d_forward.8} parent=83 // pred_check
          %p1349 = pneg %p120
        $region86: #{residual_block1d_forward.8} parent=83 // pred_check_branch
          %1351 = sbr.rel (%p1349) target = $region88
        $region87: #{residual_block1d_forward.8} parent=83 // pred_region
          %s1352 = sand.u32 %s105, 1
          %s1353 = sand.u32 %s105, 1
          %s1354 = smul.addr %s1353, 32
          %s1355 = scalar_lea.vmem [#allocation3], %s1354
        $region88: #{residual_block1d_forward.8} parent=83 // pred_fallthru
          _
      $region84: #{residual_block1d_forward.8} parent=5 // pred_fallthru
        _
    $region6: #{residual_block1d_forward.8} parent=1 // loop_footer
      %s13 = sadd.s32 1, %s9
    $region7: #{residual_block1d_forward.8} parent=1 // loop_footer_branch
      %8 = sbr.rel target = $region3
    $region8: #{residual_block1d_forward.8} parent=1 // loop_exit
      _

// kernel: residual_block1d_forward.6
$region0: #{residual_block1d_forward.6}
  #allocation0 [shape = 'u32[]', space=smem, size = 0x4, offset = 0x4, fixed_abs, tag = 'smem constant byte address 0x4 - core index']
  #allocation1 [shape = 'u32[144,128]{1,0:T(1,128)}', space=vmem, size = 0x12000, scoped, tag = 'internal scratch']
  #allocation2 [shape = 'bf16[80,128]{1,0:T(8,128)(2,1)}', space=vmem, size = 0x5000, scoped, tag = 'scratch operand']
  %s0 = inlined_call_operand.vmem [shape: bf16[2,80,128], index: 0, kind: input, shape index: {}]
  %s1 = inlined_call_operand.vmem [shape: bf16[2,256,128], index: 1, kind: input, shape index: {}]
  %s2 = inlined_call_operand.vmem [shape: f32[1,128], index: 2, kind: input, shape index: {}]
  %s3 = inlined_call_operand.vmem [shape: bf16[2,50,128], index: 3, kind: output, shape index: {}]
  %s4 = sld [smem:[#allocation0]]
  $region89: #{residual_block1d_forward.6} parent=0
    _
  %s6 = ssub.s32 1, %s4
  %s7 = scalar_select 0, %s6, %s4
  $region1: #{residual_block1d_forward.6} parent=0
    #allocation3 [shape = 'u8[32768]{0}', space=vmem, size = 0x8000, scoped, tag = 'output window, operand 0']
    loop: start=0, step=1, limit=4
    $region2: #{residual_block1d_forward.6} parent=1 // loop_pre_header
      _
    $region3: #{residual_block1d_forward.6} parent=1 // loop_header
      %s9 = sphi 0, %s13
      %p10 = scmp.ge.s32.totalorder %s9, 4
      %s16 = sphi 0, %s28
      %s17 = sphi 0, %s24
      %s18 = sphi 0, %s16
      %s19 = sphi 0, %s17
      %s20 = sphi 0, %s18
      %s21 = sphi 0, %s19
      %s31 = sphi 0, %s33
      %s34 = sphi 0, %s31
      %s35 = sphi 0, %s34
      %s51 = sphi 0, %s35
      %s55 = sphi 0, %s55
      %s57 = sphi 0, %s55
      %s58 = sphi 0, %s57
      %s72 = sphi 0, %s58
      %s76 = sphi 0, %s76
      %s78 = sphi 0, %s76
      %s79 = sphi 0, %s78
      %s93 = sphi 0, %s79
      %s101 = sphi 0, %s103
      %s104 = sphi 0, %s101
      %s105 = sphi 0, %s104
      %s121 = sphi 0, %s105
    $region4: #{residual_block1d_forward.6} parent=1 // loop_header_branch
      %12 = sbr.rel (%p10) target = $region8
    $region5: #{residual_block1d_forward.6} parent=1 // loop_body
      %s14 = ssub.s32 %s9, 1
      %s15 = ssub.s32 %s9, 2
      %s22 = sadd.s32 1, %s17
      %p23 = scmp.ge.s32.totalorder %s22, 1
      %s24 = scalar_select %p23, 0, %s22
      %s25 = sadd.s32 1, %s16
      %s26 = scalar_select %p23, %s25, %s16
      %p27 = scmp.ge.s32.totalorder %s26, 2
      %s28 = scalar_select %p27, 0, %s26
      %s29 = ssub.s32 %s16, %s28
      %p30 = scmp.eq.s32.totalorder %s29, 0
      %s32 = sadd.s32 %s31, 1
      %s33 = scalar_select %p30, %s31, %s32
      %p36 = pneg %p30
      %p37 = scmp.eq.s32.totalorder %s9, 1
      %p38 = por %p36, %p37
      %p39 = scmp.ne.s32.totalorder %s31, %s34
      %p40 = scmp.eq.s32.totalorder %s9, 0
      %p41 = por %p39, %p40
      %p42 = scmp.ne.s32.totalorder %s31, %s34
      %p43 = scmp.eq.s32.totalorder %s14, 1
      %p44 = por %p42, %p43
      %p45 = scmp.ne.s32.totalorder %s34, %s35
      %p46 = scmp.eq.s32.totalorder %s14, 0
      %p47 = por %p45, %p46
      %p48 = scmp.ne.s32.totalorder %s34, %s35
      %p49 = scmp.eq.s32.totalorder %s15, 1
      %p50 = por %p48, %p49
      %p52 = scmp.ne.s32.totalorder %s35, %s51
      %p53 = scmp.eq.s32.totalorder %s15, 0
      %p54 = por %p52, %p53
      %s56 = sadd.s32 %s55, 1
      %p59 = scmp.eq.s32.totalorder %s9, 1
      %p60 = scmp.ne.s32.totalorder %s55, %s57
      %p61 = scmp.eq.s32.totalorder %s9, 0
      %p62 = por %p60, %p61
      %p63 = scmp.ne.s32.totalorder %s55, %s57
      %p64 = scmp.eq.s32.totalorder %s14, 1
      %p65 = por %p63, %p64
      %p66 = scmp.ne.s32.totalorder %s57, %s58
      %p67 = scmp.eq.s32.totalorder %s14, 0
      %p68 = por %p66, %p67
      %p69 = scmp.ne.s32.totalorder %s57, %s58
      %p70 = scmp.eq.s32.totalorder %s15, 1
      %p71 = por %p69, %p70
      %p73 = scmp.ne.s32.totalorder %s58, %s72
      %p74 = scmp.eq.s32.totalorder %s15, 0
      %p75 = por %p73, %p74
      %s77 = sadd.s32 %s76, 1
      %p80 = scmp.eq.s32.totalorder %s9, 1
      %p81 = scmp.ne.s32.totalorder %s76, %s78
      %p82 = scmp.eq.s32.totalorder %s9, 0
      %p83 = por %p81, %p82
      %p84 = scmp.ne.s32.totalorder %s76, %s78
      %p85 = scmp.eq.s32.totalorder %s14, 1
      %p86 = por %p84, %p85
      %p87 = scmp.ne.s32.totalorder %s78, %s79
      %p88 = scmp.eq.s32.totalorder %s14, 0
      %p89 = por %p87, %p88
      %p90 = scmp.ne.s32.totalorder %s78, %s79
      %p91 = scmp.eq.s32.totalorder %s15, 1
      %p92 = por %p90, %p91
      %p94 = scmp.ne.s32.totalorder %s79, %s93
      %p95 = scmp.eq.s32.totalorder %s15, 0
      %p96 = por %p94, %p95
      %s97 = ssub.s32 %s16, %s28
      %s98 = ssub.s32 %s17, %s24
      %s99 = sor.u32 %s97, %s98
      %p100 = scmp.eq.s32.totalorder %s99, 0
      %s102 = sadd.s32 %s101, 1
      %s103 = scalar_select %p100, %s101, %s102
      %p106 = pneg %p100
      %p107 = scmp.eq.s32.totalorder %s9, 1
      %p108 = por %p106, %p107
      %p109 = scmp.ne.s32.totalorder %s101, %s104
      %p110 = scmp.eq.s32.totalorder %s9, 0
      %p111 = por %p109, %p110
      %p112 = scmp.ne.s32.totalorder %s101, %s104
      %p113 = scmp.eq.s32.totalorder %s14, 1
      %p114 = por %p112, %p113
      %p115 = scmp.ne.s32.totalorder %s104, %s105
      %p116 = scmp.eq.s32.totalorder %s14, 0
      %p117 = por %p115, %p116
      %p118 = scmp.ne.s32.totalorder %s104, %s105
      %p119 = scmp.eq.s32.totalorder %s15, 1
      %p120 = por %p118, %p119
      %p122 = scmp.ne.s32.totalorder %s105, %s121
      %p123 = scmp.eq.s32.totalorder %s15, 0
      %p124 = por %p122, %p123
      %p125 = scmp.le.s32.totalorder 1, %s9
      %p126 = scmp.lt.s32.totalorder %s9, 3
      %p127 = pnand %p125, %p126
      %p128 = pneg %p127
      // Predicated region
      $region9: #{residual_block1d_forward.6} parent=5 // pred_check
        _
      $region10: #{residual_block1d_forward.6} parent=5 // pred_check_branch
        %130 = sbr.rel (%p127) target = $region12
      $region11: #{residual_block1d_forward.6} parent=5 // pred_region
        %s131 = ssub.s32 %s9, 1
        // Predicated region
        $region13: #{residual_block1d_forward.6} parent=11 // pred_check
          %p132 = pneg %p68
        $region14: #{residual_block1d_forward.6} parent=11 // pred_check_branch
          %134 = sbr.rel (%p132) target = $region16
        $region15: #{residual_block1d_forward.6} parent=11 // pred_region
          _
        $region16: #{residual_block1d_forward.6} parent=11 // pred_fallthru
          _
        // Predicated region
        $region17: #{residual_block1d_forward.6} parent=11 // pred_check
          %p135 = pneg %p89
        $region18: #{residual_block1d_forward.6} parent=11 // pred_check_branch
          %137 = sbr.rel (%p135) target = $region20
        $region19: #{residual_block1d_forward.6} parent=11 // pred_region
          _
        $region20: #{residual_block1d_forward.6} parent=11 // pred_fallthru
          _
      $region12: #{residual_block1d_forward.6} parent=5 // pred_fallthru
        _
      %p138 = scmp.lt.s32.totalorder %s9, 2
      // Predicated region
      $region21: #{residual_block1d_forward.6} parent=5 // pred_check
        %p139 = pneg %p138
      $region22: #{residual_block1d_forward.6} parent=5 // pred_check_branch
        %141 = sbr.rel (%p139) target = $region24
      $region23: #{residual_block1d_forward.6} parent=5 // pred_region
        // Predicated region
        $region25: #{residual_block1d_forward.6} parent=23 // pred_check
          %p142 = pneg %p41
        $region26: #{residual_block1d_forward.6} parent=23 // pred_check_branch
          %144 = sbr.rel (%p142) target = $region28
        $region27: #{residual_block1d_forward.6} parent=23 // pred_region
          %p145 = scmp.lt.s32.totalorder %s16, 1
          %s146 = scalar_select %p145, %s16, 1
          %s147 = smul.addr %s146, 10
          %s148 = smul.addr %s147, 4
          %s149 = scalar_lea.vmem %s0, %s148
        $region28: #{residual_block1d_forward.6} parent=23 // pred_fallthru
          _
      $region24: #{residual_block1d_forward.6} parent=5 // pred_fallthru
        _
      %p150 = scmp.le.s32.totalorder 1, %s9
      %p151 = scmp.lt.s32.totalorder %s9, 3
      %p152 = pnand %p150, %p151
      %p153 = pneg %p152
      // Predicated region
      $region29: #{residual_block1d_forward.6} parent=5 // pred_check
        _
      $region30: #{residual_block1d_forward.6} parent=5 // pred_check_branch
        %155 = sbr.rel (%p152) target = $region32
      $region31: #{residual_block1d_forward.6} parent=5 // pred_region
        %s156 = ssub.s32 %s9, 1
        %p157 = scmp.lt.s32.totalorder %s18, 1
        %s158 = scalar_select %p157, %s18, 1
        %s159 = smul.addr %s158, 10
        %s160 = smul.addr %s159, 4
        %s161 = scalar_lea.vmem %s0, %s160
        %p162 = pneg %p47
        %p163 = pneg %p44
        %p164 = pneg %p68
        %p165 = pneg %p65
        %p166 = pneg %p89
        %p167 = pneg %p86
        %p168 = pneg %p117
        %p169 = pneg %p114
        %s170 = sand.u32 %s104, 1
        %s171 = sand.u32 %s104, 1
        %s172 = smul.addr %s171, 32
        %s173 = scalar_lea.vmem [#allocation3], %s172
        %p174 = scmp.lt.s32.totalorder %s18, 1
        %s175 = scalar_select %p174, %s18, 1
        %s176 = smul.addr %s175, 10
        %s177 = smul.addr %s176, 4
        %s178 = scalar_lea.vmem %s0, %s177
        %s179 = smul.u32 8, %s19
        %s180 = ssub.s32 7, %s179
        %s181 = smul.u32 64, %s180
        %s183 = smul.u32 %s19, 64
        %s184 = sshra.s32 %s183, 3
        %s185 = sand.u32 %s183, 7
        %s186 = smul.addr %s184, 4
        %s187 = scalar_lea.vmem %s178, %s186
        %v188 = vld [vmem:[%s187] sm:$0xf]
        %v189 = vld [vmem:[%s187 + $0x4] sm:$0xf]
        %v190 = vld [vmem:[%s187 + $0x8] sm:$0xf]
        %v191 = vld [vmem:[%s187 + $0xc] sm:$0xf]
        %v192 = vld [vmem:[%s187 + $0x10] sm:$0xf]
        %v193 = vld [vmem:[%s187 + $0x14] sm:$0xf]
        %v194 = vld [vmem:[%s187 + $0x18] sm:$0xf]
        %v195 = vld [vmem:[%s187 + $0x1c] sm:$0xf]
        %v196 = vld [vmem:[%s187 + $0x20] sm:$0xf]
        %v197 = vld [vmem:[%s187 + $0x24] sm:$0xf]
        %v198 = vunpack.c.l.bf16 %v188
        %v199 = vunpack.c.l.bf16 %v189
        %v200 = vunpack.c.l.bf16 %v190
        %v201 = vunpack.c.l.bf16 %v191
        %v202 = vunpack.c.l.bf16 %v192
        %v203 = vunpack.c.l.bf16 %v193
        %v204 = vunpack.c.l.bf16 %v194
        %v205 = vunpack.c.l.bf16 %v195
        %v206 = vunpack.c.l.bf16 %v196
        %v207 = vunpack.c.l.bf16 %v197
        %vm208 = vcmp.ge.f32.partialorder %v198, 0.0
        %vm209 = vcmp.ge.f32.partialorder %v199, 0.0
        %vm210 = vcmp.ge.f32.partialorder %v200, 0.0
        %vm211 = vcmp.ge.f32.partialorder %v201, 0.0
        %vm212 = vcmp.ge.f32.partialorder %v202, 0.0
        %vm213 = vcmp.ge.f32.partialorder %v203, 0.0
        %vm214 = vcmp.ge.f32.partialorder %v204, 0.0
        %vm215 = vcmp.ge.f32.partialorder %v205, 0.0
        %vm216 = vcmp.ge.f32.partialorder %v206, 0.0
        %vm217 = vcmp.ge.f32.partialorder %v207, 0.0
        %v218 = vmul.f32 %v198, 0.1
        %v219 = vmul.f32 %v199, 0.1
        %v220 = vmul.f32 %v200, 0.1
        %v221 = vmul.f32 %v201, 0.1
        %v222 = vmul.f32 %v202, 0.1
        %v223 = vmul.f32 %v203, 0.1
        %v224 = vmul.f32 %v204, 0.1
        %v225 = vmul.f32 %v205, 0.1
        %v226 = vmul.f32 %v206, 0.1
        %v227 = vmul.f32 %v207, 0.1
        %v228 = vsel %vm208, %v198, %v218
        %v229 = vsel %vm209, %v199, %v219
        %v230 = vsel %vm210, %v200, %v220
        %v231 = vsel %vm211, %v201, %v221
        %v232 = vsel %vm212, %v202, %v222
        %v233 = vsel %vm213, %v203, %v223
        %v234 = vsel %vm214, %v204, %v224
        %v235 = vsel %vm215, %v205, %v225
        %v236 = vsel %vm216, %v206, %v226
        %v237 = vsel %vm217, %v207, %v227
        %v238 = vpack.c.bf16 %v229, %v228
        %v239 = vpack.c.bf16 %v231, %v230
        %v240 = vpack.c.bf16 %v233, %v232
        %v241 = vpack.c.bf16 %v235, %v234
        %v242 = vpack.c.bf16 %v237, %v236
        %v248 = vunpack.c.l.b16 %v238
        %v249 = vunpack.c.h.b16 %v238
        %v250 = vunpack.c.l.b16 %v239
        %v251 = vunpack.c.h.b16 %v239
        %v252 = vunpack.c.l.b16 %v240
        %v253 = vunpack.c.h.b16 %v240
        %v254 = vunpack.c.l.b16 %v241
        %v255 = vunpack.c.h.b16 %v241
        %v256 = vunpack.c.l.b16 %v242
        %v257 = vunpack.c.h.b16 %v242
        %v258 = vpack.c.b16 %v248, %v248
        %v259 = vpack.c.b16 %v249, %v249
        %v260 = vpack.c.b16 %v250, %v250
        %v261 = vpack.c.b16 %v251, %v251
        %v262 = vpack.c.b16 %v252, %v252
        %v263 = vpack.c.b16 %v253, %v253
        %v264 = vpack.c.b16 %v254, %v254
        %v265 = vpack.c.b16 %v255, %v255
        %v266 = vpack.c.b16 %v256, %v256
        %v267 = vpack.c.b16 %v257, %v257
        %278 = vst [vmem:[#allocation2] sm:$0xf] %v258
        %279 = vst [vmem:[#allocation2 + $0x4] sm:$0xf] %v259
        %280 = vst [vmem:[#allocation2 + $0x8] sm:$0xf] %v260
        %281 = vst [vmem:[#allocation2 + $0xc] sm:$0xf] %v261
        %282 = vst [vmem:[#allocation2 + $0x10] sm:$0xf] %v262
        %283 = vst [vmem:[#allocation2 + $0x14] sm:$0xf] %v263
        %284 = vst [vmem:[#allocation2 + $0x18] sm:$0xf] %v264
        %285 = vst [vmem:[#allocation2 + $0x1c] sm:$0xf] %v265
        %286 = vst [vmem:[#allocation2 + $0x20] sm:$0xf] %v266
        %287 = vst [vmem:[#allocation2 + $0x24] sm:$0xf] %v267
        %v288 = vld [vmem:[%s2] sm:$0x1]
        %v289 = vld [vmem:[#allocation2] sm:$0xf]
        %v290 = vld [vmem:[#allocation2 + $0x4] sm:$0xf]
        %v291 = vld [vmem:[#allocation2 + $0x8] sm:$0xf]
        %v292 = vld [vmem:[#allocation2 + $0xc] sm:$0xf]
        %v293 = vld [vmem:[#allocation2 + $0x10] sm:$0xf]
        %v294 = vld [vmem:[#allocation2 + $0x14] sm:$0xf]
        %v295 = vld [vmem:[#allocation2 + $0x18] sm:$0xf]
        %v296 = vld [vmem:[#allocation2 + $0x1c] sm:$0xf]
        %v297 = vld [vmem:[#allocation2 + $0x20] sm:$0x1]
        %v306 = vunpack.c.l.b16 %v289
        %v307 = vunpack.c.l.b16 %v290
        %v308 = vunpack.c.l.b16 %v291
        %v309 = vunpack.c.l.b16 %v292
        %v310 = vunpack.c.l.b16 %v293
        %v311 = vunpack.c.l.b16 %v294
        %v312 = vunpack.c.l.b16 %v295
        %v313 = vunpack.c.l.b16 %v296
        %v314 = vpack.c.b16 %v307, %v306
        %v315 = vpack.c.b16 %v309, %v308
        %v316 = vpack.c.b16 %v311, %v310
        %v317 = vpack.c.b16 %v313, %v312
        %v323 = vunpack.c.l.b16 %v297
        %v324 = vpack.c.b16 %v323, %v323
        %vm325 = vsmask.f32 7424
        %v327 = vshrl.u32 %v314, 16
        %v329 = vshll.u32 %v314, 16
        %v331 = vrot.slane %v329, 1
        %v332 = vor.u32 %v327, %v331
        %v334 = vshll.u32 %v315, 16
        %v336 = vrot.slane %v334, 1
        %v337 = vsel %vm325, %v332, %v336
        %v338 = vshrl.u32 %v315, 16
        %v340 = vor.u32 %v338, %v336
        %v342 = vshll.u32 %v316, 16
        %v344 = vrot.slane %v342, 1
        %v345 = vsel %vm325, %v340, %v344
        %v346 = vshrl.u32 %v316, 16
        %v348 = vor.u32 %v346, %v344
        %v350 = vshll.u32 %v317, 16
        %v352 = vrot.slane %v350, 1
        %v353 = vsel %vm325, %v348, %v352
        %v354 = vshrl.u32 %v317, 16
        %v356 = vor.u32 %v354, %v352
        %v358 = vshll.u32 %v324, 16
        %v360 = vrot.slane %v358, 1
        %v361 = vsel %vm325, %v356, %v360
        %v366 = vld [vmem:[%s1] sm:$0xf]
        %v367 = vld [vmem:[%s1 + $0x4] sm:$0xf]
        %v368 = vld [vmem:[%s1 + $0x8] sm:$0xf]
        %v369 = vld [vmem:[%s1 + $0xc] sm:$0xf]
        %v370 = vld [vmem:[%s1 + $0x10] sm:$0xf]
        %v371 = vld [vmem:[%s1 + $0x14] sm:$0xf]
        %v372 = vld [vmem:[%s1 + $0x18] sm:$0xf]
        %v373 = vld [vmem:[%s1 + $0x1c] sm:$0xf]
        %v374 = vld [vmem:[%s1 + $0x20] sm:$0xf]
        %v375 = vld [vmem:[%s1 + $0x24] sm:$0xf]
        %v376 = vld [vmem:[%s1 + $0x28] sm:$0xf]
        %v377 = vld [vmem:[%s1 + $0x2c] sm:$0xf]
        %v378 = vld [vmem:[%s1 + $0x30] sm:$0xf]
        %v379 = vld [vmem:[%s1 + $0x34] sm:$0xf]
        %v380 = vld [vmem:[%s1 + $0x38] sm:$0xf]
        %v381 = vld [vmem:[%s1 + $0x3c] sm:$0xf]
        %v382 = vld [vmem:[%s1 + $0x40] sm:$0xf]
        %v383 = vld [vmem:[%s1 + $0x44] sm:$0xf]
        %v384 = vld [vmem:[%s1 + $0x48] sm:$0xf]
        %v385 = vld [vmem:[%s1 + $0x4c] sm:$0xf]
        %v386 = vld [vmem:[%s1 + $0x50] sm:$0xf]
        %v387 = vld [vmem:[%s1 + $0x54] sm:$0xf]
        %v388 = vld [vmem:[%s1 + $0x58] sm:$0xf]
        %v389 = vld [vmem:[%s1 + $0x5c] sm:$0xf]
        %v390 = vld [vmem:[%s1 + $0x60] sm:$0xf]
        %v391 = vld [vmem:[%s1 + $0x64] sm:$0xf]
        %v392 = vld [vmem:[%s1 + $0x68] sm:$0xf]
        %v393 = vld [vmem:[%s1 + $0x6c] sm:$0xf]
        %v394 = vld [vmem:[%s1 + $0x70] sm:$0xf]
        %v395 = vld [vmem:[%s1 + $0x74] sm:$0xf]
        %v396 = vld [vmem:[%s1 + $0x78] sm:$0xf]
        %v397 = vld [vmem:[%s1 + $0x7c] sm:$0xf]
        %v399 = vlaneseq
        %v400 = vshrl.u32 %v399, 7
        %v401 = vsub.s32 0, %v400
        %v402 = vrot.slane %v288, %v401
        %v436 = vunpack.c.l.b16 %v366
        %v437 = vunpack.c.l.b16 %v367
        %v438 = vunpack.c.l.b16 %v368
        %v439 = vunpack.c.l.b16 %v369
        %v440 = vunpack.c.l.b16 %v370
        %v441 = vunpack.c.l.b16 %v371
        %v442 = vunpack.c.l.b16 %v372
        %v443 = vunpack.c.l.b16 %v373
        %v444 = vunpack.c.l.b16 %v374
        %v445 = vunpack.c.l.b16 %v375
        %v446 = vunpack.c.l.b16 %v376
        %v447 = vunpack.c.l.b16 %v377
        %v448 = vunpack.c.l.b16 %v378
        %v449 = vunpack.c.l.b16 %v379
        %v450 = vunpack.c.l.b16 %v380
        %v451 = vunpack.c.l.b16 %v381
        %v452 = vunpack.c.l.b16 %v382
        %v453 = vunpack.c.l.b16 %v383
        %v454 = vunpack.c.l.b16 %v384
        %v455 = vunpack.c.l.b16 %v385
        %v456 = vunpack.c.l.b16 %v386
        %v457 = vunpack.c.l.b16 %v387
        %v458 = vunpack.c.l.b16 %v388
        %v459 = vunpack.c.l.b16 %v389
        %v460 = vunpack.c.l.b16 %v390
        %v461 = vunpack.c.l.b16 %v391
        %v462 = vunpack.c.l.b16 %v392
        %v463 = vunpack.c.l.b16 %v393
        %v464 = vunpack.c.l.b16 %v394
        %v465 = vunpack.c.l.b16 %v395
        %v466 = vunpack.c.l.b16 %v396
        %v467 = vunpack.c.l.b16 %v397
        %v468 = vpack.c.b16 %v437, %v436
        %v469 = vpack.c.b16 %v439, %v438
        %v470 = vpack.c.b16 %v441, %v440
        %v471 = vpack.c.b16 %v443, %v442
        %v472 = vpack.c.b16 %v445, %v444
        %v473 = vpack.c.b16 %v447, %v446
        %v474 = vpack.c.b16 %v449, %v448
        %v475 = vpack.c.b16 %v451, %v450
        %v476 = vpack.c.b16 %v453, %v452
        %v477 = vpack.c.b16 %v455, %v454
        %v478 = vpack.c.b16 %v457, %v456
        %v479 = vpack.c.b16 %v459, %v458
        %v480 = vpack.c.b16 %v461, %v460
        %v481 = vpack.c.b16 %v463, %v462
        %v482 = vpack.c.b16 %v465, %v464
        %v483 = vpack.c.b16 %v467, %v466
        %500 = vmatprep.subr.bf16.mxu0 0
        %501 = vmatpush1.bf16.msra.mxu0 %v475
        %502 = vmatprep.subr.bf16.mxu0 0
        %503 = vmatpush1.bf16.msra.mxu0 %v474
        %504 = vmatprep.subr.bf16.mxu0 0
        %505 = vmatpush1.bf16.msra.mxu0 %v473
        %506 = vmatprep.subr.bf16.mxu0 0
        %507 = vmatpush1.bf16.msra.mxu0 %v472
        %508 = vmatprep.subr.bf16.mxu0 0
        %509 = vmatpush1.bf16.msra.mxu0 %v471
        %510 = vmatprep.subr.bf16.mxu0 0
        %511 = vmatpush1.bf16.msra.mxu0 %v470
        %512 = vmatprep.subr.bf16.mxu0 0
        %513 = vmatpush1.bf16.msra.mxu0 %v469
        %514 = vmatprep.subr.bf16.mxu0 0
        %515 = vmatpush1.bf16.msra.mxu0 %v468
        %516 = vmatprep.subr.bf16.mxu0 0
        %517 = vmatpush2.bf16.msra.mxu0 %v483
        %518 = vmatprep.subr.bf16.mxu0 0
        %519 = vmatpush2.bf16.msra.mxu0 %v482
        %520 = vmatprep.subr.bf16.mxu0 0
        %521 = vmatpush2.bf16.msra.mxu0 %v481
        %522 = vmatprep.subr.bf16.mxu0 0
        %523 = vmatpush2.bf16.msra.mxu0 %v480
        %524 = vmatprep.subr.bf16.mxu0 0
        %525 = vmatpush2.bf16.msra.mxu0 %v479
        %526 = vmatprep.subr.bf16.mxu0 0
        %527 = vmatpush2.bf16.msra.mxu0 %v478
        %528 = vmatprep.subr.bf16.mxu0 0
        %529 = vmatpush2.bf16.msra.mxu0 %v477
        %530 = vmatprep.subr.bf16.mxu0 0
        %531 = vmatpush2.bf16.msra.mxu0 %v476
        %532 = vmatprep.mubr.bf16.mxu0 %v337
        %533 = vmatmul.mubr.bf16.gmra.mxu0 %v314
        %v534 = vpop.f32.mrf.mxu0
        %v535 = vadd.f32 %v402, %v534
        %v536 = vpop.f32.mrf.mxu0
        %v537 = vpop.f32.mrf.mxu0
        %v538 = vadd.f32 %v402, %v537
        %v539 = vpop.f32.mrf.mxu0
        %540 = vmatprep.mubr.bf16.mxu0 %v345
        %541 = vmatmul.mubr.bf16.gmra.mxu0 %v315
        %v542 = vpop.f32.mrf.mxu0
        %v543 = vadd.f32 %v402, %v542
        %v544 = vpop.f32.mrf.mxu0
        %v545 = vpop.f32.mrf.mxu0
        %v546 = vadd.f32 %v402, %v545
        %v547 = vpop.f32.mrf.mxu0
        %548 = vmatprep.mubr.bf16.mxu0 %v353
        %549 = vmatmul.mubr.bf16.gmra.mxu0 %v316
        %v550 = vpop.f32.mrf.mxu0
        %v551 = vadd.f32 %v402, %v550
        %v552 = vpop.f32.mrf.mxu0
        %v553 = vpop.f32.mrf.mxu0
        %v554 = vadd.f32 %v402, %v553
        %v555 = vpop.f32.mrf.mxu0
        %556 = vmatprep.mubr.bf16.mxu0 %v361
        %557 = vmatmul.mubr.bf16.gmra.mxu0 %v317
        %v558 = vpop.f32.mrf.mxu0
        %v559 = vadd.f32 %v402, %v558
        %v560 = vpop.f32.mrf.mxu0
        %v561 = vpop.f32.mrf.mxu0
        %v562 = vadd.f32 %v402, %v561
        %v563 = vpop.f32.mrf.mxu0
        %564 = vdwg.mxu0
        %v565 = vld [vmem:[#allocation2] sm:$0xe]
        %v566 = vld [vmem:[#allocation2 + $0x20] sm:$0x3]
        %v568 = vunpack.c.l.b16 %v565
        %v569 = vpack.c.b16 %v307, %v568
        %v571 = vunpack.c.l.b16 %v566
        %v572 = vpack.c.b16 %v571, %v571
        %v574 = vshrl.u32 %v569, 16
        %v576 = vshll.u32 %v569, 16
        %v578 = vrot.slane %v576, 1
        %v579 = vor.u32 %v574, %v578
        %v580 = vsel %vm325, %v579, %v336
        %v582 = vshll.u32 %v572, 16
        %v584 = vrot.slane %v582, 1
        %v585 = vsel %vm325, %v356, %v584
        %v586 = vshrl.u32 %v572, 16
        %v588 = vor.u32 %v586, %v584
        %s589 = scalar_lea.vmem %s1, 128
        %v590 = vld [vmem:[%s589] sm:$0xf]
        %v591 = vld [vmem:[%s589 + $0x4] sm:$0xf]
        %v592 = vld [vmem:[%s589 + $0x8] sm:$0xf]
        %v593 = vld [vmem:[%s589 + $0xc] sm:$0xf]
        %v594 = vld [vmem:[%s589 + $0x10] sm:$0xf]
        %v595 = vld [vmem:[%s589 + $0x14] sm:$0xf]
        %v596 = vld [vmem:[%s589 + $0x18] sm:$0xf]
        %v597 = vld [vmem:[%s589 + $0x1c] sm:$0xf]
        %v598 = vld [vmem:[%s589 + $0x20] sm:$0xf]
        %v599 = vld [vmem:[%s589 + $0x24] sm:$0xf]
        %v600 = vld [vmem:[%s589 + $0x28] sm:$0xf]
        %v601 = vld [vmem:[%s589 + $0x2c] sm:$0xf]
        %v602 = vld [vmem:[%s589 + $0x30] sm:$0xf]
        %v603 = vld [vmem:[%s589 + $0x34] sm:$0xf]
        %v604 = vld [vmem:[%s589 + $0x38] sm:$0xf]
        %v605 = vld [vmem:[%s589 + $0x3c] sm:$0xf]
        %v606 = vld [vmem:[%s589 + $0x40] sm:$0xf]
        %v607 = vld [vmem:[%s589 + $0x44] sm:$0xf]
        %v608 = vld [vmem:[%s589 + $0x48] sm:$0xf]
        %v609 = vld [vmem:[%s589 + $0x4c] sm:$0xf]
        %v610 = vld [vmem:[%s589 + $0x50] sm:$0xf]
        %v611 = vld [vmem:[%s589 + $0x54] sm:$0xf]
        %v612 = vld [vmem:[%s589 + $0x58] sm:$0xf]
        %v613 = vld [vmem:[%s589 + $0x5c] sm:$0xf]
        %v614 = vld [vmem:[%s589 + $0x60] sm:$0xf]
        %v615 = vld [vmem:[%s589 + $0x64] sm:$0xf]
        %v616 = vld [vmem:[%s589 + $0x68] sm:$0xf]
        %v617 = vld [vmem:[%s589 + $0x6c] sm:$0xf]
        %v618 = vld [vmem:[%s589 + $0x70] sm:$0xf]
        %v619 = vld [vmem:[%s589 + $0x74] sm:$0xf]
        %v620 = vld [vmem:[%s589 + $0x78] sm:$0xf]
        %v621 = vld [vmem:[%s589 + $0x7c] sm:$0xf]
        %vm622 = vcmask 1046528
        %v623 = vrot.slane %v569, 1
        %v624 = vrot.slane %v315, 1
        %v625 = vsel %vm622, %v623, %v624
        %v626 = vrot.slane %v580, 1
        %v627 = vrot.slane %v345, 1
        %v628 = vsel %vm622, %v626, %v627
        %v629 = vrot.slane %v316, 1
        %v630 = vsel %vm622, %v624, %v629
        %v631 = vrot.slane %v353, 1
        %v632 = vsel %vm622, %v627, %v631
        %v633 = vrot.slane %v317, 1
        %v634 = vsel %vm622, %v629, %v633
        %v635 = vrot.slane %v585, 1
        %v636 = vsel %vm622, %v631, %v635
        %v637 = vrot.slane %v324, 1
        %v638 = vsel %vm622, %v633, %v637
        %v639 = vrot.slane %v588, 1
        %v640 = vsel %vm622, %v635, %v639
        %v681 = vunpack.c.l.b16 %v590
        %v682 = vunpack.c.l.b16 %v591
        %v683 = vunpack.c.l.b16 %v592
        %v684 = vunpack.c.l.b16 %v593
        %v685 = vunpack.c.l.b16 %v594
        %v686 = vunpack.c.l.b16 %v595
        %v687 = vunpack.c.l.b16 %v596
        %v688 = vunpack.c.l.b16 %v597
        %v689 = vunpack.c.l.b16 %v598
        %v690 = vunpack.c.l.b16 %v599
        %v691 = vunpack.c.l.b16 %v600
        %v692 = vunpack.c.l.b16 %v601
        %v693 = vunpack.c.l.b16 %v602
        %v694 = vunpack.c.l.b16 %v603
        %v695 = vunpack.c.l.b16 %v604
        %v696 = vunpack.c.l.b16 %v605
        %v697 = vunpack.c.l.b16 %v606
        %v698 = vunpack.c.l.b16 %v607
        %v699 = vunpack.c.l.b16 %v608
        %v700 = vunpack.c.l.b16 %v609
        %v701 = vunpack.c.l.b16 %v610
        %v702 = vunpack.c.l.b16 %v611
        %v703 = vunpack.c.l.b16 %v612
        %v704 = vunpack.c.l.b16 %v613
        %v705 = vunpack.c.l.b16 %v614
        %v706 = vunpack.c.l.b16 %v615
        %v707 = vunpack.c.l.b16 %v616
        %v708 = vunpack.c.l.b16 %v617
        %v709 = vunpack.c.l.b16 %v618
        %v710 = vunpack.c.l.b16 %v619
        %v711 = vunpack.c.l.b16 %v620
        %v712 = vunpack.c.l.b16 %v621
        %v713 = vpack.c.b16 %v682, %v681
        %v714 = vpack.c.b16 %v684, %v683
        %v715 = vpack.c.b16 %v686, %v685
        %v716 = vpack.c.b16 %v688, %v687
        %v717 = vpack.c.b16 %v690, %v689
        %v718 = vpack.c.b16 %v692, %v691
        %v719 = vpack.c.b16 %v694, %v693
        %v720 = vpack.c.b16 %v696, %v695
        %v721 = vpack.c.b16 %v698, %v697
        %v722 = vpack.c.b16 %v700, %v699
        %v723 = vpack.c.b16 %v702, %v701
        %v724 = vpack.c.b16 %v704, %v703
        %v725 = vpack.c.b16 %v706, %v705
        %v726 = vpack.c.b16 %v708, %v707
        %v727 = vpack.c.b16 %v710, %v709
        %v728 = vpack.c.b16 %v712, %v711
        %745 = vmatprep.subr.bf16.mxu0 0
        %746 = vmatpush1.bf16.msra.mxu0 %v720
        %747 = vmatprep.subr.bf16.mxu0 0
        %748 = vmatpush1.bf16.msra.mxu0 %v719
        %749 = vmatprep.subr.bf16.mxu0 0
        %750 = vmatpush1.bf16.msra.mxu0 %v718
        %751 = vmatprep.subr.bf16.mxu0 0
        %752 = vmatpush1.bf16.msra.mxu0 %v717
        %753 = vmatprep.subr.bf16.mxu0 0
        %754 = vmatpush1.bf16.msra.mxu0 %v716
        %755 = vmatprep.subr.bf16.mxu0 0
        %756 = vmatpush1.bf16.msra.mxu0 %v715
        %757 = vmatprep.subr.bf16.mxu0 0
        %758 = vmatpush1.bf16.msra.mxu0 %v714
        %759 = vmatprep.subr.bf16.mxu0 0
        %760 = vmatpush1.bf16.msra.mxu0 %v713
        %761 = vmatprep.subr.bf16.mxu0 0
        %762 = vmatpush2.bf16.msra.mxu0 %v728
        %763 = vmatprep.subr.bf16.mxu0 0
        %764 = vmatpush2.bf16.msra.mxu0 %v727
        %765 = vmatprep.subr.bf16.mxu0 0
        %766 = vmatpush2.bf16.msra.mxu0 %v726
        %767 = vmatprep.subr.bf16.mxu0 0
        %768 = vmatpush2.bf16.msra.mxu0 %v725
        %769 = vmatprep.subr.bf16.mxu0 0
        %770 = vmatpush2.bf16.msra.mxu0 %v724
        %771 = vmatprep.subr.bf16.mxu0 0
        %772 = vmatpush2.bf16.msra.mxu0 %v723
        %773 = vmatprep.subr.bf16.mxu0 0
        %774 = vmatpush2.bf16.msra.mxu0 %v722
        %775 = vmatprep.subr.bf16.mxu0 0
        %776 = vmatpush2.bf16.msra.mxu0 %v721
        %777 = vmatprep.mubr.bf16.mxu0 %v628
        %778 = vmatmul.mubr.bf16.gmra.mxu0 %v625
        %v779 = vpop.f32.mrf.mxu0
        %v780 = vadd.f32 0.0, %v779
        %v781 = vpop.f32.mrf.mxu0
        %v782 = vpop.f32.mrf.mxu0
        %v783 = vadd.f32 0.0, %v782
        %v784 = vpop.f32.mrf.mxu0
        %785 = vmatprep.mubr.bf16.mxu0 %v632
        %786 = vmatmul.mubr.bf16.gmra.mxu0 %v630
        %v787 = vpop.f32.mrf.mxu0
        %v788 = vadd.f32 0.0, %v787
        %v789 = vpop.f32.mrf.mxu0
        %v790 = vpop.f32.mrf.mxu0
        %v791 = vadd.f32 0.0, %v790
        %v792 = vpop.f32.mrf.mxu0
        %793 = vmatprep.mubr.bf16.mxu0 %v636
        %794 = vmatmul.mubr.bf16.gmra.mxu0 %v634
        %v795 = vpop.f32.mrf.mxu0
        %v796 = vadd.f32 0.0, %v795
        %v797 = vpop.f32.mrf.mxu0
        %v798 = vpop.f32.mrf.mxu0
        %v799 = vadd.f32 0.0, %v798
        %v800 = vpop.f32.mrf.mxu0
        %801 = vmatprep.mubr.bf16.mxu0 %v640
        %802 = vmatmul.mubr.bf16.gmra.mxu0 %v638
        %v803 = vpop.f32.mrf.mxu0
        %v804 = vadd.f32 0.0, %v803
        %v805 = vpop.f32.mrf.mxu0
        %v806 = vpop.f32.mrf.mxu0
        %v807 = vadd.f32 0.0, %v806
        %v808 = vpop.f32.mrf.mxu0
        %809 = vdwg.mxu0
        %v810 = vadd.f32 %v535, %v780
        %v811 = vadd.f32 %v538, %v783
        %v812 = vadd.f32 %v543, %v788
        %v813 = vadd.f32 %v546, %v791
        %v814 = vadd.f32 %v551, %v796
        %v815 = vadd.f32 %v554, %v799
        %v816 = vadd.f32 %v559, %v804
        %v817 = vadd.f32 %v562, %v807
        %v818 = vpack.c.bf16 %v811, %v810
        %v819 = vpack.c.bf16 %v813, %v812
        %v820 = vpack.c.bf16 %v815, %v814
        %v821 = vpack.c.bf16 %v817, %v816
        %v826 = vunpack.c.l.b16 %v818
        %v827 = vunpack.c.h.b16 %v818
        %v828 = vunpack.c.l.b16 %v819
        %v829 = vunpack.c.h.b16 %v819
        %v830 = vunpack.c.l.b16 %v820
        %v831 = vunpack.c.h.b16 %v820
        %v832 = vunpack.c.l.b16 %v821
        %v833 = vunpack.c.h.b16 %v821
        %v834 = vpack.c.b16 %v826, %v826
        %v835 = vpack.c.b16 %v827, %v827
        %v836 = vpack.c.b16 %v828, %v828
        %v837 = vpack.c.b16 %v829, %v829
        %v838 = vpack.c.b16 %v830, %v830
        %v839 = vpack.c.b16 %v831, %v831
        %v840 = vpack.c.b16 %v832, %v832
        %v841 = vpack.c.b16 %v833, %v833
        %850 = vst [vmem:[%s173] sm:$0xf] %v834
        %851 = vst [vmem:[%s173 + $0x4] sm:$0xf] %v835
        %852 = vst [vmem:[%s173 + $0x8] sm:$0xf] %v836
        %853 = vst [vmem:[%s173 + $0xc] sm:$0xf] %v837
        %854 = vst [vmem:[%s173 + $0x10] sm:$0xf] %v838
        %855 = vst [vmem:[%s173 + $0x14] sm:$0xf] %v839
        %856 = vst [vmem:[%s173 + $0x18] sm:$0xf] %v840
        %857 = vst [vmem:[%s173 + $0x1c] sm:$0xf] %v841
        %s858 = sand.u32 %s104, 1
        %s859 = sand.u32 %s104, 1
        %s860 = smul.addr %s859, 32
        %s861 = scalar_lea.vmem [#allocation3], %s860
        // Predicated region
        $region33: #{residual_block1d_forward.6} parent=31 // pred_check
          %p862 = pneg %p114
        $region34: #{residual_block1d_forward.6} parent=31 // pred_check_branch
          %864 = sbr.rel (%p862) target = $region36
        $region35: #{residual_block1d_forward.6} parent=31 // pred_region
          %s865 = smul.u32 8, %s19
          %s866 = ssub.s32 7, %s865
          %s867 = smul.u32 64, %s866
          %p868 = scmp.ne.s32.totalorder 0, %s867
          %s869 = smul.addr %s18, 7
          %s870 = sadd.s32 %s865, %s869
          %s871 = smul.addr %s870, 4
          %s872 = scalar_lea.vmem %s3, %s871
          // Predicated region
          $region37: #{residual_block1d_forward.6} parent=35 // pred_check
            %p873 = pneg %p868
          $region38: #{residual_block1d_forward.6} parent=35 // pred_check_branch
            %875 = sbr.rel (%p873) target = $region40
          $region39: #{residual_block1d_forward.6} parent=35 // pred_region
            // Predicated region
            $region41: #{residual_block1d_forward.6} parent=39 // pred_check
              _
            $region42: #{residual_block1d_forward.6} parent=39 // pred_check_branch
              %877 = sbr.rel target = $region44
            $region43: #{residual_block1d_forward.6} parent=39 // pred_region
              // Predicated region
              $region63: #{residual_block1d_forward.6} parent=43 // pred_check
                _
              $region64: #{residual_block1d_forward.6} parent=43 // pred_check_branch
                %940 = sbr.rel (0) target = $region66
              $region65: #{residual_block1d_forward.6} parent=43 // pred_region
                %s942 = ssub.s32 16, 1
                %s943 = sdiv.u32.pop %s866, 7
                %s944 = srem.u32.pop %s866, 7
                // While loop
                $region67: #{residual_block1d_forward.6} parent=65 // loop_pre_header
                  _
                $region68: #{residual_block1d_forward.6} parent=65 // loop_header
                  %s946 = sphi 0, %s948
                  %p947 = scmp.ge.s32.totalorder %s946, %s943
                  %s951 = sphi 0, %s970
                  %s952 = sphi %s861, %s973
                  %s953 = sphi %s872, %s974
                $region69: #{residual_block1d_forward.6} parent=65 // loop_header_branch
                  %950 = sbr.rel (%p947) target = $region73
                $region70: #{residual_block1d_forward.6} parent=65 // loop_body
                  %v954 = vld [vmem:[%s952] sm:%s942]
                  %955 = vst [vmem:[%s953] sm:%s942] %v954
                  %v956 = vld [vmem:[%s952 + $0x4] sm:%s942]
                  %957 = vst [vmem:[%s953 + $0x4] sm:%s942] %v956
                  %v958 = vld [vmem:[%s952 + $0x8] sm:%s942]
                  %959 = vst [vmem:[%s953 + $0x8] sm:%s942] %v958
                  %v960 = vld [vmem:[%s952 + $0xc] sm:%s942]
                  %961 = vst [vmem:[%s953 + $0xc] sm:%s942] %v960
                  %v962 = vld [vmem:[%s952 + $0x10] sm:%s942]
                  %963 = vst [vmem:[%s953 + $0x10] sm:%s942] %v962
                  %v964 = vld [vmem:[%s952 + $0x14] sm:%s942]
                  %965 = vst [vmem:[%s953 + $0x14] sm:%s942] %v964
                  %v966 = vld [vmem:[%s952 + $0x18] sm:%s942]
                  %967 = vst [vmem:[%s953 + $0x18] sm:%s942] %v966
                  %s968 = sadd.s32 1, %s951
                  %p969 = scmp.ge.s32.totalorder %s968, %s943
                  %s970 = scalar_select %p969, 0, %s968
                  %s971 = smul.u32 %s970, 28
                  %s972 = smul.u32 %s970, 28
                  %s973 = scalar_lea.vmem %s861, %s971 [#allocation3]
                  %s974 = scalar_lea.vmem %s872, %s972
                $region71: #{residual_block1d_forward.6} parent=65 // loop_footer
                  %s948 = sadd.s32 %s946, 1
                $region72: #{residual_block1d_forward.6} parent=65 // loop_footer_branch
                  %945 = sbr.rel target = $region68
                $region73: #{residual_block1d_forward.6} parent=65 // loop_exit
                  _
                %s975 = sdiv.u32.pop %s866, 7
                %s976 = srem.u32.pop %s866, 7
                %s977 = smul.u32 %s975, 7
                %s978 = smul.u32 4, %s977
                %s979 = scalar_lea.vmem %s861, %s978 [#allocation3]
                %s980 = smul.u32 4, %s977
                %s981 = scalar_lea.vmem %s872, %s980
                // While loop
                $region74: #{residual_block1d_forward.6} parent=65 // loop_pre_header
                  _
                $region75: #{residual_block1d_forward.6} parent=65 // loop_header
                  %s983 = sphi 0, %s985
                  %p984 = scmp.ge.s32.totalorder %s983, %s976
                  %s988 = sphi 0, %s995
                  %s989 = sphi %s979, %s998
                  %s990 = sphi %s981, %s999
                $region76: #{residual_block1d_forward.6} parent=65 // loop_header_branch
                  %987 = sbr.rel (%p984) target = $region80
                $region77: #{residual_block1d_forward.6} parent=65 // loop_body
                  %v991 = vld [vmem:[%s989] sm:%s942]
                  %992 = vst [vmem:[%s990] sm:%s942] %v991
                  %s993 = sadd.s32 1, %s988
                  %p994 = scmp.ge.s32.totalorder %s993, %s976
                  %s995 = scalar_select %p994, 0, %s993
                  %s996 = smul.u32 %s995, 4
                  %s997 = smul.u32 %s995, 4
                  %s998 = scalar_lea.vmem %s979, %s996 [#allocation3]
                  %s999 = scalar_lea.vmem %s981, %s997
                $region78: #{residual_block1d_forward.6} parent=65 // loop_footer
                  %s985 = sadd.s32 %s983, 1
                $region79: #{residual_block1d_forward.6} parent=65 // loop_footer_branch
                  %982 = sbr.rel target = $region75
                $region80: #{residual_block1d_forward.6} parent=65 // loop_exit
                  _
              $region66: #{residual_block1d_forward.6} parent=43 // pred_fallthru
                _
            $region44: #{residual_block1d_forward.6} parent=39 // pred_fallthru
              _
            // Predicated region
            $region45: #{residual_block1d_forward.6} parent=39 // pred_check
              _
            $region46: #{residual_block1d_forward.6} parent=39 // pred_check_branch
              %879 = sbr.rel (0) target = $region48
            $region47: #{residual_block1d_forward.6} parent=39 // pred_region
              %s881 = ssub.s32 16, 1
              %s882 = sdiv.u32.pop %s866, 7
              %s883 = srem.u32.pop %s866, 7
              // While loop
              $region49: #{residual_block1d_forward.6} parent=47 // loop_pre_header
                _
              $region50: #{residual_block1d_forward.6} parent=47 // loop_header
                %s885 = sphi 0, %s887
                %p886 = scmp.ge.s32.totalorder %s885, %s882
                %s890 = sphi 0, %s909
                %s891 = sphi %s861, %s912
                %s892 = sphi %s872, %s913
              $region51: #{residual_block1d_forward.6} parent=47 // loop_header_branch
                %889 = sbr.rel (%p886) target = $region55
              $region52: #{residual_block1d_forward.6} parent=47 // loop_body
                %v893 = vld [vmem:[%s891] sm:%s881]
                %894 = vst [vmem:[%s892] sm:%s881] %v893
                %v895 = vld [vmem:[%s891 + $0x4] sm:%s881]
                %896 = vst [vmem:[%s892 + $0x4] sm:%s881] %v895
                %v897 = vld [vmem:[%s891 + $0x8] sm:%s881]
                %898 = vst [vmem:[%s892 + $0x8] sm:%s881] %v897
                %v899 = vld [vmem:[%s891 + $0xc] sm:%s881]
                %900 = vst [vmem:[%s892 + $0xc] sm:%s881] %v899
                %v901 = vld [vmem:[%s891 + $0x10] sm:%s881]
                %902 = vst [vmem:[%s892 + $0x10] sm:%s881] %v901
                %v903 = vld [vmem:[%s891 + $0x14] sm:%s881]
                %904 = vst [vmem:[%s892 + $0x14] sm:%s881] %v903
                %v905 = vld [vmem:[%s891 + $0x18] sm:%s881]
                %906 = vst [vmem:[%s892 + $0x18] sm:%s881] %v905
                %s907 = sadd.s32 1, %s890
                %p908 = scmp.ge.s32.totalorder %s907, %s882
                %s909 = scalar_select %p908, 0, %s907
                %s910 = smul.u32 %s909, 28
                %s911 = smul.u32 %s909, 28
                %s912 = scalar_lea.vmem %s861, %s910 [#allocation3]
                %s913 = scalar_lea.vmem %s872, %s911
              $region53: #{residual_block1d_forward.6} parent=47 // loop_footer
                %s887 = sadd.s32 %s885, 1
              $region54: #{residual_block1d_forward.6} parent=47 // loop_footer_branch
                %884 = sbr.rel target = $region50
              $region55: #{residual_block1d_forward.6} parent=47 // loop_exit
                _
              %s914 = sdiv.u32.pop %s866, 7
              %s915 = srem.u32.pop %s866, 7
              %s916 = smul.u32 %s914, 7
              %s917 = smul.u32 4, %s916
              %s918 = scalar_lea.vmem %s861, %s917 [#allocation3]
              %s919 = smul.u32 4, %s916
              %s920 = scalar_lea.vmem %s872, %s919
              // While loop
              $region56: #{residual_block1d_forward.6} parent=47 // loop_pre_header
                _
              $region57: #{residual_block1d_forward.6} parent=47 // loop_header
                %s922 = sphi 0, %s924
                %p923 = scmp.ge.s32.totalorder %s922, %s915
                %s927 = sphi 0, %s934
                %s928 = sphi %s918, %s937
                %s929 = sphi %s920, %s938
              $region58: #{residual_block1d_forward.6} parent=47 // loop_header_branch
                %926 = sbr.rel (%p923) target = $region62
              $region59: #{residual_block1d_forward.6} parent=47 // loop_body
                %v930 = vld [vmem:[%s928] sm:%s881]
                %931 = vst [vmem:[%s929] sm:%s881] %v930
                %s932 = sadd.s32 1, %s927
                %p933 = scmp.ge.s32.totalorder %s932, %s915
                %s934 = scalar_select %p933, 0, %s932
                %s935 = smul.u32 %s934, 4
                %s936 = smul.u32 %s934, 4
                %s937 = scalar_lea.vmem %s918, %s935 [#allocation3]
                %s938 = scalar_lea.vmem %s920, %s936
              $region60: #{residual_block1d_forward.6} parent=47 // loop_footer
                %s924 = sadd.s32 %s922, 1
              $region61: #{residual_block1d_forward.6} parent=47 // loop_footer_branch
                %921 = sbr.rel target = $region57
              $region62: #{residual_block1d_forward.6} parent=47 // loop_exit
                _
            $region48: #{residual_block1d_forward.6} parent=39 // pred_fallthru
              _
          $region40: #{residual_block1d_forward.6} parent=35 // pred_fallthru
            _
          %1000 = vnop
        $region36: #{residual_block1d_forward.6} parent=31 // pred_fallthru
          _
      $region32: #{residual_block1d_forward.6} parent=5 // pred_fallthru
        _
      %p1001 = scmp.le.s32.totalorder 2, %s9
      // Predicated region
      $region81: #{residual_block1d_forward.6} parent=5 // pred_check
        %p1002 = pneg %p1001
      $region82: #{residual_block1d_forward.6} parent=5 // pred_check_branch
        %1004 = sbr.rel (%p1002) target = $region84
      $region83: #{residual_block1d_forward.6} parent=5 // pred_region
        %s1005 = ssub.s32 %s9, 2
        // Predicated region
        $region85: #{residual_block1d_forward.6} parent=83 // pred_check
          %p1006 = pneg %p120
        $region86: #{residual_block1d_forward.6} parent=83 // pred_check_branch
          %1008 = sbr.rel (%p1006) target = $region88
        $region87: #{residual_block1d_forward.6} parent=83 // pred_region
          %s1009 = sand.u32 %s105, 1
          %s1010 = sand.u32 %s105, 1
          %s1011 = smul.addr %s1010, 32
          %s1012 = scalar_lea.vmem [#allocation3], %s1011
        $region88: #{residual_block1d_forward.6} parent=83 // pred_fallthru
          _
      $region84: #{residual_block1d_forward.6} parent=5 // pred_fallthru
        _
    $region6: #{residual_block1d_forward.6} parent=1 // loop_footer
      %s13 = sadd.s32 1, %s9
    $region7: #{residual_block1d_forward.6} parent=1 // loop_footer_branch
      %8 = sbr.rel target = $region3
    $region8: #{residual_block1d_forward.6} parent=1 // loop_exit
      _

// kernel: residual_block1d_forward.9
$region0: #{residual_block1d_forward.9}
  #allocation0 [shape = 'u32[]', space=smem, size = 0x4, offset = 0x4, fixed_abs, tag = 'smem constant byte address 0x4 - core index']
  #allocation1 [shape = 'u32[144,128]{1,0:T(1,128)}', space=vmem, size = 0x12000, scoped, tag = 'internal scratch']
  #allocation2 [shape = 'bf16[80,128]{1,0:T(8,128)(2,1)}', space=vmem, size = 0x5000, scoped, tag = 'scratch operand']
  %s0 = inlined_call_operand.vmem [shape: bf16[2,80,128], index: 0, kind: input, shape index: {}]
  %s1 = inlined_call_operand.vmem [shape: bf16[3,256,128], index: 1, kind: input, shape index: {}]
  %s2 = inlined_call_operand.vmem [shape: f32[1,128], index: 2, kind: input, shape index: {}]
  %s3 = inlined_call_operand.vmem [shape: bf16[2,50,128], index: 3, kind: output, shape index: {}]
  %s4 = sld [smem:[#allocation0]]
  $region89: #{residual_block1d_forward.9} parent=0
    _
  %s6 = ssub.s32 1, %s4
  %s7 = scalar_select 0, %s6, %s4
  $region1: #{residual_block1d_forward.9} parent=0
    #allocation3 [shape = 'u8[32768]{0}', space=vmem, size = 0x8000, scoped, tag = 'output window, operand 0']
    loop: start=0, step=1, limit=4
    $region2: #{residual_block1d_forward.9} parent=1 // loop_pre_header
      _
    $region3: #{residual_block1d_forward.9} parent=1 // loop_header
      %s9 = sphi 0, %s13
      %p10 = scmp.ge.s32.totalorder %s9, 4
      %s16 = sphi 0, %s28
      %s17 = sphi 0, %s24
      %s18 = sphi 0, %s16
      %s19 = sphi 0, %s17
      %s20 = sphi 0, %s18
      %s21 = sphi 0, %s19
      %s31 = sphi 0, %s33
      %s34 = sphi 0, %s31
      %s35 = sphi 0, %s34
      %s51 = sphi 0, %s35
      %s55 = sphi 0, %s55
      %s57 = sphi 0, %s55
      %s58 = sphi 0, %s57
      %s72 = sphi 0, %s58
      %s76 = sphi 0, %s76
      %s78 = sphi 0, %s76
      %s79 = sphi 0, %s78
      %s93 = sphi 0, %s79
      %s101 = sphi 0, %s103
      %s104 = sphi 0, %s101
      %s105 = sphi 0, %s104
      %s121 = sphi 0, %s105
    $region4: #{residual_block1d_forward.9} parent=1 // loop_header_branch
      %12 = sbr.rel (%p10) target = $region8
    $region5: #{residual_block1d_forward.9} parent=1 // loop_body
      %s14 = ssub.s32 %s9, 1
      %s15 = ssub.s32 %s9, 2
      %s22 = sadd.s32 1, %s17
      %p23 = scmp.ge.s32.totalorder %s22, 1
      %s24 = scalar_select %p23, 0, %s22
      %s25 = sadd.s32 1, %s16
      %s26 = scalar_select %p23, %s25, %s16
      %p27 = scmp.ge.s32.totalorder %s26, 2
      %s28 = scalar_select %p27, 0, %s26
      %s29 = ssub.s32 %s16, %s28
      %p30 = scmp.eq.s32.totalorder %s29, 0
      %s32 = sadd.s32 %s31, 1
      %s33 = scalar_select %p30, %s31, %s32
      %p36 = pneg %p30
      %p37 = scmp.eq.s32.totalorder %s9, 1
      %p38 = por %p36, %p37
      %p39 = scmp.ne.s32.totalorder %s31, %s34
      %p40 = scmp.eq.s32.totalorder %s9, 0
      %p41 = por %p39, %p40
      %p42 = scmp.ne.s32.totalorder %s31, %s34
      %p43 = scmp.eq.s32.totalorder %s14, 1
      %p44 = por %p42, %p43
      %p45 = scmp.ne.s32.totalorder %s34, %s35
      %p46 = scmp.eq.s32.totalorder %s14, 0
      %p47 = por %p45, %p46
      %p48 = scmp.ne.s32.totalorder %s34, %s35
      %p49 = scmp.eq.s32.totalorder %s15, 1
      %p50 = por %p48, %p49
      %p52 = scmp.ne.s32.totalorder %s35, %s51
      %p53 = scmp.eq.s32.totalorder %s15, 0
      %p54 = por %p52, %p53
      %s56 = sadd.s32 %s55, 1
      %p59 = scmp.eq.s32.totalorder %s9, 1
      %p60 = scmp.ne.s32.totalorder %s55, %s57
      %p61 = scmp.eq.s32.totalorder %s9, 0
      %p62 = por %p60, %p61
      %p63 = scmp.ne.s32.totalorder %s55, %s57
      %p64 = scmp.eq.s32.totalorder %s14, 1
      %p65 = por %p63, %p64
      %p66 = scmp.ne.s32.totalorder %s57, %s58
      %p67 = scmp.eq.s32.totalorder %s14, 0
      %p68 = por %p66, %p67
      %p69 = scmp.ne.s32.totalorder %s57, %s58
      %p70 = scmp.eq.s32.totalorder %s15, 1
      %p71 = por %p69, %p70
      %p73 = scmp.ne.s32.totalorder %s58, %s72
      %p74 = scmp.eq.s32.totalorder %s15, 0
      %p75 = por %p73, %p74
      %s77 = sadd.s32 %s76, 1
      %p80 = scmp.eq.s32.totalorder %s9, 1
      %p81 = scmp.ne.s32.totalorder %s76, %s78
      %p82 = scmp.eq.s32.totalorder %s9, 0
      %p83 = por %p81, %p82
      %p84 = scmp.ne.s32.totalorder %s76, %s78
      %p85 = scmp.eq.s32.totalorder %s14, 1
      %p86 = por %p84, %p85
      %p87 = scmp.ne.s32.totalorder %s78, %s79
      %p88 = scmp.eq.s32.totalorder %s14, 0
      %p89 = por %p87, %p88
      %p90 = scmp.ne.s32.totalorder %s78, %s79
      %p91 = scmp.eq.s32.totalorder %s15, 1
      %p92 = por %p90, %p91
      %p94 = scmp.ne.s32.totalorder %s79, %s93
      %p95 = scmp.eq.s32.totalorder %s15, 0
      %p96 = por %p94, %p95
      %s97 = ssub.s32 %s16, %s28
      %s98 = ssub.s32 %s17, %s24
      %s99 = sor.u32 %s97, %s98
      %p100 = scmp.eq.s32.totalorder %s99, 0
      %s102 = sadd.s32 %s101, 1
      %s103 = scalar_select %p100, %s101, %s102
      %p106 = pneg %p100
      %p107 = scmp.eq.s32.totalorder %s9, 1
      %p108 = por %p106, %p107
      %p109 = scmp.ne.s32.totalorder %s101, %s104
      %p110 = scmp.eq.s32.totalorder %s9, 0
      %p111 = por %p109, %p110
      %p112 = scmp.ne.s32.totalorder %s101, %s104
      %p113 = scmp.eq.s32.totalorder %s14, 1
      %p114 = por %p112, %p113
      %p115 = scmp.ne.s32.totalorder %s104, %s105
      %p116 = scmp.eq.s32.totalorder %s14, 0
      %p117 = por %p115, %p116
      %p118 = scmp.ne.s32.totalorder %s104, %s105
      %p119 = scmp.eq.s32.totalorder %s15, 1
      %p120 = por %p118, %p119
      %p122 = scmp.ne.s32.totalorder %s105, %s121
      %p123 = scmp.eq.s32.totalorder %s15, 0
      %p124 = por %p122, %p123
      %p125 = scmp.le.s32.totalorder 1, %s9
      %p126 = scmp.lt.s32.totalorder %s9, 3
      %p127 = pnand %p125, %p126
      %p128 = pneg %p127
      // Predicated region
      $region9: #{residual_block1d_forward.9} parent=5 // pred_check
        _
      $region10: #{residual_block1d_forward.9} parent=5 // pred_check_branch
        %130 = sbr.rel (%p127) target = $region12
      $region11: #{residual_block1d_forward.9} parent=5 // pred_region
        %s131 = ssub.s32 %s9, 1
        // Predicated region
        $region13: #{residual_block1d_forward.9} parent=11 // pred_check
          %p132 = pneg %p68
        $region14: #{residual_block1d_forward.9} parent=11 // pred_check_branch
          %134 = sbr.rel (%p132) target = $region16
        $region15: #{residual_block1d_forward.9} parent=11 // pred_region
          _
        $region16: #{residual_block1d_forward.9} parent=11 // pred_fallthru
          _
        // Predicated region
        $region17: #{residual_block1d_forward.9} parent=11 // pred_check
          %p135 = pneg %p89
        $region18: #{residual_block1d_forward.9} parent=11 // pred_check_branch
          %137 = sbr.rel (%p135) target = $region20
        $region19: #{residual_block1d_forward.9} parent=11 // pred_region
          _
        $region20: #{residual_block1d_forward.9} parent=11 // pred_fallthru
          _
      $region12: #{residual_block1d_forward.9} parent=5 // pred_fallthru
        _
      %p138 = scmp.lt.s32.totalorder %s9, 2
      // Predicated region
      $region21: #{residual_block1d_forward.9} parent=5 // pred_check
        %p139 = pneg %p138
      $region22: #{residual_block1d_forward.9} parent=5 // pred_check_branch
        %141 = sbr.rel (%p139) target = $region24
      $region23: #{residual_block1d_forward.9} parent=5 // pred_region
        // Predicated region
        $region25: #{residual_block1d_forward.9} parent=23 // pred_check
          %p142 = pneg %p41
        $region26: #{residual_block1d_forward.9} parent=23 // pred_check_branch
          %144 = sbr.rel (%p142) target = $region28
        $region27: #{residual_block1d_forward.9} parent=23 // pred_region
          %p145 = scmp.lt.s32.totalorder %s16, 1
          %s146 = scalar_select %p145, %s16, 1
          %s147 = smul.addr %s146, 10
          %s148 = smul.addr %s147, 4
          %s149 = scalar_lea.vmem %s0, %s148
        $region28: #{residual_block1d_forward.9} parent=23 // pred_fallthru
          _
      $region24: #{residual_block1d_forward.9} parent=5 // pred_fallthru
        _
      %p150 = scmp.le.s32.totalorder 1, %s9
      %p151 = scmp.lt.s32.totalorder %s9, 3
      %p152 = pnand %p150, %p151
      %p153 = pneg %p152
      // Predicated region
      $region29: #{residual_block1d_forward.9} parent=5 // pred_check
        _
      $region30: #{residual_block1d_forward.9} parent=5 // pred_check_branch
        %155 = sbr.rel (%p152) target = $region32
      $region31: #{residual_block1d_forward.9} parent=5 // pred_region
        %s156 = ssub.s32 %s9, 1
        %p157 = scmp.lt.s32.totalorder %s18, 1
        %s158 = scalar_select %p157, %s18, 1
        %s159 = smul.addr %s158, 10
        %s160 = smul.addr %s159, 4
        %s161 = scalar_lea.vmem %s0, %s160
        %p162 = pneg %p47
        %p163 = pneg %p44
        %p164 = pneg %p68
        %p165 = pneg %p65
        %p166 = pneg %p89
        %p167 = pneg %p86
        %p168 = pneg %p117
        %p169 = pneg %p114
        %s170 = sand.u32 %s104, 1
        %s171 = sand.u32 %s104, 1
        %s172 = smul.addr %s171, 32
        %s173 = scalar_lea.vmem [#allocation3], %s172
        %p174 = scmp.lt.s32.totalorder %s18, 1
        %s175 = scalar_select %p174, %s18, 1
        %s176 = smul.addr %s175, 10
        %s177 = smul.addr %s176, 4
        %s178 = scalar_lea.vmem %s0, %s177
        %s179 = smul.u32 8, %s19
        %s180 = ssub.s32 7, %s179
        %s181 = smul.u32 64, %s180
        %s183 = smul.u32 %s19, 64
        %s184 = sshra.s32 %s183, 3
        %s185 = sand.u32 %s183, 7
        %s186 = smul.addr %s184, 4
        %s187 = scalar_lea.vmem %s178, %s186
        %v188 = vld [vmem:[%s187] sm:$0xf]
        %v189 = vld [vmem:[%s187 + $0x4] sm:$0xf]
        %v190 = vld [vmem:[%s187 + $0x8] sm:$0xf]
        %v191 = vld [vmem:[%s187 + $0xc] sm:$0xf]
        %v192 = vld [vmem:[%s187 + $0x10] sm:$0xf]
        %v193 = vld [vmem:[%s187 + $0x14] sm:$0xf]
        %v194 = vld [vmem:[%s187 + $0x18] sm:$0xf]
        %v195 = vld [vmem:[%s187 + $0x1c] sm:$0xf]
        %v196 = vld [vmem:[%s187 + $0x20] sm:$0xf]
        %v197 = vld [vmem:[%s187 + $0x24] sm:$0xf]
        %v198 = vunpack.c.l.bf16 %v188
        %v199 = vunpack.c.l.bf16 %v189
        %v200 = vunpack.c.l.bf16 %v190
        %v201 = vunpack.c.l.bf16 %v191
        %v202 = vunpack.c.l.bf16 %v192
        %v203 = vunpack.c.l.bf16 %v193
        %v204 = vunpack.c.l.bf16 %v194
        %v205 = vunpack.c.l.bf16 %v195
        %v206 = vunpack.c.l.bf16 %v196
        %v207 = vunpack.c.l.bf16 %v197
        %vm208 = vcmp.ge.f32.partialorder %v198, 0.0
        %vm209 = vcmp.ge.f32.partialorder %v199, 0.0
        %vm210 = vcmp.ge.f32.partialorder %v200, 0.0
        %vm211 = vcmp.ge.f32.partialorder %v201, 0.0
        %vm212 = vcmp.ge.f32.partialorder %v202, 0.0
        %vm213 = vcmp.ge.f32.partialorder %v203, 0.0
        %vm214 = vcmp.ge.f32.partialorder %v204, 0.0
        %vm215 = vcmp.ge.f32.partialorder %v205, 0.0
        %vm216 = vcmp.ge.f32.partialorder %v206, 0.0
        %vm217 = vcmp.ge.f32.partialorder %v207, 0.0
        %v218 = vmul.f32 %v198, 0.1
        %v219 = vmul.f32 %v199, 0.1
        %v220 = vmul.f32 %v200, 0.1
        %v221 = vmul.f32 %v201, 0.1
        %v222 = vmul.f32 %v202, 0.1
        %v223 = vmul.f32 %v203, 0.1
        %v224 = vmul.f32 %v204, 0.1
        %v225 = vmul.f32 %v205, 0.1
        %v226 = vmul.f32 %v206, 0.1
        %v227 = vmul.f32 %v207, 0.1
        %v228 = vsel %vm208, %v198, %v218
        %v229 = vsel %vm209, %v199, %v219
        %v230 = vsel %vm210, %v200, %v220
        %v231 = vsel %vm211, %v201, %v221
        %v232 = vsel %vm212, %v202, %v222
        %v233 = vsel %vm213, %v203, %v223
        %v234 = vsel %vm214, %v204, %v224
        %v235 = vsel %vm215, %v205, %v225
        %v236 = vsel %vm216, %v206, %v226
        %v237 = vsel %vm217, %v207, %v227
        %v238 = vpack.c.bf16 %v229, %v228
        %v239 = vpack.c.bf16 %v231, %v230
        %v240 = vpack.c.bf16 %v233, %v232
        %v241 = vpack.c.bf16 %v235, %v234
        %v242 = vpack.c.bf16 %v237, %v236
        %v248 = vunpack.c.l.b16 %v238
        %v249 = vunpack.c.h.b16 %v238
        %v250 = vunpack.c.l.b16 %v239
        %v251 = vunpack.c.h.b16 %v239
        %v252 = vunpack.c.l.b16 %v240
        %v253 = vunpack.c.h.b16 %v240
        %v254 = vunpack.c.l.b16 %v241
        %v255 = vunpack.c.h.b16 %v241
        %v256 = vunpack.c.l.b16 %v242
        %v257 = vunpack.c.h.b16 %v242
        %v258 = vpack.c.b16 %v248, %v248
        %v259 = vpack.c.b16 %v249, %v249
        %v260 = vpack.c.b16 %v250, %v250
        %v261 = vpack.c.b16 %v251, %v251
        %v262 = vpack.c.b16 %v252, %v252
        %v263 = vpack.c.b16 %v253, %v253
        %v264 = vpack.c.b16 %v254, %v254
        %v265 = vpack.c.b16 %v255, %v255
        %v266 = vpack.c.b16 %v256, %v256
        %v267 = vpack.c.b16 %v257, %v257
        %278 = vst [vmem:[#allocation2] sm:$0xf] %v258
        %279 = vst [vmem:[#allocation2 + $0x4] sm:$0xf] %v259
        %280 = vst [vmem:[#allocation2 + $0x8] sm:$0xf] %v260
        %281 = vst [vmem:[#allocation2 + $0xc] sm:$0xf] %v261
        %282 = vst [vmem:[#allocation2 + $0x10] sm:$0xf] %v262
        %283 = vst [vmem:[#allocation2 + $0x14] sm:$0xf] %v263
        %284 = vst [vmem:[#allocation2 + $0x18] sm:$0xf] %v264
        %285 = vst [vmem:[#allocation2 + $0x1c] sm:$0xf] %v265
        %286 = vst [vmem:[#allocation2 + $0x20] sm:$0xf] %v266
        %287 = vst [vmem:[#allocation2 + $0x24] sm:$0xf] %v267
        %v288 = vld [vmem:[%s2] sm:$0x1]
        %v289 = vld [vmem:[#allocation2] sm:$0xf]
        %v290 = vld [vmem:[#allocation2 + $0x4] sm:$0xf]
        %v291 = vld [vmem:[#allocation2 + $0x8] sm:$0xf]
        %v292 = vld [vmem:[#allocation2 + $0xc] sm:$0xf]
        %v293 = vld [vmem:[#allocation2 + $0x10] sm:$0xf]
        %v294 = vld [vmem:[#allocation2 + $0x14] sm:$0xf]
        %v295 = vld [vmem:[#allocation2 + $0x18] sm:$0xf]
        %v296 = vld [vmem:[#allocation2 + $0x1c] sm:$0xf]
        %v297 = vld [vmem:[#allocation2 + $0x20] sm:$0x1]
        %v306 = vunpack.c.l.b16 %v289
        %v307 = vunpack.c.l.b16 %v290
        %v308 = vunpack.c.l.b16 %v291
        %v309 = vunpack.c.l.b16 %v292
        %v310 = vunpack.c.l.b16 %v293
        %v311 = vunpack.c.l.b16 %v294
        %v312 = vunpack.c.l.b16 %v295
        %v313 = vunpack.c.l.b16 %v296
        %v314 = vpack.c.b16 %v307, %v306
        %v315 = vpack.c.b16 %v309, %v308
        %v316 = vpack.c.b16 %v311, %v310
        %v317 = vpack.c.b16 %v313, %v312
        %v323 = vunpack.c.l.b16 %v297
        %v324 = vpack.c.b16 %v323, %v323
        %vm325 = vsmask.f32 7424
        %v327 = vshrl.u32 %v314, 16
        %v329 = vshll.u32 %v314, 16
        %v331 = vrot.slane %v329, 1
        %v332 = vor.u32 %v327, %v331
        %v334 = vshll.u32 %v315, 16
        %v336 = vrot.slane %v334, 1
        %v337 = vsel %vm325, %v332, %v336
        %v338 = vshrl.u32 %v315, 16
        %v340 = vor.u32 %v338, %v336
        %v342 = vshll.u32 %v316, 16
        %v344 = vrot.slane %v342, 1
        %v345 = vsel %vm325, %v340, %v344
        %v346 = vshrl.u32 %v316, 16
        %v348 = vor.u32 %v346, %v344
        %v350 = vshll.u32 %v317, 16
        %v352 = vrot.slane %v350, 1
        %v353 = vsel %vm325, %v348, %v352
        %v354 = vshrl.u32 %v317, 16
        %v356 = vor.u32 %v354, %v352
        %v358 = vshll.u32 %v324, 16
        %v360 = vrot.slane %v358, 1
        %v361 = vsel %vm325, %v356, %v360
        %v366 = vld [vmem:[%s1] sm:$0xf]
        %v367 = vld [vmem:[%s1 + $0x4] sm:$0xf]
        %v368 = vld [vmem:[%s1 + $0x8] sm:$0xf]
        %v369 = vld [vmem:[%s1 + $0xc] sm:$0xf]
        %v370 = vld [vmem:[%s1 + $0x10] sm:$0xf]
        %v371 = vld [vmem:[%s1 + $0x14] sm:$0xf]
        %v372 = vld [vmem:[%s1 + $0x18] sm:$0xf]
        %v373 = vld [vmem:[%s1 + $0x1c] sm:$0xf]
        %v374 = vld [vmem:[%s1 + $0x20] sm:$0xf]
        %v375 = vld [vmem:[%s1 + $0x24] sm:$0xf]
        %v376 = vld [vmem:[%s1 + $0x28] sm:$0xf]
        %v377 = vld [vmem:[%s1 + $0x2c] sm:$0xf]
        %v378 = vld [vmem:[%s1 + $0x30] sm:$0xf]
        %v379 = vld [vmem:[%s1 + $0x34] sm:$0xf]
        %v380 = vld [vmem:[%s1 + $0x38] sm:$0xf]
        %v381 = vld [vmem:[%s1 + $0x3c] sm:$0xf]
        %v382 = vld [vmem:[%s1 + $0x40] sm:$0xf]
        %v383 = vld [vmem:[%s1 + $0x44] sm:$0xf]
        %v384 = vld [vmem:[%s1 + $0x48] sm:$0xf]
        %v385 = vld [vmem:[%s1 + $0x4c] sm:$0xf]
        %v386 = vld [vmem:[%s1 + $0x50] sm:$0xf]
        %v387 = vld [vmem:[%s1 + $0x54] sm:$0xf]
        %v388 = vld [vmem:[%s1 + $0x58] sm:$0xf]
        %v389 = vld [vmem:[%s1 + $0x5c] sm:$0xf]
        %v390 = vld [vmem:[%s1 + $0x60] sm:$0xf]
        %v391 = vld [vmem:[%s1 + $0x64] sm:$0xf]
        %v392 = vld [vmem:[%s1 + $0x68] sm:$0xf]
        %v393 = vld [vmem:[%s1 + $0x6c] sm:$0xf]
        %v394 = vld [vmem:[%s1 + $0x70] sm:$0xf]
        %v395 = vld [vmem:[%s1 + $0x74] sm:$0xf]
        %v396 = vld [vmem:[%s1 + $0x78] sm:$0xf]
        %v397 = vld [vmem:[%s1 + $0x7c] sm:$0xf]
        %v399 = vlaneseq
        %v400 = vshrl.u32 %v399, 7
        %v401 = vsub.s32 0, %v400
        %v402 = vrot.slane %v288, %v401
        %v436 = vunpack.c.l.b16 %v366
        %v437 = vunpack.c.l.b16 %v367
        %v438 = vunpack.c.l.b16 %v368
        %v439 = vunpack.c.l.b16 %v369
        %v440 = vunpack.c.l.b16 %v370
        %v441 = vunpack.c.l.b16 %v371
        %v442 = vunpack.c.l.b16 %v372
        %v443 = vunpack.c.l.b16 %v373
        %v444 = vunpack.c.l.b16 %v374
        %v445 = vunpack.c.l.b16 %v375
        %v446 = vunpack.c.l.b16 %v376
        %v447 = vunpack.c.l.b16 %v377
        %v448 = vunpack.c.l.b16 %v378
        %v449 = vunpack.c.l.b16 %v379
        %v450 = vunpack.c.l.b16 %v380
        %v451 = vunpack.c.l.b16 %v381
        %v452 = vunpack.c.l.b16 %v382
        %v453 = vunpack.c.l.b16 %v383
        %v454 = vunpack.c.l.b16 %v384
        %v455 = vunpack.c.l.b16 %v385
        %v456 = vunpack.c.l.b16 %v386
        %v457 = vunpack.c.l.b16 %v387
        %v458 = vunpack.c.l.b16 %v388
        %v459 = vunpack.c.l.b16 %v389
        %v460 = vunpack.c.l.b16 %v390
        %v461 = vunpack.c.l.b16 %v391
        %v462 = vunpack.c.l.b16 %v392
        %v463 = vunpack.c.l.b16 %v393
        %v464 = vunpack.c.l.b16 %v394
        %v465 = vunpack.c.l.b16 %v395
        %v466 = vunpack.c.l.b16 %v396
        %v467 = vunpack.c.l.b16 %v397
        %v468 = vpack.c.b16 %v437, %v436
        %v469 = vpack.c.b16 %v439, %v438
        %v470 = vpack.c.b16 %v441, %v440
        %v471 = vpack.c.b16 %v443, %v442
        %v472 = vpack.c.b16 %v445, %v444
        %v473 = vpack.c.b16 %v447, %v446
        %v474 = vpack.c.b16 %v449, %v448
        %v475 = vpack.c.b16 %v451, %v450
        %v476 = vpack.c.b16 %v453, %v452
        %v477 = vpack.c.b16 %v455, %v454
        %v478 = vpack.c.b16 %v457, %v456
        %v479 = vpack.c.b16 %v459, %v458
        %v480 = vpack.c.b16 %v461, %v460
        %v481 = vpack.c.b16 %v463, %v462
        %v482 = vpack.c.b16 %v465, %v464
        %v483 = vpack.c.b16 %v467, %v466
        %500 = vmatprep.subr.bf16.mxu0 0
        %501 = vmatpush1.bf16.msra.mxu0 %v475
        %502 = vmatprep.subr.bf16.mxu0 0
        %503 = vmatpush1.bf16.msra.mxu0 %v474
        %504 = vmatprep.subr.bf16.mxu0 0
        %505 = vmatpush1.bf16.msra.mxu0 %v473
        %506 = vmatprep.subr.bf16.mxu0 0
        %507 = vmatpush1.bf16.msra.mxu0 %v472
        %508 = vmatprep.subr.bf16.mxu0 0
        %509 = vmatpush1.bf16.msra.mxu0 %v471
        %510 = vmatprep.subr.bf16.mxu0 0
        %511 = vmatpush1.bf16.msra.mxu0 %v470
        %512 = vmatprep.subr.bf16.mxu0 0
        %513 = vmatpush1.bf16.msra.mxu0 %v469
        %514 = vmatprep.subr.bf16.mxu0 0
        %515 = vmatpush1.bf16.msra.mxu0 %v468
        %516 = vmatprep.subr.bf16.mxu0 0
        %517 = vmatpush2.bf16.msra.mxu0 %v483
        %518 = vmatprep.subr.bf16.mxu0 0
        %519 = vmatpush2.bf16.msra.mxu0 %v482
        %520 = vmatprep.subr.bf16.mxu0 0
        %521 = vmatpush2.bf16.msra.mxu0 %v481
        %522 = vmatprep.subr.bf16.mxu0 0
        %523 = vmatpush2.bf16.msra.mxu0 %v480
        %524 = vmatprep.subr.bf16.mxu0 0
        %525 = vmatpush2.bf16.msra.mxu0 %v479
        %526 = vmatprep.subr.bf16.mxu0 0
        %527 = vmatpush2.bf16.msra.mxu0 %v478
        %528 = vmatprep.subr.bf16.mxu0 0
        %529 = vmatpush2.bf16.msra.mxu0 %v477
        %530 = vmatprep.subr.bf16.mxu0 0
        %531 = vmatpush2.bf16.msra.mxu0 %v476
        %532 = vmatprep.mubr.bf16.mxu0 %v337
        %533 = vmatmul.mubr.bf16.gmra.mxu0 %v314
        %v534 = vpop.f32.mrf.mxu0
        %v535 = vadd.f32 %v402, %v534
        %v536 = vpop.f32.mrf.mxu0
        %v537 = vpop.f32.mrf.mxu0
        %v538 = vadd.f32 %v402, %v537
        %v539 = vpop.f32.mrf.mxu0
        %540 = vmatprep.mubr.bf16.mxu0 %v345
        %541 = vmatmul.mubr.bf16.gmra.mxu0 %v315
        %v542 = vpop.f32.mrf.mxu0
        %v543 = vadd.f32 %v402, %v542
        %v544 = vpop.f32.mrf.mxu0
        %v545 = vpop.f32.mrf.mxu0
        %v546 = vadd.f32 %v402, %v545
        %v547 = vpop.f32.mrf.mxu0
        %548 = vmatprep.mubr.bf16.mxu0 %v353
        %549 = vmatmul.mubr.bf16.gmra.mxu0 %v316
        %v550 = vpop.f32.mrf.mxu0
        %v551 = vadd.f32 %v402, %v550
        %v552 = vpop.f32.mrf.mxu0
        %v553 = vpop.f32.mrf.mxu0
        %v554 = vadd.f32 %v402, %v553
        %v555 = vpop.f32.mrf.mxu0
        %556 = vmatprep.mubr.bf16.mxu0 %v361
        %557 = vmatmul.mubr.bf16.gmra.mxu0 %v317
        %v558 = vpop.f32.mrf.mxu0
        %v559 = vadd.f32 %v402, %v558
        %v560 = vpop.f32.mrf.mxu0
        %v561 = vpop.f32.mrf.mxu0
        %v562 = vadd.f32 %v402, %v561
        %v563 = vpop.f32.mrf.mxu0
        %564 = vdwg.mxu0
        %v565 = vld [vmem:[#allocation2] sm:$0xe]
        %v566 = vld [vmem:[#allocation2 + $0x20] sm:$0x3]
        %v568 = vunpack.c.l.b16 %v565
        %v569 = vpack.c.b16 %v307, %v568
        %v571 = vunpack.c.l.b16 %v566
        %v572 = vpack.c.b16 %v571, %v571
        %v574 = vshrl.u32 %v569, 16
        %v576 = vshll.u32 %v569, 16
        %v578 = vrot.slane %v576, 1
        %v579 = vor.u32 %v574, %v578
        %v580 = vsel %vm325, %v579, %v336
        %v582 = vshll.u32 %v572, 16
        %v584 = vrot.slane %v582, 1
        %v585 = vsel %vm325, %v356, %v584
        %v586 = vshrl.u32 %v572, 16
        %v588 = vor.u32 %v586, %v584
        %s589 = scalar_lea.vmem %s1, 128
        %v590 = vld [vmem:[%s589] sm:$0xf]
        %v591 = vld [vmem:[%s589 + $0x4] sm:$0xf]
        %v592 = vld [vmem:[%s589 + $0x8] sm:$0xf]
        %v593 = vld [vmem:[%s589 + $0xc] sm:$0xf]
        %v594 = vld [vmem:[%s589 + $0x10] sm:$0xf]
        %v595 = vld [vmem:[%s589 + $0x14] sm:$0xf]
        %v596 = vld [vmem:[%s589 + $0x18] sm:$0xf]
        %v597 = vld [vmem:[%s589 + $0x1c] sm:$0xf]
        %v598 = vld [vmem:[%s589 + $0x20] sm:$0xf]
        %v599 = vld [vmem:[%s589 + $0x24] sm:$0xf]
        %v600 = vld [vmem:[%s589 + $0x28] sm:$0xf]
        %v601 = vld [vmem:[%s589 + $0x2c] sm:$0xf]
        %v602 = vld [vmem:[%s589 + $0x30] sm:$0xf]
        %v603 = vld [vmem:[%s589 + $0x34] sm:$0xf]
        %v604 = vld [vmem:[%s589 + $0x38] sm:$0xf]
        %v605 = vld [vmem:[%s589 + $0x3c] sm:$0xf]
        %v606 = vld [vmem:[%s589 + $0x40] sm:$0xf]
        %v607 = vld [vmem:[%s589 + $0x44] sm:$0xf]
        %v608 = vld [vmem:[%s589 + $0x48] sm:$0xf]
        %v609 = vld [vmem:[%s589 + $0x4c] sm:$0xf]
        %v610 = vld [vmem:[%s589 + $0x50] sm:$0xf]
        %v611 = vld [vmem:[%s589 + $0x54] sm:$0xf]
        %v612 = vld [vmem:[%s589 + $0x58] sm:$0xf]
        %v613 = vld [vmem:[%s589 + $0x5c] sm:$0xf]
        %v614 = vld [vmem:[%s589 + $0x60] sm:$0xf]
        %v615 = vld [vmem:[%s589 + $0x64] sm:$0xf]
        %v616 = vld [vmem:[%s589 + $0x68] sm:$0xf]
        %v617 = vld [vmem:[%s589 + $0x6c] sm:$0xf]
        %v618 = vld [vmem:[%s589 + $0x70] sm:$0xf]
        %v619 = vld [vmem:[%s589 + $0x74] sm:$0xf]
        %v620 = vld [vmem:[%s589 + $0x78] sm:$0xf]
        %v621 = vld [vmem:[%s589 + $0x7c] sm:$0xf]
        %vm622 = vcmask 1046528
        %v623 = vrot.slane %v569, 1
        %v624 = vrot.slane %v315, 1
        %v625 = vsel %vm622, %v623, %v624
        %v626 = vrot.slane %v580, 1
        %v627 = vrot.slane %v345, 1
        %v628 = vsel %vm622, %v626, %v627
        %v629 = vrot.slane %v316, 1
        %v630 = vsel %vm622, %v624, %v629
        %v631 = vrot.slane %v353, 1
        %v632 = vsel %vm622, %v627, %v631
        %v633 = vrot.slane %v317, 1
        %v634 = vsel %vm622, %v629, %v633
        %v635 = vrot.slane %v585, 1
        %v636 = vsel %vm622, %v631, %v635
        %v637 = vrot.slane %v324, 1
        %v638 = vsel %vm622, %v633, %v637
        %v639 = vrot.slane %v588, 1
        %v640 = vsel %vm622, %v635, %v639
        %v681 = vunpack.c.l.b16 %v590
        %v682 = vunpack.c.l.b16 %v591
        %v683 = vunpack.c.l.b16 %v592
        %v684 = vunpack.c.l.b16 %v593
        %v685 = vunpack.c.l.b16 %v594
        %v686 = vunpack.c.l.b16 %v595
        %v687 = vunpack.c.l.b16 %v596
        %v688 = vunpack.c.l.b16 %v597
        %v689 = vunpack.c.l.b16 %v598
        %v690 = vunpack.c.l.b16 %v599
        %v691 = vunpack.c.l.b16 %v600
        %v692 = vunpack.c.l.b16 %v601
        %v693 = vunpack.c.l.b16 %v602
        %v694 = vunpack.c.l.b16 %v603
        %v695 = vunpack.c.l.b16 %v604
        %v696 = vunpack.c.l.b16 %v605
        %v697 = vunpack.c.l.b16 %v606
        %v698 = vunpack.c.l.b16 %v607
        %v699 = vunpack.c.l.b16 %v608
        %v700 = vunpack.c.l.b16 %v609
        %v701 = vunpack.c.l.b16 %v610
        %v702 = vunpack.c.l.b16 %v611
        %v703 = vunpack.c.l.b16 %v612
        %v704 = vunpack.c.l.b16 %v613
        %v705 = vunpack.c.l.b16 %v614
        %v706 = vunpack.c.l.b16 %v615
        %v707 = vunpack.c.l.b16 %v616
        %v708 = vunpack.c.l.b16 %v617
        %v709 = vunpack.c.l.b16 %v618
        %v710 = vunpack.c.l.b16 %v619
        %v711 = vunpack.c.l.b16 %v620
        %v712 = vunpack.c.l.b16 %v621
        %v713 = vpack.c.b16 %v682, %v681
        %v714 = vpack.c.b16 %v684, %v683
        %v715 = vpack.c.b16 %v686, %v685
        %v716 = vpack.c.b16 %v688, %v687
        %v717 = vpack.c.b16 %v690, %v689
        %v718 = vpack.c.b16 %v692, %v691
        %v719 = vpack.c.b16 %v694, %v693
        %v720 = vpack.c.b16 %v696, %v695
        %v721 = vpack.c.b16 %v698, %v697
        %v722 = vpack.c.b16 %v700, %v699
        %v723 = vpack.c.b16 %v702, %v701
        %v724 = vpack.c.b16 %v704, %v703
        %v725 = vpack.c.b16 %v706, %v705
        %v726 = vpack.c.b16 %v708, %v707
        %v727 = vpack.c.b16 %v710, %v709
        %v728 = vpack.c.b16 %v712, %v711
        %745 = vmatprep.subr.bf16.mxu0 0
        %746 = vmatpush1.bf16.msra.mxu0 %v720
        %747 = vmatprep.subr.bf16.mxu0 0
        %748 = vmatpush1.bf16.msra.mxu0 %v719
        %749 = vmatprep.subr.bf16.mxu0 0
        %750 = vmatpush1.bf16.msra.mxu0 %v718
        %751 = vmatprep.subr.bf16.mxu0 0
        %752 = vmatpush1.bf16.msra.mxu0 %v717
        %753 = vmatprep.subr.bf16.mxu0 0
        %754 = vmatpush1.bf16.msra.mxu0 %v716
        %755 = vmatprep.subr.bf16.mxu0 0
        %756 = vmatpush1.bf16.msra.mxu0 %v715
        %757 = vmatprep.subr.bf16.mxu0 0
        %758 = vmatpush1.bf16.msra.mxu0 %v714
        %759 = vmatprep.subr.bf16.mxu0 0
        %760 = vmatpush1.bf16.msra.mxu0 %v713
        %761 = vmatprep.subr.bf16.mxu0 0
        %762 = vmatpush2.bf16.msra.mxu0 %v728
        %763 = vmatprep.subr.bf16.mxu0 0
        %764 = vmatpush2.bf16.msra.mxu0 %v727
        %765 = vmatprep.subr.bf16.mxu0 0
        %766 = vmatpush2.bf16.msra.mxu0 %v726
        %767 = vmatprep.subr.bf16.mxu0 0
        %768 = vmatpush2.bf16.msra.mxu0 %v725
        %769 = vmatprep.subr.bf16.mxu0 0
        %770 = vmatpush2.bf16.msra.mxu0 %v724
        %771 = vmatprep.subr.bf16.mxu0 0
        %772 = vmatpush2.bf16.msra.mxu0 %v723
        %773 = vmatprep.subr.bf16.mxu0 0
        %774 = vmatpush2.bf16.msra.mxu0 %v722
        %775 = vmatprep.subr.bf16.mxu0 0
        %776 = vmatpush2.bf16.msra.mxu0 %v721
        %777 = vmatprep.mubr.bf16.mxu0 %v628
        %778 = vmatmul.mubr.bf16.gmra.mxu0 %v625
        %v779 = vpop.f32.mrf.mxu0
        %v780 = vadd.f32 0.0, %v779
        %v781 = vpop.f32.mrf.mxu0
        %v782 = vpop.f32.mrf.mxu0
        %v783 = vadd.f32 0.0, %v782
        %v784 = vpop.f32.mrf.mxu0
        %785 = vmatprep.mubr.bf16.mxu0 %v632
        %786 = vmatmul.mubr.bf16.gmra.mxu0 %v630
        %v787 = vpop.f32.mrf.mxu0
        %v788 = vadd.f32 0.0, %v787
        %v789 = vpop.f32.mrf.mxu0
        %v790 = vpop.f32.mrf.mxu0
        %v791 = vadd.f32 0.0, %v790
        %v792 = vpop.f32.mrf.mxu0
        %793 = vmatprep.mubr.bf16.mxu0 %v636
        %794 = vmatmul.mubr.bf16.gmra.mxu0 %v634
        %v795 = vpop.f32.mrf.mxu0
        %v796 = vadd.f32 0.0, %v795
        %v797 = vpop.f32.mrf.mxu0
        %v798 = vpop.f32.mrf.mxu0
        %v799 = vadd.f32 0.0, %v798
        %v800 = vpop.f32.mrf.mxu0
        %801 = vmatprep.mubr.bf16.mxu0 %v640
        %802 = vmatmul.mubr.bf16.gmra.mxu0 %v638
        %v803 = vpop.f32.mrf.mxu0
        %v804 = vadd.f32 0.0, %v803
        %v805 = vpop.f32.mrf.mxu0
        %v806 = vpop.f32.mrf.mxu0
        %v807 = vadd.f32 0.0, %v806
        %v808 = vpop.f32.mrf.mxu0
        %809 = vdwg.mxu0
        %v810 = vadd.f32 %v535, %v780
        %v811 = vadd.f32 %v538, %v783
        %v812 = vadd.f32 %v543, %v788
        %v813 = vadd.f32 %v546, %v791
        %v814 = vadd.f32 %v551, %v796
        %v815 = vadd.f32 %v554, %v799
        %v816 = vadd.f32 %v559, %v804
        %v817 = vadd.f32 %v562, %v807
        %v818 = vld [vmem:[#allocation2] sm:$0xc]
        %v819 = vld [vmem:[#allocation2 + $0x20] sm:$0x7]
        %v821 = vunpack.c.l.b16 %v818
        %v822 = vpack.c.b16 %v307, %v821
        %v824 = vunpack.c.l.b16 %v819
        %v825 = vpack.c.b16 %v824, %v824
        %v827 = vshrl.u32 %v822, 16
        %v829 = vshll.u32 %v822, 16
        %v831 = vrot.slane %v829, 1
        %v832 = vor.u32 %v827, %v831
        %v833 = vsel %vm325, %v832, %v336
        %v835 = vshll.u32 %v825, 16
        %v837 = vrot.slane %v835, 1
        %v838 = vsel %vm325, %v356, %v837
        %v839 = vshrl.u32 %v825, 16
        %v841 = vor.u32 %v839, %v837
        %s842 = scalar_lea.vmem %s1, 256
        %v843 = vld [vmem:[%s842] sm:$0xf]
        %v844 = vld [vmem:[%s842 + $0x4] sm:$0xf]
        %v845 = vld [vmem:[%s842 + $0x8] sm:$0xf]
        %v846 = vld [vmem:[%s842 + $0xc] sm:$0xf]
        %v847 = vld [vmem:[%s842 + $0x10] sm:$0xf]
        %v848 = vld [vmem:[%s842 + $0x14] sm:$0xf]
        %v849 = vld [vmem:[%s842 + $0x18] sm:$0xf]
        %v850 = vld [vmem:[%s842 + $0x1c] sm:$0xf]
        %v851 = vld [vmem:[%s842 + $0x20] sm:$0xf]
        %v852 = vld [vmem:[%s842 + $0x24] sm:$0xf]
        %v853 = vld [vmem:[%s842 + $0x28] sm:$0xf]
        %v854 = vld [vmem:[%s842 + $0x2c] sm:$0xf]
        %v855 = vld [vmem:[%s842 + $0x30] sm:$0xf]
        %v856 = vld [vmem:[%s842 + $0x34] sm:$0xf]
        %v857 = vld [vmem:[%s842 + $0x38] sm:$0xf]
        %v858 = vld [vmem:[%s842 + $0x3c] sm:$0xf]
        %v859 = vld [vmem:[%s842 + $0x40] sm:$0xf]
        %v860 = vld [vmem:[%s842 + $0x44] sm:$0xf]
        %v861 = vld [vmem:[%s842 + $0x48] sm:$0xf]
        %v862 = vld [vmem:[%s842 + $0x4c] sm:$0xf]
        %v863 = vld [vmem:[%s842 + $0x50] sm:$0xf]
        %v864 = vld [vmem:[%s842 + $0x54] sm:$0xf]
        %v865 = vld [vmem:[%s842 + $0x58] sm:$0xf]
        %v866 = vld [vmem:[%s842 + $0x5c] sm:$0xf]
        %v867 = vld [vmem:[%s842 + $0x60] sm:$0xf]
        %v868 = vld [vmem:[%s842 + $0x64] sm:$0xf]
        %v869 = vld [vmem:[%s842 + $0x68] sm:$0xf]
        %v870 = vld [vmem:[%s842 + $0x6c] sm:$0xf]
        %v871 = vld [vmem:[%s842 + $0x70] sm:$0xf]
        %v872 = vld [vmem:[%s842 + $0x74] sm:$0xf]
        %v873 = vld [vmem:[%s842 + $0x78] sm:$0xf]
        %v874 = vld [vmem:[%s842 + $0x7c] sm:$0xf]
        %vm875 = vcmask 1045504
        %v876 = vrot.slane %v822, 2
        %v877 = vrot.slane %v315, 2
        %v878 = vsel %vm875, %v876, %v877
        %v879 = vrot.slane %v833, 2
        %v880 = vrot.slane %v345, 2
        %v881 = vsel %vm875, %v879, %v880
        %v882 = vrot.slane %v316, 2
        %v883 = vsel %vm875, %v877, %v882
        %v884 = vrot.slane %v353, 2
        %v885 = vsel %vm875, %v880, %v884
        %v886 = vrot.slane %v317, 2
        %v887 = vsel %vm875, %v882, %v886
        %v888 = vrot.slane %v838, 2
        %v889 = vsel %vm875, %v884, %v888
        %v890 = vrot.slane %v572, 2
        %v891 = vsel %vm875, %v886, %v890
        %v892 = vrot.slane %v841, 2
        %v893 = vsel %vm875, %v888, %v892
        %v934 = vunpack.c.l.b16 %v843
        %v935 = vunpack.c.l.b16 %v844
        %v936 = vunpack.c.l.b16 %v845
        %v937 = vunpack.c.l.b16 %v846
        %v938 = vunpack.c.l.b16 %v847
        %v939 = vunpack.c.l.b16 %v848
        %v940 = vunpack.c.l.b16 %v849
        %v941 = vunpack.c.l.b16 %v850
        %v942 = vunpack.c.l.b16 %v851
        %v943 = vunpack.c.l.b16 %v852
        %v944 = vunpack.c.l.b16 %v853
        %v945 = vunpack.c.l.b16 %v854
        %v946 = vunpack.c.l.b16 %v855
        %v947 = vunpack.c.l.b16 %v856
        %v948 = vunpack.c.l.b16 %v857
        %v949 = vunpack.c.l.b16 %v858
        %v950 = vunpack.c.l.b16 %v859
        %v951 = vunpack.c.l.b16 %v860
        %v952 = vunpack.c.l.b16 %v861
        %v953 = vunpack.c.l.b16 %v862
        %v954 = vunpack.c.l.b16 %v863
        %v955 = vunpack.c.l.b16 %v864
        %v956 = vunpack.c.l.b16 %v865
        %v957 = vunpack.c.l.b16 %v866
        %v958 = vunpack.c.l.b16 %v867
        %v959 = vunpack.c.l.b16 %v868
        %v960 = vunpack.c.l.b16 %v869
        %v961 = vunpack.c.l.b16 %v870
        %v962 = vunpack.c.l.b16 %v871
        %v963 = vunpack.c.l.b16 %v872
        %v964 = vunpack.c.l.b16 %v873
        %v965 = vunpack.c.l.b16 %v874
        %v966 = vpack.c.b16 %v935, %v934
        %v967 = vpack.c.b16 %v937, %v936
        %v968 = vpack.c.b16 %v939, %v938
        %v969 = vpack.c.b16 %v941, %v940
        %v970 = vpack.c.b16 %v943, %v942
        %v971 = vpack.c.b16 %v945, %v944
        %v972 = vpack.c.b16 %v947, %v946
        %v973 = vpack.c.b16 %v949, %v948
        %v974 = vpack.c.b16 %v951, %v950
        %v975 = vpack.c.b16 %v953, %v952
        %v976 = vpack.c.b16 %v955, %v954
        %v977 = vpack.c.b16 %v957, %v956
        %v978 = vpack.c.b16 %v959, %v958
        %v979 = vpack.c.b16 %v961, %v960
        %v980 = vpack.c.b16 %v963, %v962
        %v981 = vpack.c.b16 %v965, %v964
        %998 = vmatprep.subr.bf16.mxu0 0
        %999 = vmatpush1.bf16.msra.mxu0 %v973
        %1000 = vmatprep.subr.bf16.mxu0 0
        %1001 = vmatpush1.bf16.msra.mxu0 %v972
        %1002 = vmatprep.subr.bf16.mxu0 0
        %1003 = vmatpush1.bf16.msra.mxu0 %v971
        %1004 = vmatprep.subr.bf16.mxu0 0
        %1005 = vmatpush1.bf16.msra.mxu0 %v970
        %1006 = vmatprep.subr.bf16.mxu0 0
        %1007 = vmatpush1.bf16.msra.mxu0 %v969
        %1008 = vmatprep.subr.bf16.mxu0 0
        %1009 = vmatpush1.bf16.msra.mxu0 %v968
        %1010 = vmatprep.subr.bf16.mxu0 0
        %1011 = vmatpush1.bf16.msra.mxu0 %v967
        %1012 = vmatprep.subr.bf16.mxu0 0
        %1013 = vmatpush1.bf16.msra.mxu0 %v966
        %1014 = vmatprep.subr.bf16.mxu0 0
        %1015 = vmatpush2.bf16.msra.mxu0 %v981
        %1016 = vmatprep.subr.bf16.mxu0 0
        %1017 = vmatpush2.bf16.msra.mxu0 %v980
        %1018 = vmatprep.subr.bf16.mxu0 0
        %1019 = vmatpush2.bf16.msra.mxu0 %v979
        %1020 = vmatprep.subr.bf16.mxu0 0
        %1021 = vmatpush2.bf16.msra.mxu0 %v978
        %1022 = vmatprep.subr.bf16.mxu0 0
        %1023 = vmatpush2.bf16.msra.mxu0 %v977
        %1024 = vmatprep.subr.bf16.mxu0 0
        %1025 = vmatpush2.bf16.msra.mxu0 %v976
        %1026 = vmatprep.subr.bf16.mxu0 0
        %1027 = vmatpush2.bf16.msra.mxu0 %v975
        %1028 = vmatprep.subr.bf16.mxu0 0
        %1029 = vmatpush2.bf16.msra.mxu0 %v974
        %1030 = vmatprep.mubr.bf16.mxu0 %v881
        %1031 = vmatmul.mubr.bf16.gmra.mxu0 %v878
        %v1032 = vpop.f32.mrf.mxu0
        %v1033 = vadd.f32 0.0, %v1032
        %v1034 = vpop.f32.mrf.mxu0
        %v1035 = vpop.f32.mrf.mxu0
        %v1036 = vadd.f32 0.0, %v1035
        %v1037 = vpop.f32.mrf.mxu0
        %1038 = vmatprep.mubr.bf16.mxu0 %v885
        %1039 = vmatmul.mubr.bf16.gmra.mxu0 %v883
        %v1040 = vpop.f32.mrf.mxu0
        %v1041 = vadd.f32 0.0, %v1040
        %v1042 = vpop.f32.mrf.mxu0
        %v1043 = vpop.f32.mrf.mxu0
        %v1044 = vadd.f32 0.0, %v1043
        %v1045 = vpop.f32.mrf.mxu0
        %1046 = vmatprep.mubr.bf16.mxu0 %v889
        %1047 = vmatmul.mubr.bf16.gmra.mxu0 %v887
        %v1048 = vpop.f32.mrf.mxu0
        %v1049 = vadd.f32 0.0, %v1048
        %v1050 = vpop.f32.mrf.mxu0
        %v1051 = vpop.f32.mrf.mxu0
        %v1052 = vadd.f32 0.0, %v1051
        %v1053 = vpop.f32.mrf.mxu0
        %1054 = vmatprep.mubr.bf16.mxu0 %v893
        %1055 = vmatmul.mubr.bf16.gmra.mxu0 %v891
        %v1056 = vpop.f32.mrf.mxu0
        %v1057 = vadd.f32 0.0, %v1056
        %v1058 = vpop.f32.mrf.mxu0
        %v1059 = vpop.f32.mrf.mxu0
        %v1060 = vadd.f32 0.0, %v1059
        %v1061 = vpop.f32.mrf.mxu0
        %1062 = vdwg.mxu0
        %v1063 = vadd.f32 %v810, %v1033
        %v1064 = vadd.f32 %v811, %v1036
        %v1065 = vadd.f32 %v812, %v1041
        %v1066 = vadd.f32 %v813, %v1044
        %v1067 = vadd.f32 %v814, %v1049
        %v1068 = vadd.f32 %v815, %v1052
        %v1069 = vadd.f32 %v816, %v1057
        %v1070 = vadd.f32 %v817, %v1060
        %v1071 = vpack.c.bf16 %v1064, %v1063
        %v1072 = vpack.c.bf16 %v1066, %v1065
        %v1073 = vpack.c.bf16 %v1068, %v1067
        %v1074 = vpack.c.bf16 %v1070, %v1069
        %v1079 = vunpack.c.l.b16 %v1071
        %v1080 = vunpack.c.h.b16 %v1071
        %v1081 = vunpack.c.l.b16 %v1072
        %v1082 = vunpack.c.h.b16 %v1072
        %v1083 = vunpack.c.l.b16 %v1073
        %v1084 = vunpack.c.h.b16 %v1073
        %v1085 = vunpack.c.l.b16 %v1074
        %v1086 = vunpack.c.h.b16 %v1074
        %v1087 = vpack.c.b16 %v1079, %v1079
        %v1088 = vpack.c.b16 %v1080, %v1080
        %v1089 = vpack.c.b16 %v1081, %v1081
        %v1090 = vpack.c.b16 %v1082, %v1082
        %v1091 = vpack.c.b16 %v1083, %v1083
        %v1092 = vpack.c.b16 %v1084, %v1084
        %v1093 = vpack.c.b16 %v1085, %v1085
        %v1094 = vpack.c.b16 %v1086, %v1086
        %1103 = vst [vmem:[%s173] sm:$0xf] %v1087
        %1104 = vst [vmem:[%s173 + $0x4] sm:$0xf] %v1088
        %1105 = vst [vmem:[%s173 + $0x8] sm:$0xf] %v1089
        %1106 = vst [vmem:[%s173 + $0xc] sm:$0xf] %v1090
        %1107 = vst [vmem:[%s173 + $0x10] sm:$0xf] %v1091
        %1108 = vst [vmem:[%s173 + $0x14] sm:$0xf] %v1092
        %1109 = vst [vmem:[%s173 + $0x18] sm:$0xf] %v1093
        %1110 = vst [vmem:[%s173 + $0x1c] sm:$0xf] %v1094
        %s1111 = sand.u32 %s104, 1
        %s1112 = sand.u32 %s104, 1
        %s1113 = smul.addr %s1112, 32
        %s1114 = scalar_lea.vmem [#allocation3], %s1113
        // Predicated region
        $region33: #{residual_block1d_forward.9} parent=31 // pred_check
          %p1115 = pneg %p114
        $region34: #{residual_block1d_forward.9} parent=31 // pred_check_branch
          %1117 = sbr.rel (%p1115) target = $region36
        $region35: #{residual_block1d_forward.9} parent=31 // pred_region
          %s1118 = smul.u32 8, %s19
          %s1119 = ssub.s32 7, %s1118
          %s1120 = smul.u32 64, %s1119
          %p1121 = scmp.ne.s32.totalorder 0, %s1120
          %s1122 = smul.addr %s18, 7
          %s1123 = sadd.s32 %s1118, %s1122
          %s1124 = smul.addr %s1123, 4
          %s1125 = scalar_lea.vmem %s3, %s1124
          // Predicated region
          $region37: #{residual_block1d_forward.9} parent=35 // pred_check
            %p1126 = pneg %p1121
          $region38: #{residual_block1d_forward.9} parent=35 // pred_check_branch
            %1128 = sbr.rel (%p1126) target = $region40
          $region39: #{residual_block1d_forward.9} parent=35 // pred_region
            // Predicated region
            $region41: #{residual_block1d_forward.9} parent=39 // pred_check
              _
            $region42: #{residual_block1d_forward.9} parent=39 // pred_check_branch
              %1130 = sbr.rel target = $region44
            $region43: #{residual_block1d_forward.9} parent=39 // pred_region
              // Predicated region
              $region63: #{residual_block1d_forward.9} parent=43 // pred_check
                _
              $region64: #{residual_block1d_forward.9} parent=43 // pred_check_branch
                %1193 = sbr.rel (0) target = $region66
              $region65: #{residual_block1d_forward.9} parent=43 // pred_region
                %s1195 = ssub.s32 16, 1
                %s1196 = sdiv.u32.pop %s1119, 7
                %s1197 = srem.u32.pop %s1119, 7
                // While loop
                $region67: #{residual_block1d_forward.9} parent=65 // loop_pre_header
                  _
                $region68: #{residual_block1d_forward.9} parent=65 // loop_header
                  %s1199 = sphi 0, %s1201
                  %p1200 = scmp.ge.s32.totalorder %s1199, %s1196
                  %s1204 = sphi 0, %s1223
                  %s1205 = sphi %s1114, %s1226
                  %s1206 = sphi %s1125, %s1227
                $region69: #{residual_block1d_forward.9} parent=65 // loop_header_branch
                  %1203 = sbr.rel (%p1200) target = $region73
                $region70: #{residual_block1d_forward.9} parent=65 // loop_body
                  %v1207 = vld [vmem:[%s1205] sm:%s1195]
                  %1208 = vst [vmem:[%s1206] sm:%s1195] %v1207
                  %v1209 = vld [vmem:[%s1205 + $0x4] sm:%s1195]
                  %1210 = vst [vmem:[%s1206 + $0x4] sm:%s1195] %v1209
                  %v1211 = vld [vmem:[%s1205 + $0x8] sm:%s1195]
                  %1212 = vst [vmem:[%s1206 + $0x8] sm:%s1195] %v1211
                  %v1213 = vld [vmem:[%s1205 + $0xc] sm:%s1195]
                  %1214 = vst [vmem:[%s1206 + $0xc] sm:%s1195] %v1213
                  %v1215 = vld [vmem:[%s1205 + $0x10] sm:%s1195]
                  %1216 = vst [vmem:[%s1206 + $0x10] sm:%s1195] %v1215
                  %v1217 = vld [vmem:[%s1205 + $0x14] sm:%s1195]
                  %1218 = vst [vmem:[%s1206 + $0x14] sm:%s1195] %v1217
                  %v1219 = vld [vmem:[%s1205 + $0x18] sm:%s1195]
                  %1220 = vst [vmem:[%s1206 + $0x18] sm:%s1195] %v1219
                  %s1221 = sadd.s32 1, %s1204
                  %p1222 = scmp.ge.s32.totalorder %s1221, %s1196
                  %s1223 = scalar_select %p1222, 0, %s1221
                  %s1224 = smul.u32 %s1223, 28
                  %s1225 = smul.u32 %s1223, 28
                  %s1226 = scalar_lea.vmem %s1114, %s1224 [#allocation3]
                  %s1227 = scalar_lea.vmem %s1125, %s1225
                $region71: #{residual_block1d_forward.9} parent=65 // loop_footer
                  %s1201 = sadd.s32 %s1199, 1
                $region72: #{residual_block1d_forward.9} parent=65 // loop_footer_branch
                  %1198 = sbr.rel target = $region68
                $region73: #{residual_block1d_forward.9} parent=65 // loop_exit
                  _
                %s1228 = sdiv.u32.pop %s1119, 7
                %s1229 = srem.u32.pop %s1119, 7
                %s1230 = smul.u32 %s1228, 7
                %s1231 = smul.u32 4, %s1230
                %s1232 = scalar_lea.vmem %s1114, %s1231 [#allocation3]
                %s1233 = smul.u32 4, %s1230
                %s1234 = scalar_lea.vmem %s1125, %s1233
                // While loop
                $region74: #{residual_block1d_forward.9} parent=65 // loop_pre_header
                  _
                $region75: #{residual_block1d_forward.9} parent=65 // loop_header
                  %s1236 = sphi 0, %s1238
                  %p1237 = scmp.ge.s32.totalorder %s1236, %s1229
                  %s1241 = sphi 0, %s1248
                  %s1242 = sphi %s1232, %s1251
                  %s1243 = sphi %s1234, %s1252
                $region76: #{residual_block1d_forward.9} parent=65 // loop_header_branch
                  %1240 = sbr.rel (%p1237) target = $region80
                $region77: #{residual_block1d_forward.9} parent=65 // loop_body
                  %v1244 = vld [vmem:[%s1242] sm:%s1195]
                  %1245 = vst [vmem:[%s1243] sm:%s1195] %v1244
                  %s1246 = sadd.s32 1, %s1241
                  %p1247 = scmp.ge.s32.totalorder %s1246, %s1229
                  %s1248 = scalar_select %p1247, 0, %s1246
                  %s1249 = smul.u32 %s1248, 4
                  %s1250 = smul.u32 %s1248, 4
                  %s1251 = scalar_lea.vmem %s1232, %s1249 [#allocation3]
                  %s1252 = scalar_lea.vmem %s1234, %s1250
                $region78: #{residual_block1d_forward.9} parent=65 // loop_footer
                  %s1238 = sadd.s32 %s1236, 1
                $region79: #{residual_block1d_forward.9} parent=65 // loop_footer_branch
                  %1235 = sbr.rel target = $region75
                $region80: #{residual_block1d_forward.9} parent=65 // loop_exit
                  _
              $region66: #{residual_block1d_forward.9} parent=43 // pred_fallthru
                _
            $region44: #{residual_block1d_forward.9} parent=39 // pred_fallthru
              _
            // Predicated region
            $region45: #{residual_block1d_forward.9} parent=39 // pred_check
              _
            $region46: #{residual_block1d_forward.9} parent=39 // pred_check_branch
              %1132 = sbr.rel (0) target = $region48
            $region47: #{residual_block1d_forward.9} parent=39 // pred_region
              %s1134 = ssub.s32 16, 1
              %s1135 = sdiv.u32.pop %s1119, 7
              %s1136 = srem.u32.pop %s1119, 7
              // While loop
              $region49: #{residual_block1d_forward.9} parent=47 // loop_pre_header
                _
              $region50: #{residual_block1d_forward.9} parent=47 // loop_header
                %s1138 = sphi 0, %s1140
                %p1139 = scmp.ge.s32.totalorder %s1138, %s1135
                %s1143 = sphi 0, %s1162
                %s1144 = sphi %s1114, %s1165
                %s1145 = sphi %s1125, %s1166
              $region51: #{residual_block1d_forward.9} parent=47 // loop_header_branch
                %1142 = sbr.rel (%p1139) target = $region55
              $region52: #{residual_block1d_forward.9} parent=47 // loop_body
                %v1146 = vld [vmem:[%s1144] sm:%s1134]
                %1147 = vst [vmem:[%s1145] sm:%s1134] %v1146
                %v1148 = vld [vmem:[%s1144 + $0x4] sm:%s1134]
                %1149 = vst [vmem:[%s1145 + $0x4] sm:%s1134] %v1148
                %v1150 = vld [vmem:[%s1144 + $0x8] sm:%s1134]
                %1151 = vst [vmem:[%s1145 + $0x8] sm:%s1134] %v1150
                %v1152 = vld [vmem:[%s1144 + $0xc] sm:%s1134]
                %1153 = vst [vmem:[%s1145 + $0xc] sm:%s1134] %v1152
                %v1154 = vld [vmem:[%s1144 + $0x10] sm:%s1134]
                %1155 = vst [vmem:[%s1145 + $0x10] sm:%s1134] %v1154
                %v1156 = vld [vmem:[%s1144 + $0x14] sm:%s1134]
                %1157 = vst [vmem:[%s1145 + $0x14] sm:%s1134] %v1156
                %v1158 = vld [vmem:[%s1144 + $0x18] sm:%s1134]
                %1159 = vst [vmem:[%s1145 + $0x18] sm:%s1134] %v1158
                %s1160 = sadd.s32 1, %s1143
                %p1161 = scmp.ge.s32.totalorder %s1160, %s1135
                %s1162 = scalar_select %p1161, 0, %s1160
                %s1163 = smul.u32 %s1162, 28
                %s1164 = smul.u32 %s1162, 28
                %s1165 = scalar_lea.vmem %s1114, %s1163 [#allocation3]
                %s1166 = scalar_lea.vmem %s1125, %s1164
              $region53: #{residual_block1d_forward.9} parent=47 // loop_footer
                %s1140 = sadd.s32 %s1138, 1
              $region54: #{residual_block1d_forward.9} parent=47 // loop_footer_branch
                %1137 = sbr.rel target = $region50
              $region55: #{residual_block1d_forward.9} parent=47 // loop_exit
                _
              %s1167 = sdiv.u32.pop %s1119, 7
              %s1168 = srem.u32.pop %s1119, 7
              %s1169 = smul.u32 %s1167, 7
              %s1170 = smul.u32 4, %s1169
              %s1171 = scalar_lea.vmem %s1114, %s1170 [#allocation3]
              %s1172 = smul.u32 4, %s1169
              %s1173 = scalar_lea.vmem %s1125, %s1172
              // While loop
              $region56: #{residual_block1d_forward.9} parent=47 // loop_pre_header
                _
              $region57: #{residual_block1d_forward.9} parent=47 // loop_header
                %s1175 = sphi 0, %s1177
                %p1176 = scmp.ge.s32.totalorder %s1175, %s1168
                %s1180 = sphi 0, %s1187
                %s1181 = sphi %s1171, %s1190
                %s1182 = sphi %s1173, %s1191
              $region58: #{residual_block1d_forward.9} parent=47 // loop_header_branch
                %1179 = sbr.rel (%p1176) target = $region62
              $region59: #{residual_block1d_forward.9} parent=47 // loop_body
                %v1183 = vld [vmem:[%s1181] sm:%s1134]
                %1184 = vst [vmem:[%s1182] sm:%s1134] %v1183
                %s1185 = sadd.s32 1, %s1180
                %p1186 = scmp.ge.s32.totalorder %s1185, %s1168
                %s1187 = scalar_select %p1186, 0, %s1185
                %s1188 = smul.u32 %s1187, 4
                %s1189 = smul.u32 %s1187, 4
                %s1190 = scalar_lea.vmem %s1171, %s1188 [#allocation3]
                %s1191 = scalar_lea.vmem %s1173, %s1189
              $region60: #{residual_block1d_forward.9} parent=47 // loop_footer
                %s1177 = sadd.s32 %s1175, 1
              $region61: #{residual_block1d_forward.9} parent=47 // loop_footer_branch
                %1174 = sbr.rel target = $region57
              $region62: #{residual_block1d_forward.9} parent=47 // loop_exit
                _
            $region48: #{residual_block1d_forward.9} parent=39 // pred_fallthru
              _
          $region40: #{residual_block1d_forward.9} parent=35 // pred_fallthru
            _
          %1253 = vnop
        $region36: #{residual_block1d_forward.9} parent=31 // pred_fallthru
          _
      $region32: #{residual_block1d_forward.9} parent=5 // pred_fallthru
        _
      %p1254 = scmp.le.s32.totalorder 2, %s9
      // Predicated region
      $region81: #{residual_block1d_forward.9} parent=5 // pred_check
        %p1255 = pneg %p1254
      $region82: #{residual_block1d_forward.9} parent=5 // pred_check_branch
        %1257 = sbr.rel (%p1255) target = $region84
      $region83: #{residual_block1d_forward.9} parent=5 // pred_region
        %s1258 = ssub.s32 %s9, 2
        // Predicated region
        $region85: #{residual_block1d_forward.9} parent=83 // pred_check
          %p1259 = pneg %p120
        $region86: #{residual_block1d_forward.9} parent=83 // pred_check_branch
          %1261 = sbr.rel (%p1259) target = $region88
        $region87: #{residual_block1d_forward.9} parent=83 // pred_region
          %s1262 = sand.u32 %s105, 1
          %s1263 = sand.u32 %s105, 1
          %s1264 = smul.addr %s1263, 32
          %s1265 = scalar_lea.vmem [#allocation3], %s1264
        $region88: #{residual_block1d_forward.9} parent=83 // pred_fallthru
          _
      $region84: #{residual_block1d_forward.9} parent=5 // pred_fallthru
        _
    $region6: #{residual_block1d_forward.9} parent=1 // loop_footer
      %s13 = sadd.s32 1, %s9
    $region7: #{residual_block1d_forward.9} parent=1 // loop_footer_branch
      %8 = sbr.rel target = $region3
    $region8: #{residual_block1d_forward.9} parent=1 // loop_exit
      _

// kernel: residual_block1d_forward.10
$region0: #{residual_block1d_forward.10}
  #allocation0 [shape = 'u32[]', space=smem, size = 0x4, offset = 0x4, fixed_abs, tag = 'smem constant byte address 0x4 - core index']
  #allocation1 [shape = 'u32[144,128]{1,0:T(1,128)}', space=vmem, size = 0x12000, scoped, tag = 'internal scratch']
  #allocation2 [shape = 'bf16[112,128]{1,0:T(8,128)(2,1)}', space=vmem, size = 0x7000, scoped, tag = 'scratch operand']
  %s0 = inlined_call_operand.vmem [shape: bf16[2,112,128], index: 0, kind: input, shape index: {}]
  %s1 = inlined_call_operand.vmem [shape: bf16[4,256,128], index: 1, kind: input, shape index: {}]
  %s2 = inlined_call_operand.vmem [shape: f32[1,128], index: 2, kind: input, shape index: {}]
  %s3 = inlined_call_operand.vmem [shape: bf16[2,50,128], index: 3, kind: output, shape index: {}]
  %s4 = sld [smem:[#allocation0]]
  $region89: #{residual_block1d_forward.10} parent=0
    _
  %s6 = ssub.s32 1, %s4
  %s7 = scalar_select 0, %s6, %s4
  $region1: #{residual_block1d_forward.10} parent=0
    #allocation3 [shape = 'u8[32768]{0}', space=vmem, size = 0x8000, scoped, tag = 'output window, operand 0']
    loop: start=0, step=1, limit=4
    $region2: #{residual_block1d_forward.10} parent=1 // loop_pre_header
      _
    $region3: #{residual_block1d_forward.10} parent=1 // loop_header
      %s9 = sphi 0, %s13
      %p10 = scmp.ge.s32.totalorder %s9, 4
      %s16 = sphi 0, %s28
      %s17 = sphi 0, %s24
      %s18 = sphi 0, %s16
      %s19 = sphi 0, %s17
      %s20 = sphi 0, %s18
      %s21 = sphi 0, %s19
      %s31 = sphi 0, %s33
      %s34 = sphi 0, %s31
      %s35 = sphi 0, %s34
      %s51 = sphi 0, %s35
      %s55 = sphi 0, %s55
      %s57 = sphi 0, %s55
      %s58 = sphi 0, %s57
      %s72 = sphi 0, %s58
      %s76 = sphi 0, %s76
      %s78 = sphi 0, %s76
      %s79 = sphi 0, %s78
      %s93 = sphi 0, %s79
      %s101 = sphi 0, %s103
      %s104 = sphi 0, %s101
      %s105 = sphi 0, %s104
      %s121 = sphi 0, %s105
    $region4: #{residual_block1d_forward.10} parent=1 // loop_header_branch
      %12 = sbr.rel (%p10) target = $region8
    $region5: #{residual_block1d_forward.10} parent=1 // loop_body
      %s14 = ssub.s32 %s9, 1
      %s15 = ssub.s32 %s9, 2
      %s22 = sadd.s32 1, %s17
      %p23 = scmp.ge.s32.totalorder %s22, 1
      %s24 = scalar_select %p23, 0, %s22
      %s25 = sadd.s32 1, %s16
      %s26 = scalar_select %p23, %s25, %s16
      %p27 = scmp.ge.s32.totalorder %s26, 2
      %s28 = scalar_select %p27, 0, %s26
      %s29 = ssub.s32 %s16, %s28
      %p30 = scmp.eq.s32.totalorder %s29, 0
      %s32 = sadd.s32 %s31, 1
      %s33 = scalar_select %p30, %s31, %s32
      %p36 = pneg %p30
      %p37 = scmp.eq.s32.totalorder %s9, 1
      %p38 = por %p36, %p37
      %p39 = scmp.ne.s32.totalorder %s31, %s34
      %p40 = scmp.eq.s32.totalorder %s9, 0
      %p41 = por %p39, %p40
      %p42 = scmp.ne.s32.totalorder %s31, %s34
      %p43 = scmp.eq.s32.totalorder %s14, 1
      %p44 = por %p42, %p43
      %p45 = scmp.ne.s32.totalorder %s34, %s35
      %p46 = scmp.eq.s32.totalorder %s14, 0
      %p47 = por %p45, %p46
      %p48 = scmp.ne.s32.totalorder %s34, %s35
      %p49 = scmp.eq.s32.totalorder %s15, 1
      %p50 = por %p48, %p49
      %p52 = scmp.ne.s32.totalorder %s35, %s51
      %p53 = scmp.eq.s32.totalorder %s15, 0
      %p54 = por %p52, %p53
      %s56 = sadd.s32 %s55, 1
      %p59 = scmp.eq.s32.totalorder %s9, 1
      %p60 = scmp.ne.s32.totalorder %s55, %s57
      %p61 = scmp.eq.s32.totalorder %s9, 0
      %p62 = por %p60, %p61
      %p63 = scmp.ne.s32.totalorder %s55, %s57
      %p64 = scmp.eq.s32.totalorder %s14, 1
      %p65 = por %p63, %p64
      %p66 = scmp.ne.s32.totalorder %s57, %s58
      %p67 = scmp.eq.s32.totalorder %s14, 0
      %p68 = por %p66, %p67
      %p69 = scmp.ne.s32.totalorder %s57, %s58
      %p70 = scmp.eq.s32.totalorder %s15, 1
      %p71 = por %p69, %p70
      %p73 = scmp.ne.s32.totalorder %s58, %s72
      %p74 = scmp.eq.s32.totalorder %s15, 0
      %p75 = por %p73, %p74
      %s77 = sadd.s32 %s76, 1
      %p80 = scmp.eq.s32.totalorder %s9, 1
      %p81 = scmp.ne.s32.totalorder %s76, %s78
      %p82 = scmp.eq.s32.totalorder %s9, 0
      %p83 = por %p81, %p82
      %p84 = scmp.ne.s32.totalorder %s76, %s78
      %p85 = scmp.eq.s32.totalorder %s14, 1
      %p86 = por %p84, %p85
      %p87 = scmp.ne.s32.totalorder %s78, %s79
      %p88 = scmp.eq.s32.totalorder %s14, 0
      %p89 = por %p87, %p88
      %p90 = scmp.ne.s32.totalorder %s78, %s79
      %p91 = scmp.eq.s32.totalorder %s15, 1
      %p92 = por %p90, %p91
      %p94 = scmp.ne.s32.totalorder %s79, %s93
      %p95 = scmp.eq.s32.totalorder %s15, 0
      %p96 = por %p94, %p95
      %s97 = ssub.s32 %s16, %s28
      %s98 = ssub.s32 %s17, %s24
      %s99 = sor.u32 %s97, %s98
      %p100 = scmp.eq.s32.totalorder %s99, 0
      %s102 = sadd.s32 %s101, 1
      %s103 = scalar_select %p100, %s101, %s102
      %p106 = pneg %p100
      %p107 = scmp.eq.s32.totalorder %s9, 1
      %p108 = por %p106, %p107
      %p109 = scmp.ne.s32.totalorder %s101, %s104
      %p110 = scmp.eq.s32.totalorder %s9, 0
      %p111 = por %p109, %p110
      %p112 = scmp.ne.s32.totalorder %s101, %s104
      %p113 = scmp.eq.s32.totalorder %s14, 1
      %p114 = por %p112, %p113
      %p115 = scmp.ne.s32.totalorder %s104, %s105
      %p116 = scmp.eq.s32.totalorder %s14, 0
      %p117 = por %p115, %p116
      %p118 = scmp.ne.s32.totalorder %s104, %s105
      %p119 = scmp.eq.s32.totalorder %s15, 1
      %p120 = por %p118, %p119
      %p122 = scmp.ne.s32.totalorder %s105, %s121
      %p123 = scmp.eq.s32.totalorder %s15, 0
      %p124 = por %p122, %p123
      %p125 = scmp.le.s32.totalorder 1, %s9
      %p126 = scmp.lt.s32.totalorder %s9, 3
      %p127 = pnand %p125, %p126
      %p128 = pneg %p127
      // Predicated region
      $region9: #{residual_block1d_forward.10} parent=5 // pred_check
        _
      $region10: #{residual_block1d_forward.10} parent=5 // pred_check_branch
        %130 = sbr.rel (%p127) target = $region12
      $region11: #{residual_block1d_forward.10} parent=5 // pred_region
        %s131 = ssub.s32 %s9, 1
        // Predicated region
        $region13: #{residual_block1d_forward.10} parent=11 // pred_check
          %p132 = pneg %p68
        $region14: #{residual_block1d_forward.10} parent=11 // pred_check_branch
          %134 = sbr.rel (%p132) target = $region16
        $region15: #{residual_block1d_forward.10} parent=11 // pred_region
          _
        $region16: #{residual_block1d_forward.10} parent=11 // pred_fallthru
          _
        // Predicated region
        $region17: #{residual_block1d_forward.10} parent=11 // pred_check
          %p135 = pneg %p89
        $region18: #{residual_block1d_forward.10} parent=11 // pred_check_branch
          %137 = sbr.rel (%p135) target = $region20
        $region19: #{residual_block1d_forward.10} parent=11 // pred_region
          _
        $region20: #{residual_block1d_forward.10} parent=11 // pred_fallthru
          _
      $region12: #{residual_block1d_forward.10} parent=5 // pred_fallthru
        _
      %p138 = scmp.lt.s32.totalorder %s9, 2
      // Predicated region
      $region21: #{residual_block1d_forward.10} parent=5 // pred_check
        %p139 = pneg %p138
      $region22: #{residual_block1d_forward.10} parent=5 // pred_check_branch
        %141 = sbr.rel (%p139) target = $region24
      $region23: #{residual_block1d_forward.10} parent=5 // pred_region
        // Predicated region
        $region25: #{residual_block1d_forward.10} parent=23 // pred_check
          %p142 = pneg %p41
        $region26: #{residual_block1d_forward.10} parent=23 // pred_check_branch
          %144 = sbr.rel (%p142) target = $region28
        $region27: #{residual_block1d_forward.10} parent=23 // pred_region
          %p145 = scmp.lt.s32.totalorder %s16, 1
          %s146 = scalar_select %p145, %s16, 1
          %s147 = smul.addr %s146, 14
          %s148 = smul.addr %s147, 4
          %s149 = scalar_lea.vmem %s0, %s148
        $region28: #{residual_block1d_forward.10} parent=23 // pred_fallthru
          _
      $region24: #{residual_block1d_forward.10} parent=5 // pred_fallthru
        _
      %p150 = scmp.le.s32.totalorder 1, %s9
      %p151 = scmp.lt.s32.totalorder %s9, 3
      %p152 = pnand %p150, %p151
      %p153 = pneg %p152
      // Predicated region
      $region29: #{residual_block1d_forward.10} parent=5 // pred_check
        _
      $region30: #{residual_block1d_forward.10} parent=5 // pred_check_branch
        %155 = sbr.rel (%p152) target = $region32
      $region31: #{residual_block1d_forward.10} parent=5 // pred_region
        %s156 = ssub.s32 %s9, 1
        %p157 = scmp.lt.s32.totalorder %s18, 1
        %s158 = scalar_select %p157, %s18, 1
        %s159 = smul.addr %s158, 14
        %s160 = smul.addr %s159, 4
        %s161 = scalar_lea.vmem %s0, %s160
        %p162 = pneg %p47
        %p163 = pneg %p44
        %p164 = pneg %p68
        %p165 = pneg %p65
        %p166 = pneg %p89
        %p167 = pneg %p86
        %p168 = pneg %p117
        %p169 = pneg %p114
        %s170 = sand.u32 %s104, 1
        %s171 = sand.u32 %s104, 1
        %s172 = smul.addr %s171, 32
        %s173 = scalar_lea.vmem [#allocation3], %s172
        %p174 = scmp.lt.s32.totalorder %s18, 1
        %s175 = scalar_select %p174, %s18, 1
        %s176 = smul.addr %s175, 14
        %s177 = smul.addr %s176, 4
        %s178 = scalar_lea.vmem %s0, %s177
        %s179 = smul.u32 8, %s19
        %s180 = ssub.s32 7, %s179
        %s181 = smul.u32 64, %s180
        %s183 = smul.u32 %s19, 64
        %s184 = sshra.s32 %s183, 3
        %s185 = sand.u32 %s183, 7
        %s186 = smul.addr %s184, 4
        %s187 = scalar_lea.vmem %s178, %s186
        %v188 = vld [vmem:[%s187] sm:$0xf]
        %v189 = vld [vmem:[%s187 + $0x4] sm:$0xf]
        %v190 = vld [vmem:[%s187 + $0x8] sm:$0xf]
        %v191 = vld [vmem:[%s187 + $0xc] sm:$0xf]
        %v192 = vld [vmem:[%s187 + $0x10] sm:$0xf]
        %v193 = vld [vmem:[%s187 + $0x14] sm:$0xf]
        %v194 = vld [vmem:[%s187 + $0x18] sm:$0xf]
        %v195 = vld [vmem:[%s187 + $0x1c] sm:$0xf]
        %v196 = vld [vmem:[%s187 + $0x20] sm:$0xf]
        %v197 = vld [vmem:[%s187 + $0x24] sm:$0xf]
        %v198 = vld [vmem:[%s187 + $0x28] sm:$0xf]
        %v199 = vld [vmem:[%s187 + $0x2c] sm:$0xf]
        %v200 = vld [vmem:[%s187 + $0x30] sm:$0xf]
        %v201 = vld [vmem:[%s187 + $0x34] sm:$0xf]
        %v202 = vunpack.c.l.bf16 %v188
        %v203 = vunpack.c.l.bf16 %v189
        %v204 = vunpack.c.l.bf16 %v190
        %v205 = vunpack.c.l.bf16 %v191
        %v206 = vunpack.c.l.bf16 %v192
        %v207 = vunpack.c.l.bf16 %v193
        %v208 = vunpack.c.l.bf16 %v194
        %v209 = vunpack.c.l.bf16 %v195
        %v210 = vunpack.c.l.bf16 %v196
        %v211 = vunpack.c.l.bf16 %v197
        %v212 = vunpack.c.l.bf16 %v198
        %v213 = vunpack.c.l.bf16 %v199
        %v214 = vunpack.c.l.bf16 %v200
        %v215 = vunpack.c.l.bf16 %v201
        %vm216 = vcmp.ge.f32.partialorder %v202, 0.0
        %vm217 = vcmp.ge.f32.partialorder %v203, 0.0
        %vm218 = vcmp.ge.f32.partialorder %v204, 0.0
        %vm219 = vcmp.ge.f32.partialorder %v205, 0.0
        %vm220 = vcmp.ge.f32.partialorder %v206, 0.0
        %vm221 = vcmp.ge.f32.partialorder %v207, 0.0
        %vm222 = vcmp.ge.f32.partialorder %v208, 0.0
        %vm223 = vcmp.ge.f32.partialorder %v209, 0.0
        %vm224 = vcmp.ge.f32.partialorder %v210, 0.0
        %vm225 = vcmp.ge.f32.partialorder %v211, 0.0
        %vm226 = vcmp.ge.f32.partialorder %v212, 0.0
        %vm227 = vcmp.ge.f32.partialorder %v213, 0.0
        %vm228 = vcmp.ge.f32.partialorder %v214, 0.0
        %vm229 = vcmp.ge.f32.partialorder %v215, 0.0
        %v230 = vmul.f32 %v202, 0.1
        %v231 = vmul.f32 %v203, 0.1
        %v232 = vmul.f32 %v204, 0.1
        %v233 = vmul.f32 %v205, 0.1
        %v234 = vmul.f32 %v206, 0.1
        %v235 = vmul.f32 %v207, 0.1
        %v236 = vmul.f32 %v208, 0.1
        %v237 = vmul.f32 %v209, 0.1
        %v238 = vmul.f32 %v210, 0.1
        %v239 = vmul.f32 %v211, 0.1
        %v240 = vmul.f32 %v212, 0.1
        %v241 = vmul.f32 %v213, 0.1
        %v242 = vmul.f32 %v214, 0.1
        %v243 = vmul.f32 %v215, 0.1
        %v244 = vsel %vm216, %v202, %v230
        %v245 = vsel %vm217, %v203, %v231
        %v246 = vsel %vm218, %v204, %v232
        %v247 = vsel %vm219, %v205, %v233
        %v248 = vsel %vm220, %v206, %v234
        %v249 = vsel %vm221, %v207, %v235
        %v250 = vsel %vm222, %v208, %v236
        %v251 = vsel %vm223, %v209, %v237
        %v252 = vsel %vm224, %v210, %v238
        %v253 = vsel %vm225, %v211, %v239
        %v254 = vsel %vm226, %v212, %v240
        %v255 = vsel %vm227, %v213, %v241
        %v256 = vsel %vm228, %v214, %v242
        %v257 = vsel %vm229, %v215, %v243
        %v258 = vpack.c.bf16 %v245, %v244
        %v259 = vpack.c.bf16 %v247, %v246
        %v260 = vpack.c.bf16 %v249, %v248
        %v261 = vpack.c.bf16 %v251, %v250
        %v262 = vpack.c.bf16 %v253, %v252
        %v263 = vpack.c.bf16 %v255, %v254
        %v264 = vpack.c.bf16 %v257, %v256
        %v272 = vunpack.c.l.b16 %v258
        %v273 = vunpack.c.h.b16 %v258
        %v274 = vunpack.c.l.b16 %v259
        %v275 = vunpack.c.h.b16 %v259
        %v276 = vunpack.c.l.b16 %v260
        %v277 = vunpack.c.h.b16 %v260
        %v278 = vunpack.c.l.b16 %v261
        %v279 = vunpack.c.h.b16 %v261
        %v280 = vunpack.c.l.b16 %v262
        %v281 = vunpack.c.h.b16 %v262
        %v282 = vunpack.c.l.b16 %v263
        %v283 = vunpack.c.h.b16 %v263
        %v284 = vunpack.c.l.b16 %v264
        %v285 = vunpack.c.h.b16 %v264
        %v286 = vpack.c.b16 %v272, %v272
        %v287 = vpack.c.b16 %v273, %v273
        %v288 = vpack.c.b16 %v274, %v274
        %v289 = vpack.c.b16 %v275, %v275
        %v290 = vpack.c.b16 %v276, %v276
        %v291 = vpack.c.b16 %v277, %v277
        %v292 = vpack.c.b16 %v278, %v278
        %v293 = vpack.c.b16 %v279, %v279
        %v294 = vpack.c.b16 %v280, %v280
        %v295 = vpack.c.b16 %v281, %v281
        %v296 = vpack.c.b16 %v282, %v282
        %v297 = vpack.c.b16 %v283, %v283
        %v298 = vpack.c.b16 %v284, %v284
        %v299 = vpack.c.b16 %v285, %v285
        %314 = vst [vmem:[#allocation2] sm:$0xf] %v286
        %315 = vst [vmem:[#allocation2 + $0x4] sm:$0xf] %v287
        %316 = vst [vmem:[#allocation2 + $0x8] sm:$0xf] %v288
        %317 = vst [vmem:[#allocation2 + $0xc] sm:$0xf] %v289
        %318 = vst [vmem:[#allocation2 + $0x10] sm:$0xf] %v290
        %319 = vst [vmem:[#allocation2 + $0x14] sm:$0xf] %v291
        %320 = vst [vmem:[#allocation2 + $0x18] sm:$0xf] %v292
        %321 = vst [vmem:[#allocation2 + $0x1c] sm:$0xf] %v293
        %322 = vst [vmem:[#allocation2 + $0x20] sm:$0xf] %v294
        %323 = vst [vmem:[#allocation2 + $0x24] sm:$0xf] %v295
        %324 = vst [vmem:[#allocation2 + $0x28] sm:$0xf] %v296
        %325 = vst [vmem:[#allocation2 + $0x2c] sm:$0xf] %v297
        %326 = vst [vmem:[#allocation2 + $0x30] sm:$0xf] %v298
        %327 = vst [vmem:[#allocation2 + $0x34] sm:$0xf] %v299
        %v328 = vld [vmem:[%s2] sm:$0x1]
        %v329 = vld [vmem:[#allocation2] sm:$0xf]
        %v330 = vld [vmem:[#allocation2 + $0x4] sm:$0xf]
        %v331 = vld [vmem:[#allocation2 + $0x8] sm:$0xf]
        %v332 = vld [vmem:[#allocation2 + $0xc] sm:$0xf]
        %v333 = vld [vmem:[#allocation2 + $0x10] sm:$0xf]
        %v334 = vld [vmem:[#allocation2 + $0x14] sm:$0xf]
        %v335 = vld [vmem:[#allocation2 + $0x18] sm:$0xf]
        %v336 = vld [vmem:[#allocation2 + $0x1c] sm:$0xf]
        %v337 = vld [vmem:[#allocation2] sm:$0xc]
        %v338 = vld [vmem:[#allocation2 + $0x20] sm:$0x7]
        %v347 = vunpack.c.l.b16 %v329
        %v348 = vunpack.c.l.b16 %v330
        %v349 = vunpack.c.l.b16 %v331
        %v350 = vunpack.c.l.b16 %v332
        %v351 = vunpack.c.l.b16 %v333
        %v352 = vunpack.c.l.b16 %v334
        %v353 = vunpack.c.l.b16 %v335
        %v354 = vunpack.c.l.b16 %v336
        %v355 = vpack.c.b16 %v348, %v347
        %v356 = vpack.c.b16 %v350, %v349
        %v357 = vpack.c.b16 %v352, %v351
        %v358 = vpack.c.b16 %v354, %v353
        %v365 = vunpack.c.l.b16 %v337
        %v366 = vunpack.c.l.b16 %v338
        %v367 = vpack.c.b16 %v348, %v365
        %v368 = vpack.c.b16 %v366, %v366
        %vm369 = vsmask.f32 5376
        %v371 = vshrl.u32 %v367, 16
        %v373 = vrot.slane %v371, 2
        %v374 = vshll.u32 %v367, 16
        %v376 = vrot.slane %v374, 3
        %v377 = vor.u32 %v373, %v376
        %v379 = vshrl.u32 %v356, 16
        %v381 = vrot.slane %v379, 2
        %v382 = vshll.u32 %v356, 16
        %v384 = vrot.slane %v382, 3
        %v385 = vor.u32 %v381, %v384
        %v386 = vsel %vm369, %v377, %v385
        %v388 = vshrl.u32 %v357, 16
        %v390 = vrot.slane %v388, 2
        %v391 = vshll.u32 %v357, 16
        %v393 = vrot.slane %v391, 3
        %v394 = vor.u32 %v390, %v393
        %v395 = vsel %vm369, %v385, %v394
        %v397 = vshrl.u32 %v358, 16
        %v399 = vrot.slane %v397, 2
        %v400 = vshll.u32 %v358, 16
        %v402 = vrot.slane %v400, 3
        %v403 = vor.u32 %v399, %v402
        %v404 = vsel %vm369, %v394, %v403
        %v406 = vshrl.u32 %v368, 16
        %v408 = vrot.slane %v406, 2
        %v409 = vshll.u32 %v368, 16
        %v411 = vrot.slane %v409, 3
        %v412 = vor.u32 %v408, %v411
        %v413 = vsel %vm369, %v403, %v412
        %v418 = vld [vmem:[%s1] sm:$0xf]
        %v419 = vld [vmem:[%s1 + $0x4] sm:$0xf]
        %v420 = vld [vmem:[%s1 + $0x8] sm:$0xf]
        %v421 = vld [vmem:[%s1 + $0xc] sm:$0xf]
        %v422 = vld [vmem:[%s1 + $0x10] sm:$0xf]
        %v423 = vld [vmem:[%s1 + $0x14] sm:$0xf]
        %v424 = vld [vmem:[%s1 + $0x18] sm:$0xf]
        %v425 = vld [vmem:[%s1 + $0x1c] sm:$0xf]
        %v426 = vld [vmem:[%s1 + $0x20] sm:$0xf]
        %v427 = vld [vmem:[%s1 + $0x24] sm:$0xf]
        %v428 = vld [vmem:[%s1 + $0x28] sm:$0xf]
        %v429 = vld [vmem:[%s1 + $0x2c] sm:$0xf]
        %v430 = vld [vmem:[%s1 + $0x30] sm:$0xf]
        %v431 = vld [vmem:[%s1 + $0x34] sm:$0xf]
        %v432 = vld [vmem:[%s1 + $0x38] sm:$0xf]
        %v433 = vld [vmem:[%s1 + $0x3c] sm:$0xf]
        %v434 = vld [vmem:[%s1 + $0x40] sm:$0xf]
        %v435 = vld [vmem:[%s1 + $0x44] sm:$0xf]
        %v436 = vld [vmem:[%s1 + $0x48] sm:$0xf]
        %v437 = vld [vmem:[%s1 + $0x4c] sm:$0xf]
        %v438 = vld [vmem:[%s1 + $0x50] sm:$0xf]
        %v439 = vld [vmem:[%s1 + $0x54] sm:$0xf]
        %v440 = vld [vmem:[%s1 + $0x58] sm:$0xf]
        %v441 = vld [vmem:[%s1 + $0x5c] sm:$0xf]
        %v442 = vld [vmem:[%s1 + $0x60] sm:$0xf]
        %v443 = vld [vmem:[%s1 + $0x64] sm:$0xf]
        %v444 = vld [vmem:[%s1 + $0x68] sm:$0xf]
        %v445 = vld [vmem:[%s1 + $0x6c] sm:$0xf]
        %v446 = vld [vmem:[%s1 + $0x70] sm:$0xf]
        %v447 = vld [vmem:[%s1 + $0x74] sm:$0xf]
        %v448 = vld [vmem:[%s1 + $0x78] sm:$0xf]
        %v449 = vld [vmem:[%s1 + $0x7c] sm:$0xf]
        %v451 = vlaneseq
        %v452 = vshrl.u32 %v451, 7
        %v453 = vsub.s32 0, %v452
        %v454 = vrot.slane %v328, %v453
        %v488 = vunpack.c.l.b16 %v418
        %v489 = vunpack.c.l.b16 %v419
        %v490 = vunpack.c.l.b16 %v420
        %v491 = vunpack.c.l.b16 %v421
        %v492 = vunpack.c.l.b16 %v422
        %v493 = vunpack.c.l.b16 %v423
        %v494 = vunpack.c.l.b16 %v424
        %v495 = vunpack.c.l.b16 %v425
        %v496 = vunpack.c.l.b16 %v426
        %v497 = vunpack.c.l.b16 %v427
        %v498 = vunpack.c.l.b16 %v428
        %v499 = vunpack.c.l.b16 %v429
        %v500 = vunpack.c.l.b16 %v430
        %v501 = vunpack.c.l.b16 %v431
        %v502 = vunpack.c.l.b16 %v432
        %v503 = vunpack.c.l.b16 %v433
        %v504 = vunpack.c.l.b16 %v434
        %v505 = vunpack.c.l.b16 %v435
        %v506 = vunpack.c.l.b16 %v436
        %v507 = vunpack.c.l.b16 %v437
        %v508 = vunpack.c.l.b16 %v438
        %v509 = vunpack.c.l.b16 %v439
        %v510 = vunpack.c.l.b16 %v440
        %v511 = vunpack.c.l.b16 %v441
        %v512 = vunpack.c.l.b16 %v442
        %v513 = vunpack.c.l.b16 %v443
        %v514 = vunpack.c.l.b16 %v444
        %v515 = vunpack.c.l.b16 %v445
        %v516 = vunpack.c.l.b16 %v446
        %v517 = vunpack.c.l.b16 %v447
        %v518 = vunpack.c.l.b16 %v448
        %v519 = vunpack.c.l.b16 %v449
        %v520 = vpack.c.b16 %v489, %v488
        %v521 = vpack.c.b16 %v491, %v490
        %v522 = vpack.c.b16 %v493, %v492
        %v523 = vpack.c.b16 %v495, %v494
        %v524 = vpack.c.b16 %v497, %v496
        %v525 = vpack.c.b16 %v499, %v498
        %v526 = vpack.c.b16 %v501, %v500
        %v527 = vpack.c.b16 %v503, %v502
        %v528 = vpack.c.b16 %v505, %v504
        %v529 = vpack.c.b16 %v507, %v506
        %v530 = vpack.c.b16 %v509, %v508
        %v531 = vpack.c.b16 %v511, %v510
        %v532 = vpack.c.b16 %v513, %v512
        %v533 = vpack.c.b16 %v515, %v514
        %v534 = vpack.c.b16 %v517, %v516
        %v535 = vpack.c.b16 %v519, %v518
        %552 = vmatprep.subr.bf16.mxu0 0
        %553 = vmatpush1.bf16.msra.mxu0 %v527
        %554 = vmatprep.subr.bf16.mxu0 0
        %555 = vmatpush1.bf16.msra.mxu0 %v526
        %556 = vmatprep.subr.bf16.mxu0 0
        %557 = vmatpush1.bf16.msra.mxu0 %v525
        %558 = vmatprep.subr.bf16.mxu0 0
        %559 = vmatpush1.bf16.msra.mxu0 %v524
        %560 = vmatprep.subr.bf16.mxu0 0
        %561 = vmatpush1.bf16.msra.mxu0 %v523
        %562 = vmatprep.subr.bf16.mxu0 0
        %563 = vmatpush1.bf16.msra.mxu0 %v522
        %564 = vmatprep.subr.bf16.mxu0 0
        %565 = vmatpush1.bf16.msra.mxu0 %v521
        %566 = vmatprep.subr.bf16.mxu0 0
        %567 = vmatpush1.bf16.msra.mxu0 %v520
        %568 = vmatprep.subr.bf16.mxu0 0
        %569 = vmatpush2.bf16.msra.mxu0 %v535
        %570 = vmatprep.subr.bf16.mxu0 0
        %571 = vmatpush2.bf16.msra.mxu0 %v534
        %572 = vmatprep.subr.bf16.mxu0 0
        %573 = vmatpush2.bf16.msra.mxu0 %v533
        %574 = vmatprep.subr.bf16.mxu0 0
        %575 = vmatpush2.bf16.msra.mxu0 %v532
        %576 = vmatprep.subr.bf16.mxu0 0
        %577 = vmatpush2.bf16.msra.mxu0 %v531
        %578 = vmatprep.subr.bf16.mxu0 0
        %579 = vmatpush2.bf16.msra.mxu0 %v530
        %580 = vmatprep.subr.bf16.mxu0 0
        %581 = vmatpush2.bf16.msra.mxu0 %v529
        %582 = vmatprep.subr.bf16.mxu0 0
        %583 = vmatpush2.bf16.msra.mxu0 %v528
        %584 = vmatprep.mubr.bf16.mxu0 %v386
        %585 = vmatmul.mubr.bf16.gmra.mxu0 %v355
        %v586 = vpop.f32.mrf.mxu0
        %v587 = vadd.f32 %v454, %v586
        %v588 = vpop.f32.mrf.mxu0
        %v589 = vpop.f32.mrf.mxu0
        %v590 = vadd.f32 %v454, %v589
        %v591 = vpop.f32.mrf.mxu0
        %592 = vmatprep.mubr.bf16.mxu0 %v395
        %593 = vmatmul.mubr.bf16.gmra.mxu0 %v356
        %v594 = vpop.f32.mrf.mxu0
        %v595 = vadd.f32 %v454, %v594
        %v596 = vpop.f32.mrf.mxu0
        %v597 = vpop.f32.mrf.mxu0
        %v598 = vadd.f32 %v454, %v597
        %v599 = vpop.f32.mrf.mxu0
        %600 = vmatprep.mubr.bf16.mxu0 %v404
        %601 = vmatmul.mubr.bf16.gmra.mxu0 %v357
        %v602 = vpop.f32.mrf.mxu0
        %v603 = vadd.f32 %v454, %v602
        %v604 = vpop.f32.mrf.mxu0
        %v605 = vpop.f32.mrf.mxu0
        %v606 = vadd.f32 %v454, %v605
        %v607 = vpop.f32.mrf.mxu0
        %608 = vmatprep.mubr.bf16.mxu0 %v413
        %609 = vmatmul.mubr.bf16.gmra.mxu0 %v358
        %v610 = vpop.f32.mrf.mxu0
        %v611 = vadd.f32 %v454, %v610
        %v612 = vpop.f32.mrf.mxu0
        %v613 = vpop.f32.mrf.mxu0
        %v614 = vadd.f32 %v454, %v613
        %v615 = vpop.f32.mrf.mxu0
        %616 = vdwg.mxu0
        %v617 = vld [vmem:[#allocation2 + $0x4] sm:$0xe]
        %v618 = vld [vmem:[#allocation2 + $0x8] sm:$0xf]
        %v619 = vld [vmem:[#allocation2 + $0xc] sm:$0xf]
        %v620 = vld [vmem:[#allocation2 + $0x10] sm:$0xf]
        %v621 = vld [vmem:[#allocation2 + $0x14] sm:$0xf]
        %v622 = vld [vmem:[#allocation2 + $0x18] sm:$0xf]
        %v623 = vld [vmem:[#allocation2 + $0x1c] sm:$0xf]
        %v624 = vld [vmem:[#allocation2 + $0x20] sm:$0xf]
        %v625 = vld [vmem:[#allocation2 + $0x24] sm:$0x1]
        %v626 = vld [vmem:[#allocation2 + $0x4] sm:$0x8]
        %v627 = vld [vmem:[#allocation2 + $0x24] sm:$0xf]
        %v637 = vunpack.c.l.b16 %v617
        %v638 = vunpack.c.l.b16 %v618
        %v639 = vunpack.c.l.b16 %v619
        %v640 = vunpack.c.l.b16 %v620
        %v641 = vunpack.c.l.b16 %v621
        %v642 = vunpack.c.l.b16 %v622
        %v643 = vunpack.c.l.b16 %v623
        %v644 = vunpack.c.l.b16 %v624
        %v645 = vunpack.c.l.b16 %v625
        %v646 = vpack.c.b16 %v638, %v637
        %v647 = vpack.c.b16 %v640, %v639
        %v648 = vpack.c.b16 %v642, %v641
        %v649 = vpack.c.b16 %v644, %v643
        %v650 = vpack.c.b16 %v645, %v645
        %v653 = vunpack.c.l.b16 %v626
        %v654 = vunpack.c.l.b16 %v627
        %v655 = vpack.c.b16 %v638, %v653
        %v656 = vpack.c.b16 %v654, %v654
        %v658 = vshrl.u32 %v655, 16
        %v660 = vrot.slane %v658, 2
        %v661 = vshll.u32 %v655, 16
        %v663 = vrot.slane %v661, 3
        %v664 = vor.u32 %v660, %v663
        %v666 = vshrl.u32 %v647, 16
        %v668 = vrot.slane %v666, 2
        %v669 = vshll.u32 %v647, 16
        %v671 = vrot.slane %v669, 3
        %v672 = vor.u32 %v668, %v671
        %v673 = vsel %vm369, %v664, %v672
        %v675 = vshrl.u32 %v648, 16
        %v677 = vrot.slane %v675, 2
        %v678 = vshll.u32 %v648, 16
        %v680 = vrot.slane %v678, 3
        %v681 = vor.u32 %v677, %v680
        %v682 = vsel %vm369, %v672, %v681
        %v684 = vshrl.u32 %v649, 16
        %v686 = vrot.slane %v684, 2
        %v687 = vshll.u32 %v649, 16
        %v689 = vrot.slane %v687, 3
        %v690 = vor.u32 %v686, %v689
        %v691 = vsel %vm369, %v681, %v690
        %v693 = vshrl.u32 %v656, 16
        %v695 = vrot.slane %v693, 2
        %v696 = vshll.u32 %v656, 16
        %v698 = vrot.slane %v696, 3
        %v699 = vor.u32 %v695, %v698
        %v700 = vsel %vm369, %v690, %v699
        %s701 = scalar_lea.vmem %s1, 128
        %v702 = vld [vmem:[%s701] sm:$0xf]
        %v703 = vld [vmem:[%s701 + $0x4] sm:$0xf]
        %v704 = vld [vmem:[%s701 + $0x8] sm:$0xf]
        %v705 = vld [vmem:[%s701 + $0xc] sm:$0xf]
        %v706 = vld [vmem:[%s701 + $0x10] sm:$0xf]
        %v707 = vld [vmem:[%s701 + $0x14] sm:$0xf]
        %v708 = vld [vmem:[%s701 + $0x18] sm:$0xf]
        %v709 = vld [vmem:[%s701 + $0x1c] sm:$0xf]
        %v710 = vld [vmem:[%s701 + $0x20] sm:$0xf]
        %v711 = vld [vmem:[%s701 + $0x24] sm:$0xf]
        %v712 = vld [vmem:[%s701 + $0x28] sm:$0xf]
        %v713 = vld [vmem:[%s701 + $0x2c] sm:$0xf]
        %v714 = vld [vmem:[%s701 + $0x30] sm:$0xf]
        %v715 = vld [vmem:[%s701 + $0x34] sm:$0xf]
        %v716 = vld [vmem:[%s701 + $0x38] sm:$0xf]
        %v717 = vld [vmem:[%s701 + $0x3c] sm:$0xf]
        %v718 = vld [vmem:[%s701 + $0x40] sm:$0xf]
        %v719 = vld [vmem:[%s701 + $0x44] sm:$0xf]
        %v720 = vld [vmem:[%s701 + $0x48] sm:$0xf]
        %v721 = vld [vmem:[%s701 + $0x4c] sm:$0xf]
        %v722 = vld [vmem:[%s701 + $0x50] sm:$0xf]
        %v723 = vld [vmem:[%s701 + $0x54] sm:$0xf]
        %v724 = vld [vmem:[%s701 + $0x58] sm:$0xf]
        %v725 = vld [vmem:[%s701 + $0x5c] sm:$0xf]
        %v726 = vld [vmem:[%s701 + $0x60] sm:$0xf]
        %v727 = vld [vmem:[%s701 + $0x64] sm:$0xf]
        %v728 = vld [vmem:[%s701 + $0x68] sm:$0xf]
        %v729 = vld [vmem:[%s701 + $0x6c] sm:$0xf]
        %v730 = vld [vmem:[%s701 + $0x70] sm:$0xf]
        %v731 = vld [vmem:[%s701 + $0x74] sm:$0xf]
        %v732 = vld [vmem:[%s701 + $0x78] sm:$0xf]
        %v733 = vld [vmem:[%s701 + $0x7c] sm:$0xf]
        %vm734 = vcmask 1046528
        %v735 = vrot.slane %v646, 1
        %v736 = vrot.slane %v647, 1
        %v737 = vsel %vm734, %v735, %v736
        %v738 = vrot.slane %v673, 1
        %v739 = vrot.slane %v682, 1
        %v740 = vsel %vm734, %v738, %v739
        %v741 = vrot.slane %v648, 1
        %v742 = vsel %vm734, %v736, %v741
        %v743 = vrot.slane %v691, 1
        %v744 = vsel %vm734, %v739, %v743
        %v745 = vrot.slane %v649, 1
        %v746 = vsel %vm734, %v741, %v745
        %v747 = vrot.slane %v700, 1
        %v748 = vsel %vm734, %v743, %v747
        %v749 = vrot.slane %v650, 1
        %v750 = vsel %vm734, %v745, %v749
        %v751 = vrot.slane %v699, 1
        %v752 = vsel %vm734, %v747, %v751
        %v793 = vunpack.c.l.b16 %v702
        %v794 = vunpack.c.l.b16 %v703
        %v795 = vunpack.c.l.b16 %v704
        %v796 = vunpack.c.l.b16 %v705
        %v797 = vunpack.c.l.b16 %v706
        %v798 = vunpack.c.l.b16 %v707
        %v799 = vunpack.c.l.b16 %v708
        %v800 = vunpack.c.l.b16 %v709
        %v801 = vunpack.c.l.b16 %v710
        %v802 = vunpack.c.l.b16 %v711
        %v803 = vunpack.c.l.b16 %v712
        %v804 = vunpack.c.l.b16 %v713
        %v805 = vunpack.c.l.b16 %v714
        %v806 = vunpack.c.l.b16 %v715
        %v807 = vunpack.c.l.b16 %v716
        %v808 = vunpack.c.l.b16 %v717
        %v809 = vunpack.c.l.b16 %v718
        %v810 = vunpack.c.l.b16 %v719
        %v811 = vunpack.c.l.b16 %v720
        %v812 = vunpack.c.l.b16 %v721
        %v813 = vunpack.c.l.b16 %v722
        %v814 = vunpack.c.l.b16 %v723
        %v815 = vunpack.c.l.b16 %v724
        %v816 = vunpack.c.l.b16 %v725
        %v817 = vunpack.c.l.b16 %v726
        %v818 = vunpack.c.l.b16 %v727
        %v819 = vunpack.c.l.b16 %v728
        %v820 = vunpack.c.l.b16 %v729
        %v821 = vunpack.c.l.b16 %v730
        %v822 = vunpack.c.l.b16 %v731
        %v823 = vunpack.c.l.b16 %v732
        %v824 = vunpack.c.l.b16 %v733
        %v825 = vpack.c.b16 %v794, %v793
        %v826 = vpack.c.b16 %v796, %v795
        %v827 = vpack.c.b16 %v798, %v797
        %v828 = vpack.c.b16 %v800, %v799
        %v829 = vpack.c.b16 %v802, %v801
        %v830 = vpack.c.b16 %v804, %v803
        %v831 = vpack.c.b16 %v806, %v805
        %v832 = vpack.c.b16 %v808, %v807
        %v833 = vpack.c.b16 %v810, %v809
        %v834 = vpack.c.b16 %v812, %v811
        %v835 = vpack.c.b16 %v814, %v813
        %v836 = vpack.c.b16 %v816, %v815
        %v837 = vpack.c.b16 %v818, %v817
        %v838 = vpack.c.b16 %v820, %v819
        %v839 = vpack.c.b16 %v822, %v821
        %v840 = vpack.c.b16 %v824, %v823
        %857 = vmatprep.subr.bf16.mxu0 0
        %858 = vmatpush1.bf16.msra.mxu0 %v832
        %859 = vmatprep.subr.bf16.mxu0 0
        %860 = vmatpush1.bf16.msra.mxu0 %v831
        %861 = vmatprep.subr.bf16.mxu0 0
        %862 = vmatpush1.bf16.msra.mxu0 %v830
        %863 = vmatprep.subr.bf16.mxu0 0
        %864 = vmatpush1.bf16.msra.mxu0 %v829
        %865 = vmatprep.subr.bf16.mxu0 0
        %866 = vmatpush1.bf16.msra.mxu0 %v828
        %867 = vmatprep.subr.bf16.mxu0 0
        %868 = vmatpush1.bf16.msra.mxu0 %v827
        %869 = vmatprep.subr.bf16.mxu0 0
        %870 = vmatpush1.bf16.msra.mxu0 %v826
        %871 = vmatprep.subr.bf16.mxu0 0
        %872 = vmatpush1.bf16.msra.mxu0 %v825
        %873 = vmatprep.subr.bf16.mxu0 0
        %874 = vmatpush2.bf16.msra.mxu0 %v840
        %875 = vmatprep.subr.bf16.mxu0 0
        %876 = vmatpush2.bf16.msra.mxu0 %v839
        %877 = vmatprep.subr.bf16.mxu0 0
        %878 = vmatpush2.bf16.msra.mxu0 %v838
        %879 = vmatprep.subr.bf16.mxu0 0
        %880 = vmatpush2.bf16.msra.mxu0 %v837
        %881 = vmatprep.subr.bf16.mxu0 0
        %882 = vmatpush2.bf16.msra.mxu0 %v836
        %883 = vmatprep.subr.bf16.mxu0 0
        %884 = vmatpush2.bf16.msra.mxu0 %v835
        %885 = vmatprep.subr.bf16.mxu0 0
        %886 = vmatpush2.bf16.msra.mxu0 %v834
        %887 = vmatprep.subr.bf16.mxu0 0
        %888 = vmatpush2.bf16.msra.mxu0 %v833
        %889 = vmatprep.mubr.bf16.mxu0 %v740
        %890 = vmatmul.mubr.bf16.gmra.mxu0 %v737
        %v891 = vpop.f32.mrf.mxu0
        %v892 = vadd.f32 0.0, %v891
        %v893 = vpop.f32.mrf.mxu0
        %v894 = vpop.f32.mrf.mxu0
        %v895 = vadd.f32 0.0, %v894
        %v896 = vpop.f32.mrf.mxu0
        %897 = vmatprep.mubr.bf16.mxu0 %v744
        %898 = vmatmul.mubr.bf16.gmra.mxu0 %v742
        %v899 = vpop.f32.mrf.mxu0
        %v900 = vadd.f32 0.0, %v899
        %v901 = vpop.f32.mrf.mxu0
        %v902 = vpop.f32.mrf.mxu0
        %v903 = vadd.f32 0.0, %v902
        %v904 = vpop.f32.mrf.mxu0
        %905 = vmatprep.mubr.bf16.mxu0 %v748
        %906 = vmatmul.mubr.bf16.gmra.mxu0 %v746
        %v907 = vpop.f32.mrf.mxu0
        %v908 = vadd.f32 0.0, %v907
        %v909 = vpop.f32.mrf.mxu0
        %v910 = vpop.f32.mrf.mxu0
        %v911 = vadd.f32 0.0, %v910
        %v912 = vpop.f32.mrf.mxu0
        %913 = vmatprep.mubr.bf16.mxu0 %v752
        %914 = vmatmul.mubr.bf16.gmra.mxu0 %v750
        %v915 = vpop.f32.mrf.mxu0
        %v916 = vadd.f32 0.0, %v915
        %v917 = vpop.f32.mrf.mxu0
        %v918 = vpop.f32.mrf.mxu0
        %v919 = vadd.f32 0.0, %v918
        %v920 = vpop.f32.mrf.mxu0
        %921 = vdwg.mxu0
        %v922 = vadd.f32 %v587, %v892
        %v923 = vadd.f32 %v590, %v895
        %v924 = vadd.f32 %v595, %v900
        %v925 = vadd.f32 %v598, %v903
        %v926 = vadd.f32 %v603, %v908
        %v927 = vadd.f32 %v606, %v911
        %v928 = vadd.f32 %v611, %v916
        %v929 = vadd.f32 %v614, %v919
        %v930 = vld [vmem:[#allocation2 + $0x8] sm:$0xc]
        %v931 = vld [vmem:[#allocation2 + $0xc] sm:$0xf]
        %v932 = vld [vmem:[#allocation2 + $0x10] sm:$0xf]
        %v933 = vld [vmem:[#allocation2 + $0x14] sm:$0xf]
        %v934 = vld [vmem:[#allocation2 + $0x18] sm:$0xf]
        %v935 = vld [vmem:[#allocation2 + $0x1c] sm:$0xf]
        %v936 = vld [vmem:[#allocation2 + $0x20] sm:$0xf]
        %v937 = vld [vmem:[#allocation2 + $0x24] sm:$0xf]
        %v938 = vld [vmem:[#allocation2 + $0x28] sm:$0x3]
        %v939 = vld [vmem:[#allocation2 + $0x28] sm:$0xf]
        %v940 = vld [vmem:[#allocation2 + $0x2c] sm:$0x1]
        %v950 = vunpack.c.l.b16 %v930
        %v951 = vunpack.c.l.b16 %v931
        %v952 = vunpack.c.l.b16 %v932
        %v953 = vunpack.c.l.b16 %v933
        %v954 = vunpack.c.l.b16 %v934
        %v955 = vunpack.c.l.b16 %v935
        %v956 = vunpack.c.l.b16 %v936
        %v957 = vunpack.c.l.b16 %v937
        %v958 = vunpack.c.l.b16 %v938
        %v959 = vpack.c.b16 %v951, %v950
        %v960 = vpack.c.b16 %v953, %v952
        %v961 = vpack.c.b16 %v955, %v954
        %v962 = vpack.c.b16 %v957, %v956
        %v963 = vpack.c.b16 %v958, %v958
        %v966 = vunpack.c.l.b16 %v939
        %v967 = vunpack.c.l.b16 %v940
        %v968 = vpack.c.b16 %v952, %v951
        %v969 = vpack.c.b16 %v954, %v953
        %v970 = vpack.c.b16 %v956, %v955
        %v971 = vpack.c.b16 %v966, %v957
        %v972 = vpack.c.b16 %v967, %v967
        %vm973 = vsmask.f32 1280
        %v975 = vshrl.u32 %v968, 16
        %v977 = vrot.slane %v975, 6
        %v978 = vshll.u32 %v968, 16
        %v980 = vrot.slane %v978, 7
        %v981 = vor.u32 %v977, %v980
        %v983 = vshrl.u32 %v969, 16
        %v985 = vrot.slane %v983, 6
        %v986 = vshll.u32 %v969, 16
        %v988 = vrot.slane %v986, 7
        %v989 = vor.u32 %v985, %v988
        %v990 = vsel %vm973, %v981, %v989
        %v992 = vshrl.u32 %v970, 16
        %v994 = vrot.slane %v992, 6
        %v995 = vshll.u32 %v970, 16
        %v997 = vrot.slane %v995, 7
        %v998 = vor.u32 %v994, %v997
        %v999 = vsel %vm973, %v989, %v998
        %v1001 = vshrl.u32 %v971, 16
        %v1003 = vrot.slane %v1001, 6
        %v1004 = vshll.u32 %v971, 16
        %v1006 = vrot.slane %v1004, 7
        %v1007 = vor.u32 %v1003, %v1006
        %v1008 = vsel %vm973, %v998, %v1007
        %v1010 = vshll.u32 %v972, 16
        %v1012 = vrot.slane %v1010, 7
        %v1013 = vsel %vm973, %v1007, %v1012
        %s1014 = scalar_lea.vmem %s1, 256
        %v1015 = vld [vmem:[%s1014] sm:$0xf]
        %v1016 = vld [vmem:[%s1014 + $0x4] sm:$0xf]
        %v1017 = vld [vmem:[%s1014 + $0x8] sm:$0xf]
        %v1018 = vld [vmem:[%s1014 + $0xc] sm:$0xf]
        %v1019 = vld [vmem:[%s1014 + $0x10] sm:$0xf]
        %v1020 = vld [vmem:[%s1014 + $0x14] sm:$0xf]
        %v1021 = vld [vmem:[%s1014 + $0x18] sm:$0xf]
        %v1022 = vld [vmem:[%s1014 + $0x1c] sm:$0xf]
        %v1023 = vld [vmem:[%s1014 + $0x20] sm:$0xf]
        %v1024 = vld [vmem:[%s1014 + $0x24] sm:$0xf]
        %v1025 = vld [vmem:[%s1014 + $0x28] sm:$0xf]
        %v1026 = vld [vmem:[%s1014 + $0x2c] sm:$0xf]
        %v1027 = vld [vmem:[%s1014 + $0x30] sm:$0xf]
        %v1028 = vld [vmem:[%s1014 + $0x34] sm:$0xf]
        %v1029 = vld [vmem:[%s1014 + $0x38] sm:$0xf]
        %v1030 = vld [vmem:[%s1014 + $0x3c] sm:$0xf]
        %v1031 = vld [vmem:[%s1014 + $0x40] sm:$0xf]
        %v1032 = vld [vmem:[%s1014 + $0x44] sm:$0xf]
        %v1033 = vld [vmem:[%s1014 + $0x48] sm:$0xf]
        %v1034 = vld [vmem:[%s1014 + $0x4c] sm:$0xf]
        %v1035 = vld [vmem:[%s1014 + $0x50] sm:$0xf]
        %v1036 = vld [vmem:[%s1014 + $0x54] sm:$0xf]
        %v1037 = vld [vmem:[%s1014 + $0x58] sm:$0xf]
        %v1038 = vld [vmem:[%s1014 + $0x5c] sm:$0xf]
        %v1039 = vld [vmem:[%s1014 + $0x60] sm:$0xf]
        %v1040 = vld [vmem:[%s1014 + $0x64] sm:$0xf]
        %v1041 = vld [vmem:[%s1014 + $0x68] sm:$0xf]
        %v1042 = vld [vmem:[%s1014 + $0x6c] sm:$0xf]
        %v1043 = vld [vmem:[%s1014 + $0x70] sm:$0xf]
        %v1044 = vld [vmem:[%s1014 + $0x74] sm:$0xf]
        %v1045 = vld [vmem:[%s1014 + $0x78] sm:$0xf]
        %v1046 = vld [vmem:[%s1014 + $0x7c] sm:$0xf]
        %vm1047 = vcmask 1045504
        %v1048 = vrot.slane %v959, 2
        %v1049 = vrot.slane %v960, 2
        %v1050 = vsel %vm1047, %v1048, %v1049
        %v1051 = vrot.slane %v981, 2
        %v1052 = vrot.slane %v990, 2
        %v1053 = vsel %vm1047, %v1051, %v1052
        %v1054 = vrot.slane %v961, 2
        %v1055 = vsel %vm1047, %v1049, %v1054
        %v1056 = vrot.slane %v999, 2
        %v1057 = vsel %vm1047, %v1052, %v1056
        %v1058 = vrot.slane %v962, 2
        %v1059 = vsel %vm1047, %v1054, %v1058
        %v1060 = vrot.slane %v1008, 2
        %v1061 = vsel %vm1047, %v1056, %v1060
        %v1062 = vrot.slane %v963, 2
        %v1063 = vsel %vm1047, %v1058, %v1062
        %v1064 = vrot.slane %v1013, 2
        %v1065 = vsel %vm1047, %v1060, %v1064
        %v1106 = vunpack.c.l.b16 %v1015
        %v1107 = vunpack.c.l.b16 %v1016
        %v1108 = vunpack.c.l.b16 %v1017
        %v1109 = vunpack.c.l.b16 %v1018
        %v1110 = vunpack.c.l.b16 %v1019
        %v1111 = vunpack.c.l.b16 %v1020
        %v1112 = vunpack.c.l.b16 %v1021
        %v1113 = vunpack.c.l.b16 %v1022
        %v1114 = vunpack.c.l.b16 %v1023
        %v1115 = vunpack.c.l.b16 %v1024
        %v1116 = vunpack.c.l.b16 %v1025
        %v1117 = vunpack.c.l.b16 %v1026
        %v1118 = vunpack.c.l.b16 %v1027
        %v1119 = vunpack.c.l.b16 %v1028
        %v1120 = vunpack.c.l.b16 %v1029
        %v1121 = vunpack.c.l.b16 %v1030
        %v1122 = vunpack.c.l.b16 %v1031
        %v1123 = vunpack.c.l.b16 %v1032
        %v1124 = vunpack.c.l.b16 %v1033
        %v1125 = vunpack.c.l.b16 %v1034
        %v1126 = vunpack.c.l.b16 %v1035
        %v1127 = vunpack.c.l.b16 %v1036
        %v1128 = vunpack.c.l.b16 %v1037
        %v1129 = vunpack.c.l.b16 %v1038
        %v1130 = vunpack.c.l.b16 %v1039
        %v1131 = vunpack.c.l.b16 %v1040
        %v1132 = vunpack.c.l.b16 %v1041
        %v1133 = vunpack.c.l.b16 %v1042
        %v1134 = vunpack.c.l.b16 %v1043
        %v1135 = vunpack.c.l.b16 %v1044
        %v1136 = vunpack.c.l.b16 %v1045
        %v1137 = vunpack.c.l.b16 %v1046
        %v1138 = vpack.c.b16 %v1107, %v1106
        %v1139 = vpack.c.b16 %v1109, %v1108
        %v1140 = vpack.c.b16 %v1111, %v1110
        %v1141 = vpack.c.b16 %v1113, %v1112
        %v1142 = vpack.c.b16 %v1115, %v1114
        %v1143 = vpack.c.b16 %v1117, %v1116
        %v1144 = vpack.c.b16 %v1119, %v1118
        %v1145 = vpack.c.b16 %v1121, %v1120
        %v1146 = vpack.c.b16 %v1123, %v1122
        %v1147 = vpack.c.b16 %v1125, %v1124
        %v1148 = vpack.c.b16 %v1127, %v1126
        %v1149 = vpack.c.b16 %v1129, %v1128
        %v1150 = vpack.c.b16 %v1131, %v1130
        %v1151 = vpack.c.b16 %v1133, %v1132
        %v1152 = vpack.c.b16 %v1135, %v1134
        %v1153 = vpack.c.b16 %v1137, %v1136
        %1170 = vmatprep.subr.bf16.mxu0 0
        %1171 = vmatpush1.bf16.msra.mxu0 %v1145
        %1172 = vmatprep.subr.bf16.mxu0 0
        %1173 = vmatpush1.bf16.msra.mxu0 %v1144
        %1174 = vmatprep.subr.bf16.mxu0 0
        %1175 = vmatpush1.bf16.msra.mxu0 %v1143
        %1176 = vmatprep.subr.bf16.mxu0 0
        %1177 = vmatpush1.bf16.msra.mxu0 %v1142
        %1178 = vmatprep.subr.bf16.mxu0 0
        %1179 = vmatpush1.bf16.msra.mxu0 %v1141
        %1180 = vmatprep.subr.bf16.mxu0 0
        %1181 = vmatpush1.bf16.msra.mxu0 %v1140
        %1182 = vmatprep.subr.bf16.mxu0 0
        %1183 = vmatpush1.bf16.msra.mxu0 %v1139
        %1184 = vmatprep.subr.bf16.mxu0 0
        %1185 = vmatpush1.bf16.msra.mxu0 %v1138
        %1186 = vmatprep.subr.bf16.mxu0 0
        %1187 = vmatpush2.bf16.msra.mxu0 %v1153
        %1188 = vmatprep.subr.bf16.mxu0 0
        %1189 = vmatpush2.bf16.msra.mxu0 %v1152
        %1190 = vmatprep.subr.bf16.mxu0 0
        %1191 = vmatpush2.bf16.msra.mxu0 %v1151
        %1192 = vmatprep.subr.bf16.mxu0 0
        %1193 = vmatpush2.bf16.msra.mxu0 %v1150
        %1194 = vmatprep.subr.bf16.mxu0 0
        %1195 = vmatpush2.bf16.msra.mxu0 %v1149
        %1196 = vmatprep.subr.bf16.mxu0 0
        %1197 = vmatpush2.bf16.msra.mxu0 %v1148
        %1198 = vmatprep.subr.bf16.mxu0 0
        %1199 = vmatpush2.bf16.msra.mxu0 %v1147
        %1200 = vmatprep.subr.bf16.mxu0 0
        %1201 = vmatpush2.bf16.msra.mxu0 %v1146
        %1202 = vmatprep.mubr.bf16.mxu0 %v1053
        %1203 = vmatmul.mubr.bf16.gmra.mxu0 %v1050
        %v1204 = vpop.f32.mrf.mxu0
        %v1205 = vadd.f32 0.0, %v1204
        %v1206 = vpop.f32.mrf.mxu0
        %v1207 = vpop.f32.mrf.mxu0
        %v1208 = vadd.f32 0.0, %v1207
        %v1209 = vpop.f32.mrf.mxu0
        %1210 = vmatprep.mubr.bf16.mxu0 %v1057
        %1211 = vmatmul.mubr.bf16.gmra.mxu0 %v1055
        %v1212 = vpop.f32.mrf.mxu0
        %v1213 = vadd.f32 0.0, %v1212
        %v1214 = vpop.f32.mrf.mxu0
        %v1215 = vpop.f32.mrf.mxu0
        %v1216 = vadd.f32 0.0, %v1215
        %v1217 = vpop.f32.mrf.mxu0
        %1218 = vmatprep.mubr.bf16.mxu0 %v1061
        %1219 = vmatmul.mubr.bf16.gmra.mxu0 %v1059
        %v1220 = vpop.f32.mrf.mxu0
        %v1221 = vadd.f32 0.0, %v1220
        %v1222 = vpop.f32.mrf.mxu0
        %v1223 = vpop.f32.mrf.mxu0
        %v1224 = vadd.f32 0.0, %v1223
        %v1225 = vpop.f32.mrf.mxu0
        %1226 = vmatprep.mubr.bf16.mxu0 %v1065
        %1227 = vmatmul.mubr.bf16.gmra.mxu0 %v1063
        %v1228 = vpop.f32.mrf.mxu0
        %v1229 = vadd.f32 0.0, %v1228
        %v1230 = vpop.f32.mrf.mxu0
        %v1231 = vpop.f32.mrf.mxu0
        %v1232 = vadd.f32 0.0, %v1231
        %v1233 = vpop.f32.mrf.mxu0
        %1234 = vdwg.mxu0
        %v1235 = vadd.f32 %v922, %v1205
        %v1236 = vadd.f32 %v923, %v1208
        %v1237 = vadd.f32 %v924, %v1213
        %v1238 = vadd.f32 %v925, %v1216
        %v1239 = vadd.f32 %v926, %v1221
        %v1240 = vadd.f32 %v927, %v1224
        %v1241 = vadd.f32 %v928, %v1229
        %v1242 = vadd.f32 %v929, %v1232
        %v1243 = vld [vmem:[#allocation2 + $0xc] sm:$0x8]
        %v1244 = vld [vmem:[#allocation2 + $0x2c] sm:$0x7]
        %v1245 = vld [vmem:[#allocation2 + $0x10] sm:$0xe]
        %v1246 = vld [vmem:[#allocation2 + $0x14] sm:$0xf]
        %v1247 = vld [vmem:[#allocation2 + $0x18] sm:$0xf]
        %v1248 = vld [vmem:[#allocation2 + $0x1c] sm:$0xf]
        %v1249 = vld [vmem:[#allocation2 + $0x20] sm:$0xf]
        %v1250 = vld [vmem:[#allocation2 + $0x24] sm:$0xf]
        %v1251 = vld [vmem:[#allocation2 + $0x28] sm:$0xf]
        %v1252 = vld [vmem:[#allocation2 + $0x2c] sm:$0xf]
        %v1253 = vld [vmem:[#allocation2 + $0x30] sm:$0x3]
        %v1256 = vunpack.c.l.b16 %v1243
        %v1257 = vunpack.c.l.b16 %v1244
        %v1258 = vpack.c.b16 %v952, %v1256
        %v1259 = vpack.c.b16 %v1257, %v1257
        %v1269 = vunpack.c.l.b16 %v1245
        %v1270 = vunpack.c.l.b16 %v1246
        %v1271 = vunpack.c.l.b16 %v1247
        %v1272 = vunpack.c.l.b16 %v1248
        %v1273 = vunpack.c.l.b16 %v1249
        %v1274 = vunpack.c.l.b16 %v1250
        %v1275 = vunpack.c.l.b16 %v1251
        %v1276 = vunpack.c.l.b16 %v1252
        %v1277 = vunpack.c.l.b16 %v1253
        %v1278 = vpack.c.b16 %v1270, %v1269
        %v1279 = vpack.c.b16 %v1272, %v1271
        %v1280 = vpack.c.b16 %v1274, %v1273
        %v1281 = vpack.c.b16 %v1276, %v1275
        %v1282 = vpack.c.b16 %v1277, %v1277
        %v1284 = vshrl.u32 %v1278, 16
        %v1286 = vrot.slane %v1284, 6
        %v1287 = vshll.u32 %v1278, 16
        %v1289 = vrot.slane %v1287, 7
        %v1290 = vor.u32 %v1286, %v1289
        %v1292 = vshrl.u32 %v1279, 16
        %v1294 = vrot.slane %v1292, 6
        %v1295 = vshll.u32 %v1279, 16
        %v1297 = vrot.slane %v1295, 7
        %v1298 = vor.u32 %v1294, %v1297
        %v1299 = vsel %vm973, %v1290, %v1298
        %v1301 = vshrl.u32 %v1280, 16
        %v1303 = vrot.slane %v1301, 6
        %v1304 = vshll.u32 %v1280, 16
        %v1306 = vrot.slane %v1304, 7
        %v1307 = vor.u32 %v1303, %v1306
        %v1308 = vsel %vm973, %v1298, %v1307
        %v1310 = vshrl.u32 %v1281, 16
        %v1312 = vrot.slane %v1310, 6
        %v1313 = vshll.u32 %v1281, 16
        %v1315 = vrot.slane %v1313, 7
        %v1316 = vor.u32 %v1312, %v1315
        %v1317 = vsel %vm973, %v1307, %v1316
        %v1319 = vshrl.u32 %v1282, 16
        %v1321 = vrot.slane %v1319, 6
        %v1322 = vshll.u32 %v1282, 16
        %v1324 = vrot.slane %v1322, 7
        %v1325 = vor.u32 %v1321, %v1324
        %v1326 = vsel %vm973, %v1316, %v1325
        %s1327 = scalar_lea.vmem %s1, 384
        %v1328 = vld [vmem:[%s1327] sm:$0xf]
        %v1329 = vld [vmem:[%s1327 + $0x4] sm:$0xf]
        %v1330 = vld [vmem:[%s1327 + $0x8] sm:$0xf]
        %v1331 = vld [vmem:[%s1327 + $0xc] sm:$0xf]
        %v1332 = vld [vmem:[%s1327 + $0x10] sm:$0xf]
        %v1333 = vld [vmem:[%s1327 + $0x14] sm:$0xf]
        %v1334 = vld [vmem:[%s1327 + $0x18] sm:$0xf]
        %v1335 = vld [vmem:[%s1327 + $0x1c] sm:$0xf]
        %v1336 = vld [vmem:[%s1327 + $0x20] sm:$0xf]
        %v1337 = vld [vmem:[%s1327 + $0x24] sm:$0xf]
        %v1338 = vld [vmem:[%s1327 + $0x28] sm:$0xf]
        %v1339 = vld [vmem:[%s1327 + $0x2c] sm:$0xf]
        %v1340 = vld [vmem:[%s1327 + $0x30] sm:$0xf]
        %v1341 = vld [vmem:[%s1327 + $0x34] sm:$0xf]
        %v1342 = vld [vmem:[%s1327 + $0x38] sm:$0xf]
        %v1343 = vld [vmem:[%s1327 + $0x3c] sm:$0xf]
        %v1344 = vld [vmem:[%s1327 + $0x40] sm:$0xf]
        %v1345 = vld [vmem:[%s1327 + $0x44] sm:$0xf]
        %v1346 = vld [vmem:[%s1327 + $0x48] sm:$0xf]
        %v1347 = vld [vmem:[%s1327 + $0x4c] sm:$0xf]
        %v1348 = vld [vmem:[%s1327 + $0x50] sm:$0xf]
        %v1349 = vld [vmem:[%s1327 + $0x54] sm:$0xf]
        %v1350 = vld [vmem:[%s1327 + $0x58] sm:$0xf]
        %v1351 = vld [vmem:[%s1327 + $0x5c] sm:$0xf]
        %v1352 = vld [vmem:[%s1327 + $0x60] sm:$0xf]
        %v1353 = vld [vmem:[%s1327 + $0x64] sm:$0xf]
        %v1354 = vld [vmem:[%s1327 + $0x68] sm:$0xf]
        %v1355 = vld [vmem:[%s1327 + $0x6c] sm:$0xf]
        %v1356 = vld [vmem:[%s1327 + $0x70] sm:$0xf]
        %v1357 = vld [vmem:[%s1327 + $0x74] sm:$0xf]
        %v1358 = vld [vmem:[%s1327 + $0x78] sm:$0xf]
        %v1359 = vld [vmem:[%s1327 + $0x7c] sm:$0xf]
        %vm1360 = vcmask 1044480
        %v1361 = vrot.slane %v1258, 3
        %v1362 = vrot.slane %v969, 3
        %v1363 = vsel %vm1360, %v1361, %v1362
        %v1364 = vrot.slane %v1290, 3
        %v1365 = vrot.slane %v1299, 3
        %v1366 = vsel %vm1360, %v1364, %v1365
        %v1367 = vrot.slane %v970, 3
        %v1368 = vsel %vm1360, %v1362, %v1367
        %v1369 = vrot.slane %v1308, 3
        %v1370 = vsel %vm1360, %v1365, %v1369
        %v1371 = vrot.slane %v971, 3
        %v1372 = vsel %vm1360, %v1367, %v1371
        %v1373 = vrot.slane %v1317, 3
        %v1374 = vsel %vm1360, %v1369, %v1373
        %v1375 = vrot.slane %v1259, 3
        %v1376 = vsel %vm1360, %v1371, %v1375
        %v1377 = vrot.slane %v1326, 3
        %v1378 = vsel %vm1360, %v1373, %v1377
        %v1419 = vunpack.c.l.b16 %v1328
        %v1420 = vunpack.c.l.b16 %v1329
        %v1421 = vunpack.c.l.b16 %v1330
        %v1422 = vunpack.c.l.b16 %v1331
        %v1423 = vunpack.c.l.b16 %v1332
        %v1424 = vunpack.c.l.b16 %v1333
        %v1425 = vunpack.c.l.b16 %v1334
        %v1426 = vunpack.c.l.b16 %v1335
        %v1427 = vunpack.c.l.b16 %v1336
        %v1428 = vunpack.c.l.b16 %v1337
        %v1429 = vunpack.c.l.b16 %v1338
        %v1430 = vunpack.c.l.b16 %v1339
        %v1431 = vunpack.c.l.b16 %v1340
        %v1432 = vunpack.c.l.b16 %v1341
        %v1433 = vunpack.c.l.b16 %v1342
        %v1434 = vunpack.c.l.b16 %v1343
        %v1435 = vunpack.c.l.b16 %v1344
        %v1436 = vunpack.c.l.b16 %v1345
        %v1437 = vunpack.c.l.b16 %v1346
        %v1438 = vunpack.c.l.b16 %v1347
        %v1439 = vunpack.c.l.b16 %v1348
        %v1440 = vunpack.c.l.b16 %v1349
        %v1441 = vunpack.c.l.b16 %v1350
        %v1442 = vunpack.c.l.b16 %v1351
        %v1443 = vunpack.c.l.b16 %v1352
        %v1444 = vunpack.c.l.b16 %v1353
        %v1445 = vunpack.c.l.b16 %v1354
        %v1446 = vunpack.c.l.b16 %v1355
        %v1447 = vunpack.c.l.b16 %v1356
        %v1448 = vunpack.c.l.b16 %v1357
        %v1449 = vunpack.c.l.b16 %v1358
        %v1450 = vunpack.c.l.b16 %v1359
        %v1451 = vpack.c.b16 %v1420, %v1419
        %v1452 = vpack.c.b16 %v1422, %v1421
        %v1453 = vpack.c.b16 %v1424, %v1423
        %v1454 = vpack.c.b16 %v1426, %v1425
        %v1455 = vpack.c.b16 %v1428, %v1427
        %v1456 = vpack.c.b16 %v1430, %v1429
        %v1457 = vpack.c.b16 %v1432, %v1431
        %v1458 = vpack.c.b16 %v1434, %v1433
        %v1459 = vpack.c.b16 %v1436, %v1435
        %v1460 = vpack.c.b16 %v1438, %v1437
        %v1461 = vpack.c.b16 %v1440, %v1439
        %v1462 = vpack.c.b16 %v1442, %v1441
        %v1463 = vpack.c.b16 %v1444, %v1443
        %v1464 = vpack.c.b16 %v1446, %v1445
        %v1465 = vpack.c.b16 %v1448, %v1447
        %v1466 = vpack.c.b16 %v1450, %v1449
        %1483 = vmatprep.subr.bf16.mxu0 0
        %1484 = vmatpush1.bf16.msra.mxu0 %v1458
        %1485 = vmatprep.subr.bf16.mxu0 0
        %1486 = vmatpush1.bf16.msra.mxu0 %v1457
        %1487 = vmatprep.subr.bf16.mxu0 0
        %1488 = vmatpush1.bf16.msra.mxu0 %v1456
        %1489 = vmatprep.subr.bf16.mxu0 0
        %1490 = vmatpush1.bf16.msra.mxu0 %v1455
        %1491 = vmatprep.subr.bf16.mxu0 0
        %1492 = vmatpush1.bf16.msra.mxu0 %v1454
        %1493 = vmatprep.subr.bf16.mxu0 0
        %1494 = vmatpush1.bf16.msra.mxu0 %v1453
        %1495 = vmatprep.subr.bf16.mxu0 0
        %1496 = vmatpush1.bf16.msra.mxu0 %v1452
        %1497 = vmatprep.subr.bf16.mxu0 0
        %1498 = vmatpush1.bf16.msra.mxu0 %v1451
        %1499 = vmatprep.subr.bf16.mxu0 0
        %1500 = vmatpush2.bf16.msra.mxu0 %v1466
        %1501 = vmatprep.subr.bf16.mxu0 0
        %1502 = vmatpush2.bf16.msra.mxu0 %v1465
        %1503 = vmatprep.subr.bf16.mxu0 0
        %1504 = vmatpush2.bf16.msra.mxu0 %v1464
        %1505 = vmatprep.subr.bf16.mxu0 0
        %1506 = vmatpush2.bf16.msra.mxu0 %v1463
        %1507 = vmatprep.subr.bf16.mxu0 0
        %1508 = vmatpush2.bf16.msra.mxu0 %v1462
        %1509 = vmatprep.subr.bf16.mxu0 0
        %1510 = vmatpush2.bf16.msra.mxu0 %v1461
        %1511 = vmatprep.subr.bf16.mxu0 0
        %1512 = vmatpush2.bf16.msra.mxu0 %v1460
        %1513 = vmatprep.subr.bf16.mxu0 0
        %1514 = vmatpush2.bf16.msra.mxu0 %v1459
        %1515 = vmatprep.mubr.bf16.mxu0 %v1366
        %1516 = vmatmul.mubr.bf16.gmra.mxu0 %v1363
        %v1517 = vpop.f32.mrf.mxu0
        %v1518 = vadd.f32 0.0, %v1517
        %v1519 = vpop.f32.mrf.mxu0
        %v1520 = vpop.f32.mrf.mxu0
        %v1521 = vadd.f32 0.0, %v1520
        %v1522 = vpop.f32.mrf.mxu0
        %1523 = vmatprep.mubr.bf16.mxu0 %v1370
        %1524 = vmatmul.mubr.bf16.gmra.mxu0 %v1368
        %v1525 = vpop.f32.mrf.mxu0
        %v1526 = vadd.f32 0.0, %v1525
        %v1527 = vpop.f32.mrf.mxu0
        %v1528 = vpop.f32.mrf.mxu0
        %v1529 = vadd.f32 0.0, %v1528
        %v1530 = vpop.f32.mrf.mxu0
        %1531 = vmatprep.mubr.bf16.mxu0 %v1374
        %1532 = vmatmul.mubr.bf16.gmra.mxu0 %v1372
        %v1533 = vpop.f32.mrf.mxu0
        %v1534 = vadd.f32 0.0, %v1533
        %v1535 = vpop.f32.mrf.mxu0
        %v1536 = vpop.f32.mrf.mxu0
        %v1537 = vadd.f32 0.0, %v1536
        %v1538 = vpop.f32.mrf.mxu0
        %1539 = vmatprep.mubr.bf16.mxu0 %v1378
        %1540 = vmatmul.mubr.bf16.gmra.mxu0 %v1376
        %v1541 = vpop.f32.mrf.mxu0
        %v1542 = vadd.f32 0.0, %v1541
        %v1543 = vpop.f32.mrf.mxu0
        %v1544 = vpop.f32.mrf.mxu0
        %v1545 = vadd.f32 0.0, %v1544
        %v1546 = vpop.f32.mrf.mxu0
        %1547 = vdwg.mxu0
        %v1548 = vadd.f32 %v1235, %v1518
        %v1549 = vadd.f32 %v1236, %v1521
        %v1550 = vadd.f32 %v1237, %v1526
        %v1551 = vadd.f32 %v1238, %v1529
        %v1552 = vadd.f32 %v1239, %v1534
        %v1553 = vadd.f32 %v1240, %v1537
        %v1554 = vadd.f32 %v1241, %v1542
        %v1555 = vadd.f32 %v1242, %v1545
        %v1556 = vpack.c.bf16 %v1549, %v1548
        %v1557 = vpack.c.bf16 %v1551, %v1550
        %v1558 = vpack.c.bf16 %v1553, %v1552
        %v1559 = vpack.c.bf16 %v1555, %v1554
        %v1564 = vunpack.c.l.b16 %v1556
        %v1565 = vunpack.c.h.b16 %v1556
        %v1566 = vunpack.c.l.b16 %v1557
        %v1567 = vunpack.c.h.b16 %v1557
        %v1568 = vunpack.c.l.b16 %v1558
        %v1569 = vunpack.c.h.b16 %v1558
        %v1570 = vunpack.c.l.b16 %v1559
        %v1571 = vunpack.c.h.b16 %v1559
        %v1572 = vpack.c.b16 %v1564, %v1564
        %v1573 = vpack.c.b16 %v1565, %v1565
        %v1574 = vpack.c.b16 %v1566, %v1566
        %v1575 = vpack.c.b16 %v1567, %v1567
        %v1576 = vpack.c.b16 %v1568, %v1568
        %v1577 = vpack.c.b16 %v1569, %v1569
        %v1578 = vpack.c.b16 %v1570, %v1570
        %v1579 = vpack.c.b16 %v1571, %v1571
        %1588 = vst [vmem:[%s173] sm:$0xf] %v1572
        %1589 = vst [vmem:[%s173 + $0x4] sm:$0xf] %v1573
        %1590 = vst [vmem:[%s173 + $0x8] sm:$0xf] %v1574
        %1591 = vst [vmem:[%s173 + $0xc] sm:$0xf] %v1575
        %1592 = vst [vmem:[%s173 + $0x10] sm:$0xf] %v1576
        %1593 = vst [vmem:[%s173 + $0x14] sm:$0xf] %v1577
        %1594 = vst [vmem:[%s173 + $0x18] sm:$0xf] %v1578
        %1595 = vst [vmem:[%s173 + $0x1c] sm:$0xf] %v1579
        %s1596 = sand.u32 %s104, 1
        %s1597 = sand.u32 %s104, 1
        %s1598 = smul.addr %s1597, 32
        %s1599 = scalar_lea.vmem [#allocation3], %s1598
        // Predicated region
        $region33: #{residual_block1d_forward.10} parent=31 // pred_check
          %p1600 = pneg %p114
        $region34: #{residual_block1d_forward.10} parent=31 // pred_check_branch
          %1602 = sbr.rel (%p1600) target = $region36
        $region35: #{residual_block1d_forward.10} parent=31 // pred_region
          %s1603 = smul.u32 8, %s19
          %s1604 = ssub.s32 7, %s1603
          %s1605 = smul.u32 64, %s1604
          %p1606 = scmp.ne.s32.totalorder 0, %s1605
          %s1607 = smul.addr %s18, 7
          %s1608 = sadd.s32 %s1603, %s1607
          %s1609 = smul.addr %s1608, 4
          %s1610 = scalar_lea.vmem %s3, %s1609
          // Predicated region
          $region37: #{residual_block1d_forward.10} parent=35 // pred_check
            %p1611 = pneg %p1606
          $region38: #{residual_block1d_forward.10} parent=35 // pred_check_branch
            %1613 = sbr.rel (%p1611) target = $region40
          $region39: #{residual_block1d_forward.10} parent=35 // pred_region
            // Predicated region
            $region41: #{residual_block1d_forward.10} parent=39 // pred_check
              _
            $region42: #{residual_block1d_forward.10} parent=39 // pred_check_branch
              %1615 = sbr.rel target = $region44
            $region43: #{residual_block1d_forward.10} parent=39 // pred_region
              // Predicated region
              $region63: #{residual_block1d_forward.10} parent=43 // pred_check
                _
              $region64: #{residual_block1d_forward.10} parent=43 // pred_check_branch
                %1678 = sbr.rel (0) target = $region66
              $region65: #{residual_block1d_forward.10} parent=43 // pred_region
                %s1680 = ssub.s32 16, 1
                %s1681 = sdiv.u32.pop %s1604, 7
                %s1682 = srem.u32.pop %s1604, 7
                // While loop
                $region67: #{residual_block1d_forward.10} parent=65 // loop_pre_header
                  _
                $region68: #{residual_block1d_forward.10} parent=65 // loop_header
                  %s1684 = sphi 0, %s1686
                  %p1685 = scmp.ge.s32.totalorder %s1684, %s1681
                  %s1689 = sphi 0, %s1708
                  %s1690 = sphi %s1599, %s1711
                  %s1691 = sphi %s1610, %s1712
                $region69: #{residual_block1d_forward.10} parent=65 // loop_header_branch
                  %1688 = sbr.rel (%p1685) target = $region73
                $region70: #{residual_block1d_forward.10} parent=65 // loop_body
                  %v1692 = vld [vmem:[%s1690] sm:%s1680]
                  %1693 = vst [vmem:[%s1691] sm:%s1680] %v1692
                  %v1694 = vld [vmem:[%s1690 + $0x4] sm:%s1680]
                  %1695 = vst [vmem:[%s1691 + $0x4] sm:%s1680] %v1694
                  %v1696 = vld [vmem:[%s1690 + $0x8] sm:%s1680]
                  %1697 = vst [vmem:[%s1691 + $0x8] sm:%s1680] %v1696
                  %v1698 = vld [vmem:[%s1690 + $0xc] sm:%s1680]
                  %1699 = vst [vmem:[%s1691 + $0xc] sm:%s1680] %v1698
                  %v1700 = vld [vmem:[%s1690 + $0x10] sm:%s1680]
                  %1701 = vst [vmem:[%s1691 + $0x10] sm:%s1680] %v1700
                  %v1702 = vld [vmem:[%s1690 + $0x14] sm:%s1680]
                  %1703 = vst [vmem:[%s1691 + $0x14] sm:%s1680] %v1702
                  %v1704 = vld [vmem:[%s1690 + $0x18] sm:%s1680]
                  %1705 = vst [vmem:[%s1691 + $0x18] sm:%s1680] %v1704
                  %s1706 = sadd.s32 1, %s1689
                  %p1707 = scmp.ge.s32.totalorder %s1706, %s1681
                  %s1708 = scalar_select %p1707, 0, %s1706
                  %s1709 = smul.u32 %s1708, 28
                  %s1710 = smul.u32 %s1708, 28
                  %s1711 = scalar_lea.vmem %s1599, %s1709 [#allocation3]
                  %s1712 = scalar_lea.vmem %s1610, %s1710
                $region71: #{residual_block1d_forward.10} parent=65 // loop_footer
                  %s1686 = sadd.s32 %s1684, 1
                $region72: #{residual_block1d_forward.10} parent=65 // loop_footer_branch
                  %1683 = sbr.rel target = $region68
                $region73: #{residual_block1d_forward.10} parent=65 // loop_exit
                  _
                %s1713 = sdiv.u32.pop %s1604, 7
                %s1714 = srem.u32.pop %s1604, 7
                %s1715 = smul.u32 %s1713, 7
                %s1716 = smul.u32 4, %s1715
                %s1717 = scalar_lea.vmem %s1599, %s1716 [#allocation3]
                %s1718 = smul.u32 4, %s1715
                %s1719 = scalar_lea.vmem %s1610, %s1718
                // While loop
                $region74: #{residual_block1d_forward.10} parent=65 // loop_pre_header
                  _
                $region75: #{residual_block1d_forward.10} parent=65 // loop_header
                  %s1721 = sphi 0, %s1723
                  %p1722 = scmp.ge.s32.totalorder %s1721, %s1714
                  %s1726 = sphi 0, %s1733
                  %s1727 = sphi %s1717, %s1736
                  %s1728 = sphi %s1719, %s1737
                $region76: #{residual_block1d_forward.10} parent=65 // loop_header_branch
                  %1725 = sbr.rel (%p1722) target = $region80
                $region77: #{residual_block1d_forward.10} parent=65 // loop_body
                  %v1729 = vld [vmem:[%s1727] sm:%s1680]
                  %1730 = vst [vmem:[%s1728] sm:%s1680] %v1729
                  %s1731 = sadd.s32 1, %s1726
                  %p1732 = scmp.ge.s32.totalorder %s1731, %s1714
                  %s1733 = scalar_select %p1732, 0, %s1731
                  %s1734 = smul.u32 %s1733, 4
                  %s1735 = smul.u32 %s1733, 4
                  %s1736 = scalar_lea.vmem %s1717, %s1734 [#allocation3]
                  %s1737 = scalar_lea.vmem %s1719, %s1735
                $region78: #{residual_block1d_forward.10} parent=65 // loop_footer
                  %s1723 = sadd.s32 %s1721, 1
                $region79: #{residual_block1d_forward.10} parent=65 // loop_footer_branch
                  %1720 = sbr.rel target = $region75
                $region80: #{residual_block1d_forward.10} parent=65 // loop_exit
                  _
              $region66: #{residual_block1d_forward.10} parent=43 // pred_fallthru
                _
            $region44: #{residual_block1d_forward.10} parent=39 // pred_fallthru
              _
            // Predicated region
            $region45: #{residual_block1d_forward.10} parent=39 // pred_check
              _
            $region46: #{residual_block1d_forward.10} parent=39 // pred_check_branch
              %1617 = sbr.rel (0) target = $region48
            $region47: #{residual_block1d_forward.10} parent=39 // pred_region
              %s1619 = ssub.s32 16, 1
              %s1620 = sdiv.u32.pop %s1604, 7
              %s1621 = srem.u32.pop %s1604, 7
              // While loop
              $region49: #{residual_block1d_forward.10} parent=47 // loop_pre_header
                _
              $region50: #{residual_block1d_forward.10} parent=47 // loop_header
                %s1623 = sphi 0, %s1625
                %p1624 = scmp.ge.s32.totalorder %s1623, %s1620
                %s1628 = sphi 0, %s1647
                %s1629 = sphi %s1599, %s1650
                %s1630 = sphi %s1610, %s1651
              $region51: #{residual_block1d_forward.10} parent=47 // loop_header_branch
                %1627 = sbr.rel (%p1624) target = $region55
              $region52: #{residual_block1d_forward.10} parent=47 // loop_body
                %v1631 = vld [vmem:[%s1629] sm:%s1619]
                %1632 = vst [vmem:[%s1630] sm:%s1619] %v1631
                %v1633 = vld [vmem:[%s1629 + $0x4] sm:%s1619]
                %1634 = vst [vmem:[%s1630 + $0x4] sm:%s1619] %v1633
                %v1635 = vld [vmem:[%s1629 + $0x8] sm:%s1619]
                %1636 = vst [vmem:[%s1630 + $0x8] sm:%s1619] %v1635
                %v1637 = vld [vmem:[%s1629 + $0xc] sm:%s1619]
                %1638 = vst [vmem:[%s1630 + $0xc] sm:%s1619] %v1637
                %v1639 = vld [vmem:[%s1629 + $0x10] sm:%s1619]
                %1640 = vst [vmem:[%s1630 + $0x10] sm:%s1619] %v1639
                %v1641 = vld [vmem:[%s1629 + $0x14] sm:%s1619]
                %1642 = vst [vmem:[%s1630 + $0x14] sm:%s1619] %v1641
                %v1643 = vld [vmem:[%s1629 + $0x18] sm:%s1619]
                %1644 = vst [vmem:[%s1630 + $0x18] sm:%s1619] %v1643
                %s1645 = sadd.s32 1, %s1628
                %p1646 = scmp.ge.s32.totalorder %s1645, %s1620
                %s1647 = scalar_select %p1646, 0, %s1645
                %s1648 = smul.u32 %s1647, 28
                %s1649 = smul.u32 %s1647, 28
                %s1650 = scalar_lea.vmem %s1599, %s1648 [#allocation3]
                %s1651 = scalar_lea.vmem %s1610, %s1649
              $region53: #{residual_block1d_forward.10} parent=47 // loop_footer
                %s1625 = sadd.s32 %s1623, 1
              $region54: #{residual_block1d_forward.10} parent=47 // loop_footer_branch
                %1622 = sbr.rel target = $region50
              $region55: #{residual_block1d_forward.10} parent=47 // loop_exit
                _
              %s1652 = sdiv.u32.pop %s1604, 7
              %s1653 = srem.u32.pop %s1604, 7
              %s1654 = smul.u32 %s1652, 7
              %s1655 = smul.u32 4, %s1654
              %s1656 = scalar_lea.vmem %s1599, %s1655 [#allocation3]
              %s1657 = smul.u32 4, %s1654
              %s1658 = scalar_lea.vmem %s1610, %s1657
              // While loop
              $region56: #{residual_block1d_forward.10} parent=47 // loop_pre_header
                _
              $region57: #{residual_block1d_forward.10} parent=47 // loop_header
                %s1660 = sphi 0, %s1662
                %p1661 = scmp.ge.s32.totalorder %s1660, %s1653
                %s1665 = sphi 0, %s1672
                %s1666 = sphi %s1656, %s1675
                %s1667 = sphi %s1658, %s1676
              $region58: #{residual_block1d_forward.10} parent=47 // loop_header_branch
                %1664 = sbr.rel (%p1661) target = $region62
              $region59: #{residual_block1d_forward.10} parent=47 // loop_body
                %v1668 = vld [vmem:[%s1666] sm:%s1619]
                %1669 = vst [vmem:[%s1667] sm:%s1619] %v1668
                %s1670 = sadd.s32 1, %s1665
                %p1671 = scmp.ge.s32.totalorder %s1670, %s1653
                %s1672 = scalar_select %p1671, 0, %s1670
                %s1673 = smul.u32 %s1672, 4
                %s1674 = smul.u32 %s1672, 4
                %s1675 = scalar_lea.vmem %s1656, %s1673 [#allocation3]
                %s1676 = scalar_lea.vmem %s1658, %s1674
              $region60: #{residual_block1d_forward.10} parent=47 // loop_footer
                %s1662 = sadd.s32 %s1660, 1
              $region61: #{residual_block1d_forward.10} parent=47 // loop_footer_branch
                %1659 = sbr.rel target = $region57
              $region62: #{residual_block1d_forward.10} parent=47 // loop_exit
                _
            $region48: #{residual_block1d_forward.10} parent=39 // pred_fallthru
              _
          $region40: #{residual_block1d_forward.10} parent=35 // pred_fallthru
            _
          %1738 = vnop
        $region36: #{residual_block1d_forward.10} parent=31 // pred_fallthru
          _
      $region32: #{residual_block1d_forward.10} parent=5 // pred_fallthru
        _
      %p1739 = scmp.le.s32.totalorder 2, %s9
      // Predicated region
      $region81: #{residual_block1d_forward.10} parent=5 // pred_check
        %p1740 = pneg %p1739
      $region82: #{residual_block1d_forward.10} parent=5 // pred_check_branch
        %1742 = sbr.rel (%p1740) target = $region84
      $region83: #{residual_block1d_forward.10} parent=5 // pred_region
        %s1743 = ssub.s32 %s9, 2
        // Predicated region
        $region85: #{residual_block1d_forward.10} parent=83 // pred_check
          %p1744 = pneg %p120
        $region86: #{residual_block1d_forward.10} parent=83 // pred_check_branch
          %1746 = sbr.rel (%p1744) target = $region88
        $region87: #{residual_block1d_forward.10} parent=83 // pred_region
          %s1747 = sand.u32 %s105, 1
          %s1748 = sand.u32 %s105, 1
          %s1749 = smul.addr %s1748, 32
          %s1750 = scalar_lea.vmem [#allocation3], %s1749
        $region88: #{residual_block1d_forward.10} parent=83 // pred_fallthru
          _
      $region84: #{residual_block1d_forward.10} parent=5 // pred_fallthru
        _
    $region6: #{residual_block1d_forward.10} parent=1 // loop_footer
      %s13 = sadd.s32 1, %s9
    $region7: #{residual_block1d_forward.10} parent=1 // loop_footer_branch
      %8 = sbr.rel target = $region3
    $region8: #{residual_block1d_forward.10} parent=1 // loop_exit
      _

// kernel: residual_block1d_forward.11
$region0: #{residual_block1d_forward.11}
  #allocation0 [shape = 'u32[]', space=smem, size = 0x4, offset = 0x4, fixed_abs, tag = 'smem constant byte address 0x4 - core index']
  #allocation1 [shape = 'u32[144,128]{1,0:T(1,128)}', space=vmem, size = 0x12000, scoped, tag = 'internal scratch']
  #allocation2 [shape = 'bf16[80,128]{1,0:T(8,128)(2,1)}', space=vmem, size = 0x5000, scoped, tag = 'scratch operand']
  %s0 = inlined_call_operand.vmem [shape: bf16[2,80,128], index: 0, kind: input, shape index: {}]
  %s1 = inlined_call_operand.vmem [shape: bf16[4,256,128], index: 1, kind: input, shape index: {}]
  %s2 = inlined_call_operand.vmem [shape: f32[1,128], index: 2, kind: input, shape index: {}]
  %s3 = inlined_call_operand.vmem [shape: bf16[2,64,128], index: 3, kind: input, shape index: {}]
  %s4 = inlined_call_operand.vmem [shape: f32[2,50,128], index: 4, kind: output, shape index: {}]
  %s5 = sld [smem:[#allocation0]]
  $region97: #{residual_block1d_forward.11} parent=0
    _
  %s7 = ssub.s32 1, %s5
  %s8 = scalar_select 0, %s7, %s5
  $region1: #{residual_block1d_forward.11} parent=0
    #allocation3 [shape = 'u8[65536]{0}', space=vmem, size = 0x10000, scoped, tag = 'output window, operand 0']
    loop: start=0, step=1, limit=4
    $region2: #{residual_block1d_forward.11} parent=1 // loop_pre_header
      _
    $region3: #{residual_block1d_forward.11} parent=1 // loop_header
      %s10 = sphi 0, %s14
      %p11 = scmp.ge.s32.totalorder %s10, 4
      %s17 = sphi 0, %s29
      %s18 = sphi 0, %s25
      %s19 = sphi 0, %s17
      %s20 = sphi 0, %s18
      %s21 = sphi 0, %s19
      %s22 = sphi 0, %s20
      %s32 = sphi 0, %s34
      %s35 = sphi 0, %s32
      %s36 = sphi 0, %s35
      %s52 = sphi 0, %s36
      %s56 = sphi 0, %s56
      %s58 = sphi 0, %s56
      %s59 = sphi 0, %s58
      %s73 = sphi 0, %s59
      %s77 = sphi 0, %s77
      %s79 = sphi 0, %s77
      %s80 = sphi 0, %s79
      %s94 = sphi 0, %s80
      %s102 = sphi 0, %s104
      %s105 = sphi 0, %s102
      %s106 = sphi 0, %s105
      %s122 = sphi 0, %s106
      %s130 = sphi 0, %s132
      %s133 = sphi 0, %s130
      %s134 = sphi 0, %s133
      %s150 = sphi 0, %s134
    $region4: #{residual_block1d_forward.11} parent=1 // loop_header_branch
      %13 = sbr.rel (%p11) target = $region8
    $region5: #{residual_block1d_forward.11} parent=1 // loop_body
      %s15 = ssub.s32 %s10, 1
      %s16 = ssub.s32 %s10, 2
      %s23 = sadd.s32 1, %s18
      %p24 = scmp.ge.s32.totalorder %s23, 1
      %s25 = scalar_select %p24, 0, %s23
      %s26 = sadd.s32 1, %s17
      %s27 = scalar_select %p24, %s26, %s17
      %p28 = scmp.ge.s32.totalorder %s27, 2
      %s29 = scalar_select %p28, 0, %s27
      %s30 = ssub.s32 %s17, %s29
      %p31 = scmp.eq.s32.totalorder %s30, 0
      %s33 = sadd.s32 %s32, 1
      %s34 = scalar_select %p31, %s32, %s33
      %p37 = pneg %p31
      %p38 = scmp.eq.s32.totalorder %s10, 1
      %p39 = por %p37, %p38
      %p40 = scmp.ne.s32.totalorder %s32, %s35
      %p41 = scmp.eq.s32.totalorder %s10, 0
      %p42 = por %p40, %p41
      %p43 = scmp.ne.s32.totalorder %s32, %s35
      %p44 = scmp.eq.s32.totalorder %s15, 1
      %p45 = por %p43, %p44
      %p46 = scmp.ne.s32.totalorder %s35, %s36
      %p47 = scmp.eq.s32.totalorder %s15, 0
      %p48 = por %p46, %p47
      %p49 = scmp.ne.s32.totalorder %s35, %s36
      %p50 = scmp.eq.s32.totalorder %s16, 1
      %p51 = por %p49, %p50
      %p53 = scmp.ne.s32.totalorder %s36, %s52
      %p54 = scmp.eq.s32.totalorder %s16, 0
      %p55 = por %p53, %p54
      %s57 = sadd.s32 %s56, 1
      %p60 = scmp.eq.s32.totalorder %s10, 1
      %p61 = scmp.ne.s32.totalorder %s56, %s58
      %p62 = scmp.eq.s32.totalorder %s10, 0
      %p63 = por %p61, %p62
      %p64 = scmp.ne.s32.totalorder %s56, %s58
      %p65 = scmp.eq.s32.totalorder %s15, 1
      %p66 = por %p64, %p65
      %p67 = scmp.ne.s32.totalorder %s58, %s59
      %p68 = scmp.eq.s32.totalorder %s15, 0
      %p69 = por %p67, %p68
      %p70 = scmp.ne.s32.totalorder %s58, %s59
      %p71 = scmp.eq.s32.totalorder %s16, 1
      %p72 = por %p70, %p71
      %p74 = scmp.ne.s32.totalorder %s59, %s73
      %p75 = scmp.eq.s32.totalorder %s16, 0
      %p76 = por %p74, %p75
      %s78 = sadd.s32 %s77, 1
      %p81 = scmp.eq.s32.totalorder %s10, 1
      %p82 = scmp.ne.s32.totalorder %s77, %s79
      %p83 = scmp.eq.s32.totalorder %s10, 0
      %p84 = por %p82, %p83
      %p85 = scmp.ne.s32.totalorder %s77, %s79
      %p86 = scmp.eq.s32.totalorder %s15, 1
      %p87 = por %p85, %p86
      %p88 = scmp.ne.s32.totalorder %s79, %s80
      %p89 = scmp.eq.s32.totalorder %s15, 0
      %p90 = por %p88, %p89
      %p91 = scmp.ne.s32.totalorder %s79, %s80
      %p92 = scmp.eq.s32.totalorder %s16, 1
      %p93 = por %p91, %p92
      %p95 = scmp.ne.s32.totalorder %s80, %s94
      %p96 = scmp.eq.s32.totalorder %s16, 0
      %p97 = por %p95, %p96
      %s98 = ssub.s32 %s17, %s29
      %s99 = ssub.s32 %s18, %s25
      %s100 = sor.u32 %s98, %s99
      %p101 = scmp.eq.s32.totalorder %s100, 0
      %s103 = sadd.s32 %s102, 1
      %s104 = scalar_select %p101, %s102, %s103
      %p107 = pneg %p101
      %p108 = scmp.eq.s32.totalorder %s10, 1
      %p109 = por %p107, %p108
      %p110 = scmp.ne.s32.totalorder %s102, %s105
      %p111 = scmp.eq.s32.totalorder %s10, 0
      %p112 = por %p110, %p111
      %p113 = scmp.ne.s32.totalorder %s102, %s105
      %p114 = scmp.eq.s32.totalorder %s15, 1
      %p115 = por %p113, %p114
      %p116 = scmp.ne.s32.totalorder %s105, %s106
      %p117 = scmp.eq.s32.totalorder %s15, 0
      %p118 = por %p116, %p117
      %p119 = scmp.ne.s32.totalorder %s105, %s106
      %p120 = scmp.eq.s32.totalorder %s16, 1
      %p121 = por %p119, %p120
      %p123 = scmp.ne.s32.totalorder %s106, %s122
      %p124 = scmp.eq.s32.totalorder %s16, 0
      %p125 = por %p123, %p124
      %s126 = ssub.s32 %s17, %s29
      %s127 = ssub.s32 %s18, %s25
      %s128 = sor.u32 %s126, %s127
      %p129 = scmp.eq.s32.totalorder %s128, 0
      %s131 = sadd.s32 %s130, 1
      %s132 = scalar_select %p129, %s130, %s131
      %p135 = pneg %p129
      %p136 = scmp.eq.s32.totalorder %s10, 1
      %p137 = por %p135, %p136
      %p138 = scmp.ne.s32.totalorder %s130, %s133
      %p139 = scmp.eq.s32.totalorder %s10, 0
      %p140 = por %p138, %p139
      %p141 = scmp.ne.s32.totalorder %s130, %s133
      %p142 = scmp.eq.s32.totalorder %s15, 1
      %p143 = por %p141, %p142
      %p144 = scmp.ne.s32.totalorder %s133, %s134
      %p145 = scmp.eq.s32.totalorder %s15, 0
      %p146 = por %p144, %p145
      %p147 = scmp.ne.s32.totalorder %s133, %s134
      %p148 = scmp.eq.s32.totalorder %s16, 1
      %p149 = por %p147, %p148
      %p151 = scmp.ne.s32.totalorder %s134, %s150
      %p152 = scmp.eq.s32.totalorder %s16, 0
      %p153 = por %p151, %p152
      %p154 = scmp.le.s32.totalorder 1, %s10
      %p155 = scmp.lt.s32.totalorder %s10, 3
      %p156 = pnand %p154, %p155
      %p157 = pneg %p156
      // Predicated region
      $region9: #{residual_block1d_forward.11} parent=5 // pred_check
        _
      $region10: #{residual_block1d_forward.11} parent=5 // pred_check_branch
        %159 = sbr.rel (%p156) target = $region12
      $region11: #{residual_block1d_forward.11} parent=5 // pred_region
        %s160 = ssub.s32 %s10, 1
        // Predicated region
        $region13: #{residual_block1d_forward.11} parent=11 // pred_check
          %p161 = pneg %p69
        $region14: #{residual_block1d_forward.11} parent=11 // pred_check_branch
          %163 = sbr.rel (%p161) target = $region16
        $region15: #{residual_block1d_forward.11} parent=11 // pred_region
          _
        $region16: #{residual_block1d_forward.11} parent=11 // pred_fallthru
          _
        // Predicated region
        $region17: #{residual_block1d_forward.11} parent=11 // pred_check
          %p164 = pneg %p90
        $region18: #{residual_block1d_forward.11} parent=11 // pred_check_branch
          %166 = sbr.rel (%p164) target = $region20
        $region19: #{residual_block1d_forward.11} parent=11 // pred_region
          _
        $region20: #{residual_block1d_forward.11} parent=11 // pred_fallthru
          _
      $region12: #{residual_block1d_forward.11} parent=5 // pred_fallthru
        _
      %p167 = scmp.lt.s32.totalorder %s10, 2
      // Predicated region
      $region21: #{residual_block1d_forward.11} parent=5 // pred_check
        %p168 = pneg %p167
      $region22: #{residual_block1d_forward.11} parent=5 // pred_check_branch
        %170 = sbr.rel (%p168) target = $region24
      $region23: #{residual_block1d_forward.11} parent=5 // pred_region
        // Predicated region
        $region25: #{residual_block1d_forward.11} parent=23 // pred_check
          %p171 = pneg %p42
        $region26: #{residual_block1d_forward.11} parent=23 // pred_check_branch
          %173 = sbr.rel (%p171) target = $region28
        $region27: #{residual_block1d_forward.11} parent=23 // pred_region
          %p174 = scmp.lt.s32.totalorder %s17, 1
          %s175 = scalar_select %p174, %s17, 1
          %s176 = smul.addr %s175, 10
          %s177 = smul.addr %s176, 4
          %s178 = scalar_lea.vmem %s0, %s177
        $region28: #{residual_block1d_forward.11} parent=23 // pred_fallthru
          _
        // Predicated region
        $region29: #{residual_block1d_forward.11} parent=23 // pred_check
          %p179 = pneg %p112
        $region30: #{residual_block1d_forward.11} parent=23 // pred_check_branch
          %181 = sbr.rel (%p179) target = $region32
        $region31: #{residual_block1d_forward.11} parent=23 // pred_region
          %s182 = smul.u32 8, %s18
          %p183 = scmp.lt.s32.totalorder %s17, 1
          %s184 = scalar_select %p183, %s17, 1
          %p185 = scmp.lt.s32.totalorder %s182, 7
          %s186 = scalar_select %p185, %s182, 7
          %s187 = smul.addr %s184, 8
          %s188 = sadd.s32 %s186, %s187
          %s189 = smul.addr %s188, 4
          %s190 = scalar_lea.vmem %s3, %s189
          %s191 = smul.u32 8, %s18
        $region32: #{residual_block1d_forward.11} parent=23 // pred_fallthru
          _
      $region24: #{residual_block1d_forward.11} parent=5 // pred_fallthru
        _
      %p192 = scmp.le.s32.totalorder 1, %s10
      %p193 = scmp.lt.s32.totalorder %s10, 3
      %p194 = pnand %p192, %p193
      %p195 = pneg %p194
      // Predicated region
      $region33: #{residual_block1d_forward.11} parent=5 // pred_check
        _
      $region34: #{residual_block1d_forward.11} parent=5 // pred_check_branch
        %197 = sbr.rel (%p194) target = $region36
      $region35: #{residual_block1d_forward.11} parent=5 // pred_region
        %s198 = ssub.s32 %s10, 1
        %p199 = scmp.lt.s32.totalorder %s19, 1
        %s200 = scalar_select %p199, %s19, 1
        %s201 = smul.addr %s200, 10
        %s202 = smul.addr %s201, 4
        %s203 = scalar_lea.vmem %s0, %s202
        %p204 = pneg %p48
        %p205 = pneg %p45
        %p206 = pneg %p69
        %p207 = pneg %p66
        %p208 = pneg %p90
        %p209 = pneg %p87
        %s210 = smul.u32 8, %s20
        %p211 = scmp.lt.s32.totalorder %s19, 1
        %s212 = scalar_select %p211, %s19, 1
        %p213 = scmp.lt.s32.totalorder %s210, 7
        %s214 = scalar_select %p213, %s210, 7
        %s215 = smul.addr %s212, 8
        %s216 = sadd.s32 %s214, %s215
        %s217 = smul.addr %s216, 4
        %s218 = scalar_lea.vmem %s3, %s217
        %p219 = pneg %p118
        %p220 = pneg %p115
        %p221 = pneg %p146
        %p222 = pneg %p143
        %s223 = sand.u32 %s133, 1
        %s224 = sand.u32 %s133, 1
        %s225 = smul.addr %s224, 64
        %s226 = scalar_lea.vmem [#allocation3], %s225
        %p227 = scmp.lt.s32.totalorder %s19, 1
        %s228 = scalar_select %p227, %s19, 1
        %s229 = smul.addr %s228, 10
        %s230 = smul.addr %s229, 4
        %s231 = scalar_lea.vmem %s0, %s230
        %s232 = smul.u32 8, %s20
        %p233 = scmp.lt.s32.totalorder %s19, 1
        %s234 = scalar_select %p233, %s19, 1
        %p235 = scmp.lt.s32.totalorder %s232, 7
        %s236 = scalar_select %p235, %s232, 7
        %s237 = smul.addr %s234, 8
        %s238 = sadd.s32 %s236, %s237
        %s239 = smul.addr %s238, 4
        %s240 = scalar_lea.vmem %s3, %s239
        %s241 = smul.u32 8, %s20
        %s242 = smul.u32 8, %s20
        %s243 = ssub.s32 7, %s242
        %s244 = smul.u32 128, %s243
        %s246 = smul.u32 %s20, 64
        %s247 = sshra.s32 %s246, 3
        %s248 = sand.u32 %s246, 7
        %s249 = smul.addr %s247, 4
        %s250 = scalar_lea.vmem %s231, %s249
        %v251 = vld [vmem:[%s250] sm:$0xf]
        %v252 = vld [vmem:[%s250 + $0x4] sm:$0xf]
        %v253 = vld [vmem:[%s250 + $0x8] sm:$0xf]
        %v254 = vld [vmem:[%s250 + $0xc] sm:$0xf]
        %v255 = vld [vmem:[%s250 + $0x10] sm:$0xf]
        %v256 = vld [vmem:[%s250 + $0x14] sm:$0xf]
        %v257 = vld [vmem:[%s250 + $0x18] sm:$0xf]
        %v258 = vld [vmem:[%s250 + $0x1c] sm:$0xf]
        %v259 = vld [vmem:[%s250 + $0x20] sm:$0xf]
        %v260 = vld [vmem:[%s250 + $0x24] sm:$0xf]
        %v261 = vunpack.c.l.bf16 %v251
        %v262 = vunpack.c.l.bf16 %v252
        %v263 = vunpack.c.l.bf16 %v253
        %v264 = vunpack.c.l.bf16 %v254
        %v265 = vunpack.c.l.bf16 %v255
        %v266 = vunpack.c.l.bf16 %v256
        %v267 = vunpack.c.l.bf16 %v257
        %v268 = vunpack.c.l.bf16 %v258
        %v269 = vunpack.c.l.bf16 %v259
        %v270 = vunpack.c.l.bf16 %v260
        %vm271 = vcmp.ge.f32.partialorder %v261, 0.0
        %vm272 = vcmp.ge.f32.partialorder %v262, 0.0
        %vm273 = vcmp.ge.f32.partialorder %v263, 0.0
        %vm274 = vcmp.ge.f32.partialorder %v264, 0.0
        %vm275 = vcmp.ge.f32.partialorder %v265, 0.0
        %vm276 = vcmp.ge.f32.partialorder %v266, 0.0
        %vm277 = vcmp.ge.f32.partialorder %v267, 0.0
        %vm278 = vcmp.ge.f32.partialorder %v268, 0.0
        %vm279 = vcmp.ge.f32.partialorder %v269, 0.0
        %vm280 = vcmp.ge.f32.partialorder %v270, 0.0
        %v281 = vmul.f32 %v261, 0.1
        %v282 = vmul.f32 %v262, 0.1
        %v283 = vmul.f32 %v263, 0.1
        %v284 = vmul.f32 %v264, 0.1
        %v285 = vmul.f32 %v265, 0.1
        %v286 = vmul.f32 %v266, 0.1
        %v287 = vmul.f32 %v267, 0.1
        %v288 = vmul.f32 %v268, 0.1
        %v289 = vmul.f32 %v269, 0.1
        %v290 = vmul.f32 %v270, 0.1
        %v291 = vsel %vm271, %v261, %v281
        %v292 = vsel %vm272, %v262, %v282
        %v293 = vsel %vm273, %v263, %v283
        %v294 = vsel %vm274, %v264, %v284
        %v295 = vsel %vm275, %v265, %v285
        %v296 = vsel %vm276, %v266, %v286
        %v297 = vsel %vm277, %v267, %v287
        %v298 = vsel %vm278, %v268, %v288
        %v299 = vsel %vm279, %v269, %v289
        %v300 = vsel %vm280, %v270, %v290
        %v301 = vpack.c.bf16 %v292, %v291
        %v302 = vpack.c.bf16 %v294, %v293
        %v303 = vpack.c.bf16 %v296, %v295
        %v304 = vpack.c.bf16 %v298, %v297
        %v305 = vpack.c.bf16 %v300, %v299
        %v311 = vunpack.c.l.b16 %v301
        %v312 = vunpack.c.h.b16 %v301
        %v313 = vunpack.c.l.b16 %v302
        %v314 = vunpack.c.h.b16 %v302
        %v315 = vunpack.c.l.b16 %v303
        %v316 = vunpack.c.h.b16 %v303
        %v317 = vunpack.c.l.b16 %v304
        %v318 = vunpack.c.h.b16 %v304
        %v319 = vunpack.c.l.b16 %v305
        %v320 = vunpack.c.h.b16 %v305
        %v321 = vpack.c.b16 %v311, %v311
        %v322 = vpack.c.b16 %v312, %v312
        %v323 = vpack.c.b16 %v313, %v313
        %v324 = vpack.c.b16 %v314, %v314
        %v325 = vpack.c.b16 %v315, %v315
        %v326 = vpack.c.b16 %v316, %v316
        %v327 = vpack.c.b16 %v317, %v317
        %v328 = vpack.c.b16 %v318, %v318
        %v329 = vpack.c.b16 %v319, %v319
        %v330 = vpack.c.b16 %v320, %v320
        %341 = vst [vmem:[#allocation2] sm:$0xf] %v321
        %342 = vst [vmem:[#allocation2 + $0x4] sm:$0xf] %v322
        %343 = vst [vmem:[#allocation2 + $0x8] sm:$0xf] %v323
        %344 = vst [vmem:[#allocation2 + $0xc] sm:$0xf] %v324
        %345 = vst [vmem:[#allocation2 + $0x10] sm:$0xf] %v325
        %346 = vst [vmem:[#allocation2 + $0x14] sm:$0xf] %v326
        %347 = vst [vmem:[#allocation2 + $0x18] sm:$0xf] %v327
        %348 = vst [vmem:[#allocation2 + $0x1c] sm:$0xf] %v328
        %349 = vst [vmem:[#allocation2 + $0x20] sm:$0xf] %v329
        %350 = vst [vmem:[#allocation2 + $0x24] sm:$0xf] %v330
        %v351 = vld [vmem:[%s2] sm:$0x1]
        %v352 = vld [vmem:[#allocation2] sm:$0xf]
        %v353 = vld [vmem:[#allocation2 + $0x4] sm:$0xf]
        %v354 = vld [vmem:[#allocation2 + $0x8] sm:$0xf]
        %v355 = vld [vmem:[#allocation2 + $0xc] sm:$0xf]
        %v356 = vld [vmem:[#allocation2 + $0x10] sm:$0xf]
        %v357 = vld [vmem:[#allocation2 + $0x14] sm:$0xf]
        %v358 = vld [vmem:[#allocation2 + $0x18] sm:$0xf]
        %v359 = vld [vmem:[#allocation2 + $0x1c] sm:$0xf]
        %v360 = vld [vmem:[#allocation2 + $0x20] sm:$0x1]
        %v369 = vunpack.c.l.b16 %v352
        %v370 = vunpack.c.l.b16 %v353
        %v371 = vunpack.c.l.b16 %v354
        %v372 = vunpack.c.l.b16 %v355
        %v373 = vunpack.c.l.b16 %v356
        %v374 = vunpack.c.l.b16 %v357
        %v375 = vunpack.c.l.b16 %v358
        %v376 = vunpack.c.l.b16 %v359
        %v377 = vpack.c.b16 %v370, %v369
        %v378 = vpack.c.b16 %v372, %v371
        %v379 = vpack.c.b16 %v374, %v373
        %v380 = vpack.c.b16 %v376, %v375
        %v386 = vunpack.c.l.b16 %v360
        %v387 = vpack.c.b16 %v386, %v386
        %vm388 = vsmask.f32 7424
        %v390 = vshrl.u32 %v377, 16
        %v392 = vshll.u32 %v377, 16
        %v394 = vrot.slane %v392, 1
        %v395 = vor.u32 %v390, %v394
        %v397 = vshll.u32 %v378, 16
        %v399 = vrot.slane %v397, 1
        %v400 = vsel %vm388, %v395, %v399
        %v401 = vshrl.u32 %v378, 16
        %v403 = vor.u32 %v401, %v399
        %v405 = vshll.u32 %v379, 16
        %v407 = vrot.slane %v405, 1
        %v408 = vsel %vm388, %v403, %v407
        %v409 = vshrl.u32 %v379, 16
        %v411 = vor.u32 %v409, %v407
        %v413 = vshll.u32 %v380, 16
        %v415 = vrot.slane %v413, 1
        %v416 = vsel %vm388, %v411, %v415
        %v417 = vshrl.u32 %v380, 16
        %v419 = vor.u32 %v417, %v415
        %v421 = vshll.u32 %v387, 16
        %v423 = vrot.slane %v421, 1
        %v424 = vsel %vm388, %v419, %v423
        %v429 = vld [vmem:[%s1] sm:$0xf]
        %v430 = vld [vmem:[%s1 + $0x4] sm:$0xf]
        %v431 = vld [vmem:[%s1 + $0x8] sm:$0xf]
        %v432 = vld [vmem:[%s1 + $0xc] sm:$0xf]
        %v433 = vld [vmem:[%s1 + $0x10] sm:$0xf]
        %v434 = vld [vmem:[%s1 + $0x14] sm:$0xf]
        %v435 = vld [vmem:[%s1 + $0x18] sm:$0xf]
        %v436 = vld [vmem:[%s1 + $0x1c] sm:$0xf]
        %v437 = vld [vmem:[%s1 + $0x20] sm:$0xf]
        %v438 = vld [vmem:[%s1 + $0x24] sm:$0xf]
        %v439 = vld [vmem:[%s1 + $0x28] sm:$0xf]
        %v440 = vld [vmem:[%s1 + $0x2c] sm:$0xf]
        %v441 = vld [vmem:[%s1 + $0x30] sm:$0xf]
        %v442 = vld [vmem:[%s1 + $0x34] sm:$0xf]
        %v443 = vld [vmem:[%s1 + $0x38] sm:$0xf]
        %v444 = vld [vmem:[%s1 + $0x3c] sm:$0xf]
        %v445 = vld [vmem:[%s1 + $0x40] sm:$0xf]
        %v446 = vld [vmem:[%s1 + $0x44] sm:$0xf]
        %v447 = vld [vmem:[%s1 + $0x48] sm:$0xf]
        %v448 = vld [vmem:[%s1 + $0x4c] sm:$0xf]
        %v449 = vld [vmem:[%s1 + $0x50] sm:$0xf]
        %v450 = vld [vmem:[%s1 + $0x54] sm:$0xf]
        %v451 = vld [vmem:[%s1 + $0x58] sm:$0xf]
        %v452 = vld [vmem:[%s1 + $0x5c] sm:$0xf]
        %v453 = vld [vmem:[%s1 + $0x60] sm:$0xf]
        %v454 = vld [vmem:[%s1 + $0x64] sm:$0xf]
        %v455 = vld [vmem:[%s1 + $0x68] sm:$0xf]
        %v456 = vld [vmem:[%s1 + $0x6c] sm:$0xf]
        %v457 = vld [vmem:[%s1 + $0x70] sm:$0xf]
        %v458 = vld [vmem:[%s1 + $0x74] sm:$0xf]
        %v459 = vld [vmem:[%s1 + $0x78] sm:$0xf]
        %v460 = vld [vmem:[%s1 + $0x7c] sm:$0xf]
        %v462 = vlaneseq
        %v463 = vshrl.u32 %v462, 7
        %v464 = vsub.s32 0, %v463
        %v465 = vrot.slane %v351, %v464
        %v499 = vunpack.c.l.b16 %v429
        %v500 = vunpack.c.l.b16 %v430
        %v501 = vunpack.c.l.b16 %v431
        %v502 = vunpack.c.l.b16 %v432
        %v503 = vunpack.c.l.b16 %v433
        %v504 = vunpack.c.l.b16 %v434
        %v505 = vunpack.c.l.b16 %v435
        %v506 = vunpack.c.l.b16 %v436
        %v507 = vunpack.c.l.b16 %v437
        %v508 = vunpack.c.l.b16 %v438
        %v509 = vunpack.c.l.b16 %v439
        %v510 = vunpack.c.l.b16 %v440
        %v511 = vunpack.c.l.b16 %v441
        %v512 = vunpack.c.l.b16 %v442
        %v513 = vunpack.c.l.b16 %v443
        %v514 = vunpack.c.l.b16 %v444
        %v515 = vunpack.c.l.b16 %v445
        %v516 = vunpack.c.l.b16 %v446
        %v517 = vunpack.c.l.b16 %v447
        %v518 = vunpack.c.l.b16 %v448
        %v519 = vunpack.c.l.b16 %v449
        %v520 = vunpack.c.l.b16 %v450
        %v521 = vunpack.c.l.b16 %v451
        %v522 = vunpack.c.l.b16 %v452
        %v523 = vunpack.c.l.b16 %v453
        %v524 = vunpack.c.l.b16 %v454
        %v525 = vunpack.c.l.b16 %v455
        %v526 = vunpack.c.l.b16 %v456
        %v527 = vunpack.c.l.b16 %v457
        %v528 = vunpack.c.l.b16 %v458
        %v529 = vunpack.c.l.b16 %v459
        %v530 = vunpack.c.l.b16 %v460
        %v531 = vpack.c.b16 %v500, %v499
        %v532 = vpack.c.b16 %v502, %v501
        %v533 = vpack.c.b16 %v504, %v503
        %v534 = vpack.c.b16 %v506, %v505
        %v535 = vpack.c.b16 %v508, %v507
        %v536 = vpack.c.b16 %v510, %v509
        %v537 = vpack.c.b16 %v512, %v511
        %v538 = vpack.c.b16 %v514, %v513
        %v539 = vpack.c.b16 %v516, %v515
        %v540 = vpack.c.b16 %v518, %v517
        %v541 = vpack.c.b16 %v520, %v519
        %v542 = vpack.c.b16 %v522, %v521
        %v543 = vpack.c.b16 %v524, %v523
        %v544 = vpack.c.b16 %v526, %v525
        %v545 = vpack.c.b16 %v528, %v527
        %v546 = vpack.c.b16 %v530, %v529
        %563 = vmatprep.subr.bf16.mxu0 0
        %564 = vmatpush1.bf16.msra.mxu0 %v538
        %565 = vmatprep.subr.bf16.mxu0 0
        %566 = vmatpush1.bf16.msra.mxu0 %v537
        %567 = vmatprep.subr.bf16.mxu0 0
        %568 = vmatpush1.bf16.msra.mxu0 %v536
        %569 = vmatprep.subr.bf16.mxu0 0
        %570 = vmatpush1.bf16.msra.mxu0 %v535
        %571 = vmatprep.subr.bf16.mxu0 0
        %572 = vmatpush1.bf16.msra.mxu0 %v534
        %573 = vmatprep.subr.bf16.mxu0 0
        %574 = vmatpush1.bf16.msra.mxu0 %v533
        %575 = vmatprep.subr.bf16.mxu0 0
        %576 = vmatpush1.bf16.msra.mxu0 %v532
        %577 = vmatprep.subr.bf16.mxu0 0
        %578 = vmatpush1.bf16.msra.mxu0 %v531
        %579 = vmatprep.subr.bf16.mxu0 0
        %580 = vmatpush2.bf16.msra.mxu0 %v546
        %581 = vmatprep.subr.bf16.mxu0 0
        %582 = vmatpush2.bf16.msra.mxu0 %v545
        %583 = vmatprep.subr.bf16.mxu0 0
        %584 = vmatpush2.bf16.msra.mxu0 %v544
        %585 = vmatprep.subr.bf16.mxu0 0
        %586 = vmatpush2.bf16.msra.mxu0 %v543
        %587 = vmatprep.subr.bf16.mxu0 0
        %588 = vmatpush2.bf16.msra.mxu0 %v542
        %589 = vmatprep.subr.bf16.mxu0 0
        %590 = vmatpush2.bf16.msra.mxu0 %v541
        %591 = vmatprep.subr.bf16.mxu0 0
        %592 = vmatpush2.bf16.msra.mxu0 %v540
        %593 = vmatprep.subr.bf16.mxu0 0
        %594 = vmatpush2.bf16.msra.mxu0 %v539
        %595 = vmatprep.mubr.bf16.mxu0 %v400
        %596 = vmatmul.mubr.bf16.gmra.mxu0 %v377
        %v597 = vpop.f32.mrf.mxu0
        %v598 = vadd.f32 %v465, %v597
        %v599 = vpop.f32.mrf.mxu0
        %v600 = vpop.f32.mrf.mxu0
        %v601 = vadd.f32 %v465, %v600
        %v602 = vpop.f32.mrf.mxu0
        %603 = vmatprep.mubr.bf16.mxu0 %v408
        %604 = vmatmul.mubr.bf16.gmra.mxu0 %v378
        %v605 = vpop.f32.mrf.mxu0
        %v606 = vadd.f32 %v465, %v605
        %v607 = vpop.f32.mrf.mxu0
        %v608 = vpop.f32.mrf.mxu0
        %v609 = vadd.f32 %v465, %v608
        %v610 = vpop.f32.mrf.mxu0
        %611 = vmatprep.mubr.bf16.mxu0 %v416
        %612 = vmatmul.mubr.bf16.gmra.mxu0 %v379
        %v613 = vpop.f32.mrf.mxu0
        %v614 = vadd.f32 %v465, %v613
        %v615 = vpop.f32.mrf.mxu0
        %v616 = vpop.f32.mrf.mxu0
        %v617 = vadd.f32 %v465, %v616
        %v618 = vpop.f32.mrf.mxu0
        %619 = vmatprep.mubr.bf16.mxu0 %v424
        %620 = vmatmul.mubr.bf16.gmra.mxu0 %v380
        %v621 = vpop.f32.mrf.mxu0
        %v622 = vadd.f32 %v465, %v621
        %v623 = vpop.f32.mrf.mxu0
        %v624 = vpop.f32.mrf.mxu0
        %v625 = vadd.f32 %v465, %v624
        %v626 = vpop.f32.mrf.mxu0
        %627 = vdwg.mxu0
        %v628 = vld [vmem:[#allocation2] sm:$0xe]
        %v629 = vld [vmem:[#allocation2 + $0x20] sm:$0x3]
        %v631 = vunpack.c.l.b16 %v628
        %v632 = vpack.c.b16 %v370, %v631
        %v634 = vunpack.c.l.b16 %v629
        %v635 = vpack.c.b16 %v634, %v634
        %v637 = vshrl.u32 %v632, 16
        %v639 = vshll.u32 %v632, 16
        %v641 = vrot.slane %v639, 1
        %v642 = vor.u32 %v637, %v641
        %v643 = vsel %vm388, %v642, %v399
        %v645 = vshll.u32 %v635, 16
        %v647 = vrot.slane %v645, 1
        %v648 = vsel %vm388, %v419, %v647
        %v649 = vshrl.u32 %v635, 16
        %v651 = vor.u32 %v649, %v647
        %s652 = scalar_lea.vmem %s1, 128
        %v653 = vld [vmem:[%s652] sm:$0xf]
        %v654 = vld [vmem:[%s652 + $0x4] sm:$0xf]
        %v655 = vld [vmem:[%s652 + $0x8] sm:$0xf]
        %v656 = vld [vmem:[%s652 + $0xc] sm:$0xf]
        %v657 = vld [vmem:[%s652 + $0x10] sm:$0xf]
        %v658 = vld [vmem:[%s652 + $0x14] sm:$0xf]
        %v659 = vld [vmem:[%s652 + $0x18] sm:$0xf]
        %v660 = vld [vmem:[%s652 + $0x1c] sm:$0xf]
        %v661 = vld [vmem:[%s652 + $0x20] sm:$0xf]
        %v662 = vld [vmem:[%s652 + $0x24] sm:$0xf]
        %v663 = vld [vmem:[%s652 + $0x28] sm:$0xf]
        %v664 = vld [vmem:[%s652 + $0x2c] sm:$0xf]
        %v665 = vld [vmem:[%s652 + $0x30] sm:$0xf]
        %v666 = vld [vmem:[%s652 + $0x34] sm:$0xf]
        %v667 = vld [vmem:[%s652 + $0x38] sm:$0xf]
        %v668 = vld [vmem:[%s652 + $0x3c] sm:$0xf]
        %v669 = vld [vmem:[%s652 + $0x40] sm:$0xf]
        %v670 = vld [vmem:[%s652 + $0x44] sm:$0xf]
        %v671 = vld [vmem:[%s652 + $0x48] sm:$0xf]
        %v672 = vld [vmem:[%s652 + $0x4c] sm:$0xf]
        %v673 = vld [vmem:[%s652 + $0x50] sm:$0xf]
        %v674 = vld [vmem:[%s652 + $0x54] sm:$0xf]
        %v675 = vld [vmem:[%s652 + $0x58] sm:$0xf]
        %v676 = vld [vmem:[%s652 + $0x5c] sm:$0xf]
        %v677 = vld [vmem:[%s652 + $0x60] sm:$0xf]
        %v678 = vld [vmem:[%s652 + $0x64] sm:$0xf]
        %v679 = vld [vmem:[%s652 + $0x68] sm:$0xf]
        %v680 = vld [vmem:[%s652 + $0x6c] sm:$0xf]
        %v681 = vld [vmem:[%s652 + $0x70] sm:$0xf]
        %v682 = vld [vmem:[%s652 + $0x74] sm:$0xf]
        %v683 = vld [vmem:[%s652 + $0x78] sm:$0xf]
        %v684 = vld [vmem:[%s652 + $0x7c] sm:$0xf]
        %vm685 = vcmask 1046528
        %v686 = vrot.slane %v632, 1
        %v687 = vrot.slane %v378, 1
        %v688 = vsel %vm685, %v686, %v687
        %v689 = vrot.slane %v643, 1
        %v690 = vrot.slane %v408, 1
        %v691 = vsel %vm685, %v689, %v690
        %v692 = vrot.slane %v379, 1
        %v693 = vsel %vm685, %v687, %v692
        %v694 = vrot.slane %v416, 1
        %v695 = vsel %vm685, %v690, %v694
        %v696 = vrot.slane %v380, 1
        %v697 = vsel %vm685, %v692, %v696
        %v698 = vrot.slane %v648, 1
        %v699 = vsel %vm685, %v694, %v698
        %v700 = vrot.slane %v387, 1
        %v701 = vsel %vm685, %v696, %v700
        %v702 = vrot.slane %v651, 1
        %v703 = vsel %vm685, %v698, %v702
        %v744 = vunpack.c.l.b16 %v653
        %v745 = vunpack.c.l.b16 %v654
        %v746 = vunpack.c.l.b16 %v655
        %v747 = vunpack.c.l.b16 %v656
        %v748 = vunpack.c.l.b16 %v657
        %v749 = vunpack.c.l.b16 %v658
        %v750 = vunpack.c.l.b16 %v659
        %v751 = vunpack.c.l.b16 %v660
        %v752 = vunpack.c.l.b16 %v661
        %v753 = vunpack.c.l.b16 %v662
        %v754 = vunpack.c.l.b16 %v663
        %v755 = vunpack.c.l.b16 %v664
        %v756 = vunpack.c.l.b16 %v665
        %v757 = vunpack.c.l.b16 %v666
        %v758 = vunpack.c.l.b16 %v667
        %v759 = vunpack.c.l.b16 %v668
        %v760 = vunpack.c.l.b16 %v669
        %v761 = vunpack.c.l.b16 %v670
        %v762 = vunpack.c.l.b16 %v671
        %v763 = vunpack.c.l.b16 %v672
        %v764 = vunpack.c.l.b16 %v673
        %v765 = vunpack.c.l.b16 %v674
        %v766 = vunpack.c.l.b16 %v675
        %v767 = vunpack.c.l.b16 %v676
        %v768 = vunpack.c.l.b16 %v677
        %v769 = vunpack.c.l.b16 %v678
        %v770 = vunpack.c.l.b16 %v679
        %v771 = vunpack.c.l.b16 %v680
        %v772 = vunpack.c.l.b16 %v681
        %v773 = vunpack.c.l.b16 %v682
        %v774 = vunpack.c.l.b16 %v683
        %v775 = vunpack.c.l.b16 %v684
        %v776 = vpack.c.b16 %v745, %v744
        %v777 = vpack.c.b16 %v747, %v746
        %v778 = vpack.c.b16 %v749, %v748
        %v779 = vpack.c.b16 %v751, %v750
        %v780 = vpack.c.b16 %v753, %v752
        %v781 = vpack.c.b16 %v755, %v754
        %v782 = vpack.c.b16 %v757, %v756
        %v783 = vpack.c.b16 %v759, %v758
        %v784 = vpack.c.b16 %v761, %v760
        %v785 = vpack.c.b16 %v763, %v762
        %v786 = vpack.c.b16 %v765, %v764
        %v787 = vpack.c.b16 %v767, %v766
        %v788 = vpack.c.b16 %v769, %v768
        %v789 = vpack.c.b16 %v771, %v770
        %v790 = vpack.c.b16 %v773, %v772
        %v791 = vpack.c.b16 %v775, %v774
        %808 = vmatprep.subr.bf16.mxu0 0
        %809 = vmatpush1.bf16.msra.mxu0 %v783
        %810 = vmatprep.subr.bf16.mxu0 0
        %811 = vmatpush1.bf16.msra.mxu0 %v782
        %812 = vmatprep.subr.bf16.mxu0 0
        %813 = vmatpush1.bf16.msra.mxu0 %v781
        %814 = vmatprep.subr.bf16.mxu0 0
        %815 = vmatpush1.bf16.msra.mxu0 %v780
        %816 = vmatprep.subr.bf16.mxu0 0
        %817 = vmatpush1.bf16.msra.mxu0 %v779
        %818 = vmatprep.subr.bf16.mxu0 0
        %819 = vmatpush1.bf16.msra.mxu0 %v778
        %820 = vmatprep.subr.bf16.mxu0 0
        %821 = vmatpush1.bf16.msra.mxu0 %v777
        %822 = vmatprep.subr.bf16.mxu0 0
        %823 = vmatpush1.bf16.msra.mxu0 %v776
        %824 = vmatprep.subr.bf16.mxu0 0
        %825 = vmatpush2.bf16.msra.mxu0 %v791
        %826 = vmatprep.subr.bf16.mxu0 0
        %827 = vmatpush2.bf16.msra.mxu0 %v790
        %828 = vmatprep.subr.bf16.mxu0 0
        %829 = vmatpush2.bf16.msra.mxu0 %v789
        %830 = vmatprep.subr.bf16.mxu0 0
        %831 = vmatpush2.bf16.msra.mxu0 %v788
        %832 = vmatprep.subr.bf16.mxu0 0
        %833 = vmatpush2.bf16.msra.mxu0 %v787
        %834 = vmatprep.subr.bf16.mxu0 0
        %835 = vmatpush2.bf16.msra.mxu0 %v786
        %836 = vmatprep.subr.bf16.mxu0 0
        %837 = vmatpush2.bf16.msra.mxu0 %v785
        %838 = vmatprep.subr.bf16.mxu0 0
        %839 = vmatpush2.bf16.msra.mxu0 %v784
        %840 = vmatprep.mubr.bf16.mxu0 %v691
        %841 = vmatmul.mubr.bf16.gmra.mxu0 %v688
        %v842 = vpop.f32.mrf.mxu0
        %v843 = vadd.f32 0.0, %v842
        %v844 = vpop.f32.mrf.mxu0
        %v845 = vpop.f32.mrf.mxu0
        %v846 = vadd.f32 0.0, %v845
        %v847 = vpop.f32.mrf.mxu0
        %848 = vmatprep.mubr.bf16.mxu0 %v695
        %849 = vmatmul.mubr.bf16.gmra.mxu0 %v693
        %v850 = vpop.f32.mrf.mxu0
        %v851 = vadd.f32 0.0, %v850
        %v852 = vpop.f32.mrf.mxu0
        %v853 = vpop.f32.mrf.mxu0
        %v854 = vadd.f32 0.0, %v853
        %v855 = vpop.f32.mrf.mxu0
        %856 = vmatprep.mubr.bf16.mxu0 %v699
        %857 = vmatmul.mubr.bf16.gmra.mxu0 %v697
        %v858 = vpop.f32.mrf.mxu0
        %v859 = vadd.f32 0.0, %v858
        %v860 = vpop.f32.mrf.mxu0
        %v861 = vpop.f32.mrf.mxu0
        %v862 = vadd.f32 0.0, %v861
        %v863 = vpop.f32.mrf.mxu0
        %864 = vmatprep.mubr.bf16.mxu0 %v703
        %865 = vmatmul.mubr.bf16.gmra.mxu0 %v701
        %v866 = vpop.f32.mrf.mxu0
        %v867 = vadd.f32 0.0, %v866
        %v868 = vpop.f32.mrf.mxu0
        %v869 = vpop.f32.mrf.mxu0
        %v870 = vadd.f32 0.0, %v869
        %v871 = vpop.f32.mrf.mxu0
        %872 = vdwg.mxu0
        %v873 = vadd.f32 %v598, %v843
        %v874 = vadd.f32 %v601, %v846
        %v875 = vadd.f32 %v606, %v851
        %v876 = vadd.f32 %v609, %v854
        %v877 = vadd.f32 %v614, %v859
        %v878 = vadd.f32 %v617, %v862
        %v879 = vadd.f32 %v622, %v867
        %v880 = vadd.f32 %v625, %v870
        %v881 = vld [vmem:[#allocation2] sm:$0xc]
        %v882 = vld [vmem:[#allocation2 + $0x20] sm:$0x7]
        %v884 = vunpack.c.l.b16 %v881
        %v885 = vpack.c.b16 %v370, %v884
        %v887 = vunpack.c.l.b16 %v882
        %v888 = vpack.c.b16 %v887, %v887
        %v890 = vshrl.u32 %v885, 16
        %v892 = vshll.u32 %v885, 16
        %v894 = vrot.slane %v892, 1
        %v895 = vor.u32 %v890, %v894
        %v896 = vsel %vm388, %v895, %v399
        %v898 = vshll.u32 %v888, 16
        %v900 = vrot.slane %v898, 1
        %v901 = vsel %vm388, %v419, %v900
        %v902 = vshrl.u32 %v888, 16
        %v904 = vor.u32 %v902, %v900
        %s905 = scalar_lea.vmem %s1, 256
        %v906 = vld [vmem:[%s905] sm:$0xf]
        %v907 = vld [vmem:[%s905 + $0x4] sm:$0xf]
        %v908 = vld [vmem:[%s905 + $0x8] sm:$0xf]
        %v909 = vld [vmem:[%s905 + $0xc] sm:$0xf]
        %v910 = vld [vmem:[%s905 + $0x10] sm:$0xf]
        %v911 = vld [vmem:[%s905 + $0x14] sm:$0xf]
        %v912 = vld [vmem:[%s905 + $0x18] sm:$0xf]
        %v913 = vld [vmem:[%s905 + $0x1c] sm:$0xf]
        %v914 = vld [vmem:[%s905 + $0x20] sm:$0xf]
        %v915 = vld [vmem:[%s905 + $0x24] sm:$0xf]
        %v916 = vld [vmem:[%s905 + $0x28] sm:$0xf]
        %v917 = vld [vmem:[%s905 + $0x2c] sm:$0xf]
        %v918 = vld [vmem:[%s905 + $0x30] sm:$0xf]
        %v919 = vld [vmem:[%s905 + $0x34] sm:$0xf]
        %v920 = vld [vmem:[%s905 + $0x38] sm:$0xf]
        %v921 = vld [vmem:[%s905 + $0x3c] sm:$0xf]
        %v922 = vld [vmem:[%s905 + $0x40] sm:$0xf]
        %v923 = vld [vmem:[%s905 + $0x44] sm:$0xf]
        %v924 = vld [vmem:[%s905 + $0x48] sm:$0xf]
        %v925 = vld [vmem:[%s905 + $0x4c] sm:$0xf]
        %v926 = vld [vmem:[%s905 + $0x50] sm:$0xf]
        %v927 = vld [vmem:[%s905 + $0x54] sm:$0xf]
        %v928 = vld [vmem:[%s905 + $0x58] sm:$0xf]
        %v929 = vld [vmem:[%s905 + $0x5c] sm:$0xf]
        %v930 = vld [vmem:[%s905 + $0x60] sm:$0xf]
        %v931 = vld [vmem:[%s905 + $0x64] sm:$0xf]
        %v932 = vld [vmem:[%s905 + $0x68] sm:$0xf]
        %v933 = vld [vmem:[%s905 + $0x6c] sm:$0xf]
        %v934 = vld [vmem:[%s905 + $0x70] sm:$0xf]
        %v935 = vld [vmem:[%s905 + $0x74] sm:$0xf]
        %v936 = vld [vmem:[%s905 + $0x78] sm:$0xf]
        %v937 = vld [vmem:[%s905 + $0x7c] sm:$0xf]
        %vm938 = vcmask 1045504
        %v939 = vrot.slane %v885, 2
        %v940 = vrot.slane %v378, 2
        %v941 = vsel %vm938, %v939, %v940
        %v942 = vrot.slane %v896, 2
        %v943 = vrot.slane %v408, 2
        %v944 = vsel %vm938, %v942, %v943
        %v945 = vrot.slane %v379, 2
        %v946 = vsel %vm938, %v940, %v945
        %v947 = vrot.slane %v416, 2
        %v948 = vsel %vm938, %v943, %v947
        %v949 = vrot.slane %v380, 2
        %v950 = vsel %vm938, %v945, %v949
        %v951 = vrot.slane %v901, 2
        %v952 = vsel %vm938, %v947, %v951
        %v953 = vrot.slane %v635, 2
        %v954 = vsel %vm938, %v949, %v953
        %v955 = vrot.slane %v904, 2
        %v956 = vsel %vm938, %v951, %v955
        %v997 = vunpack.c.l.b16 %v906
        %v998 = vunpack.c.l.b16 %v907
        %v999 = vunpack.c.l.b16 %v908
        %v1000 = vunpack.c.l.b16 %v909
        %v1001 = vunpack.c.l.b16 %v910
        %v1002 = vunpack.c.l.b16 %v911
        %v1003 = vunpack.c.l.b16 %v912
        %v1004 = vunpack.c.l.b16 %v913
        %v1005 = vunpack.c.l.b16 %v914
        %v1006 = vunpack.c.l.b16 %v915
        %v1007 = vunpack.c.l.b16 %v916
        %v1008 = vunpack.c.l.b16 %v917
        %v1009 = vunpack.c.l.b16 %v918
        %v1010 = vunpack.c.l.b16 %v919
        %v1011 = vunpack.c.l.b16 %v920
        %v1012 = vunpack.c.l.b16 %v921
        %v1013 = vunpack.c.l.b16 %v922
        %v1014 = vunpack.c.l.b16 %v923
        %v1015 = vunpack.c.l.b16 %v924
        %v1016 = vunpack.c.l.b16 %v925
        %v1017 = vunpack.c.l.b16 %v926
        %v1018 = vunpack.c.l.b16 %v927
        %v1019 = vunpack.c.l.b16 %v928
        %v1020 = vunpack.c.l.b16 %v929
        %v1021 = vunpack.c.l.b16 %v930
        %v1022 = vunpack.c.l.b16 %v931
        %v1023 = vunpack.c.l.b16 %v932
        %v1024 = vunpack.c.l.b16 %v933
        %v1025 = vunpack.c.l.b16 %v934
        %v1026 = vunpack.c.l.b16 %v935
        %v1027 = vunpack.c.l.b16 %v936
        %v1028 = vunpack.c.l.b16 %v937
        %v1029 = vpack.c.b16 %v998, %v997
        %v1030 = vpack.c.b16 %v1000, %v999
        %v1031 = vpack.c.b16 %v1002, %v1001
        %v1032 = vpack.c.b16 %v1004, %v1003
        %v1033 = vpack.c.b16 %v1006, %v1005
        %v1034 = vpack.c.b16 %v1008, %v1007
        %v1035 = vpack.c.b16 %v1010, %v1009
        %v1036 = vpack.c.b16 %v1012, %v1011
        %v1037 = vpack.c.b16 %v1014, %v1013
        %v1038 = vpack.c.b16 %v1016, %v1015
        %v1039 = vpack.c.b16 %v1018, %v1017
        %v1040 = vpack.c.b16 %v1020, %v1019
        %v1041 = vpack.c.b16 %v1022, %v1021
        %v1042 = vpack.c.b16 %v1024, %v1023
        %v1043 = vpack.c.b16 %v1026, %v1025
        %v1044 = vpack.c.b16 %v1028, %v1027
        %1061 = vmatprep.subr.bf16.mxu0 0
        %1062 = vmatpush1.bf16.msra.mxu0 %v1036
        %1063 = vmatprep.subr.bf16.mxu0 0
        %1064 = vmatpush1.bf16.msra.mxu0 %v1035
        %1065 = vmatprep.subr.bf16.mxu0 0
        %1066 = vmatpush1.bf16.msra.mxu0 %v1034
        %1067 = vmatprep.subr.bf16.mxu0 0
        %1068 = vmatpush1.bf16.msra.mxu0 %v1033
        %1069 = vmatprep.subr.bf16.mxu0 0
        %1070 = vmatpush1.bf16.msra.mxu0 %v1032
        %1071 = vmatprep.subr.bf16.mxu0 0
        %1072 = vmatpush1.bf16.msra.mxu0 %v1031
        %1073 = vmatprep.subr.bf16.mxu0 0
        %1074 = vmatpush1.bf16.msra.mxu0 %v1030
        %1075 = vmatprep.subr.bf16.mxu0 0
        %1076 = vmatpush1.bf16.msra.mxu0 %v1029
        %1077 = vmatprep.subr.bf16.mxu0 0
        %1078 = vmatpush2.bf16.msra.mxu0 %v1044
        %1079 = vmatprep.subr.bf16.mxu0 0
        %1080 = vmatpush2.bf16.msra.mxu0 %v1043
        %1081 = vmatprep.subr.bf16.mxu0 0
        %1082 = vmatpush2.bf16.msra.mxu0 %v1042
        %1083 = vmatprep.subr.bf16.mxu0 0
        %1084 = vmatpush2.bf16.msra.mxu0 %v1041
        %1085 = vmatprep.subr.bf16.mxu0 0
        %1086 = vmatpush2.bf16.msra.mxu0 %v1040
        %1087 = vmatprep.subr.bf16.mxu0 0
        %1088 = vmatpush2.bf16.msra.mxu0 %v1039
        %1089 = vmatprep.subr.bf16.mxu0 0
        %1090 = vmatpush2.bf16.msra.mxu0 %v1038
        %1091 = vmatprep.subr.bf16.mxu0 0
        %1092 = vmatpush2.bf16.msra.mxu0 %v1037
        %1093 = vmatprep.mubr.bf16.mxu0 %v944
        %1094 = vmatmul.mubr.bf16.gmra.mxu0 %v941
        %v1095 = vpop.f32.mrf.mxu0
        %v1096 = vadd.f32 0.0, %v1095
        %v1097 = vpop.f32.mrf.mxu0
        %v1098 = vpop.f32.mrf.mxu0
        %v1099 = vadd.f32 0.0, %v1098
        %v1100 = vpop.f32.mrf.mxu0
        %1101 = vmatprep.mubr.bf16.mxu0 %v948
        %1102 = vmatmul.mubr.bf16.gmra.mxu0 %v946
        %v1103 = vpop.f32.mrf.mxu0
        %v1104 = vadd.f32 0.0, %v1103
        %v1105 = vpop.f32.mrf.mxu0
        %v1106 = vpop.f32.mrf.mxu0
        %v1107 = vadd.f32 0.0, %v1106
        %v1108 = vpop.f32.mrf.mxu0
        %1109 = vmatprep.mubr.bf16.mxu0 %v952
        %1110 = vmatmul.mubr.bf16.gmra.mxu0 %v950
        %v1111 = vpop.f32.mrf.mxu0
        %v1112 = vadd.f32 0.0, %v1111
        %v1113 = vpop.f32.mrf.mxu0
        %v1114 = vpop.f32.mrf.mxu0
        %v1115 = vadd.f32 0.0, %v1114
        %v1116 = vpop.f32.mrf.mxu0
        %1117 = vmatprep.mubr.bf16.mxu0 %v956
        %1118 = vmatmul.mubr.bf16.gmra.mxu0 %v954
        %v1119 = vpop.f32.mrf.mxu0
        %v1120 = vadd.f32 0.0, %v1119
        %v1121 = vpop.f32.mrf.mxu0
        %v1122 = vpop.f32.mrf.mxu0
        %v1123 = vadd.f32 0.0, %v1122
        %v1124 = vpop.f32.mrf.mxu0
        %1125 = vdwg.mxu0
        %v1126 = vadd.f32 %v873, %v1096
        %v1127 = vadd.f32 %v874, %v1099
        %v1128 = vadd.f32 %v875, %v1104
        %v1129 = vadd.f32 %v876, %v1107
        %v1130 = vadd.f32 %v877, %v1112
        %v1131 = vadd.f32 %v878, %v1115
        %v1132 = vadd.f32 %v879, %v1120
        %v1133 = vadd.f32 %v880, %v1123
        %v1134 = vld [vmem:[#allocation2] sm:$0x8]
        %v1135 = vld [vmem:[#allocation2 + $0x20] sm:$0xf]
        %v1137 = vunpack.c.l.b16 %v1134
        %v1138 = vpack.c.b16 %v370, %v1137
        %v1140 = vunpack.c.l.b16 %v1135
        %v1141 = vpack.c.b16 %v1140, %v1140
        %v1143 = vshrl.u32 %v1138, 16
        %v1145 = vshll.u32 %v1138, 16
        %v1147 = vrot.slane %v1145, 1
        %v1148 = vor.u32 %v1143, %v1147
        %v1149 = vsel %vm388, %v1148, %v399
        %v1151 = vshll.u32 %v1141, 16
        %v1153 = vrot.slane %v1151, 1
        %v1154 = vsel %vm388, %v419, %v1153
        %v1155 = vshrl.u32 %v1141, 16
        %v1157 = vor.u32 %v1155, %v1153
        %s1158 = scalar_lea.vmem %s1, 384
        %v1159 = vld [vmem:[%s1158] sm:$0xf]
        %v1160 = vld [vmem:[%s1158 + $0x4] sm:$0xf]
        %v1161 = vld [vmem:[%s1158 + $0x8] sm:$0xf]
        %v1162 = vld [vmem:[%s1158 + $0xc] sm:$0xf]
        %v1163 = vld [vmem:[%s1158 + $0x10] sm:$0xf]
        %v1164 = vld [vmem:[%s1158 + $0x14] sm:$0xf]
        %v1165 = vld [vmem:[%s1158 + $0x18] sm:$0xf]
        %v1166 = vld [vmem:[%s1158 + $0x1c] sm:$0xf]
        %v1167 = vld [vmem:[%s1158 + $0x20] sm:$0xf]
        %v1168 = vld [vmem:[%s1158 + $0x24] sm:$0xf]
        %v1169 = vld [vmem:[%s1158 + $0x28] sm:$0xf]
        %v1170 = vld [vmem:[%s1158 + $0x2c] sm:$0xf]
        %v1171 = vld [vmem:[%s1158 + $0x30] sm:$0xf]
        %v1172 = vld [vmem:[%s1158 + $0x34] sm:$0xf]
        %v1173 = vld [vmem:[%s1158 + $0x38] sm:$0xf]
        %v1174 = vld [vmem:[%s1158 + $0x3c] sm:$0xf]
        %v1175 = vld [vmem:[%s1158 + $0x40] sm:$0xf]
        %v1176 = vld [vmem:[%s1158 + $0x44] sm:$0xf]
        %v1177 = vld [vmem:[%s1158 + $0x48] sm:$0xf]
        %v1178 = vld [vmem:[%s1158 + $0x4c] sm:$0xf]
        %v1179 = vld [vmem:[%s1158 + $0x50] sm:$0xf]
        %v1180 = vld [vmem:[%s1158 + $0x54] sm:$0xf]
        %v1181 = vld [vmem:[%s1158 + $0x58] sm:$0xf]
        %v1182 = vld [vmem:[%s1158 + $0x5c] sm:$0xf]
        %v1183 = vld [vmem:[%s1158 + $0x60] sm:$0xf]
        %v1184 = vld [vmem:[%s1158 + $0x64] sm:$0xf]
        %v1185 = vld [vmem:[%s1158 + $0x68] sm:$0xf]
        %v1186 = vld [vmem:[%s1158 + $0x6c] sm:$0xf]
        %v1187 = vld [vmem:[%s1158 + $0x70] sm:$0xf]
        %v1188 = vld [vmem:[%s1158 + $0x74] sm:$0xf]
        %v1189 = vld [vmem:[%s1158 + $0x78] sm:$0xf]
        %v1190 = vld [vmem:[%s1158 + $0x7c] sm:$0xf]
        %vm1191 = vcmask 1044480
        %v1192 = vrot.slane %v1138, 3
        %v1193 = vrot.slane %v378, 3
        %v1194 = vsel %vm1191, %v1192, %v1193
        %v1195 = vrot.slane %v1149, 3
        %v1196 = vrot.slane %v408, 3
        %v1197 = vsel %vm1191, %v1195, %v1196
        %v1198 = vrot.slane %v379, 3
        %v1199 = vsel %vm1191, %v1193, %v1198
        %v1200 = vrot.slane %v416, 3
        %v1201 = vsel %vm1191, %v1196, %v1200
        %v1202 = vrot.slane %v380, 3
        %v1203 = vsel %vm1191, %v1198, %v1202
        %v1204 = vrot.slane %v1154, 3
        %v1205 = vsel %vm1191, %v1200, %v1204
        %v1206 = vrot.slane %v888, 3
        %v1207 = vsel %vm1191, %v1202, %v1206
        %v1208 = vrot.slane %v1157, 3
        %v1209 = vsel %vm1191, %v1204, %v1208
        %v1250 = vunpack.c.l.b16 %v1159
        %v1251 = vunpack.c.l.b16 %v1160
        %v1252 = vunpack.c.l.b16 %v1161
        %v1253 = vunpack.c.l.b16 %v1162
        %v1254 = vunpack.c.l.b16 %v1163
        %v1255 = vunpack.c.l.b16 %v1164
        %v1256 = vunpack.c.l.b16 %v1165
        %v1257 = vunpack.c.l.b16 %v1166
        %v1258 = vunpack.c.l.b16 %v1167
        %v1259 = vunpack.c.l.b16 %v1168
        %v1260 = vunpack.c.l.b16 %v1169
        %v1261 = vunpack.c.l.b16 %v1170
        %v1262 = vunpack.c.l.b16 %v1171
        %v1263 = vunpack.c.l.b16 %v1172
        %v1264 = vunpack.c.l.b16 %v1173
        %v1265 = vunpack.c.l.b16 %v1174
        %v1266 = vunpack.c.l.b16 %v1175
        %v1267 = vunpack.c.l.b16 %v1176
        %v1268 = vunpack.c.l.b16 %v1177
        %v1269 = vunpack.c.l.b16 %v1178
        %v1270 = vunpack.c.l.b16 %v1179
        %v1271 = vunpack.c.l.b16 %v1180
        %v1272 = vunpack.c.l.b16 %v1181
        %v1273 = vunpack.c.l.b16 %v1182
        %v1274 = vunpack.c.l.b16 %v1183
        %v1275 = vunpack.c.l.b16 %v1184
        %v1276 = vunpack.c.l.b16 %v1185
        %v1277 = vunpack.c.l.b16 %v1186
        %v1278 = vunpack.c.l.b16 %v1187
        %v1279 = vunpack.c.l.b16 %v1188
        %v1280 = vunpack.c.l.b16 %v1189
        %v1281 = vunpack.c.l.b16 %v1190
        %v1282 = vpack.c.b16 %v1251, %v1250
        %v1283 = vpack.c.b16 %v1253, %v1252
        %v1284 = vpack.c.b16 %v1255, %v1254
        %v1285 = vpack.c.b16 %v1257, %v1256
        %v1286 = vpack.c.b16 %v1259, %v1258
        %v1287 = vpack.c.b16 %v1261, %v1260
        %v1288 = vpack.c.b16 %v1263, %v1262
        %v1289 = vpack.c.b16 %v1265, %v1264
        %v1290 = vpack.c.b16 %v1267, %v1266
        %v1291 = vpack.c.b16 %v1269, %v1268
        %v1292 = vpack.c.b16 %v1271, %v1270
        %v1293 = vpack.c.b16 %v1273, %v1272
        %v1294 = vpack.c.b16 %v1275, %v1274
        %v1295 = vpack.c.b16 %v1277, %v1276
        %v1296 = vpack.c.b16 %v1279, %v1278
        %v1297 = vpack.c.b16 %v1281, %v1280
        %1314 = vmatprep.subr.bf16.mxu0 0
        %1315 = vmatpush1.bf16.msra.mxu0 %v1289
        %1316 = vmatprep.subr.bf16.mxu0 0
        %1317 = vmatpush1.bf16.msra.mxu0 %v1288
        %1318 = vmatprep.subr.bf16.mxu0 0
        %1319 = vmatpush1.bf16.msra.mxu0 %v1287
        %1320 = vmatprep.subr.bf16.mxu0 0
        %1321 = vmatpush1.bf16.msra.mxu0 %v1286
        %1322 = vmatprep.subr.bf16.mxu0 0
        %1323 = vmatpush1.bf16.msra.mxu0 %v1285
        %1324 = vmatprep.subr.bf16.mxu0 0
        %1325 = vmatpush1.bf16.msra.mxu0 %v1284
        %1326 = vmatprep.subr.bf16.mxu0 0
        %1327 = vmatpush1.bf16.msra.mxu0 %v1283
        %1328 = vmatprep.subr.bf16.mxu0 0
        %1329 = vmatpush1.bf16.msra.mxu0 %v1282
        %1330 = vmatprep.subr.bf16.mxu0 0
        %1331 = vmatpush2.bf16.msra.mxu0 %v1297
        %1332 = vmatprep.subr.bf16.mxu0 0
        %1333 = vmatpush2.bf16.msra.mxu0 %v1296
        %1334 = vmatprep.subr.bf16.mxu0 0
        %1335 = vmatpush2.bf16.msra.mxu0 %v1295
        %1336 = vmatprep.subr.bf16.mxu0 0
        %1337 = vmatpush2.bf16.msra.mxu0 %v1294
        %1338 = vmatprep.subr.bf16.mxu0 0
        %1339 = vmatpush2.bf16.msra.mxu0 %v1293
        %1340 = vmatprep.subr.bf16.mxu0 0
        %1341 = vmatpush2.bf16.msra.mxu0 %v1292
        %1342 = vmatprep.subr.bf16.mxu0 0
        %1343 = vmatpush2.bf16.msra.mxu0 %v1291
        %1344 = vmatprep.subr.bf16.mxu0 0
        %1345 = vmatpush2.bf16.msra.mxu0 %v1290
        %1346 = vmatprep.mubr.bf16.mxu0 %v1197
        %1347 = vmatmul.mubr.bf16.gmra.mxu0 %v1194
        %v1348 = vpop.f32.mrf.mxu0
        %v1349 = vadd.f32 0.0, %v1348
        %v1350 = vpop.f32.mrf.mxu0
        %v1351 = vpop.f32.mrf.mxu0
        %v1352 = vadd.f32 0.0, %v1351
        %v1353 = vpop.f32.mrf.mxu0
        %1354 = vmatprep.mubr.bf16.mxu0 %v1201
        %1355 = vmatmul.mubr.bf16.gmra.mxu0 %v1199
        %v1356 = vpop.f32.mrf.mxu0
        %v1357 = vadd.f32 0.0, %v1356
        %v1358 = vpop.f32.mrf.mxu0
        %v1359 = vpop.f32.mrf.mxu0
        %v1360 = vadd.f32 0.0, %v1359
        %v1361 = vpop.f32.mrf.mxu0
        %1362 = vmatprep.mubr.bf16.mxu0 %v1205
        %1363 = vmatmul.mubr.bf16.gmra.mxu0 %v1203
        %v1364 = vpop.f32.mrf.mxu0
        %v1365 = vadd.f32 0.0, %v1364
        %v1366 = vpop.f32.mrf.mxu0
        %v1367 = vpop.f32.mrf.mxu0
        %v1368 = vadd.f32 0.0, %v1367
        %v1369 = vpop.f32.mrf.mxu0
        %1370 = vmatprep.mubr.bf16.mxu0 %v1209
        %1371 = vmatmul.mubr.bf16.gmra.mxu0 %v1207
        %v1372 = vpop.f32.mrf.mxu0
        %v1373 = vadd.f32 0.0, %v1372
        %v1374 = vpop.f32.mrf.mxu0
        %v1375 = vpop.f32.mrf.mxu0
        %v1376 = vadd.f32 0.0, %v1375
        %v1377 = vpop.f32.mrf.mxu0
        %1378 = vdwg.mxu0
        %v1379 = vadd.f32 %v1126, %v1349
        %v1380 = vadd.f32 %v1127, %v1352
        %v1381 = vadd.f32 %v1128, %v1357
        %v1382 = vadd.f32 %v1129, %v1360
        %v1383 = vadd.f32 %v1130, %v1365
        %v1384 = vadd.f32 %v1131, %v1368
        %v1385 = vadd.f32 %v1132, %v1373
        %v1386 = vadd.f32 %v1133, %v1376
        %v1387 = vld [vmem:[%s240] sm:$0xf]
        %v1388 = vld [vmem:[%s240 + $0x4] sm:$0xf]
        %v1389 = vld [vmem:[%s240 + $0x8] sm:$0xf]
        %v1390 = vld [vmem:[%s240 + $0xc] sm:$0xf]
        %v1391 = vld [vmem:[%s240 + $0x10] sm:$0xf]
        %v1392 = vld [vmem:[%s240 + $0x14] sm:$0xf]
        %v1393 = vld [vmem:[%s240 + $0x18] sm:$0xf]
        %v1394 = vld [vmem:[%s240 + $0x1c] sm:$0xf]
        %v1395 = vunpack.c.l.bf16 %v1387
        %v1396 = vunpack.c.l.bf16 %v1388
        %v1397 = vunpack.c.l.bf16 %v1389
        %v1398 = vunpack.c.l.bf16 %v1390
        %v1399 = vunpack.c.l.bf16 %v1391
        %v1400 = vunpack.c.l.bf16 %v1392
        %v1401 = vunpack.c.l.bf16 %v1393
        %v1402 = vunpack.c.l.bf16 %v1394
        %v1403 = vadd.f32 %v1379, %v1395
        %v1404 = vadd.f32 %v1380, %v1396
        %v1405 = vadd.f32 %v1381, %v1397
        %v1406 = vadd.f32 %v1382, %v1398
        %v1407 = vadd.f32 %v1383, %v1399
        %v1408 = vadd.f32 %v1384, %v1400
        %v1409 = vadd.f32 %v1385, %v1401
        %v1410 = vadd.f32 %v1386, %v1402
        %1411 = vst [vmem:[%s226] sm:$0xff] %v1403
        %1412 = vst [vmem:[%s226 + $0x8] sm:$0xff] %v1404
        %1413 = vst [vmem:[%s226 + $0x10] sm:$0xff] %v1405
        %1414 = vst [vmem:[%s226 + $0x18] sm:$0xff] %v1406
        %1415 = vst [vmem:[%s226 + $0x20] sm:$0xff] %v1407
        %1416 = vst [vmem:[%s226 + $0x28] sm:$0xff] %v1408
        %1417 = vst [vmem:[%s226 + $0x30] sm:$0xff] %v1409
        %1418 = vst [vmem:[%s226 + $0x38] sm:$0xff] %v1410
        %s1419 = sand.u32 %s133, 1
        %s1420 = sand.u32 %s133, 1
        %s1421 = smul.addr %s1420, 64
        %s1422 = scalar_lea.vmem [#allocation3], %s1421
        // Predicated region
        $region37: #{residual_block1d_forward.11} parent=35 // pred_check
          %p1423 = pneg %p143
        $region38: #{residual_block1d_forward.11} parent=35 // pred_check_branch
          %1425 = sbr.rel (%p1423) target = $region40
        $region39: #{residual_block1d_forward.11} parent=35 // pred_region
          %s1426 = smul.u32 8, %s20
          %s1427 = ssub.s32 7, %s1426
          %s1428 = smul.u32 128, %s1427
          %p1429 = scmp.ne.s32.totalorder 0, %s1428
          %s1430 = smul.addr %s19, 7
          %s1431 = sadd.s32 %s1426, %s1430
          %s1432 = smul.addr %s1431, 8
          %s1433 = scalar_lea.vmem %s4, %s1432
          // Predicated region
          $region41: #{residual_block1d_forward.11} parent=39 // pred_check
            %p1434 = pneg %p1429
          $region42: #{residual_block1d_forward.11} parent=39 // pred_check_branch
            %1436 = sbr.rel (%p1434) target = $region44
          $region43: #{residual_block1d_forward.11} parent=39 // pred_region
            // Predicated region
            $region45: #{residual_block1d_forward.11} parent=43 // pred_check
              _
            $region46: #{residual_block1d_forward.11} parent=43 // pred_check_branch
              %1438 = sbr.rel (0) target = $region48
            $region47: #{residual_block1d_forward.11} parent=43 // pred_region
              // Predicated region
              $region67: #{residual_block1d_forward.11} parent=47 // pred_check
                _
              $region68: #{residual_block1d_forward.11} parent=47 // pred_check_branch
                %1501 = sbr.rel (0) target = $region70
              $region69: #{residual_block1d_forward.11} parent=47 // pred_region
                %s1502 = sdiv.u32.pop %s1427, 7
                %s1503 = srem.u32.pop %s1427, 7
                // While loop
                $region71: #{residual_block1d_forward.11} parent=69 // loop_pre_header
                  _
                $region72: #{residual_block1d_forward.11} parent=69 // loop_header
                  %s1505 = sphi 0, %s1507
                  %p1506 = scmp.ge.s32.totalorder %s1505, %s1502
                  %s1510 = sphi 0, %s1529
                  %s1511 = sphi %s1422, %s1532
                  %s1512 = sphi %s1433, %s1533
                $region73: #{residual_block1d_forward.11} parent=69 // loop_header_branch
                  %1509 = sbr.rel (%p1506) target = $region77
                $region74: #{residual_block1d_forward.11} parent=69 // loop_body
                  %v1513 = vld [vmem:[%s1511] sm:$0xff]
                  %1514 = vst [vmem:[%s1512] sm:$0xff] %v1513
                  %v1515 = vld [vmem:[%s1511 + $0x8] sm:$0xff]
                  %1516 = vst [vmem:[%s1512 + $0x8] sm:$0xff] %v1515
                  %v1517 = vld [vmem:[%s1511 + $0x10] sm:$0xff]
                  %1518 = vst [vmem:[%s1512 + $0x10] sm:$0xff] %v1517
                  %v1519 = vld [vmem:[%s1511 + $0x18] sm:$0xff]
                  %1520 = vst [vmem:[%s1512 + $0x18] sm:$0xff] %v1519
                  %v1521 = vld [vmem:[%s1511 + $0x20] sm:$0xff]
                  %1522 = vst [vmem:[%s1512 + $0x20] sm:$0xff] %v1521
                  %v1523 = vld [vmem:[%s1511 + $0x28] sm:$0xff]
                  %1524 = vst [vmem:[%s1512 + $0x28] sm:$0xff] %v1523
                  %v1525 = vld [vmem:[%s1511 + $0x30] sm:$0xff]
                  %1526 = vst [vmem:[%s1512 + $0x30] sm:$0xff] %v1525
                  %s1527 = sadd.s32 1, %s1510
                  %p1528 = scmp.ge.s32.totalorder %s1527, %s1502
                  %s1529 = scalar_select %p1528, 0, %s1527
                  %s1530 = smul.u32 %s1529, 56
                  %s1531 = smul.u32 %s1529, 56
                  %s1532 = scalar_lea.vmem %s1422, %s1530 [#allocation3]
                  %s1533 = scalar_lea.vmem %s1433, %s1531
                $region75: #{residual_block1d_forward.11} parent=69 // loop_footer
                  %s1507 = sadd.s32 %s1505, 1
                $region76: #{residual_block1d_forward.11} parent=69 // loop_footer_branch
                  %1504 = sbr.rel target = $region72
                $region77: #{residual_block1d_forward.11} parent=69 // loop_exit
                  _
                %s1534 = sdiv.u32.pop %s1427, 7
                %s1535 = srem.u32.pop %s1427, 7
                %s1536 = smul.u32 %s1534, 7
                %s1537 = smul.u32 8, %s1536
                %s1538 = scalar_lea.vmem %s1422, %s1537 [#allocation3]
                %s1539 = smul.u32 8, %s1536
                %s1540 = scalar_lea.vmem %s1433, %s1539
                // While loop
                $region78: #{residual_block1d_forward.11} parent=69 // loop_pre_header
                  _
                $region79: #{residual_block1d_forward.11} parent=69 // loop_header
                  %s1542 = sphi 0, %s1544
                  %p1543 = scmp.ge.s32.totalorder %s1542, %s1535
                  %s1547 = sphi 0, %s1554
                  %s1548 = sphi %s1538, %s1557
                  %s1549 = sphi %s1540, %s1558
                $region80: #{residual_block1d_forward.11} parent=69 // loop_header_branch
                  %1546 = sbr.rel (%p1543) target = $region84
                $region81: #{residual_block1d_forward.11} parent=69 // loop_body
                  %v1550 = vld [vmem:[%s1548] sm:$0xff]
                  %1551 = vst [vmem:[%s1549] sm:$0xff] %v1550
                  %s1552 = sadd.s32 1, %s1547
                  %p1553 = scmp.ge.s32.totalorder %s1552, %s1535
                  %s1554 = scalar_select %p1553, 0, %s1552
                  %s1555 = smul.u32 %s1554, 8
                  %s1556 = smul.u32 %s1554, 8
                  %s1557 = scalar_lea.vmem %s1538, %s1555 [#allocation3]
                  %s1558 = scalar_lea.vmem %s1540, %s1556
                $region82: #{residual_block1d_forward.11} parent=69 // loop_footer
                  %s1544 = sadd.s32 %s1542, 1
                $region83: #{residual_block1d_forward.11} parent=69 // loop_footer_branch
                  %1541 = sbr.rel target = $region79
                $region84: #{residual_block1d_forward.11} parent=69 // loop_exit
                  _
              $region70: #{residual_block1d_forward.11} parent=47 // pred_fallthru
                _
              // Predicated region
              $region85: #{residual_block1d_forward.11} parent=47 // pred_check
                _
              $region86: #{residual_block1d_forward.11} parent=47 // pred_check_branch
                %1560 = sbr.rel target = $region88
              $region87: #{residual_block1d_forward.11} parent=47 // pred_region
                _
              $region88: #{residual_block1d_forward.11} parent=47 // pred_fallthru
                _
            $region48: #{residual_block1d_forward.11} parent=43 // pred_fallthru
              _
            // Predicated region
            $region49: #{residual_block1d_forward.11} parent=43 // pred_check
              _
            $region50: #{residual_block1d_forward.11} parent=43 // pred_check_branch
              %1440 = sbr.rel target = $region52
            $region51: #{residual_block1d_forward.11} parent=43 // pred_region
              %s1442 = ssub.s32 256, 1
              %s1443 = sdiv.u32.pop %s1427, 7
              %s1444 = srem.u32.pop %s1427, 7
              // While loop
              $region53: #{residual_block1d_forward.11} parent=51 // loop_pre_header
                _
              $region54: #{residual_block1d_forward.11} parent=51 // loop_header
                %s1446 = sphi 0, %s1448
                %p1447 = scmp.ge.s32.totalorder %s1446, %s1443
                %s1451 = sphi 0, %s1470
                %s1452 = sphi %s1422, %s1473
                %s1453 = sphi %s1433, %s1474
              $region55: #{residual_block1d_forward.11} parent=51 // loop_header_branch
                %1450 = sbr.rel (%p1447) target = $region59
              $region56: #{residual_block1d_forward.11} parent=51 // loop_body
                %v1454 = vld [vmem:[%s1452] sm:%s1442]
                %1455 = vst [vmem:[%s1453] sm:%s1442] %v1454
                %v1456 = vld [vmem:[%s1452 + $0x8] sm:%s1442]
                %1457 = vst [vmem:[%s1453 + $0x8] sm:%s1442] %v1456
                %v1458 = vld [vmem:[%s1452 + $0x10] sm:%s1442]
                %1459 = vst [vmem:[%s1453 + $0x10] sm:%s1442] %v1458
                %v1460 = vld [vmem:[%s1452 + $0x18] sm:%s1442]
                %1461 = vst [vmem:[%s1453 + $0x18] sm:%s1442] %v1460
                %v1462 = vld [vmem:[%s1452 + $0x20] sm:%s1442]
                %1463 = vst [vmem:[%s1453 + $0x20] sm:%s1442] %v1462
                %v1464 = vld [vmem:[%s1452 + $0x28] sm:%s1442]
                %1465 = vst [vmem:[%s1453 + $0x28] sm:%s1442] %v1464
                %v1466 = vld [vmem:[%s1452 + $0x30] sm:%s1442]
                %1467 = vst [vmem:[%s1453 + $0x30] sm:%s1442] %v1466
                %s1468 = sadd.s32 1, %s1451
                %p1469 = scmp.ge.s32.totalorder %s1468, %s1443
                %s1470 = scalar_select %p1469, 0, %s1468
                %s1471 = smul.u32 %s1470, 56
                %s1472 = smul.u32 %s1470, 56
                %s1473 = scalar_lea.vmem %s1422, %s1471 [#allocation3]
                %s1474 = scalar_lea.vmem %s1433, %s1472
              $region57: #{residual_block1d_forward.11} parent=51 // loop_footer
                %s1448 = sadd.s32 %s1446, 1
              $region58: #{residual_block1d_forward.11} parent=51 // loop_footer_branch
                %1445 = sbr.rel target = $region54
              $region59: #{residual_block1d_forward.11} parent=51 // loop_exit
                _
              %s1475 = sdiv.u32.pop %s1427, 7
              %s1476 = srem.u32.pop %s1427, 7
              %s1477 = smul.u32 %s1475, 7
              %s1478 = smul.u32 8, %s1477
              %s1479 = scalar_lea.vmem %s1422, %s1478 [#allocation3]
              %s1480 = smul.u32 8, %s1477
              %s1481 = scalar_lea.vmem %s1433, %s1480
              // While loop
              $region60: #{residual_block1d_forward.11} parent=51 // loop_pre_header
                _
              $region61: #{residual_block1d_forward.11} parent=51 // loop_header
                %s1483 = sphi 0, %s1485
                %p1484 = scmp.ge.s32.totalorder %s1483, %s1476
                %s1488 = sphi 0, %s1495
                %s1489 = sphi %s1479, %s1498
                %s1490 = sphi %s1481, %s1499
              $region62: #{residual_block1d_forward.11} parent=51 // loop_header_branch
                %1487 = sbr.rel (%p1484) target = $region66
              $region63: #{residual_block1d_forward.11} parent=51 // loop_body
                %v1491 = vld [vmem:[%s1489] sm:%s1442]
                %1492 = vst [vmem:[%s1490] sm:%s1442] %v1491
                %s1493 = sadd.s32 1, %s1488
                %p1494 = scmp.ge.s32.totalorder %s1493, %s1476
                %s1495 = scalar_select %p1494, 0, %s1493
                %s1496 = smul.u32 %s1495, 8
                %s1497 = smul.u32 %s1495, 8
                %s1498 = scalar_lea.vmem %s1479, %s1496 [#allocation3]
                %s1499 = scalar_lea.vmem %s1481, %s1497
              $region64: #{residual_block1d_forward.11} parent=51 // loop_footer
                %s1485 = sadd.s32 %s1483, 1
              $region65: #{residual_block1d_forward.11} parent=51 // loop_footer_branch
                %1482 = sbr.rel target = $region61
              $region66: #{residual_block1d_forward.11} parent=51 // loop_exit
                _
            $region52: #{residual_block1d_forward.11} parent=43 // pred_fallthru
              _
          $region44: #{residual_block1d_forward.11} parent=39 // pred_fallthru
            _
          %1561 = vnop
        $region40: #{residual_block1d_forward.11} parent=35 // pred_fallthru
          _
      $region36: #{residual_block1d_forward.11} parent=5 // pred_fallthru
        _
      %p1562 = scmp.le.s32.totalorder 2, %s10
      // Predicated region
      $region89: #{residual_block1d_forward.11} parent=5 // pred_check
        %p1563 = pneg %p1562
      $region90: #{residual_block1d_forward.11} parent=5 // pred_check_branch
        %1565 = sbr.rel (%p1563) target = $region92
      $region91: #{residual_block1d_forward.11} parent=5 // pred_region
        %s1566 = ssub.s32 %s10, 2
        // Predicated region
        $region93: #{residual_block1d_forward.11} parent=91 // pred_check
          %p1567 = pneg %p149
        $region94: #{residual_block1d_forward.11} parent=91 // pred_check_branch
          %1569 = sbr.rel (%p1567) target = $region96
        $region95: #{residual_block1d_forward.11} parent=91 // pred_region
          %s1570 = sand.u32 %s134, 1
          %s1571 = sand.u32 %s134, 1
          %s1572 = smul.addr %s1571, 64
          %s1573 = scalar_lea.vmem [#allocation3], %s1572
        $region96: #{residual_block1d_forward.11} parent=91 // pred_fallthru
          _
      $region92: #{residual_block1d_forward.11} parent=5 // pred_fallthru
        _
    $region6: #{residual_block1d_forward.11} parent=1 // loop_footer
      %s14 = sadd.s32 1, %s10
    $region7: #{residual_block1d_forward.11} parent=1 // loop_footer_branch
      %9 = sbr.rel target = $region3
    $region8: #{residual_block1d_forward.11} parent=1 // loop_exit
      _

</llo_original>
